<compile_context>
chip_gen: v7x
topology: tpu7x:2x2x1
jax: 0.10.0
libtpu: 0.0.40
codegen_flags: <defaults>
</compile_context>

<pallas_src>
import functools

import jax
import jax.numpy as jnp
from jax.experimental import pallas as pl
from jax.experimental.pallas import tpu as pltpu


SUB = 16   # sublane multiple for bf16 M-tiles


def _round_up(x, m):
    return ((x + m - 1) // m) * m


# ---------------------------------------------------------------------------
# Pallas kernel 1: fused  out = relu(a @ w + bias)   (conv-as-matmul)
# ---------------------------------------------------------------------------
def _matmul_bias_relu_kernel(a_ref, w_ref, b_ref, o_ref):
    acc = jnp.dot(a_ref[...], w_ref[...], preferred_element_type=jnp.float32)
    acc = jnp.maximum(acc + b_ref[...], 0.0)      # (1, N) bias broadcasts over rows
    o_ref[...] = acc.astype(o_ref.dtype)


def matmul_bias_relu(a, w, bias_row, *, out_dtype=jnp.bfloat16):
    """relu(a @ w + bias).  a: (M, K) bf16, w: (K, N) bf16, bias_row: (1, N) f32."""
    M, K = a.shape
    N = w.shape[1]

    # M-grid of 2 blocks when possible: megacore sharding on v7x, negligible
    # extra step cost on single-TensorCore chips (v5e/v6e).  Unpadded A: the
    # trailing partial block is handled by Pallas (padded read, masked store).
    if M >= 2 * SUB:
        tm = _round_up(pl.cdiv(M, 2), SUB)
    else:
        tm = M
    grid_m = pl.cdiv(M, tm)

    return pl.pallas_call(
        _matmul_bias_relu_kernel,
        out_shape=jax.ShapeDtypeStruct((M, N), out_dtype),
        grid=(grid_m,),
        in_specs=[
            pl.BlockSpec((tm, K), lambda i: (i, 0)),   # A tile (grid over M)
            pl.BlockSpec((K, N), lambda i: (0, 0)),    # weight, resident across steps
            pl.BlockSpec((1, N), lambda i: (0, 0)),    # bias row
        ],
        out_specs=pl.BlockSpec((tm, N), lambda i: (i, 0)),
        compiler_params=pltpu.CompilerParams(dimension_semantics=("parallel",)),
    )(a.astype(jnp.bfloat16), w, bias_row)


# ---------------------------------------------------------------------------
# Pallas kernel 2: fused fc + critic/policy heads
#   out = relu(x @ fc_w + fc_b) @ head_w + head_b
# ---------------------------------------------------------------------------
def _fc_heads_kernel(x_ref, fw_ref, fb_ref, hw_ref, hb_ref, o_ref):
    h = jnp.dot(x_ref[...], fw_ref[...], preferred_element_type=jnp.float32)
    h = jnp.maximum(h + fb_ref[...], 0.0)                       # (M, 512) f32, stays in VMEM
    acc = jnp.dot(h.astype(hw_ref.dtype), hw_ref[...],
                  preferred_element_type=jnp.float32)
    o_ref[...] = (acc + hb_ref[...]).astype(o_ref.dtype)


def fc_heads(x, fc_w, fc_b, head_w, head_b):
    """x: (M, K); fc_w: (K, H) bf16; head_w: (H, 1+A) bf16. Returns (M, 1+A) f32."""
    M, K = x.shape
    H = fc_w.shape[1]
    N = head_w.shape[1]
    return pl.pallas_call(
        _fc_heads_kernel,
        out_shape=jax.ShapeDtypeStruct((M, N), jnp.float32),
        grid=(1,),
        in_specs=[
            pl.BlockSpec((M, K), lambda i: (0, 0)),
            pl.BlockSpec((K, H), lambda i: (0, 0)),
            pl.BlockSpec((1, H), lambda i: (0, 0)),
            pl.BlockSpec((H, N), lambda i: (0, 0)),
            pl.BlockSpec((1, N), lambda i: (0, 0)),
        ],
        out_specs=pl.BlockSpec((M, N), lambda i: (0, 0)),
    )(x.astype(jnp.bfloat16), fc_w, fc_b, head_w, head_b)


# ---------------------------------------------------------------------------
# Plain-JAX glue (NHWC, data movement only — no MXU work outside the kernels)
# ---------------------------------------------------------------------------
def im2col_nhwc(x, ksize, stride):
    """x: (N, H, W, C) -> (N*OH*OW, KH*KW*C) via pure strided slices + concat.
    Feature order is tap-major (kh, kw, c); conv weights are pre-permuted to
    the same order in prepare_params."""
    N, H, W, C = x.shape
    OH = (H - ksize) // stride + 1
    OW = (W - ksize) // stride + 1
    cols = []
    for kh in range(ksize):
        for kw in range(ksize):
            sl = jax.lax.slice(
                x,
                (0, kh, kw, 0),
                (N, kh + (OH - 1) * stride + 1, kw + (OW - 1) * stride + 1, C),
                (1, stride, stride, 1))
            cols.append(sl)                       # (N, OH, OW, C)
    patches = jnp.concatenate(cols, axis=-1)      # (N, OH, OW, KH*KW*C)
    return patches.reshape(N * OH * OW, ksize * ksize * C), OH, OW


def conv2d_relu_nhwc(x, wmat, bias_row, ksize, stride):
    """PyTorch Conv2d(+ReLU) semantics on NHWC activations via a Pallas matmul."""
    N = x.shape[0]
    n_out = wmat.shape[1]
    patches, OH, OW = im2col_nhwc(x, ksize, stride)
    y = matmul_bias_relu(patches, wmat, bias_row, out_dtype=jnp.bfloat16)
    return y.reshape(N, OH, OW, n_out)


def stack_frames_channels_last(seqs, lens, num_stack):
    """StackFrames(num_stack, channel axis), batch_first=False, channels-last.
    seqs: (T, B, H, W, C), lens: (B,) -> (T, B, H, W, num_stack*C)."""
    T = seqs.shape[0]
    first = jnp.broadcast_to(seqs[0:1], (num_stack - 1,) + seqs.shape[1:])
    padded = jnp.concatenate([first, seqs], axis=0)           # (T+num_stack-1, ...)
    groups = [padded[i:i + T] for i in range(num_stack)]      # group i = frame t-(S-1-i)
    out = jnp.concatenate(groups, axis=-1)                    # stack on channels
    mask = jnp.arange(T)[:, None] >= lens[None, :]            # (T, B)
    out = jnp.where(mask[:, :, None, None, None], jnp.zeros((), out.dtype), out)
    return out, lens


# ---------------------------------------------------------------------------
# Parameters: deterministic synthetic init + one-time kernel-layout preparation
# ---------------------------------------------------------------------------
def init_params(key, num_stack=4, num_actions=6):
    keys = jax.random.split(key, 12)

    def w(k, shape, scale=0.05):
        return scale * jax.random.normal(k, shape, dtype=jnp.float32)

    # TODO(synk): nn.init.orthogonal_(policy.weight, 0.01) approximated with a
    # small-scale normal init (orthogonalization is init-time only).
    return {
        "conv1_w": w(keys[0], (32, num_stack, 8, 8)),
        "conv1_b": w(keys[1], (32,)),
        "conv2_w": w(keys[2], (64, 32, 4, 4)),
        "conv2_b": w(keys[3], (64,)),
        "conv3_w": w(keys[4], (32, 64, 3, 3)),
        "conv3_b": w(keys[5], (32,)),
        "fc_w": w(keys[6], (512, 32 * 7 * 7), 0.02),
        "fc_b": w(keys[7], (512,)),
        "critic_w": w(keys[8], (1, 512), 0.02),
        "critic_b": w(keys[9], (1,)),
        "policy_w": w(keys[10], (num_actions, 512), 0.01),
        "policy_b": w(keys[11], (num_actions,), 0.01),
    }


def prepare_params(raw):
    """One-time prep: permute weights into kernel layout (no per-forward work),
    bf16 matmul operands, f32 biases for the epilogue."""
    p = {}
    for name in ("conv1", "conv2", "conv3"):
        w = raw[f"{name}_w"]                                    # (Cout, Cin, KH, KW)
        # Tap-major (KH, KW, Cin) row order to match im2col_nhwc's slice+concat.
        wmat = w.transpose(2, 3, 1, 0).reshape(-1, w.shape[0])  # (KH*KW*Cin, Cout)
        p[f"{name}_w"] = wmat.astype(jnp.bfloat16)
        p[f"{name}_b"] = raw[f"{name}_b"].reshape(1, -1).astype(jnp.float32)

    # fc weight: PyTorch columns follow the NCHW flatten (C, H, W); permute once
    # to the NHWC flatten order (H, W, C) used by this implementation.
    fc_w = raw["fc_w"].reshape(512, 32, 7, 7).transpose(0, 2, 3, 1).reshape(512, -1)
    p["fc_w"] = fc_w.T.astype(jnp.bfloat16)                     # (1568, 512)
    p["fc_b"] = raw["fc_b"].reshape(1, -1).astype(jnp.float32)  # (1, 512)

    # Fused heads: col 0 = critic value, cols 1..num_actions = policy logits.
    head_w = jnp.concatenate([raw["critic_w"], raw["policy_w"]], axis=0).T  # (512, 1+A)
    head_b = jnp.concatenate([raw["critic_b"], raw["policy_b"]], axis=0)    # (1+A,)
    p["head_w"] = head_w.astype(jnp.bfloat16)
    p["head_b"] = head_b.reshape(1, -1).astype(jnp.float32)
    return p


# ---------------------------------------------------------------------------
# Forward
# ---------------------------------------------------------------------------
def network_forward(params, x, lens, *, num_stack=4, num_actions=6):
    # x: (T, B, 1, H, W) f32, lens: (B,) int32
    x = jnp.moveaxis(x, 2, -1)                                   # channels-last (C == 1)
    x, lens = stack_frames_channels_last(x, lens, num_stack)     # (T, B, H, W, num_stack)
    T, B = x.shape[:2]
    x = x.reshape((T * B,) + x.shape[2:]).astype(jnp.bfloat16)   # (TB, H, W, num_stack)

    x = conv2d_relu_nhwc(x, params["conv1_w"], params["conv1_b"], 8, 4)   # (TB,20,20,32)
    x = conv2d_relu_nhwc(x, params["conv2_w"], params["conv2_b"], 4, 2)   # (TB, 9, 9,64)
    x = conv2d_relu_nhwc(x, params["conv3_w"], params["conv3_b"], 3, 1)   # (TB, 7, 7,32)

    x = x.reshape(T * B, -1)                                     # NHWC flatten (H, W, C)
    heads = fc_heads(x, params["fc_w"], params["fc_b"],
                     params["head_w"], params["head_b"])         # (TB, 1+A) f32

    values = heads[:, 0:1].reshape(T, B, 1)
    logits = heads[:, 1:1 + num_actions].reshape(T, B, num_actions)
    return values, logits


# ---------------------------------------------------------------------------
if __name__ == "__main__":
    T, B, H, W = 3, 2, 84, 84        # 84x84 required by the fc layer (32*7*7 flatten)
    NUM_STACK, NUM_ACTIONS = 4, 6

    key = jax.random.PRNGKey(0)
    k_param, k_x = jax.random.split(key)

    raw = init_params(k_param, NUM_STACK, NUM_ACTIONS)
    params = prepare_params(raw)

    x = jax.random.normal(k_x, (T, B, 1, H, W), dtype=jnp.float32)
    lens = jnp.array([3, 2], dtype=jnp.int32)

    fwd = jax.jit(functools.partial(network_forward,
                                    num_stack=NUM_STACK, num_actions=NUM_ACTIONS))
    values, policy_logits = fwd(params, x, lens)
    jax.block_until_ready((values, policy_logits))

    assert values.shape == (T, B, 1), values.shape
    assert policy_logits.shape == (T, B, NUM_ACTIONS), policy_logits.shape
    print("KERNEL_OK")
</pallas_src>

<mosaic_0001>
module attributes {stable_mosaic.version = 11 : i64} {
  func.func @_matmul_bias_relu_kernel(%arg0: i32, %arg1: memref<1200x256xbf16, #tpu.memory_space<vmem>>, %arg2: memref<256x32xbf16, #tpu.memory_space<vmem>>, %arg3: memref<1x32xf32, #tpu.memory_space<vmem>>, %arg4: memref<1200x32xbf16, #tpu.memory_space<vmem>>) attributes {dimension_semantics = [#tpu.dimension_semantics<parallel>], iteration_bounds = array<i64: 2>, scalar_prefetch = 0 : i64, scratch_operands = 0 : i64, tpu.core_type = #tpu.core_type<tc>, window_params = [{transform_indices = @transform_0, window_bounds = array<i64: 1200, 256>}, {pipeline_mode = #tpu.pipeline_mode<synchronous>, transform_indices = @transform_1, window_bounds = array<i64: 256, 32>}, {pipeline_mode = #tpu.pipeline_mode<synchronous>, transform_indices = @transform_2, window_bounds = array<i64: 1, 32>}, {transform_indices = @transform_3, window_bounds = array<i64: 1200, 32>}]} {
    %c0 = arith.constant 0 : index
    %c0_0 = arith.constant 0 : index
    %0 = vector.load %arg1[%c0, %c0_0] : memref<1200x256xbf16, #tpu.memory_space<vmem>>, vector<1200x256xbf16>
    %c0_1 = arith.constant 0 : index
    %c0_2 = arith.constant 0 : index
    %1 = vector.load %arg2[%c0_1, %c0_2] : memref<256x32xbf16, #tpu.memory_space<vmem>>, vector<256x32xbf16>
    %cst = arith.constant dense<0.000000e+00> : vector<1200x32xf32>
    %2 = tpu.matmul %0, %1, %cst {dimension_numbers = #tpu.dot_dimension_numbers<[1], [0], [0], [1], [0, 0, 1, 1], [], []>} : vector<1200x256xbf16>, vector<256x32xbf16>, vector<1200x32xf32> -> vector<1200x32xf32>
    %c0_3 = arith.constant 0 : index
    %c0_4 = arith.constant 0 : index
    %3 = vector.load %arg3[%c0_3, %c0_4] : memref<1x32xf32, #tpu.memory_space<vmem>>, vector<1x32xf32>
    %4 = vector.broadcast %3 : vector<1x32xf32> to vector<1200x32xf32>
    %5 = arith.addf %2, %4 : vector<1200x32xf32>
    %cst_5 = arith.constant 0.000000e+00 : f32
    %6 = vector.broadcast %cst_5 : f32 to vector<1200x32xf32>
    %7 = arith.maximumf %5, %6 : vector<1200x32xf32>
    %8 = arith.truncf %7 : vector<1200x32xf32> to vector<1200x32xbf16>
    %c0_6 = arith.constant 0 : index
    %c0_7 = arith.constant 0 : index
    %9 = vector.load %arg4[%c0_6, %c0_7] : memref<1200x32xbf16, #tpu.memory_space<vmem>>, vector<1200x32xbf16>
    tpu.vector_store %arg4[%c0_6, %c0_7], %8 {strides = array<i32>} : memref<1200x32xbf16, #tpu.memory_space<vmem>>, vector<1200x32xbf16>,
    return
  }
  func.func @transform_0(%arg0: i32) -> (i32, i32) {
    %c0_i32 = arith.constant 0 : i32
    %c0_i32_0 = arith.constant 0 : i32
    return %arg0, %c0_i32 : i32, i32
  }
  func.func @transform_1(%arg0: i32) -> (i32, i32) {
    %c0_i32 = arith.constant 0 : i32
    %c0_i32_0 = arith.constant 0 : i32
    %c0_i32_1 = arith.constant 0 : i32
    return %c0_i32, %c0_i32_0 : i32, i32
  }
  func.func @transform_2(%arg0: i32) -> (i32, i32) {
    %c0_i32 = arith.constant 0 : i32
    %c0_i32_0 = arith.constant 0 : i32
    %c0_i32_1 = arith.constant 0 : i32
    return %c0_i32, %c0_i32_0 : i32, i32
  }
  func.func @transform_3(%arg0: i32) -> (i32, i32) {
    %c0_i32 = arith.constant 0 : i32
    %c0_i32_0 = arith.constant 0 : i32
    return %arg0, %c0_i32 : i32, i32
  }
}

module attributes {stable_mosaic.version = 11 : i64} {
  func.func @_matmul_bias_relu_kernel(%arg0: i32, %arg1: memref<256x512xbf16, #tpu.memory_space<vmem>>, %arg2: memref<512x64xbf16, #tpu.memory_space<vmem>>, %arg3: memref<1x64xf32, #tpu.memory_space<vmem>>, %arg4: memref<256x64xbf16, #tpu.memory_space<vmem>>) attributes {dimension_semantics = [#tpu.dimension_semantics<parallel>], iteration_bounds = array<i64: 2>, scalar_prefetch = 0 : i64, scratch_operands = 0 : i64, tpu.core_type = #tpu.core_type<tc>, window_params = [{transform_indices = @transform_0, window_bounds = array<i64: 256, 512>}, {pipeline_mode = #tpu.pipeline_mode<synchronous>, transform_indices = @transform_1, window_bounds = array<i64: 512, 64>}, {pipeline_mode = #tpu.pipeline_mode<synchronous>, transform_indices = @transform_2, window_bounds = array<i64: 1, 64>}, {transform_indices = @transform_3, window_bounds = array<i64: 256, 64>}]} {
    %c0 = arith.constant 0 : index
    %c0_0 = arith.constant 0 : index
    %0 = vector.load %arg1[%c0, %c0_0] : memref<256x512xbf16, #tpu.memory_space<vmem>>, vector<256x512xbf16>
    %c0_1 = arith.constant 0 : index
    %c0_2 = arith.constant 0 : index
    %1 = vector.load %arg2[%c0_1, %c0_2] : memref<512x64xbf16, #tpu.memory_space<vmem>>, vector<512x64xbf16>
    %cst = arith.constant dense<0.000000e+00> : vector<256x64xf32>
    %2 = tpu.matmul %0, %1, %cst {dimension_numbers = #tpu.dot_dimension_numbers<[1], [0], [0], [1], [0, 0, 1, 1], [], []>} : vector<256x512xbf16>, vector<512x64xbf16>, vector<256x64xf32> -> vector<256x64xf32>
    %c0_3 = arith.constant 0 : index
    %c0_4 = arith.constant 0 : index
    %3 = vector.load %arg3[%c0_3, %c0_4] : memref<1x64xf32, #tpu.memory_space<vmem>>, vector<1x64xf32>
    %4 = vector.broadcast %3 : vector<1x64xf32> to vector<256x64xf32>
    %5 = arith.addf %2, %4 : vector<256x64xf32>
    %cst_5 = arith.constant 0.000000e+00 : f32
    %6 = vector.broadcast %cst_5 : f32 to vector<256x64xf32>
    %7 = arith.maximumf %5, %6 : vector<256x64xf32>
    %8 = arith.truncf %7 : vector<256x64xf32> to vector<256x64xbf16>
    %c0_6 = arith.constant 0 : index
    %c0_7 = arith.constant 0 : index
    %9 = vector.load %arg4[%c0_6, %c0_7] : memref<256x64xbf16, #tpu.memory_space<vmem>>, vector<256x64xbf16>
    tpu.vector_store %arg4[%c0_6, %c0_7], %8 {strides = array<i32>} : memref<256x64xbf16, #tpu.memory_space<vmem>>, vector<256x64xbf16>,
    return
  }
  func.func @transform_0(%arg0: i32) -> (i32, i32) {
    %c0_i32 = arith.constant 0 : i32
    %c0_i32_0 = arith.constant 0 : i32
    return %arg0, %c0_i32 : i32, i32
  }
  func.func @transform_1(%arg0: i32) -> (i32, i32) {
    %c0_i32 = arith.constant 0 : i32
    %c0_i32_0 = arith.constant 0 : i32
    %c0_i32_1 = arith.constant 0 : i32
    return %c0_i32, %c0_i32_0 : i32, i32
  }
  func.func @transform_2(%arg0: i32) -> (i32, i32) {
    %c0_i32 = arith.constant 0 : i32
    %c0_i32_0 = arith.constant 0 : i32
    %c0_i32_1 = arith.constant 0 : i32
    return %c0_i32, %c0_i32_0 : i32, i32
  }
  func.func @transform_3(%arg0: i32) -> (i32, i32) {
    %c0_i32 = arith.constant 0 : i32
    %c0_i32_0 = arith.constant 0 : i32
    return %arg0, %c0_i32 : i32, i32
  }
}

module attributes {stable_mosaic.version = 11 : i64} {
  func.func @_matmul_bias_relu_kernel(%arg0: i32, %arg1: memref<160x576xbf16, #tpu.memory_space<vmem>>, %arg2: memref<576x32xbf16, #tpu.memory_space<vmem>>, %arg3: memref<1x32xf32, #tpu.memory_space<vmem>>, %arg4: memref<160x32xbf16, #tpu.memory_space<vmem>>) attributes {dimension_semantics = [#tpu.dimension_semantics<parallel>], iteration_bounds = array<i64: 2>, scalar_prefetch = 0 : i64, scratch_operands = 0 : i64, tpu.core_type = #tpu.core_type<tc>, window_params = [{transform_indices = @transform_0, window_bounds = array<i64: 160, 576>}, {pipeline_mode = #tpu.pipeline_mode<synchronous>, transform_indices = @transform_1, window_bounds = array<i64: 576, 32>}, {pipeline_mode = #tpu.pipeline_mode<synchronous>, transform_indices = @transform_2, window_bounds = array<i64: 1, 32>}, {transform_indices = @transform_3, window_bounds = array<i64: 160, 32>}]} {
    %c0 = arith.constant 0 : index
    %c0_0 = arith.constant 0 : index
    %0 = vector.load %arg1[%c0, %c0_0] : memref<160x576xbf16, #tpu.memory_space<vmem>>, vector<160x576xbf16>
    %c0_1 = arith.constant 0 : index
    %c0_2 = arith.constant 0 : index
    %1 = vector.load %arg2[%c0_1, %c0_2] : memref<576x32xbf16, #tpu.memory_space<vmem>>, vector<576x32xbf16>
    %cst = arith.constant dense<0.000000e+00> : vector<160x32xf32>
    %2 = tpu.matmul %0, %1, %cst {dimension_numbers = #tpu.dot_dimension_numbers<[1], [0], [0], [1], [0, 0, 1, 1], [], []>} : vector<160x576xbf16>, vector<576x32xbf16>, vector<160x32xf32> -> vector<160x32xf32>
    %c0_3 = arith.constant 0 : index
    %c0_4 = arith.constant 0 : index
    %3 = vector.load %arg3[%c0_3, %c0_4] : memref<1x32xf32, #tpu.memory_space<vmem>>, vector<1x32xf32>
    %4 = vector.broadcast %3 : vector<1x32xf32> to vector<160x32xf32>
    %5 = arith.addf %2, %4 : vector<160x32xf32>
    %cst_5 = arith.constant 0.000000e+00 : f32
    %6 = vector.broadcast %cst_5 : f32 to vector<160x32xf32>
    %7 = arith.maximumf %5, %6 : vector<160x32xf32>
    %8 = arith.truncf %7 : vector<160x32xf32> to vector<160x32xbf16>
    %c0_6 = arith.constant 0 : index
    %c0_7 = arith.constant 0 : index
    %9 = vector.load %arg4[%c0_6, %c0_7] : memref<160x32xbf16, #tpu.memory_space<vmem>>, vector<160x32xbf16>
    tpu.vector_store %arg4[%c0_6, %c0_7], %8 {strides = array<i32>} : memref<160x32xbf16, #tpu.memory_space<vmem>>, vector<160x32xbf16>,
    return
  }
  func.func @transform_0(%arg0: i32) -> (i32, i32) {
    %c0_i32 = arith.constant 0 : i32
    %c0_i32_0 = arith.constant 0 : i32
    return %arg0, %c0_i32 : i32, i32
  }
  func.func @transform_1(%arg0: i32) -> (i32, i32) {
    %c0_i32 = arith.constant 0 : i32
    %c0_i32_0 = arith.constant 0 : i32
    %c0_i32_1 = arith.constant 0 : i32
    return %c0_i32, %c0_i32_0 : i32, i32
  }
  func.func @transform_2(%arg0: i32) -> (i32, i32) {
    %c0_i32 = arith.constant 0 : i32
    %c0_i32_0 = arith.constant 0 : i32
    %c0_i32_1 = arith.constant 0 : i32
    return %c0_i32, %c0_i32_0 : i32, i32
  }
  func.func @transform_3(%arg0: i32) -> (i32, i32) {
    %c0_i32 = arith.constant 0 : i32
    %c0_i32_0 = arith.constant 0 : i32
    return %arg0, %c0_i32 : i32, i32
  }
}

module attributes {stable_mosaic.version = 11 : i64} {
  func.func @_fc_heads_kernel(%arg0: i32, %arg1: memref<6x1568xbf16, #tpu.memory_space<vmem>>, %arg2: memref<1568x512xbf16, #tpu.memory_space<vmem>>, %arg3: memref<1x512xf32, #tpu.memory_space<vmem>>, %arg4: memref<512x7xbf16, #tpu.memory_space<vmem>>, %arg5: memref<1x7xf32, #tpu.memory_space<vmem>>, %arg6: memref<6x7xf32, #tpu.memory_space<vmem>>) attributes {dimension_semantics = [#tpu.dimension_semantics<arbitrary>], iteration_bounds = array<i64: 1>, scalar_prefetch = 0 : i64, scratch_operands = 0 : i64, tpu.core_type = #tpu.core_type<tc>, window_params = [{pipeline_mode = #tpu.pipeline_mode<synchronous>, transform_indices = @transform_0, window_bounds = array<i64: 6, 1568>}, {pipeline_mode = #tpu.pipeline_mode<synchronous>, transform_indices = @transform_1, window_bounds = array<i64: 1568, 512>}, {pipeline_mode = #tpu.pipeline_mode<synchronous>, transform_indices = @transform_2, window_bounds = array<i64: 1, 512>}, {pipeline_mode = #tpu.pipeline_mode<synchronous>, transform_indices = @transform_3, window_bounds = array<i64: 512, 7>}, {pipeline_mode = #tpu.pipeline_mode<synchronous>, transform_indices = @transform_4, window_bounds = array<i64: 1, 7>}, {pipeline_mode = #tpu.pipeline_mode<synchronous>, transform_indices = @transform_5, window_bounds = array<i64: 6, 7>}]} {
    %c0 = arith.constant 0 : index
    %c0_0 = arith.constant 0 : index
    %0 = vector.load %arg1[%c0, %c0_0] : memref<6x1568xbf16, #tpu.memory_space<vmem>>, vector<6x1568xbf16>
    %c0_1 = arith.constant 0 : index
    %c0_2 = arith.constant 0 : index
    %1 = vector.load %arg2[%c0_1, %c0_2] : memref<1568x512xbf16, #tpu.memory_space<vmem>>, vector<1568x512xbf16>
    %cst = arith.constant dense<0.000000e+00> : vector<6x512xf32>
    %2 = tpu.matmul %0, %1, %cst {dimension_numbers = #tpu.dot_dimension_numbers<[1], [0], [0], [1], [0, 0, 1, 1], [], []>} : vector<6x1568xbf16>, vector<1568x512xbf16>, vector<6x512xf32> -> vector<6x512xf32>
    %c0_3 = arith.constant 0 : index
    %c0_4 = arith.constant 0 : index
    %3 = vector.load %arg3[%c0_3, %c0_4] : memref<1x512xf32, #tpu.memory_space<vmem>>, vector<1x512xf32>
    %4 = vector.broadcast %3 : vector<1x512xf32> to vector<6x512xf32>
    %5 = arith.addf %2, %4 : vector<6x512xf32>
    %cst_5 = arith.constant 0.000000e+00 : f32
    %6 = vector.broadcast %cst_5 : f32 to vector<6x512xf32>
    %7 = arith.maximumf %5, %6 : vector<6x512xf32>
    %8 = arith.truncf %7 : vector<6x512xf32> to vector<6x512xbf16>
    %c0_6 = arith.constant 0 : index
    %c0_7 = arith.constant 0 : index
    %9 = vector.load %arg4[%c0_6, %c0_7] : memref<512x7xbf16, #tpu.memory_space<vmem>>, vector<512x7xbf16>
    %cst_8 = arith.constant dense<0.000000e+00> : vector<6x7xf32>
    %10 = tpu.matmul %8, %9, %cst_8 {dimension_numbers = #tpu.dot_dimension_numbers<[1], [0], [0], [1], [0, 0, 1, 1], [], []>} : vector<6x512xbf16>, vector<512x7xbf16>, vector<6x7xf32> -> vector<6x7xf32>
    %c0_9 = arith.constant 0 : index
    %c0_10 = arith.constant 0 : index
    %11 = vector.load %arg5[%c0_9, %c0_10] : memref<1x7xf32, #tpu.memory_space<vmem>>, vector<1x7xf32>
    %12 = vector.broadcast %11 : vector<1x7xf32> to vector<6x7xf32>
    %13 = arith.addf %10, %12 : vector<6x7xf32>
    %c0_11 = arith.constant 0 : index
    %c0_12 = arith.constant 0 : index
    %14 = vector.load %arg6[%c0_11, %c0_12] : memref<6x7xf32, #tpu.memory_space<vmem>>, vector<6x7xf32>
    tpu.vector_store %arg6[%c0_11, %c0_12], %13 {strides = array<i32>} : memref<6x7xf32, #tpu.memory_space<vmem>>, vector<6x7xf32>,
    return
  }
  func.func @transform_0(%arg0: i32) -> (i32, i32) {
    %c0_i32 = arith.constant 0 : i32
    %c0_i32_0 = arith.constant 0 : i32
    %c0_i32_1 = arith.constant 0 : i32
    return %c0_i32, %c0_i32_0 : i32, i32
  }
  func.func @transform_1(%arg0: i32) -> (i32, i32) {
    %c0_i32 = arith.constant 0 : i32
    %c0_i32_0 = arith.constant 0 : i32
    %c0_i32_1 = arith.constant 0 : i32
    return %c0_i32, %c0_i32_0 : i32, i32
  }
  func.func @transform_2(%arg0: i32) -> (i32, i32) {
    %c0_i32 = arith.constant 0 : i32
    %c0_i32_0 = arith.constant 0 : i32
    %c0_i32_1 = arith.constant 0 : i32
    return %c0_i32, %c0_i32_0 : i32, i32
  }
  func.func @transform_3(%arg0: i32) -> (i32, i32) {
    %c0_i32 = arith.constant 0 : i32
    %c0_i32_0 = arith.constant 0 : i32
    %c0_i32_1 = arith.constant 0 : i32
    return %c0_i32, %c0_i32_0 : i32, i32
  }
  func.func @transform_4(%arg0: i32) -> (i32, i32) {
    %c0_i32 = arith.constant 0 : i32
    %c0_i32_0 = arith.constant 0 : i32
    %c0_i32_1 = arith.constant 0 : i32
    return %c0_i32, %c0_i32_0 : i32, i32
  }
  func.func @transform_5(%arg0: i32) -> (i32, i32) {
    %c0_i32 = arith.constant 0 : i32
    %c0_i32_0 = arith.constant 0 : i32
    %c0_i32_1 = arith.constant 0 : i32
    return %c0_i32, %c0_i32_0 : i32, i32
  }
}

</mosaic_0001>

<llo_original>
// kernel: ge.3
$region0: #{ge.3}
  #allocation0 [shape = 's32[1]{0}', space=sflag, size = 0x4, scoped, tag = 'scoped memory for ge.3']
  %s0 = inlined_call_operand.vmem [shape: s32[6], index: 0, kind: input, shape index: {}]
  %s1 = inlined_call_operand.vmem [shape: s32[6], index: 1, kind: input, shape index: {}]
  %s2 = inlined_call_operand.vmem [shape: pred[6], index: 2, kind: output, shape index: {}]
  %v3 = vld [vmem:[%s0] sm:$0x1]
  %v4 = vld [vmem:[%s1] sm:$0x1]
  %5 = xla_tuple %v3, %v4
  %6 = xla_tuple %5
  %vm7 = vcmp.ge.s32.totalorder %v3, %v4
  %v8 = vsel %vm7, 1, 0
  %9 = xla_tuple %v8
  %v10 = vpack.c.b16 0, %v8
  %v11 = vpack.c.b8 0, %v10
  %13 = vst [vmem:[%s2] sm:$0x1] %v11

// kernel: network_forward.4
$region0: #{network_forward.4}
  #allocation0 [shape = 'u32[]', space=smem, size = 0x4, offset = 0x4, fixed_abs, tag = 'smem constant byte address 0x4 - core index']
  #allocation1 [shape = 'u32[144,128]{1,0:T(1,128)}', space=vmem, size = 0x12000, scoped, tag = 'internal scratch']
  %s0 = inlined_call_operand.vmem [shape: bf16[2400,256], index: 0, kind: input, shape index: {}]
  %s1 = inlined_call_operand.vmem [shape: bf16[256,32], index: 1, kind: input, shape index: {}]
  %s2 = inlined_call_operand.vmem [shape: f32[1,32], index: 2, kind: input, shape index: {}]
  %s3 = inlined_call_operand.vmem [shape: bf16[2400,32], index: 3, kind: output, shape index: {}]
  %s4 = sld [smem:[#allocation0]]
  $region45: #{network_forward.4} parent=0
    _
  %s6 = ssub.s32 1, %s4
  %s7 = scalar_select 0, %s6, %s4
  loop: start=0, step=1, limit=4
  $region2: #{network_forward.4} parent=0 // loop_pre_header
    _
  $region3: #{network_forward.4} parent=0 // loop_header
    %s9 = sphi 0, %s13
    %p10 = scmp.ge.s32.totalorder %s9, 4
    %s19 = sphi 0, %s21
    %s22 = sphi 0, %s19
    %s23 = sphi 0, %s22
    %s39 = sphi 0, %s23
    %s43 = sphi 0, %s43
    %s45 = sphi 0, %s43
    %s46 = sphi 0, %s45
    %s60 = sphi 0, %s46
    %s64 = sphi 0, %s64
    %s66 = sphi 0, %s64
    %s67 = sphi 0, %s66
    %s81 = sphi 0, %s67
    %s87 = sphi 0, %s89
    %s90 = sphi 0, %s87
    %s91 = sphi 0, %s90
    %s107 = sphi 0, %s91
  $region4: #{network_forward.4} parent=0 // loop_header_branch
    %12 = sbr.rel (%p10) target = $region8
  $region5: #{network_forward.4} parent=0 // loop_body
    %s14 = ssub.s32 %s9, 1
    %s15 = ssub.s32 %s9, 2
    %s16 = sadd.s32 %s9, 1
    %s17 = ssub.s32 %s9, %s16
    %p18 = scmp.eq.s32.totalorder %s17, 0
    %s20 = sadd.s32 %s19, 1
    %s21 = scalar_select %p18, %s19, %s20
    %p24 = pneg %p18
    %p25 = scmp.eq.s32.totalorder %s9, 1
    %p26 = por %p24, %p25
    %p27 = scmp.ne.s32.totalorder %s19, %s22
    %p28 = scmp.eq.s32.totalorder %s9, 0
    %p29 = por %p27, %p28
    %p30 = scmp.ne.s32.totalorder %s19, %s22
    %p31 = scmp.eq.s32.totalorder %s14, 1
    %p32 = por %p30, %p31
    %p33 = scmp.ne.s32.totalorder %s22, %s23
    %p34 = scmp.eq.s32.totalorder %s14, 0
    %p35 = por %p33, %p34
    %p36 = scmp.ne.s32.totalorder %s22, %s23
    %p37 = scmp.eq.s32.totalorder %s15, 1
    %p38 = por %p36, %p37
    %p40 = scmp.ne.s32.totalorder %s23, %s39
    %p41 = scmp.eq.s32.totalorder %s15, 0
    %p42 = por %p40, %p41
    %s44 = sadd.s32 %s43, 1
    %p47 = scmp.eq.s32.totalorder %s9, 1
    %p48 = scmp.ne.s32.totalorder %s43, %s45
    %p49 = scmp.eq.s32.totalorder %s9, 0
    %p50 = por %p48, %p49
    %p51 = scmp.ne.s32.totalorder %s43, %s45
    %p52 = scmp.eq.s32.totalorder %s14, 1
    %p53 = por %p51, %p52
    %p54 = scmp.ne.s32.totalorder %s45, %s46
    %p55 = scmp.eq.s32.totalorder %s14, 0
    %p56 = por %p54, %p55
    %p57 = scmp.ne.s32.totalorder %s45, %s46
    %p58 = scmp.eq.s32.totalorder %s15, 1
    %p59 = por %p57, %p58
    %p61 = scmp.ne.s32.totalorder %s46, %s60
    %p62 = scmp.eq.s32.totalorder %s15, 0
    %p63 = por %p61, %p62
    %s65 = sadd.s32 %s64, 1
    %p68 = scmp.eq.s32.totalorder %s9, 1
    %p69 = scmp.ne.s32.totalorder %s64, %s66
    %p70 = scmp.eq.s32.totalorder %s9, 0
    %p71 = por %p69, %p70
    %p72 = scmp.ne.s32.totalorder %s64, %s66
    %p73 = scmp.eq.s32.totalorder %s14, 1
    %p74 = por %p72, %p73
    %p75 = scmp.ne.s32.totalorder %s66, %s67
    %p76 = scmp.eq.s32.totalorder %s14, 0
    %p77 = por %p75, %p76
    %p78 = scmp.ne.s32.totalorder %s66, %s67
    %p79 = scmp.eq.s32.totalorder %s15, 1
    %p80 = por %p78, %p79
    %p82 = scmp.ne.s32.totalorder %s67, %s81
    %p83 = scmp.eq.s32.totalorder %s15, 0
    %p84 = por %p82, %p83
    %s85 = ssub.s32 %s9, %s16
    %p86 = scmp.eq.s32.totalorder %s85, 0
    %s88 = sadd.s32 %s87, 1
    %s89 = scalar_select %p86, %s87, %s88
    %p92 = pneg %p86
    %p93 = scmp.eq.s32.totalorder %s9, 1
    %p94 = por %p92, %p93
    %p95 = scmp.ne.s32.totalorder %s87, %s90
    %p96 = scmp.eq.s32.totalorder %s9, 0
    %p97 = por %p95, %p96
    %p98 = scmp.ne.s32.totalorder %s87, %s90
    %p99 = scmp.eq.s32.totalorder %s14, 1
    %p100 = por %p98, %p99
    %p101 = scmp.ne.s32.totalorder %s90, %s91
    %p102 = scmp.eq.s32.totalorder %s14, 0
    %p103 = por %p101, %p102
    %p104 = scmp.ne.s32.totalorder %s90, %s91
    %p105 = scmp.eq.s32.totalorder %s15, 1
    %p106 = por %p104, %p105
    %p108 = scmp.ne.s32.totalorder %s91, %s107
    %p109 = scmp.eq.s32.totalorder %s15, 0
    %p110 = por %p108, %p109
    %p111 = scmp.le.s32.totalorder 1, %s9
    %p112 = scmp.lt.s32.totalorder %s9, 3
    %p113 = pnand %p111, %p112
    %p114 = pneg %p113
    // Predicated region
    $region9: #{network_forward.4} parent=5 // pred_check
      _
    $region10: #{network_forward.4} parent=5 // pred_check_branch
      %116 = sbr.rel (%p113) target = $region12
    $region11: #{network_forward.4} parent=5 // pred_region
      %s117 = ssub.s32 %s9, 1
      // Predicated region
      $region13: #{network_forward.4} parent=11 // pred_check
        %p118 = pneg %p56
      $region14: #{network_forward.4} parent=11 // pred_check_branch
        %120 = sbr.rel (%p118) target = $region16
      $region15: #{network_forward.4} parent=11 // pred_region
        _
      $region16: #{network_forward.4} parent=11 // pred_fallthru
        _
      // Predicated region
      $region17: #{network_forward.4} parent=11 // pred_check
        %p121 = pneg %p77
      $region18: #{network_forward.4} parent=11 // pred_check_branch
        %123 = sbr.rel (%p121) target = $region20
      $region19: #{network_forward.4} parent=11 // pred_region
        _
      $region20: #{network_forward.4} parent=11 // pred_fallthru
        _
    $region12: #{network_forward.4} parent=5 // pred_fallthru
      _
    %p124 = scmp.lt.s32.totalorder %s9, 2
    // Predicated region
    $region21: #{network_forward.4} parent=5 // pred_check
      %p125 = pneg %p124
    $region22: #{network_forward.4} parent=5 // pred_check_branch
      %127 = sbr.rel (%p125) target = $region24
    $region23: #{network_forward.4} parent=5 // pred_region
      // Predicated region
      $region25: #{network_forward.4} parent=23 // pred_check
        %p128 = pneg %p29
      $region26: #{network_forward.4} parent=23 // pred_check_branch
        %130 = sbr.rel (%p128) target = $region28
      $region27: #{network_forward.4} parent=23 // pred_region
        %s131 = smul.u32 150, %s9
        %p132 = scmp.lt.s32.totalorder %s131, 299
        %s133 = scalar_select %p132, %s131, 299
        %s134 = smul.addr %s133, 2
        %s135 = smul.addr %s134, 4
        %s136 = scalar_lea.vmem %s0, %s135
        %s137 = smul.u32 150, %s9
      $region28: #{network_forward.4} parent=23 // pred_fallthru
        _
    $region24: #{network_forward.4} parent=5 // pred_fallthru
      _
    %p138 = scmp.le.s32.totalorder 1, %s9
    %p139 = scmp.lt.s32.totalorder %s9, 3
    %p140 = pnand %p138, %p139
    %p141 = pneg %p140
    // Predicated region
    $region29: #{network_forward.4} parent=5 // pred_check
      _
    $region30: #{network_forward.4} parent=5 // pred_check_branch
      %143 = sbr.rel (%p140) target = $region32
    $region31: #{network_forward.4} parent=5 // pred_region
      %s144 = ssub.s32 %s9, 1
      %s145 = smul.u32 150, %s14
      %p146 = scmp.lt.s32.totalorder %s145, 299
      %s147 = scalar_select %p146, %s145, 299
      %s148 = smul.addr %s147, 2
      %s149 = smul.addr %s148, 4
      %s150 = scalar_lea.vmem %s0, %s149
      %p151 = pneg %p35
      %p152 = pneg %p32
      %p153 = pneg %p56
      %p154 = pneg %p53
      %p155 = pneg %p77
      %p156 = pneg %p74
      %p157 = pneg %p103
      %p158 = pneg %p100
      %s159 = smul.u32 150, %s14
      %p160 = scmp.lt.s32.totalorder %s159, 299
      %s161 = scalar_select %p160, %s159, 299
      %s162 = smul.addr %s161, 4
      %s163 = scalar_lea.vmem %s3, %s162
      %s164 = smul.u32 150, %s14
      %p165 = scmp.lt.s32.totalorder %s164, 299
      %s166 = scalar_select %p165, %s164, 299
      %s167 = smul.addr %s166, 2
      %s168 = smul.addr %s167, 4
      %s169 = scalar_lea.vmem %s0, %s168
      %s170 = smul.u32 150, %s14
      %s171 = smul.u32 150, %s14
      %p172 = scmp.lt.s32.totalorder %s171, 299
      %s173 = scalar_select %p172, %s171, 299
      %s174 = smul.addr %s173, 4
      %s175 = scalar_lea.vmem %s3, %s174
      %s176 = smul.u32 150, %s14
      %v178 = vld [vmem:[%s169] sm:$0xff]
      %v179 = vld [vmem:[%s169 + $0x8] sm:$0xff]
      %v180 = vld [vmem:[%s169 + $0x10] sm:$0xff]
      %v181 = vld [vmem:[%s169 + $0x18] sm:$0xff]
      %v182 = vld [vmem:[%s169 + $0x20] sm:$0xff]
      %v183 = vld [vmem:[%s169 + $0x28] sm:$0xff]
      %v184 = vld [vmem:[%s169 + $0x30] sm:$0xff]
      %v185 = vld [vmem:[%s169 + $0x38] sm:$0xff]
      %v186 = vld [vmem:[%s169 + $0x40] sm:$0xff]
      %v187 = vld [vmem:[%s169 + $0x48] sm:$0xff]
      %v188 = vld [vmem:[%s169 + $0x50] sm:$0xff]
      %v189 = vld [vmem:[%s169 + $0x58] sm:$0xff]
      %v190 = vld [vmem:[%s169 + $0x60] sm:$0xff]
      %v191 = vld [vmem:[%s169 + $0x68] sm:$0xff]
      %v192 = vld [vmem:[%s169 + $0x70] sm:$0xff]
      %v193 = vld [vmem:[%s169 + $0x78] sm:$0xff]
      %v194 = vld [vmem:[%s169 + $0x80] sm:$0xff]
      %v195 = vld [vmem:[%s169 + $0x88] sm:$0xff]
      %v196 = vld [vmem:[%s169 + $0x90] sm:$0xff]
      %v197 = vld [vmem:[%s169 + $0x98] sm:$0xff]
      %v198 = vld [vmem:[%s169 + $0xa0] sm:$0xff]
      %v199 = vld [vmem:[%s169 + $0xa8] sm:$0xff]
      %v200 = vld [vmem:[%s169 + $0xb0] sm:$0xff]
      %v201 = vld [vmem:[%s169 + $0xb8] sm:$0xff]
      %v202 = vld [vmem:[%s169 + $0xc0] sm:$0xff]
      %v203 = vld [vmem:[%s169 + $0xc8] sm:$0xff]
      %v204 = vld [vmem:[%s169 + $0xd0] sm:$0xff]
      %v205 = vld [vmem:[%s169 + $0xd8] sm:$0xff]
      %v206 = vld [vmem:[%s169 + $0xe0] sm:$0xff]
      %v207 = vld [vmem:[%s169 + $0xe8] sm:$0xff]
      %v208 = vld [vmem:[%s169 + $0xf0] sm:$0xff]
      %v209 = vld [vmem:[%s169 + $0xf8] sm:$0xff]
      %v210 = vld [vmem:[%s169 + $0x100] sm:$0xff]
      %v211 = vld [vmem:[%s169 + $0x108] sm:$0xff]
      %v212 = vld [vmem:[%s169 + $0x110] sm:$0xff]
      %v213 = vld [vmem:[%s169 + $0x118] sm:$0xff]
      %v214 = vld [vmem:[%s169 + $0x120] sm:$0xff]
      %v215 = vld [vmem:[%s169 + $0x128] sm:$0xff]
      %v216 = vld [vmem:[%s169 + $0x130] sm:$0xff]
      %v217 = vld [vmem:[%s169 + $0x138] sm:$0xff]
      %v218 = vld [vmem:[%s169 + $0x140] sm:$0xff]
      %v219 = vld [vmem:[%s169 + $0x148] sm:$0xff]
      %v220 = vld [vmem:[%s169 + $0x150] sm:$0xff]
      %v221 = vld [vmem:[%s169 + $0x158] sm:$0xff]
      %v222 = vld [vmem:[%s169 + $0x160] sm:$0xff]
      %v223 = vld [vmem:[%s169 + $0x168] sm:$0xff]
      %v224 = vld [vmem:[%s169 + $0x170] sm:$0xff]
      %v225 = vld [vmem:[%s169 + $0x178] sm:$0xff]
      %v226 = vld [vmem:[%s169 + $0x180] sm:$0xff]
      %v227 = vld [vmem:[%s169 + $0x188] sm:$0xff]
      %v228 = vld [vmem:[%s169 + $0x190] sm:$0xff]
      %v229 = vld [vmem:[%s169 + $0x198] sm:$0xff]
      %v230 = vld [vmem:[%s169 + $0x1a0] sm:$0xff]
      %v231 = vld [vmem:[%s169 + $0x1a8] sm:$0xff]
      %v232 = vld [vmem:[%s169 + $0x1b0] sm:$0xff]
      %v233 = vld [vmem:[%s169 + $0x1b8] sm:$0xff]
      %v234 = vld [vmem:[%s169 + $0x1c0] sm:$0xff]
      %v235 = vld [vmem:[%s169 + $0x1c8] sm:$0xff]
      %v236 = vld [vmem:[%s169 + $0x1d0] sm:$0xff]
      %v237 = vld [vmem:[%s169 + $0x1d8] sm:$0xff]
      %v238 = vld [vmem:[%s169 + $0x1e0] sm:$0xff]
      %v239 = vld [vmem:[%s169 + $0x1e8] sm:$0xff]
      %v240 = vld [vmem:[%s169 + $0x1f0] sm:$0xff]
      %v241 = vld [vmem:[%s169 + $0x1f8] sm:$0xff]
      %v242 = vld [vmem:[%s169 + $0x200] sm:$0xff]
      %v243 = vld [vmem:[%s169 + $0x208] sm:$0xff]
      %v244 = vld [vmem:[%s169 + $0x210] sm:$0xff]
      %v245 = vld [vmem:[%s169 + $0x218] sm:$0xff]
      %v246 = vld [vmem:[%s169 + $0x220] sm:$0xff]
      %v247 = vld [vmem:[%s169 + $0x228] sm:$0xff]
      %v248 = vld [vmem:[%s169 + $0x230] sm:$0xff]
      %v249 = vld [vmem:[%s169 + $0x238] sm:$0xff]
      %v250 = vld [vmem:[%s169 + $0x240] sm:$0xff]
      %v251 = vld [vmem:[%s169 + $0x248] sm:$0xff]
      %v252 = vld [vmem:[%s169 + $0x250] sm:$0xff]
      %v253 = vld [vmem:[%s169 + $0x258] sm:$0xff]
      %v254 = vld [vmem:[%s169 + $0x260] sm:$0xff]
      %v255 = vld [vmem:[%s169 + $0x268] sm:$0xff]
      %v256 = vld [vmem:[%s169 + $0x270] sm:$0xff]
      %v257 = vld [vmem:[%s169 + $0x278] sm:$0xff]
      %v258 = vld [vmem:[%s169 + $0x280] sm:$0xff]
      %v259 = vld [vmem:[%s169 + $0x288] sm:$0xff]
      %v260 = vld [vmem:[%s169 + $0x290] sm:$0xff]
      %v261 = vld [vmem:[%s169 + $0x298] sm:$0xff]
      %v262 = vld [vmem:[%s169 + $0x2a0] sm:$0xff]
      %v263 = vld [vmem:[%s169 + $0x2a8] sm:$0xff]
      %v264 = vld [vmem:[%s169 + $0x2b0] sm:$0xff]
      %v265 = vld [vmem:[%s169 + $0x2b8] sm:$0xff]
      %v266 = vld [vmem:[%s169 + $0x2c0] sm:$0xff]
      %v267 = vld [vmem:[%s169 + $0x2c8] sm:$0xff]
      %v268 = vld [vmem:[%s169 + $0x2d0] sm:$0xff]
      %v269 = vld [vmem:[%s169 + $0x2d8] sm:$0xff]
      %v270 = vld [vmem:[%s169 + $0x2e0] sm:$0xff]
      %v271 = vld [vmem:[%s169 + $0x2e8] sm:$0xff]
      %v272 = vld [vmem:[%s169 + $0x2f0] sm:$0xff]
      %v273 = vld [vmem:[%s169 + $0x2f8] sm:$0xff]
      %v274 = vld [vmem:[%s169 + $0x300] sm:$0xff]
      %v275 = vld [vmem:[%s169 + $0x308] sm:$0xff]
      %v276 = vld [vmem:[%s169 + $0x310] sm:$0xff]
      %v277 = vld [vmem:[%s169 + $0x318] sm:$0xff]
      %v278 = vld [vmem:[%s169 + $0x320] sm:$0xff]
      %v279 = vld [vmem:[%s169 + $0x328] sm:$0xff]
      %v280 = vld [vmem:[%s169 + $0x330] sm:$0xff]
      %v281 = vld [vmem:[%s169 + $0x338] sm:$0xff]
      %v282 = vld [vmem:[%s169 + $0x340] sm:$0xff]
      %v283 = vld [vmem:[%s169 + $0x348] sm:$0xff]
      %v284 = vld [vmem:[%s169 + $0x350] sm:$0xff]
      %v285 = vld [vmem:[%s169 + $0x358] sm:$0xff]
      %v286 = vld [vmem:[%s169 + $0x360] sm:$0xff]
      %v287 = vld [vmem:[%s169 + $0x368] sm:$0xff]
      %v288 = vld [vmem:[%s169 + $0x370] sm:$0xff]
      %v289 = vld [vmem:[%s169 + $0x378] sm:$0xff]
      %v290 = vld [vmem:[%s169 + $0x380] sm:$0xff]
      %v291 = vld [vmem:[%s169 + $0x388] sm:$0xff]
      %v292 = vld [vmem:[%s169 + $0x390] sm:$0xff]
      %v293 = vld [vmem:[%s169 + $0x398] sm:$0xff]
      %v294 = vld [vmem:[%s169 + $0x3a0] sm:$0xff]
      %v295 = vld [vmem:[%s169 + $0x3a8] sm:$0xff]
      %v296 = vld [vmem:[%s169 + $0x3b0] sm:$0xff]
      %v297 = vld [vmem:[%s169 + $0x3b8] sm:$0xff]
      %v298 = vld [vmem:[%s169 + $0x3c0] sm:$0xff]
      %v299 = vld [vmem:[%s169 + $0x3c8] sm:$0xff]
      %v300 = vld [vmem:[%s169 + $0x3d0] sm:$0xff]
      %v301 = vld [vmem:[%s169 + $0x3d8] sm:$0xff]
      %v302 = vld [vmem:[%s169 + $0x3e0] sm:$0xff]
      %v303 = vld [vmem:[%s169 + $0x3e8] sm:$0xff]
      %v304 = vld [vmem:[%s169 + $0x3f0] sm:$0xff]
      %v305 = vld [vmem:[%s169 + $0x3f8] sm:$0xff]
      %v306 = vld [vmem:[%s169 + $0x400] sm:$0xff]
      %v307 = vld [vmem:[%s169 + $0x408] sm:$0xff]
      %v308 = vld [vmem:[%s169 + $0x410] sm:$0xff]
      %v309 = vld [vmem:[%s169 + $0x418] sm:$0xff]
      %v310 = vld [vmem:[%s169 + $0x420] sm:$0xff]
      %v311 = vld [vmem:[%s169 + $0x428] sm:$0xff]
      %v312 = vld [vmem:[%s169 + $0x430] sm:$0xff]
      %v313 = vld [vmem:[%s169 + $0x438] sm:$0xff]
      %v314 = vld [vmem:[%s169 + $0x440] sm:$0xff]
      %v315 = vld [vmem:[%s169 + $0x448] sm:$0xff]
      %v316 = vld [vmem:[%s169 + $0x450] sm:$0xff]
      %v317 = vld [vmem:[%s169 + $0x458] sm:$0xff]
      %v318 = vld [vmem:[%s169 + $0x460] sm:$0xff]
      %v319 = vld [vmem:[%s169 + $0x468] sm:$0xff]
      %v320 = vld [vmem:[%s169 + $0x470] sm:$0xff]
      %v321 = vld [vmem:[%s169 + $0x478] sm:$0xff]
      %v322 = vld [vmem:[%s169 + $0x480] sm:$0xff]
      %v323 = vld [vmem:[%s169 + $0x488] sm:$0xff]
      %v324 = vld [vmem:[%s169 + $0x490] sm:$0xff]
      %v325 = vld [vmem:[%s169 + $0x498] sm:$0xff]
      %v326 = vld [vmem:[%s169 + $0x4a0] sm:$0xff]
      %v327 = vld [vmem:[%s169 + $0x4a8] sm:$0xff]
      %v328 = vld [vmem:[%s1] sm:$0xf]
      %v329 = vld [vmem:[%s1 + $0x4] sm:$0xf]
      %v330 = vld [vmem:[%s1 + $0x8] sm:$0xf]
      %v331 = vld [vmem:[%s1 + $0xc] sm:$0xf]
      %v332 = vld [vmem:[%s1 + $0x10] sm:$0xf]
      %v333 = vld [vmem:[%s1 + $0x14] sm:$0xf]
      %v334 = vld [vmem:[%s1 + $0x18] sm:$0xf]
      %v335 = vld [vmem:[%s1 + $0x1c] sm:$0xf]
      %v336 = vld [vmem:[%s1 + $0x20] sm:$0xf]
      %v337 = vld [vmem:[%s1 + $0x24] sm:$0xf]
      %v338 = vld [vmem:[%s1 + $0x28] sm:$0xf]
      %v339 = vld [vmem:[%s1 + $0x2c] sm:$0xf]
      %v340 = vld [vmem:[%s1 + $0x30] sm:$0xf]
      %v341 = vld [vmem:[%s1 + $0x34] sm:$0xf]
      %v342 = vld [vmem:[%s1 + $0x38] sm:$0xf]
      %v343 = vld [vmem:[%s1 + $0x3c] sm:$0xf]
      %v344 = vld [vmem:[%s1 + $0x40] sm:$0xf]
      %v345 = vld [vmem:[%s1 + $0x44] sm:$0xf]
      %v346 = vld [vmem:[%s1 + $0x48] sm:$0xf]
      %v347 = vld [vmem:[%s1 + $0x4c] sm:$0xf]
      %v348 = vld [vmem:[%s1 + $0x50] sm:$0xf]
      %v349 = vld [vmem:[%s1 + $0x54] sm:$0xf]
      %v350 = vld [vmem:[%s1 + $0x58] sm:$0xf]
      %v351 = vld [vmem:[%s1 + $0x5c] sm:$0xf]
      %v352 = vld [vmem:[%s1 + $0x60] sm:$0xf]
      %v353 = vld [vmem:[%s1 + $0x64] sm:$0xf]
      %v354 = vld [vmem:[%s1 + $0x68] sm:$0xf]
      %v355 = vld [vmem:[%s1 + $0x6c] sm:$0xf]
      %v356 = vld [vmem:[%s1 + $0x70] sm:$0xf]
      %v357 = vld [vmem:[%s1 + $0x74] sm:$0xf]
      %v358 = vld [vmem:[%s1 + $0x78] sm:$0xf]
      %v359 = vld [vmem:[%s1 + $0x7c] sm:$0xf]
      %v360 = vld [vmem:[%s2] sm:$0x1]
      %v362 = vlaneseq
      %v363 = vshrl.u32 %v362, 7
      %v364 = vsub.s32 0, %v363
      %v365 = vrot.slane %v360, %v364
      %v517 = vunpack.c.l.b16 %v178
      %v518 = vunpack.c.h.b16 %v178
      %v519 = vunpack.c.l.b16 %v179
      %v520 = vunpack.c.h.b16 %v179
      %v521 = vunpack.c.l.b16 %v180
      %v522 = vunpack.c.h.b16 %v180
      %v523 = vunpack.c.l.b16 %v181
      %v524 = vunpack.c.h.b16 %v181
      %v525 = vunpack.c.l.b16 %v182
      %v526 = vunpack.c.h.b16 %v182
      %v527 = vunpack.c.l.b16 %v183
      %v528 = vunpack.c.h.b16 %v183
      %v529 = vunpack.c.l.b16 %v184
      %v530 = vunpack.c.h.b16 %v184
      %v531 = vunpack.c.l.b16 %v185
      %v532 = vunpack.c.h.b16 %v185
      %v533 = vunpack.c.l.b16 %v186
      %v534 = vunpack.c.h.b16 %v186
      %v535 = vunpack.c.l.b16 %v187
      %v536 = vunpack.c.h.b16 %v187
      %v537 = vunpack.c.l.b16 %v188
      %v538 = vunpack.c.h.b16 %v188
      %v539 = vunpack.c.l.b16 %v189
      %v540 = vunpack.c.h.b16 %v189
      %v541 = vunpack.c.l.b16 %v190
      %v542 = vunpack.c.h.b16 %v190
      %v543 = vunpack.c.l.b16 %v191
      %v544 = vunpack.c.h.b16 %v191
      %v545 = vunpack.c.l.b16 %v192
      %v546 = vunpack.c.h.b16 %v192
      %v547 = vunpack.c.l.b16 %v193
      %v548 = vunpack.c.h.b16 %v193
      %v549 = vunpack.c.l.b16 %v194
      %v550 = vunpack.c.h.b16 %v194
      %v551 = vunpack.c.l.b16 %v195
      %v552 = vunpack.c.h.b16 %v195
      %v553 = vunpack.c.l.b16 %v196
      %v554 = vunpack.c.h.b16 %v196
      %v555 = vunpack.c.l.b16 %v197
      %v556 = vunpack.c.h.b16 %v197
      %v557 = vunpack.c.l.b16 %v198
      %v558 = vunpack.c.h.b16 %v198
      %v559 = vunpack.c.l.b16 %v199
      %v560 = vunpack.c.h.b16 %v199
      %v561 = vunpack.c.l.b16 %v200
      %v562 = vunpack.c.h.b16 %v200
      %v563 = vunpack.c.l.b16 %v201
      %v564 = vunpack.c.h.b16 %v201
      %v565 = vunpack.c.l.b16 %v202
      %v566 = vunpack.c.h.b16 %v202
      %v567 = vunpack.c.l.b16 %v203
      %v568 = vunpack.c.h.b16 %v203
      %v569 = vunpack.c.l.b16 %v204
      %v570 = vunpack.c.h.b16 %v204
      %v571 = vunpack.c.l.b16 %v205
      %v572 = vunpack.c.h.b16 %v205
      %v573 = vunpack.c.l.b16 %v206
      %v574 = vunpack.c.h.b16 %v206
      %v575 = vunpack.c.l.b16 %v207
      %v576 = vunpack.c.h.b16 %v207
      %v577 = vunpack.c.l.b16 %v208
      %v578 = vunpack.c.h.b16 %v208
      %v579 = vunpack.c.l.b16 %v209
      %v580 = vunpack.c.h.b16 %v209
      %v581 = vunpack.c.l.b16 %v210
      %v582 = vunpack.c.h.b16 %v210
      %v583 = vunpack.c.l.b16 %v211
      %v584 = vunpack.c.h.b16 %v211
      %v585 = vunpack.c.l.b16 %v212
      %v586 = vunpack.c.h.b16 %v212
      %v587 = vunpack.c.l.b16 %v213
      %v588 = vunpack.c.h.b16 %v213
      %v589 = vunpack.c.l.b16 %v214
      %v590 = vunpack.c.h.b16 %v214
      %v591 = vunpack.c.l.b16 %v215
      %v592 = vunpack.c.h.b16 %v215
      %v593 = vunpack.c.l.b16 %v216
      %v594 = vunpack.c.h.b16 %v216
      %v595 = vunpack.c.l.b16 %v217
      %v596 = vunpack.c.h.b16 %v217
      %v597 = vunpack.c.l.b16 %v218
      %v598 = vunpack.c.h.b16 %v218
      %v599 = vunpack.c.l.b16 %v219
      %v600 = vunpack.c.h.b16 %v219
      %v601 = vunpack.c.l.b16 %v220
      %v602 = vunpack.c.h.b16 %v220
      %v603 = vunpack.c.l.b16 %v221
      %v604 = vunpack.c.h.b16 %v221
      %v605 = vunpack.c.l.b16 %v222
      %v606 = vunpack.c.h.b16 %v222
      %v607 = vunpack.c.l.b16 %v223
      %v608 = vunpack.c.h.b16 %v223
      %v609 = vunpack.c.l.b16 %v224
      %v610 = vunpack.c.h.b16 %v224
      %v611 = vunpack.c.l.b16 %v225
      %v612 = vunpack.c.h.b16 %v225
      %v613 = vunpack.c.l.b16 %v226
      %v614 = vunpack.c.h.b16 %v226
      %v615 = vunpack.c.l.b16 %v227
      %v616 = vunpack.c.h.b16 %v227
      %v617 = vunpack.c.l.b16 %v228
      %v618 = vunpack.c.h.b16 %v228
      %v619 = vunpack.c.l.b16 %v229
      %v620 = vunpack.c.h.b16 %v229
      %v621 = vunpack.c.l.b16 %v230
      %v622 = vunpack.c.h.b16 %v230
      %v623 = vunpack.c.l.b16 %v231
      %v624 = vunpack.c.h.b16 %v231
      %v625 = vunpack.c.l.b16 %v232
      %v626 = vunpack.c.h.b16 %v232
      %v627 = vunpack.c.l.b16 %v233
      %v628 = vunpack.c.h.b16 %v233
      %v629 = vunpack.c.l.b16 %v234
      %v630 = vunpack.c.h.b16 %v234
      %v631 = vunpack.c.l.b16 %v235
      %v632 = vunpack.c.h.b16 %v235
      %v633 = vunpack.c.l.b16 %v236
      %v634 = vunpack.c.h.b16 %v236
      %v635 = vunpack.c.l.b16 %v237
      %v636 = vunpack.c.h.b16 %v237
      %v637 = vunpack.c.l.b16 %v238
      %v638 = vunpack.c.h.b16 %v238
      %v639 = vunpack.c.l.b16 %v239
      %v640 = vunpack.c.h.b16 %v239
      %v641 = vunpack.c.l.b16 %v240
      %v642 = vunpack.c.h.b16 %v240
      %v643 = vunpack.c.l.b16 %v241
      %v644 = vunpack.c.h.b16 %v241
      %v645 = vunpack.c.l.b16 %v242
      %v646 = vunpack.c.h.b16 %v242
      %v647 = vunpack.c.l.b16 %v243
      %v648 = vunpack.c.h.b16 %v243
      %v649 = vunpack.c.l.b16 %v244
      %v650 = vunpack.c.h.b16 %v244
      %v651 = vunpack.c.l.b16 %v245
      %v652 = vunpack.c.h.b16 %v245
      %v653 = vunpack.c.l.b16 %v246
      %v654 = vunpack.c.h.b16 %v246
      %v655 = vunpack.c.l.b16 %v247
      %v656 = vunpack.c.h.b16 %v247
      %v657 = vunpack.c.l.b16 %v248
      %v658 = vunpack.c.h.b16 %v248
      %v659 = vunpack.c.l.b16 %v249
      %v660 = vunpack.c.h.b16 %v249
      %v661 = vunpack.c.l.b16 %v250
      %v662 = vunpack.c.h.b16 %v250
      %v663 = vunpack.c.l.b16 %v251
      %v664 = vunpack.c.h.b16 %v251
      %v665 = vunpack.c.l.b16 %v252
      %v666 = vunpack.c.h.b16 %v252
      %v667 = vunpack.c.l.b16 %v253
      %v668 = vunpack.c.h.b16 %v253
      %v669 = vunpack.c.l.b16 %v254
      %v670 = vunpack.c.h.b16 %v254
      %v671 = vunpack.c.l.b16 %v255
      %v672 = vunpack.c.h.b16 %v255
      %v673 = vunpack.c.l.b16 %v256
      %v674 = vunpack.c.h.b16 %v256
      %v675 = vunpack.c.l.b16 %v257
      %v676 = vunpack.c.h.b16 %v257
      %v677 = vunpack.c.l.b16 %v258
      %v678 = vunpack.c.h.b16 %v258
      %v679 = vunpack.c.l.b16 %v259
      %v680 = vunpack.c.h.b16 %v259
      %v681 = vunpack.c.l.b16 %v260
      %v682 = vunpack.c.h.b16 %v260
      %v683 = vunpack.c.l.b16 %v261
      %v684 = vunpack.c.h.b16 %v261
      %v685 = vunpack.c.l.b16 %v262
      %v686 = vunpack.c.h.b16 %v262
      %v687 = vunpack.c.l.b16 %v263
      %v688 = vunpack.c.h.b16 %v263
      %v689 = vunpack.c.l.b16 %v264
      %v690 = vunpack.c.h.b16 %v264
      %v691 = vunpack.c.l.b16 %v265
      %v692 = vunpack.c.h.b16 %v265
      %v693 = vunpack.c.l.b16 %v266
      %v694 = vunpack.c.h.b16 %v266
      %v695 = vunpack.c.l.b16 %v267
      %v696 = vunpack.c.h.b16 %v267
      %v697 = vunpack.c.l.b16 %v268
      %v698 = vunpack.c.h.b16 %v268
      %v699 = vunpack.c.l.b16 %v269
      %v700 = vunpack.c.h.b16 %v269
      %v701 = vunpack.c.l.b16 %v270
      %v702 = vunpack.c.h.b16 %v270
      %v703 = vunpack.c.l.b16 %v271
      %v704 = vunpack.c.h.b16 %v271
      %v705 = vunpack.c.l.b16 %v272
      %v706 = vunpack.c.h.b16 %v272
      %v707 = vunpack.c.l.b16 %v273
      %v708 = vunpack.c.h.b16 %v273
      %v709 = vunpack.c.l.b16 %v274
      %v710 = vunpack.c.h.b16 %v274
      %v711 = vunpack.c.l.b16 %v275
      %v712 = vunpack.c.h.b16 %v275
      %v713 = vunpack.c.l.b16 %v276
      %v714 = vunpack.c.h.b16 %v276
      %v715 = vunpack.c.l.b16 %v277
      %v716 = vunpack.c.h.b16 %v277
      %v717 = vunpack.c.l.b16 %v278
      %v718 = vunpack.c.h.b16 %v278
      %v719 = vunpack.c.l.b16 %v279
      %v720 = vunpack.c.h.b16 %v279
      %v721 = vunpack.c.l.b16 %v280
      %v722 = vunpack.c.h.b16 %v280
      %v723 = vunpack.c.l.b16 %v281
      %v724 = vunpack.c.h.b16 %v281
      %v725 = vunpack.c.l.b16 %v282
      %v726 = vunpack.c.h.b16 %v282
      %v727 = vunpack.c.l.b16 %v283
      %v728 = vunpack.c.h.b16 %v283
      %v729 = vunpack.c.l.b16 %v284
      %v730 = vunpack.c.h.b16 %v284
      %v731 = vunpack.c.l.b16 %v285
      %v732 = vunpack.c.h.b16 %v285
      %v733 = vunpack.c.l.b16 %v286
      %v734 = vunpack.c.h.b16 %v286
      %v735 = vunpack.c.l.b16 %v287
      %v736 = vunpack.c.h.b16 %v287
      %v737 = vunpack.c.l.b16 %v288
      %v738 = vunpack.c.h.b16 %v288
      %v739 = vunpack.c.l.b16 %v289
      %v740 = vunpack.c.h.b16 %v289
      %v741 = vunpack.c.l.b16 %v290
      %v742 = vunpack.c.h.b16 %v290
      %v743 = vunpack.c.l.b16 %v291
      %v744 = vunpack.c.h.b16 %v291
      %v745 = vunpack.c.l.b16 %v292
      %v746 = vunpack.c.h.b16 %v292
      %v747 = vunpack.c.l.b16 %v293
      %v748 = vunpack.c.h.b16 %v293
      %v749 = vunpack.c.l.b16 %v294
      %v750 = vunpack.c.h.b16 %v294
      %v751 = vunpack.c.l.b16 %v295
      %v752 = vunpack.c.h.b16 %v295
      %v753 = vunpack.c.l.b16 %v296
      %v754 = vunpack.c.h.b16 %v296
      %v755 = vunpack.c.l.b16 %v297
      %v756 = vunpack.c.h.b16 %v297
      %v757 = vunpack.c.l.b16 %v298
      %v758 = vunpack.c.h.b16 %v298
      %v759 = vunpack.c.l.b16 %v299
      %v760 = vunpack.c.h.b16 %v299
      %v761 = vunpack.c.l.b16 %v300
      %v762 = vunpack.c.h.b16 %v300
      %v763 = vunpack.c.l.b16 %v301
      %v764 = vunpack.c.h.b16 %v301
      %v765 = vunpack.c.l.b16 %v302
      %v766 = vunpack.c.h.b16 %v302
      %v767 = vunpack.c.l.b16 %v303
      %v768 = vunpack.c.h.b16 %v303
      %v769 = vunpack.c.l.b16 %v304
      %v770 = vunpack.c.h.b16 %v304
      %v771 = vunpack.c.l.b16 %v305
      %v772 = vunpack.c.h.b16 %v305
      %v773 = vunpack.c.l.b16 %v306
      %v774 = vunpack.c.h.b16 %v306
      %v775 = vunpack.c.l.b16 %v307
      %v776 = vunpack.c.h.b16 %v307
      %v777 = vunpack.c.l.b16 %v308
      %v778 = vunpack.c.h.b16 %v308
      %v779 = vunpack.c.l.b16 %v309
      %v780 = vunpack.c.h.b16 %v309
      %v781 = vunpack.c.l.b16 %v310
      %v782 = vunpack.c.h.b16 %v310
      %v783 = vunpack.c.l.b16 %v311
      %v784 = vunpack.c.h.b16 %v311
      %v785 = vunpack.c.l.b16 %v312
      %v786 = vunpack.c.h.b16 %v312
      %v787 = vunpack.c.l.b16 %v313
      %v788 = vunpack.c.h.b16 %v313
      %v789 = vunpack.c.l.b16 %v314
      %v790 = vunpack.c.h.b16 %v314
      %v791 = vunpack.c.l.b16 %v315
      %v792 = vunpack.c.h.b16 %v315
      %v793 = vunpack.c.l.b16 %v316
      %v794 = vunpack.c.h.b16 %v316
      %v795 = vunpack.c.l.b16 %v317
      %v796 = vunpack.c.h.b16 %v317
      %v797 = vunpack.c.l.b16 %v318
      %v798 = vunpack.c.h.b16 %v318
      %v799 = vunpack.c.l.b16 %v319
      %v800 = vunpack.c.h.b16 %v319
      %v801 = vunpack.c.l.b16 %v320
      %v802 = vunpack.c.h.b16 %v320
      %v803 = vunpack.c.l.b16 %v321
      %v804 = vunpack.c.h.b16 %v321
      %v805 = vunpack.c.l.b16 %v322
      %v806 = vunpack.c.h.b16 %v322
      %v807 = vunpack.c.l.b16 %v323
      %v808 = vunpack.c.h.b16 %v323
      %v809 = vunpack.c.l.b16 %v324
      %v810 = vunpack.c.h.b16 %v324
      %v811 = vunpack.c.l.b16 %v325
      %v812 = vunpack.c.h.b16 %v325
      %v813 = vunpack.c.l.b16 %v326
      %v814 = vunpack.c.h.b16 %v326
      %v815 = vunpack.c.l.b16 %v327
      %v816 = vunpack.c.h.b16 %v327
      %v817 = vpack.c.b16 %v519, %v517
      %v818 = vpack.c.b16 %v520, %v518
      %v819 = vpack.c.b16 %v523, %v521
      %v820 = vpack.c.b16 %v524, %v522
      %v821 = vpack.c.b16 %v527, %v525
      %v822 = vpack.c.b16 %v528, %v526
      %v823 = vpack.c.b16 %v531, %v529
      %v824 = vpack.c.b16 %v532, %v530
      %v825 = vpack.c.b16 %v535, %v533
      %v826 = vpack.c.b16 %v536, %v534
      %v827 = vpack.c.b16 %v539, %v537
      %v828 = vpack.c.b16 %v540, %v538
      %v829 = vpack.c.b16 %v543, %v541
      %v830 = vpack.c.b16 %v544, %v542
      %v831 = vpack.c.b16 %v547, %v545
      %v832 = vpack.c.b16 %v548, %v546
      %v833 = vpack.c.b16 %v551, %v549
      %v834 = vpack.c.b16 %v552, %v550
      %v835 = vpack.c.b16 %v555, %v553
      %v836 = vpack.c.b16 %v556, %v554
      %v837 = vpack.c.b16 %v559, %v557
      %v838 = vpack.c.b16 %v560, %v558
      %v839 = vpack.c.b16 %v563, %v561
      %v840 = vpack.c.b16 %v564, %v562
      %v841 = vpack.c.b16 %v567, %v565
      %v842 = vpack.c.b16 %v568, %v566
      %v843 = vpack.c.b16 %v571, %v569
      %v844 = vpack.c.b16 %v572, %v570
      %v845 = vpack.c.b16 %v575, %v573
      %v846 = vpack.c.b16 %v576, %v574
      %v847 = vpack.c.b16 %v579, %v577
      %v848 = vpack.c.b16 %v580, %v578
      %v849 = vpack.c.b16 %v583, %v581
      %v850 = vpack.c.b16 %v584, %v582
      %v851 = vpack.c.b16 %v587, %v585
      %v852 = vpack.c.b16 %v588, %v586
      %v853 = vpack.c.b16 %v591, %v589
      %v854 = vpack.c.b16 %v592, %v590
      %v855 = vpack.c.b16 %v595, %v593
      %v856 = vpack.c.b16 %v596, %v594
      %v857 = vpack.c.b16 %v599, %v597
      %v858 = vpack.c.b16 %v600, %v598
      %v859 = vpack.c.b16 %v603, %v601
      %v860 = vpack.c.b16 %v604, %v602
      %v861 = vpack.c.b16 %v607, %v605
      %v862 = vpack.c.b16 %v608, %v606
      %v863 = vpack.c.b16 %v611, %v609
      %v864 = vpack.c.b16 %v612, %v610
      %v865 = vpack.c.b16 %v615, %v613
      %v866 = vpack.c.b16 %v616, %v614
      %v867 = vpack.c.b16 %v619, %v617
      %v868 = vpack.c.b16 %v620, %v618
      %v869 = vpack.c.b16 %v623, %v621
      %v870 = vpack.c.b16 %v624, %v622
      %v871 = vpack.c.b16 %v627, %v625
      %v872 = vpack.c.b16 %v628, %v626
      %v873 = vpack.c.b16 %v631, %v629
      %v874 = vpack.c.b16 %v632, %v630
      %v875 = vpack.c.b16 %v635, %v633
      %v876 = vpack.c.b16 %v636, %v634
      %v877 = vpack.c.b16 %v639, %v637
      %v878 = vpack.c.b16 %v640, %v638
      %v879 = vpack.c.b16 %v643, %v641
      %v880 = vpack.c.b16 %v644, %v642
      %v881 = vpack.c.b16 %v647, %v645
      %v882 = vpack.c.b16 %v648, %v646
      %v883 = vpack.c.b16 %v651, %v649
      %v884 = vpack.c.b16 %v652, %v650
      %v885 = vpack.c.b16 %v655, %v653
      %v886 = vpack.c.b16 %v656, %v654
      %v887 = vpack.c.b16 %v659, %v657
      %v888 = vpack.c.b16 %v660, %v658
      %v889 = vpack.c.b16 %v663, %v661
      %v890 = vpack.c.b16 %v664, %v662
      %v891 = vpack.c.b16 %v667, %v665
      %v892 = vpack.c.b16 %v668, %v666
      %v893 = vpack.c.b16 %v671, %v669
      %v894 = vpack.c.b16 %v672, %v670
      %v895 = vpack.c.b16 %v675, %v673
      %v896 = vpack.c.b16 %v676, %v674
      %v897 = vpack.c.b16 %v679, %v677
      %v898 = vpack.c.b16 %v680, %v678
      %v899 = vpack.c.b16 %v683, %v681
      %v900 = vpack.c.b16 %v684, %v682
      %v901 = vpack.c.b16 %v687, %v685
      %v902 = vpack.c.b16 %v688, %v686
      %v903 = vpack.c.b16 %v691, %v689
      %v904 = vpack.c.b16 %v692, %v690
      %v905 = vpack.c.b16 %v695, %v693
      %v906 = vpack.c.b16 %v696, %v694
      %v907 = vpack.c.b16 %v699, %v697
      %v908 = vpack.c.b16 %v700, %v698
      %v909 = vpack.c.b16 %v703, %v701
      %v910 = vpack.c.b16 %v704, %v702
      %v911 = vpack.c.b16 %v707, %v705
      %v912 = vpack.c.b16 %v708, %v706
      %v913 = vpack.c.b16 %v711, %v709
      %v914 = vpack.c.b16 %v712, %v710
      %v915 = vpack.c.b16 %v715, %v713
      %v916 = vpack.c.b16 %v716, %v714
      %v917 = vpack.c.b16 %v719, %v717
      %v918 = vpack.c.b16 %v720, %v718
      %v919 = vpack.c.b16 %v723, %v721
      %v920 = vpack.c.b16 %v724, %v722
      %v921 = vpack.c.b16 %v727, %v725
      %v922 = vpack.c.b16 %v728, %v726
      %v923 = vpack.c.b16 %v731, %v729
      %v924 = vpack.c.b16 %v732, %v730
      %v925 = vpack.c.b16 %v735, %v733
      %v926 = vpack.c.b16 %v736, %v734
      %v927 = vpack.c.b16 %v739, %v737
      %v928 = vpack.c.b16 %v740, %v738
      %v929 = vpack.c.b16 %v743, %v741
      %v930 = vpack.c.b16 %v744, %v742
      %v931 = vpack.c.b16 %v747, %v745
      %v932 = vpack.c.b16 %v748, %v746
      %v933 = vpack.c.b16 %v751, %v749
      %v934 = vpack.c.b16 %v752, %v750
      %v935 = vpack.c.b16 %v755, %v753
      %v936 = vpack.c.b16 %v756, %v754
      %v937 = vpack.c.b16 %v759, %v757
      %v938 = vpack.c.b16 %v760, %v758
      %v939 = vpack.c.b16 %v763, %v761
      %v940 = vpack.c.b16 %v764, %v762
      %v941 = vpack.c.b16 %v767, %v765
      %v942 = vpack.c.b16 %v768, %v766
      %v943 = vpack.c.b16 %v771, %v769
      %v944 = vpack.c.b16 %v772, %v770
      %v945 = vpack.c.b16 %v775, %v773
      %v946 = vpack.c.b16 %v776, %v774
      %v947 = vpack.c.b16 %v779, %v777
      %v948 = vpack.c.b16 %v780, %v778
      %v949 = vpack.c.b16 %v783, %v781
      %v950 = vpack.c.b16 %v784, %v782
      %v951 = vpack.c.b16 %v787, %v785
      %v952 = vpack.c.b16 %v788, %v786
      %v953 = vpack.c.b16 %v791, %v789
      %v954 = vpack.c.b16 %v792, %v790
      %v955 = vpack.c.b16 %v795, %v793
      %v956 = vpack.c.b16 %v796, %v794
      %v957 = vpack.c.b16 %v799, %v797
      %v958 = vpack.c.b16 %v800, %v798
      %v959 = vpack.c.b16 %v803, %v801
      %v960 = vpack.c.b16 %v804, %v802
      %v961 = vpack.c.b16 %v807, %v805
      %v962 = vpack.c.b16 %v808, %v806
      %v963 = vpack.c.b16 %v811, %v809
      %v964 = vpack.c.b16 %v812, %v810
      %v965 = vpack.c.b16 %v815, %v813
      %v966 = vpack.c.b16 %v816, %v814
      %v1149 = vunpack.c.l.b16 %v328
      %v1150 = vunpack.c.l.b16 %v329
      %v1151 = vunpack.c.l.b16 %v330
      %v1152 = vunpack.c.l.b16 %v331
      %v1153 = vunpack.c.l.b16 %v332
      %v1154 = vunpack.c.l.b16 %v333
      %v1155 = vunpack.c.l.b16 %v334
      %v1156 = vunpack.c.l.b16 %v335
      %v1157 = vunpack.c.l.b16 %v336
      %v1158 = vunpack.c.l.b16 %v337
      %v1159 = vunpack.c.l.b16 %v338
      %v1160 = vunpack.c.l.b16 %v339
      %v1161 = vunpack.c.l.b16 %v340
      %v1162 = vunpack.c.l.b16 %v341
      %v1163 = vunpack.c.l.b16 %v342
      %v1164 = vunpack.c.l.b16 %v343
      %v1165 = vunpack.c.l.b16 %v344
      %v1166 = vunpack.c.l.b16 %v345
      %v1167 = vunpack.c.l.b16 %v346
      %v1168 = vunpack.c.l.b16 %v347
      %v1169 = vunpack.c.l.b16 %v348
      %v1170 = vunpack.c.l.b16 %v349
      %v1171 = vunpack.c.l.b16 %v350
      %v1172 = vunpack.c.l.b16 %v351
      %v1173 = vunpack.c.l.b16 %v352
      %v1174 = vunpack.c.l.b16 %v353
      %v1175 = vunpack.c.l.b16 %v354
      %v1176 = vunpack.c.l.b16 %v355
      %v1177 = vunpack.c.l.b16 %v356
      %v1178 = vunpack.c.l.b16 %v357
      %v1179 = vunpack.c.l.b16 %v358
      %v1180 = vunpack.c.l.b16 %v359
      %v1181 = vpack.c.b16 %v1150, %v1149
      %v1182 = vpack.c.b16 %v1152, %v1151
      %v1183 = vpack.c.b16 %v1154, %v1153
      %v1184 = vpack.c.b16 %v1156, %v1155
      %v1185 = vpack.c.b16 %v1158, %v1157
      %v1186 = vpack.c.b16 %v1160, %v1159
      %v1187 = vpack.c.b16 %v1162, %v1161
      %v1188 = vpack.c.b16 %v1164, %v1163
      %v1189 = vpack.c.b16 %v1166, %v1165
      %v1190 = vpack.c.b16 %v1168, %v1167
      %v1191 = vpack.c.b16 %v1170, %v1169
      %v1192 = vpack.c.b16 %v1172, %v1171
      %v1193 = vpack.c.b16 %v1174, %v1173
      %v1194 = vpack.c.b16 %v1176, %v1175
      %v1195 = vpack.c.b16 %v1178, %v1177
      %v1196 = vpack.c.b16 %v1180, %v1179
      %1213 = vmatprep.subr.bf16.mxu0 0
      %1214 = vmatpush1.bf16.msra.mxu0 %v1181
      %1215 = vmatprep.subr.bf16.mxu0 0
      %1216 = vmatpush1.bf16.msra.mxu0 %v1182
      %1217 = vmatprep.subr.bf16.mxu0 0
      %1218 = vmatpush1.bf16.msra.mxu0 %v1183
      %1219 = vmatprep.subr.bf16.mxu0 0
      %1220 = vmatpush1.bf16.msra.mxu0 %v1184
      %1221 = vmatprep.subr.bf16.mxu0 0
      %1222 = vmatpush1.bf16.msra.mxu0 %v1185
      %1223 = vmatprep.subr.bf16.mxu0 0
      %1224 = vmatpush1.bf16.msra.mxu0 %v1186
      %1225 = vmatprep.subr.bf16.mxu0 0
      %1226 = vmatpush1.bf16.msra.mxu0 %v1187
      %1227 = vmatprep.subr.bf16.mxu0 0
      %1228 = vmatpush1.bf16.msra.mxu0 %v1188
      %1229 = vmatprep.subr.bf16.mxu0 0
      %1230 = vmatpush1.bf16.msra.mxu0 %v1189
      %1231 = vmatprep.subr.bf16.mxu0 0
      %1232 = vmatpush1.bf16.msra.mxu0 %v1190
      %1233 = vmatprep.subr.bf16.mxu0 0
      %1234 = vmatpush1.bf16.msra.mxu0 %v1191
      %1235 = vmatprep.subr.bf16.mxu0 0
      %1236 = vmatpush1.bf16.msra.mxu0 %v1192
      %1237 = vmatprep.subr.bf16.mxu0 0
      %1238 = vmatpush1.bf16.msra.mxu0 %v1193
      %1239 = vmatprep.subr.bf16.mxu0 0
      %1240 = vmatpush1.bf16.msra.mxu0 %v1194
      %1241 = vmatprep.subr.bf16.mxu0 0
      %1242 = vmatpush1.bf16.msra.mxu0 %v1195
      %1243 = vmatprep.subr.bf16.mxu0 0
      %1244 = vmatpush1.bf16.msra.mxu0 %v1196
      %1245 = vmatprep.mubr.bf16.mxu0 %v818
      %1246 = vmatmul.mubr.bf16.gmra.mrb[0].mxu0 %v817
      %v1247 = vpop.f32.mrb[0].mxu0
      %v1248 = vadd.f32 %v365, %v1247
      %v1249 = vpop.f32.mrb[0].mxu0
      %v1250 = vpop.f32.mrb[0].mxu0
      %v1251 = vadd.f32 %v365, %v1250
      %v1252 = vpop.f32.mrb[0].mxu0
      %1253 = vmatprep.mubr.bf16.mxu0 %v820
      %1254 = vmatmul.mubr.bf16.gmra.mrb[0].mxu0 %v819
      %v1255 = vpop.f32.mrb[0].mxu0
      %v1256 = vadd.f32 %v365, %v1255
      %v1257 = vpop.f32.mrb[0].mxu0
      %v1258 = vpop.f32.mrb[0].mxu0
      %v1259 = vadd.f32 %v365, %v1258
      %v1260 = vpop.f32.mrb[0].mxu0
      %1261 = vmatprep.mubr.bf16.mxu0 %v822
      %1262 = vmatmul.mubr.bf16.gmra.mrb[0].mxu0 %v821
      %v1263 = vpop.f32.mrb[0].mxu0
      %v1264 = vadd.f32 %v365, %v1263
      %v1265 = vpop.f32.mrb[0].mxu0
      %v1266 = vpop.f32.mrb[0].mxu0
      %v1267 = vadd.f32 %v365, %v1266
      %v1268 = vpop.f32.mrb[0].mxu0
      %1269 = vmatprep.mubr.bf16.mxu0 %v824
      %1270 = vmatmul.mubr.bf16.gmra.mrb[0].mxu0 %v823
      %v1271 = vpop.f32.mrb[0].mxu0
      %v1272 = vadd.f32 %v365, %v1271
      %v1273 = vpop.f32.mrb[0].mxu0
      %v1274 = vpop.f32.mrb[0].mxu0
      %v1275 = vadd.f32 %v365, %v1274
      %v1276 = vpop.f32.mrb[0].mxu0
      %1277 = vmatprep.mubr.bf16.mxu0 %v826
      %1278 = vmatmul.mubr.bf16.gmra.mrb[0].mxu0 %v825
      %v1279 = vpop.f32.mrb[0].mxu0
      %v1280 = vadd.f32 %v365, %v1279
      %v1281 = vpop.f32.mrb[0].mxu0
      %v1282 = vpop.f32.mrb[0].mxu0
      %v1283 = vadd.f32 %v365, %v1282
      %v1284 = vpop.f32.mrb[0].mxu0
      %1285 = vmatprep.mubr.bf16.mxu0 %v828
      %1286 = vmatmul.mubr.bf16.gmra.mrb[0].mxu0 %v827
      %v1287 = vpop.f32.mrb[0].mxu0
      %v1288 = vadd.f32 %v365, %v1287
      %v1289 = vpop.f32.mrb[0].mxu0
      %v1290 = vpop.f32.mrb[0].mxu0
      %v1291 = vadd.f32 %v365, %v1290
      %v1292 = vpop.f32.mrb[0].mxu0
      %1293 = vmatprep.mubr.bf16.mxu0 %v830
      %1294 = vmatmul.mubr.bf16.gmra.mrb[0].mxu0 %v829
      %v1295 = vpop.f32.mrb[0].mxu0
      %v1296 = vadd.f32 %v365, %v1295
      %v1297 = vpop.f32.mrb[0].mxu0
      %v1298 = vpop.f32.mrb[0].mxu0
      %v1299 = vadd.f32 %v365, %v1298
      %v1300 = vpop.f32.mrb[0].mxu0
      %1301 = vmatprep.mubr.bf16.mxu0 %v832
      %1302 = vmatmul.mubr.bf16.gmra.mrb[0].mxu0 %v831
      %v1303 = vpop.f32.mrb[0].mxu0
      %v1304 = vadd.f32 %v365, %v1303
      %v1305 = vpop.f32.mrb[0].mxu0
      %v1306 = vpop.f32.mrb[0].mxu0
      %v1307 = vadd.f32 %v365, %v1306
      %v1308 = vpop.f32.mrb[0].mxu0
      %1309 = vmatprep.mubr.bf16.mxu0 %v834
      %1310 = vmatmul.mubr.bf16.gmra.mrb[0].mxu0 %v833
      %v1311 = vpop.f32.mrb[0].mxu0
      %v1312 = vadd.f32 %v365, %v1311
      %v1313 = vpop.f32.mrb[0].mxu0
      %v1314 = vpop.f32.mrb[0].mxu0
      %v1315 = vadd.f32 %v365, %v1314
      %v1316 = vpop.f32.mrb[0].mxu0
      %1317 = vmatprep.mubr.bf16.mxu0 %v836
      %1318 = vmatmul.mubr.bf16.gmra.mrb[0].mxu0 %v835
      %v1319 = vpop.f32.mrb[0].mxu0
      %v1320 = vadd.f32 %v365, %v1319
      %v1321 = vpop.f32.mrb[0].mxu0
      %v1322 = vpop.f32.mrb[0].mxu0
      %v1323 = vadd.f32 %v365, %v1322
      %v1324 = vpop.f32.mrb[0].mxu0
      %1325 = vmatprep.mubr.bf16.mxu0 %v838
      %1326 = vmatmul.mubr.bf16.gmra.mrb[0].mxu0 %v837
      %v1327 = vpop.f32.mrb[0].mxu0
      %v1328 = vadd.f32 %v365, %v1327
      %v1329 = vpop.f32.mrb[0].mxu0
      %v1330 = vpop.f32.mrb[0].mxu0
      %v1331 = vadd.f32 %v365, %v1330
      %v1332 = vpop.f32.mrb[0].mxu0
      %1333 = vmatprep.mubr.bf16.mxu0 %v840
      %1334 = vmatmul.mubr.bf16.gmra.mrb[0].mxu0 %v839
      %v1335 = vpop.f32.mrb[0].mxu0
      %v1336 = vadd.f32 %v365, %v1335
      %v1337 = vpop.f32.mrb[0].mxu0
      %v1338 = vpop.f32.mrb[0].mxu0
      %v1339 = vadd.f32 %v365, %v1338
      %v1340 = vpop.f32.mrb[0].mxu0
      %1341 = vmatprep.mubr.bf16.mxu0 %v842
      %1342 = vmatmul.mubr.bf16.gmra.mrb[0].mxu0 %v841
      %v1343 = vpop.f32.mrb[0].mxu0
      %v1344 = vadd.f32 %v365, %v1343
      %v1345 = vpop.f32.mrb[0].mxu0
      %v1346 = vpop.f32.mrb[0].mxu0
      %v1347 = vadd.f32 %v365, %v1346
      %v1348 = vpop.f32.mrb[0].mxu0
      %1349 = vmatprep.mubr.bf16.mxu0 %v844
      %1350 = vmatmul.mubr.bf16.gmra.mrb[0].mxu0 %v843
      %v1351 = vpop.f32.mrb[0].mxu0
      %v1352 = vadd.f32 %v365, %v1351
      %v1353 = vpop.f32.mrb[0].mxu0
      %v1354 = vpop.f32.mrb[0].mxu0
      %v1355 = vadd.f32 %v365, %v1354
      %v1356 = vpop.f32.mrb[0].mxu0
      %1357 = vmatprep.mubr.bf16.mxu0 %v846
      %1358 = vmatmul.mubr.bf16.gmra.mrb[0].mxu0 %v845
      %v1359 = vpop.f32.mrb[0].mxu0
      %v1360 = vadd.f32 %v365, %v1359
      %v1361 = vpop.f32.mrb[0].mxu0
      %v1362 = vpop.f32.mrb[0].mxu0
      %v1363 = vadd.f32 %v365, %v1362
      %v1364 = vpop.f32.mrb[0].mxu0
      %1365 = vmatprep.mubr.bf16.mxu0 %v848
      %1366 = vmatmul.mubr.bf16.gmra.mrb[0].mxu0 %v847
      %v1367 = vpop.f32.mrb[0].mxu0
      %v1368 = vadd.f32 %v365, %v1367
      %v1369 = vpop.f32.mrb[0].mxu0
      %v1370 = vpop.f32.mrb[0].mxu0
      %v1371 = vadd.f32 %v365, %v1370
      %v1372 = vpop.f32.mrb[0].mxu0
      %1373 = vmatprep.mubr.bf16.mxu0 %v850
      %1374 = vmatmul.mubr.bf16.gmra.mrb[0].mxu0 %v849
      %v1375 = vpop.f32.mrb[0].mxu0
      %v1376 = vadd.f32 %v365, %v1375
      %v1377 = vpop.f32.mrb[0].mxu0
      %v1378 = vpop.f32.mrb[0].mxu0
      %v1379 = vadd.f32 %v365, %v1378
      %v1380 = vpop.f32.mrb[0].mxu0
      %1381 = vmatprep.mubr.bf16.mxu0 %v852
      %1382 = vmatmul.mubr.bf16.gmra.mrb[0].mxu0 %v851
      %v1383 = vpop.f32.mrb[0].mxu0
      %v1384 = vadd.f32 %v365, %v1383
      %v1385 = vpop.f32.mrb[0].mxu0
      %v1386 = vpop.f32.mrb[0].mxu0
      %v1387 = vadd.f32 %v365, %v1386
      %v1388 = vpop.f32.mrb[0].mxu0
      %1389 = vmatprep.mubr.bf16.mxu0 %v854
      %1390 = vmatmul.mubr.bf16.gmra.mrb[0].mxu0 %v853
      %v1391 = vpop.f32.mrb[0].mxu0
      %v1392 = vadd.f32 %v365, %v1391
      %v1393 = vpop.f32.mrb[0].mxu0
      %v1394 = vpop.f32.mrb[0].mxu0
      %v1395 = vadd.f32 %v365, %v1394
      %v1396 = vpop.f32.mrb[0].mxu0
      %1397 = vmatprep.mubr.bf16.mxu0 %v856
      %1398 = vmatmul.mubr.bf16.gmra.mrb[0].mxu0 %v855
      %v1399 = vpop.f32.mrb[0].mxu0
      %v1400 = vadd.f32 %v365, %v1399
      %v1401 = vpop.f32.mrb[0].mxu0
      %v1402 = vpop.f32.mrb[0].mxu0
      %v1403 = vadd.f32 %v365, %v1402
      %v1404 = vpop.f32.mrb[0].mxu0
      %1405 = vmatprep.mubr.bf16.mxu0 %v858
      %1406 = vmatmul.mubr.bf16.gmra.mrb[0].mxu0 %v857
      %v1407 = vpop.f32.mrb[0].mxu0
      %v1408 = vadd.f32 %v365, %v1407
      %v1409 = vpop.f32.mrb[0].mxu0
      %v1410 = vpop.f32.mrb[0].mxu0
      %v1411 = vadd.f32 %v365, %v1410
      %v1412 = vpop.f32.mrb[0].mxu0
      %1413 = vmatprep.mubr.bf16.mxu0 %v860
      %1414 = vmatmul.mubr.bf16.gmra.mrb[0].mxu0 %v859
      %v1415 = vpop.f32.mrb[0].mxu0
      %v1416 = vadd.f32 %v365, %v1415
      %v1417 = vpop.f32.mrb[0].mxu0
      %v1418 = vpop.f32.mrb[0].mxu0
      %v1419 = vadd.f32 %v365, %v1418
      %v1420 = vpop.f32.mrb[0].mxu0
      %1421 = vmatprep.mubr.bf16.mxu0 %v862
      %1422 = vmatmul.mubr.bf16.gmra.mrb[0].mxu0 %v861
      %v1423 = vpop.f32.mrb[0].mxu0
      %v1424 = vadd.f32 %v365, %v1423
      %v1425 = vpop.f32.mrb[0].mxu0
      %v1426 = vpop.f32.mrb[0].mxu0
      %v1427 = vadd.f32 %v365, %v1426
      %v1428 = vpop.f32.mrb[0].mxu0
      %1429 = vmatprep.mubr.bf16.mxu0 %v864
      %1430 = vmatmul.mubr.bf16.gmra.mrb[0].mxu0 %v863
      %v1431 = vpop.f32.mrb[0].mxu0
      %v1432 = vadd.f32 %v365, %v1431
      %v1433 = vpop.f32.mrb[0].mxu0
      %v1434 = vpop.f32.mrb[0].mxu0
      %v1435 = vadd.f32 %v365, %v1434
      %v1436 = vpop.f32.mrb[0].mxu0
      %1437 = vmatprep.mubr.bf16.mxu0 %v866
      %1438 = vmatmul.mubr.bf16.gmra.mrb[0].mxu0 %v865
      %v1439 = vpop.f32.mrb[0].mxu0
      %v1440 = vadd.f32 %v365, %v1439
      %v1441 = vpop.f32.mrb[0].mxu0
      %v1442 = vpop.f32.mrb[0].mxu0
      %v1443 = vadd.f32 %v365, %v1442
      %v1444 = vpop.f32.mrb[0].mxu0
      %1445 = vmatprep.mubr.bf16.mxu0 %v868
      %1446 = vmatmul.mubr.bf16.gmra.mrb[0].mxu0 %v867
      %v1447 = vpop.f32.mrb[0].mxu0
      %v1448 = vadd.f32 %v365, %v1447
      %v1449 = vpop.f32.mrb[0].mxu0
      %v1450 = vpop.f32.mrb[0].mxu0
      %v1451 = vadd.f32 %v365, %v1450
      %v1452 = vpop.f32.mrb[0].mxu0
      %1453 = vmatprep.mubr.bf16.mxu0 %v870
      %1454 = vmatmul.mubr.bf16.gmra.mrb[0].mxu0 %v869
      %v1455 = vpop.f32.mrb[0].mxu0
      %v1456 = vadd.f32 %v365, %v1455
      %v1457 = vpop.f32.mrb[0].mxu0
      %v1458 = vpop.f32.mrb[0].mxu0
      %v1459 = vadd.f32 %v365, %v1458
      %v1460 = vpop.f32.mrb[0].mxu0
      %1461 = vmatprep.mubr.bf16.mxu0 %v872
      %1462 = vmatmul.mubr.bf16.gmra.mrb[0].mxu0 %v871
      %v1463 = vpop.f32.mrb[0].mxu0
      %v1464 = vadd.f32 %v365, %v1463
      %v1465 = vpop.f32.mrb[0].mxu0
      %v1466 = vpop.f32.mrb[0].mxu0
      %v1467 = vadd.f32 %v365, %v1466
      %v1468 = vpop.f32.mrb[0].mxu0
      %1469 = vmatprep.mubr.bf16.mxu0 %v874
      %1470 = vmatmul.mubr.bf16.gmra.mrb[0].mxu0 %v873
      %v1471 = vpop.f32.mrb[0].mxu0
      %v1472 = vadd.f32 %v365, %v1471
      %v1473 = vpop.f32.mrb[0].mxu0
      %v1474 = vpop.f32.mrb[0].mxu0
      %v1475 = vadd.f32 %v365, %v1474
      %v1476 = vpop.f32.mrb[0].mxu0
      %1477 = vmatprep.mubr.bf16.mxu0 %v876
      %1478 = vmatmul.mubr.bf16.gmra.mrb[0].mxu0 %v875
      %v1479 = vpop.f32.mrb[0].mxu0
      %v1480 = vadd.f32 %v365, %v1479
      %v1481 = vpop.f32.mrb[0].mxu0
      %v1482 = vpop.f32.mrb[0].mxu0
      %v1483 = vadd.f32 %v365, %v1482
      %v1484 = vpop.f32.mrb[0].mxu0
      %1485 = vmatprep.mubr.bf16.mxu0 %v878
      %1486 = vmatmul.mubr.bf16.gmra.mrb[0].mxu0 %v877
      %v1487 = vpop.f32.mrb[0].mxu0
      %v1488 = vadd.f32 %v365, %v1487
      %v1489 = vpop.f32.mrb[0].mxu0
      %v1490 = vpop.f32.mrb[0].mxu0
      %v1491 = vadd.f32 %v365, %v1490
      %v1492 = vpop.f32.mrb[0].mxu0
      %1493 = vmatprep.mubr.bf16.mxu0 %v880
      %1494 = vmatmul.mubr.bf16.gmra.mrb[0].mxu0 %v879
      %v1495 = vpop.f32.mrb[0].mxu0
      %v1496 = vadd.f32 %v365, %v1495
      %v1497 = vpop.f32.mrb[0].mxu0
      %v1498 = vpop.f32.mrb[0].mxu0
      %v1499 = vadd.f32 %v365, %v1498
      %v1500 = vpop.f32.mrb[0].mxu0
      %1501 = vmatprep.mubr.bf16.mxu0 %v882
      %1502 = vmatmul.mubr.bf16.gmra.mrb[0].mxu0 %v881
      %v1503 = vpop.f32.mrb[0].mxu0
      %v1504 = vadd.f32 %v365, %v1503
      %v1505 = vpop.f32.mrb[0].mxu0
      %v1506 = vpop.f32.mrb[0].mxu0
      %v1507 = vadd.f32 %v365, %v1506
      %v1508 = vpop.f32.mrb[0].mxu0
      %1509 = vmatprep.mubr.bf16.mxu0 %v884
      %1510 = vmatmul.mubr.bf16.gmra.mrb[0].mxu0 %v883
      %v1511 = vpop.f32.mrb[0].mxu0
      %v1512 = vadd.f32 %v365, %v1511
      %v1513 = vpop.f32.mrb[0].mxu0
      %v1514 = vpop.f32.mrb[0].mxu0
      %v1515 = vadd.f32 %v365, %v1514
      %v1516 = vpop.f32.mrb[0].mxu0
      %1517 = vmatprep.mubr.bf16.mxu0 %v886
      %1518 = vmatmul.mubr.bf16.gmra.mrb[0].mxu0 %v885
      %v1519 = vpop.f32.mrb[0].mxu0
      %v1520 = vadd.f32 %v365, %v1519
      %v1521 = vpop.f32.mrb[0].mxu0
      %v1522 = vpop.f32.mrb[0].mxu0
      %v1523 = vadd.f32 %v365, %v1522
      %v1524 = vpop.f32.mrb[0].mxu0
      %1525 = vmatprep.mubr.bf16.mxu0 %v888
      %1526 = vmatmul.mubr.bf16.gmra.mrb[0].mxu0 %v887
      %v1527 = vpop.f32.mrb[0].mxu0
      %v1528 = vadd.f32 %v365, %v1527
      %v1529 = vpop.f32.mrb[0].mxu0
      %v1530 = vpop.f32.mrb[0].mxu0
      %v1531 = vadd.f32 %v365, %v1530
      %v1532 = vpop.f32.mrb[0].mxu0
      %1533 = vmatprep.mubr.bf16.mxu0 %v890
      %1534 = vmatmul.mubr.bf16.gmra.mrb[0].mxu0 %v889
      %v1535 = vpop.f32.mrb[0].mxu0
      %v1536 = vadd.f32 %v365, %v1535
      %v1537 = vpop.f32.mrb[0].mxu0
      %v1538 = vpop.f32.mrb[0].mxu0
      %v1539 = vadd.f32 %v365, %v1538
      %v1540 = vpop.f32.mrb[0].mxu0
      %1541 = vmatprep.mubr.bf16.mxu0 %v892
      %1542 = vmatmul.mubr.bf16.gmra.mrb[0].mxu0 %v891
      %v1543 = vpop.f32.mrb[0].mxu0
      %v1544 = vadd.f32 %v365, %v1543
      %v1545 = vpop.f32.mrb[0].mxu0
      %v1546 = vpop.f32.mrb[0].mxu0
      %v1547 = vadd.f32 %v365, %v1546
      %v1548 = vpop.f32.mrb[0].mxu0
      %1549 = vmatprep.mubr.bf16.mxu0 %v894
      %1550 = vmatmul.mubr.bf16.gmra.mrb[0].mxu0 %v893
      %v1551 = vpop.f32.mrb[0].mxu0
      %v1552 = vadd.f32 %v365, %v1551
      %v1553 = vpop.f32.mrb[0].mxu0
      %v1554 = vpop.f32.mrb[0].mxu0
      %v1555 = vadd.f32 %v365, %v1554
      %v1556 = vpop.f32.mrb[0].mxu0
      %1557 = vmatprep.mubr.bf16.mxu0 %v896
      %1558 = vmatmul.mubr.bf16.gmra.mrb[0].mxu0 %v895
      %v1559 = vpop.f32.mrb[0].mxu0
      %v1560 = vadd.f32 %v365, %v1559
      %v1561 = vpop.f32.mrb[0].mxu0
      %v1562 = vpop.f32.mrb[0].mxu0
      %v1563 = vadd.f32 %v365, %v1562
      %v1564 = vpop.f32.mrb[0].mxu0
      %1565 = vmatprep.mubr.bf16.mxu0 %v898
      %1566 = vmatmul.mubr.bf16.gmra.mrb[0].mxu0 %v897
      %v1567 = vpop.f32.mrb[0].mxu0
      %v1568 = vadd.f32 %v365, %v1567
      %v1569 = vpop.f32.mrb[0].mxu0
      %v1570 = vpop.f32.mrb[0].mxu0
      %v1571 = vadd.f32 %v365, %v1570
      %v1572 = vpop.f32.mrb[0].mxu0
      %1573 = vmatprep.mubr.bf16.mxu0 %v900
      %1574 = vmatmul.mubr.bf16.gmra.mrb[0].mxu0 %v899
      %v1575 = vpop.f32.mrb[0].mxu0
      %v1576 = vadd.f32 %v365, %v1575
      %v1577 = vpop.f32.mrb[0].mxu0
      %v1578 = vpop.f32.mrb[0].mxu0
      %v1579 = vadd.f32 %v365, %v1578
      %v1580 = vpop.f32.mrb[0].mxu0
      %1581 = vmatprep.mubr.bf16.mxu0 %v902
      %1582 = vmatmul.mubr.bf16.gmra.mrb[0].mxu0 %v901
      %v1583 = vpop.f32.mrb[0].mxu0
      %v1584 = vadd.f32 %v365, %v1583
      %v1585 = vpop.f32.mrb[0].mxu0
      %v1586 = vpop.f32.mrb[0].mxu0
      %v1587 = vadd.f32 %v365, %v1586
      %v1588 = vpop.f32.mrb[0].mxu0
      %1589 = vmatprep.mubr.bf16.mxu0 %v904
      %1590 = vmatmul.mubr.bf16.gmra.mrb[0].mxu0 %v903
      %v1591 = vpop.f32.mrb[0].mxu0
      %v1592 = vadd.f32 %v365, %v1591
      %v1593 = vpop.f32.mrb[0].mxu0
      %v1594 = vpop.f32.mrb[0].mxu0
      %v1595 = vadd.f32 %v365, %v1594
      %v1596 = vpop.f32.mrb[0].mxu0
      %1597 = vmatprep.mubr.bf16.mxu0 %v906
      %1598 = vmatmul.mubr.bf16.gmra.mrb[0].mxu0 %v905
      %v1599 = vpop.f32.mrb[0].mxu0
      %v1600 = vadd.f32 %v365, %v1599
      %v1601 = vpop.f32.mrb[0].mxu0
      %v1602 = vpop.f32.mrb[0].mxu0
      %v1603 = vadd.f32 %v365, %v1602
      %v1604 = vpop.f32.mrb[0].mxu0
      %1605 = vmatprep.mubr.bf16.mxu0 %v908
      %1606 = vmatmul.mubr.bf16.gmra.mrb[0].mxu0 %v907
      %v1607 = vpop.f32.mrb[0].mxu0
      %v1608 = vadd.f32 %v365, %v1607
      %v1609 = vpop.f32.mrb[0].mxu0
      %v1610 = vpop.f32.mrb[0].mxu0
      %v1611 = vadd.f32 %v365, %v1610
      %v1612 = vpop.f32.mrb[0].mxu0
      %1613 = vmatprep.mubr.bf16.mxu0 %v910
      %1614 = vmatmul.mubr.bf16.gmra.mrb[0].mxu0 %v909
      %v1615 = vpop.f32.mrb[0].mxu0
      %v1616 = vadd.f32 %v365, %v1615
      %v1617 = vpop.f32.mrb[0].mxu0
      %v1618 = vpop.f32.mrb[0].mxu0
      %v1619 = vadd.f32 %v365, %v1618
      %v1620 = vpop.f32.mrb[0].mxu0
      %1621 = vmatprep.mubr.bf16.mxu0 %v912
      %1622 = vmatmul.mubr.bf16.gmra.mrb[0].mxu0 %v911
      %v1623 = vpop.f32.mrb[0].mxu0
      %v1624 = vadd.f32 %v365, %v1623
      %v1625 = vpop.f32.mrb[0].mxu0
      %v1626 = vpop.f32.mrb[0].mxu0
      %v1627 = vadd.f32 %v365, %v1626
      %v1628 = vpop.f32.mrb[0].mxu0
      %1629 = vmatprep.mubr.bf16.mxu0 %v914
      %1630 = vmatmul.mubr.bf16.gmra.mrb[0].mxu0 %v913
      %v1631 = vpop.f32.mrb[0].mxu0
      %v1632 = vadd.f32 %v365, %v1631
      %v1633 = vpop.f32.mrb[0].mxu0
      %v1634 = vpop.f32.mrb[0].mxu0
      %v1635 = vadd.f32 %v365, %v1634
      %v1636 = vpop.f32.mrb[0].mxu0
      %1637 = vmatprep.mubr.bf16.mxu0 %v916
      %1638 = vmatmul.mubr.bf16.gmra.mrb[0].mxu0 %v915
      %v1639 = vpop.f32.mrb[0].mxu0
      %v1640 = vadd.f32 %v365, %v1639
      %v1641 = vpop.f32.mrb[0].mxu0
      %v1642 = vpop.f32.mrb[0].mxu0
      %v1643 = vadd.f32 %v365, %v1642
      %v1644 = vpop.f32.mrb[0].mxu0
      %1645 = vmatprep.mubr.bf16.mxu0 %v918
      %1646 = vmatmul.mubr.bf16.gmra.mrb[0].mxu0 %v917
      %v1647 = vpop.f32.mrb[0].mxu0
      %v1648 = vadd.f32 %v365, %v1647
      %v1649 = vpop.f32.mrb[0].mxu0
      %v1650 = vpop.f32.mrb[0].mxu0
      %v1651 = vadd.f32 %v365, %v1650
      %v1652 = vpop.f32.mrb[0].mxu0
      %1653 = vmatprep.mubr.bf16.mxu0 %v920
      %1654 = vmatmul.mubr.bf16.gmra.mrb[0].mxu0 %v919
      %v1655 = vpop.f32.mrb[0].mxu0
      %v1656 = vadd.f32 %v365, %v1655
      %v1657 = vpop.f32.mrb[0].mxu0
      %v1658 = vpop.f32.mrb[0].mxu0
      %v1659 = vadd.f32 %v365, %v1658
      %v1660 = vpop.f32.mrb[0].mxu0
      %1661 = vmatprep.mubr.bf16.mxu0 %v922
      %1662 = vmatmul.mubr.bf16.gmra.mrb[0].mxu0 %v921
      %v1663 = vpop.f32.mrb[0].mxu0
      %v1664 = vadd.f32 %v365, %v1663
      %v1665 = vpop.f32.mrb[0].mxu0
      %v1666 = vpop.f32.mrb[0].mxu0
      %v1667 = vadd.f32 %v365, %v1666
      %v1668 = vpop.f32.mrb[0].mxu0
      %1669 = vmatprep.mubr.bf16.mxu0 %v924
      %1670 = vmatmul.mubr.bf16.gmra.mrb[0].mxu0 %v923
      %v1671 = vpop.f32.mrb[0].mxu0
      %v1672 = vadd.f32 %v365, %v1671
      %v1673 = vpop.f32.mrb[0].mxu0
      %v1674 = vpop.f32.mrb[0].mxu0
      %v1675 = vadd.f32 %v365, %v1674
      %v1676 = vpop.f32.mrb[0].mxu0
      %1677 = vmatprep.mubr.bf16.mxu0 %v926
      %1678 = vmatmul.mubr.bf16.gmra.mrb[0].mxu0 %v925
      %v1679 = vpop.f32.mrb[0].mxu0
      %v1680 = vadd.f32 %v365, %v1679
      %v1681 = vpop.f32.mrb[0].mxu0
      %v1682 = vpop.f32.mrb[0].mxu0
      %v1683 = vadd.f32 %v365, %v1682
      %v1684 = vpop.f32.mrb[0].mxu0
      %1685 = vmatprep.mubr.bf16.mxu0 %v928
      %1686 = vmatmul.mubr.bf16.gmra.mrb[0].mxu0 %v927
      %v1687 = vpop.f32.mrb[0].mxu0
      %v1688 = vadd.f32 %v365, %v1687
      %v1689 = vpop.f32.mrb[0].mxu0
      %v1690 = vpop.f32.mrb[0].mxu0
      %v1691 = vadd.f32 %v365, %v1690
      %v1692 = vpop.f32.mrb[0].mxu0
      %1693 = vmatprep.mubr.bf16.mxu0 %v930
      %1694 = vmatmul.mubr.bf16.gmra.mrb[0].mxu0 %v929
      %v1695 = vpop.f32.mrb[0].mxu0
      %v1696 = vadd.f32 %v365, %v1695
      %v1697 = vpop.f32.mrb[0].mxu0
      %v1698 = vpop.f32.mrb[0].mxu0
      %v1699 = vadd.f32 %v365, %v1698
      %v1700 = vpop.f32.mrb[0].mxu0
      %1701 = vmatprep.mubr.bf16.mxu0 %v932
      %1702 = vmatmul.mubr.bf16.gmra.mrb[0].mxu0 %v931
      %v1703 = vpop.f32.mrb[0].mxu0
      %v1704 = vadd.f32 %v365, %v1703
      %v1705 = vpop.f32.mrb[0].mxu0
      %v1706 = vpop.f32.mrb[0].mxu0
      %v1707 = vadd.f32 %v365, %v1706
      %v1708 = vpop.f32.mrb[0].mxu0
      %1709 = vmatprep.mubr.bf16.mxu0 %v934
      %1710 = vmatmul.mubr.bf16.gmra.mrb[0].mxu0 %v933
      %v1711 = vpop.f32.mrb[0].mxu0
      %v1712 = vadd.f32 %v365, %v1711
      %v1713 = vpop.f32.mrb[0].mxu0
      %v1714 = vpop.f32.mrb[0].mxu0
      %v1715 = vadd.f32 %v365, %v1714
      %v1716 = vpop.f32.mrb[0].mxu0
      %1717 = vmatprep.mubr.bf16.mxu0 %v936
      %1718 = vmatmul.mubr.bf16.gmra.mrb[0].mxu0 %v935
      %v1719 = vpop.f32.mrb[0].mxu0
      %v1720 = vadd.f32 %v365, %v1719
      %v1721 = vpop.f32.mrb[0].mxu0
      %v1722 = vpop.f32.mrb[0].mxu0
      %v1723 = vadd.f32 %v365, %v1722
      %v1724 = vpop.f32.mrb[0].mxu0
      %1725 = vmatprep.mubr.bf16.mxu0 %v938
      %1726 = vmatmul.mubr.bf16.gmra.mrb[0].mxu0 %v937
      %v1727 = vpop.f32.mrb[0].mxu0
      %v1728 = vadd.f32 %v365, %v1727
      %v1729 = vpop.f32.mrb[0].mxu0
      %v1730 = vpop.f32.mrb[0].mxu0
      %v1731 = vadd.f32 %v365, %v1730
      %v1732 = vpop.f32.mrb[0].mxu0
      %1733 = vmatprep.mubr.bf16.mxu0 %v940
      %1734 = vmatmul.mubr.bf16.gmra.mrb[0].mxu0 %v939
      %v1735 = vpop.f32.mrb[0].mxu0
      %v1736 = vadd.f32 %v365, %v1735
      %v1737 = vpop.f32.mrb[0].mxu0
      %v1738 = vpop.f32.mrb[0].mxu0
      %v1739 = vadd.f32 %v365, %v1738
      %v1740 = vpop.f32.mrb[0].mxu0
      %1741 = vmatprep.mubr.bf16.mxu0 %v942
      %1742 = vmatmul.mubr.bf16.gmra.mrb[0].mxu0 %v941
      %v1743 = vpop.f32.mrb[0].mxu0
      %v1744 = vadd.f32 %v365, %v1743
      %v1745 = vpop.f32.mrb[0].mxu0
      %v1746 = vpop.f32.mrb[0].mxu0
      %v1747 = vadd.f32 %v365, %v1746
      %v1748 = vpop.f32.mrb[0].mxu0
      %1749 = vmatprep.mubr.bf16.mxu0 %v944
      %1750 = vmatmul.mubr.bf16.gmra.mrb[0].mxu0 %v943
      %v1751 = vpop.f32.mrb[0].mxu0
      %v1752 = vadd.f32 %v365, %v1751
      %v1753 = vpop.f32.mrb[0].mxu0
      %v1754 = vpop.f32.mrb[0].mxu0
      %v1755 = vadd.f32 %v365, %v1754
      %v1756 = vpop.f32.mrb[0].mxu0
      %1757 = vmatprep.mubr.bf16.mxu0 %v946
      %1758 = vmatmul.mubr.bf16.gmra.mrb[0].mxu0 %v945
      %v1759 = vpop.f32.mrb[0].mxu0
      %v1760 = vadd.f32 %v365, %v1759
      %v1761 = vpop.f32.mrb[0].mxu0
      %v1762 = vpop.f32.mrb[0].mxu0
      %v1763 = vadd.f32 %v365, %v1762
      %v1764 = vpop.f32.mrb[0].mxu0
      %1765 = vmatprep.mubr.bf16.mxu0 %v948
      %1766 = vmatmul.mubr.bf16.gmra.mrb[0].mxu0 %v947
      %v1767 = vpop.f32.mrb[0].mxu0
      %v1768 = vadd.f32 %v365, %v1767
      %v1769 = vpop.f32.mrb[0].mxu0
      %v1770 = vpop.f32.mrb[0].mxu0
      %v1771 = vadd.f32 %v365, %v1770
      %v1772 = vpop.f32.mrb[0].mxu0
      %1773 = vmatprep.mubr.bf16.mxu0 %v950
      %1774 = vmatmul.mubr.bf16.gmra.mrb[0].mxu0 %v949
      %v1775 = vpop.f32.mrb[0].mxu0
      %v1776 = vadd.f32 %v365, %v1775
      %v1777 = vpop.f32.mrb[0].mxu0
      %v1778 = vpop.f32.mrb[0].mxu0
      %v1779 = vadd.f32 %v365, %v1778
      %v1780 = vpop.f32.mrb[0].mxu0
      %1781 = vmatprep.mubr.bf16.mxu0 %v952
      %1782 = vmatmul.mubr.bf16.gmra.mrb[0].mxu0 %v951
      %v1783 = vpop.f32.mrb[0].mxu0
      %v1784 = vadd.f32 %v365, %v1783
      %v1785 = vpop.f32.mrb[0].mxu0
      %v1786 = vpop.f32.mrb[0].mxu0
      %v1787 = vadd.f32 %v365, %v1786
      %v1788 = vpop.f32.mrb[0].mxu0
      %1789 = vmatprep.mubr.bf16.mxu0 %v954
      %1790 = vmatmul.mubr.bf16.gmra.mrb[0].mxu0 %v953
      %v1791 = vpop.f32.mrb[0].mxu0
      %v1792 = vadd.f32 %v365, %v1791
      %v1793 = vpop.f32.mrb[0].mxu0
      %v1794 = vpop.f32.mrb[0].mxu0
      %v1795 = vadd.f32 %v365, %v1794
      %v1796 = vpop.f32.mrb[0].mxu0
      %1797 = vmatprep.mubr.bf16.mxu0 %v956
      %1798 = vmatmul.mubr.bf16.gmra.mrb[0].mxu0 %v955
      %v1799 = vpop.f32.mrb[0].mxu0
      %v1800 = vadd.f32 %v365, %v1799
      %v1801 = vpop.f32.mrb[0].mxu0
      %v1802 = vpop.f32.mrb[0].mxu0
      %v1803 = vadd.f32 %v365, %v1802
      %v1804 = vpop.f32.mrb[0].mxu0
      %1805 = vmatprep.mubr.bf16.mxu0 %v958
      %1806 = vmatmul.mubr.bf16.gmra.mrb[0].mxu0 %v957
      %v1807 = vpop.f32.mrb[0].mxu0
      %v1808 = vadd.f32 %v365, %v1807
      %v1809 = vpop.f32.mrb[0].mxu0
      %v1810 = vpop.f32.mrb[0].mxu0
      %v1811 = vadd.f32 %v365, %v1810
      %v1812 = vpop.f32.mrb[0].mxu0
      %1813 = vmatprep.mubr.bf16.mxu0 %v960
      %1814 = vmatmul.mubr.bf16.gmra.mrb[0].mxu0 %v959
      %v1815 = vpop.f32.mrb[0].mxu0
      %v1816 = vadd.f32 %v365, %v1815
      %v1817 = vpop.f32.mrb[0].mxu0
      %v1818 = vpop.f32.mrb[0].mxu0
      %v1819 = vadd.f32 %v365, %v1818
      %v1820 = vpop.f32.mrb[0].mxu0
      %1821 = vmatprep.mubr.bf16.mxu0 %v962
      %1822 = vmatmul.mubr.bf16.gmra.mrb[0].mxu0 %v961
      %v1823 = vpop.f32.mrb[0].mxu0
      %v1824 = vadd.f32 %v365, %v1823
      %v1825 = vpop.f32.mrb[0].mxu0
      %v1826 = vpop.f32.mrb[0].mxu0
      %v1827 = vadd.f32 %v365, %v1826
      %v1828 = vpop.f32.mrb[0].mxu0
      %1829 = vmatprep.mubr.bf16.mxu0 %v964
      %1830 = vmatmul.mubr.bf16.gmra.mrb[0].mxu0 %v963
      %v1831 = vpop.f32.mrb[0].mxu0
      %v1832 = vadd.f32 %v365, %v1831
      %v1833 = vpop.f32.mrb[0].mxu0
      %v1834 = vpop.f32.mrb[0].mxu0
      %v1835 = vadd.f32 %v365, %v1834
      %v1836 = vpop.f32.mrb[0].mxu0
      %1837 = vmatprep.mubr.bf16.mxu0 %v966
      %1838 = vmatmul.mubr.bf16.gmra.mrb[0].mxu0 %v965
      %v1839 = vpop.f32.mrb[0].mxu0
      %v1840 = vadd.f32 %v365, %v1839
      %v1841 = vpop.f32.mrb[0].mxu0
      %v1842 = vpop.f32.mrb[0].mxu0
      %v1843 = vadd.f32 %v365, %v1842
      %v1844 = vpop.f32.mrb[0].mxu0
      %1845 = vdwg.mxu0
      %v1846 = vmax.f32 %v1248, 0.0
      %v1847 = vmax.f32 %v1251, 0.0
      %v1848 = vmax.f32 %v1256, 0.0
      %v1849 = vmax.f32 %v1259, 0.0
      %v1850 = vmax.f32 %v1264, 0.0
      %v1851 = vmax.f32 %v1267, 0.0
      %v1852 = vmax.f32 %v1272, 0.0
      %v1853 = vmax.f32 %v1275, 0.0
      %v1854 = vmax.f32 %v1280, 0.0
      %v1855 = vmax.f32 %v1283, 0.0
      %v1856 = vmax.f32 %v1288, 0.0
      %v1857 = vmax.f32 %v1291, 0.0
      %v1858 = vmax.f32 %v1296, 0.0
      %v1859 = vmax.f32 %v1299, 0.0
      %v1860 = vmax.f32 %v1304, 0.0
      %v1861 = vmax.f32 %v1307, 0.0
      %v1862 = vmax.f32 %v1312, 0.0
      %v1863 = vmax.f32 %v1315, 0.0
      %v1864 = vmax.f32 %v1320, 0.0
      %v1865 = vmax.f32 %v1323, 0.0
      %v1866 = vmax.f32 %v1328, 0.0
      %v1867 = vmax.f32 %v1331, 0.0
      %v1868 = vmax.f32 %v1336, 0.0
      %v1869 = vmax.f32 %v1339, 0.0
      %v1870 = vmax.f32 %v1344, 0.0
      %v1871 = vmax.f32 %v1347, 0.0
      %v1872 = vmax.f32 %v1352, 0.0
      %v1873 = vmax.f32 %v1355, 0.0
      %v1874 = vmax.f32 %v1360, 0.0
      %v1875 = vmax.f32 %v1363, 0.0
      %v1876 = vmax.f32 %v1368, 0.0
      %v1877 = vmax.f32 %v1371, 0.0
      %v1878 = vmax.f32 %v1376, 0.0
      %v1879 = vmax.f32 %v1379, 0.0
      %v1880 = vmax.f32 %v1384, 0.0
      %v1881 = vmax.f32 %v1387, 0.0
      %v1882 = vmax.f32 %v1392, 0.0
      %v1883 = vmax.f32 %v1395, 0.0
      %v1884 = vmax.f32 %v1400, 0.0
      %v1885 = vmax.f32 %v1403, 0.0
      %v1886 = vmax.f32 %v1408, 0.0
      %v1887 = vmax.f32 %v1411, 0.0
      %v1888 = vmax.f32 %v1416, 0.0
      %v1889 = vmax.f32 %v1419, 0.0
      %v1890 = vmax.f32 %v1424, 0.0
      %v1891 = vmax.f32 %v1427, 0.0
      %v1892 = vmax.f32 %v1432, 0.0
      %v1893 = vmax.f32 %v1435, 0.0
      %v1894 = vmax.f32 %v1440, 0.0
      %v1895 = vmax.f32 %v1443, 0.0
      %v1896 = vmax.f32 %v1448, 0.0
      %v1897 = vmax.f32 %v1451, 0.0
      %v1898 = vmax.f32 %v1456, 0.0
      %v1899 = vmax.f32 %v1459, 0.0
      %v1900 = vmax.f32 %v1464, 0.0
      %v1901 = vmax.f32 %v1467, 0.0
      %v1902 = vmax.f32 %v1472, 0.0
      %v1903 = vmax.f32 %v1475, 0.0
      %v1904 = vmax.f32 %v1480, 0.0
      %v1905 = vmax.f32 %v1483, 0.0
      %v1906 = vmax.f32 %v1488, 0.0
      %v1907 = vmax.f32 %v1491, 0.0
      %v1908 = vmax.f32 %v1496, 0.0
      %v1909 = vmax.f32 %v1499, 0.0
      %v1910 = vmax.f32 %v1504, 0.0
      %v1911 = vmax.f32 %v1507, 0.0
      %v1912 = vmax.f32 %v1512, 0.0
      %v1913 = vmax.f32 %v1515, 0.0
      %v1914 = vmax.f32 %v1520, 0.0
      %v1915 = vmax.f32 %v1523, 0.0
      %v1916 = vmax.f32 %v1528, 0.0
      %v1917 = vmax.f32 %v1531, 0.0
      %v1918 = vmax.f32 %v1536, 0.0
      %v1919 = vmax.f32 %v1539, 0.0
      %v1920 = vmax.f32 %v1544, 0.0
      %v1921 = vmax.f32 %v1547, 0.0
      %v1922 = vmax.f32 %v1552, 0.0
      %v1923 = vmax.f32 %v1555, 0.0
      %v1924 = vmax.f32 %v1560, 0.0
      %v1925 = vmax.f32 %v1563, 0.0
      %v1926 = vmax.f32 %v1568, 0.0
      %v1927 = vmax.f32 %v1571, 0.0
      %v1928 = vmax.f32 %v1576, 0.0
      %v1929 = vmax.f32 %v1579, 0.0
      %v1930 = vmax.f32 %v1584, 0.0
      %v1931 = vmax.f32 %v1587, 0.0
      %v1932 = vmax.f32 %v1592, 0.0
      %v1933 = vmax.f32 %v1595, 0.0
      %v1934 = vmax.f32 %v1600, 0.0
      %v1935 = vmax.f32 %v1603, 0.0
      %v1936 = vmax.f32 %v1608, 0.0
      %v1937 = vmax.f32 %v1611, 0.0
      %v1938 = vmax.f32 %v1616, 0.0
      %v1939 = vmax.f32 %v1619, 0.0
      %v1940 = vmax.f32 %v1624, 0.0
      %v1941 = vmax.f32 %v1627, 0.0
      %v1942 = vmax.f32 %v1632, 0.0
      %v1943 = vmax.f32 %v1635, 0.0
      %v1944 = vmax.f32 %v1640, 0.0
      %v1945 = vmax.f32 %v1643, 0.0
      %v1946 = vmax.f32 %v1648, 0.0
      %v1947 = vmax.f32 %v1651, 0.0
      %v1948 = vmax.f32 %v1656, 0.0
      %v1949 = vmax.f32 %v1659, 0.0
      %v1950 = vmax.f32 %v1664, 0.0
      %v1951 = vmax.f32 %v1667, 0.0
      %v1952 = vmax.f32 %v1672, 0.0
      %v1953 = vmax.f32 %v1675, 0.0
      %v1954 = vmax.f32 %v1680, 0.0
      %v1955 = vmax.f32 %v1683, 0.0
      %v1956 = vmax.f32 %v1688, 0.0
      %v1957 = vmax.f32 %v1691, 0.0
      %v1958 = vmax.f32 %v1696, 0.0
      %v1959 = vmax.f32 %v1699, 0.0
      %v1960 = vmax.f32 %v1704, 0.0
      %v1961 = vmax.f32 %v1707, 0.0
      %v1962 = vmax.f32 %v1712, 0.0
      %v1963 = vmax.f32 %v1715, 0.0
      %v1964 = vmax.f32 %v1720, 0.0
      %v1965 = vmax.f32 %v1723, 0.0
      %v1966 = vmax.f32 %v1728, 0.0
      %v1967 = vmax.f32 %v1731, 0.0
      %v1968 = vmax.f32 %v1736, 0.0
      %v1969 = vmax.f32 %v1739, 0.0
      %v1970 = vmax.f32 %v1744, 0.0
      %v1971 = vmax.f32 %v1747, 0.0
      %v1972 = vmax.f32 %v1752, 0.0
      %v1973 = vmax.f32 %v1755, 0.0
      %v1974 = vmax.f32 %v1760, 0.0
      %v1975 = vmax.f32 %v1763, 0.0
      %v1976 = vmax.f32 %v1768, 0.0
      %v1977 = vmax.f32 %v1771, 0.0
      %v1978 = vmax.f32 %v1776, 0.0
      %v1979 = vmax.f32 %v1779, 0.0
      %v1980 = vmax.f32 %v1784, 0.0
      %v1981 = vmax.f32 %v1787, 0.0
      %v1982 = vmax.f32 %v1792, 0.0
      %v1983 = vmax.f32 %v1795, 0.0
      %v1984 = vmax.f32 %v1800, 0.0
      %v1985 = vmax.f32 %v1803, 0.0
      %v1986 = vmax.f32 %v1808, 0.0
      %v1987 = vmax.f32 %v1811, 0.0
      %v1988 = vmax.f32 %v1816, 0.0
      %v1989 = vmax.f32 %v1819, 0.0
      %v1990 = vmax.f32 %v1824, 0.0
      %v1991 = vmax.f32 %v1827, 0.0
      %v1992 = vmax.f32 %v1832, 0.0
      %v1993 = vmax.f32 %v1835, 0.0
      %v1994 = vmax.f32 %v1840, 0.0
      %v1995 = vmax.f32 %v1843, 0.0
      %v1996 = vpack.c.bf16 %v1847, %v1846
      %v1997 = vpack.c.bf16 %v1849, %v1848
      %v1998 = vpack.c.bf16 %v1851, %v1850
      %v1999 = vpack.c.bf16 %v1853, %v1852
      %v2000 = vpack.c.bf16 %v1855, %v1854
      %v2001 = vpack.c.bf16 %v1857, %v1856
      %v2002 = vpack.c.bf16 %v1859, %v1858
      %v2003 = vpack.c.bf16 %v1861, %v1860
      %v2004 = vpack.c.bf16 %v1863, %v1862
      %v2005 = vpack.c.bf16 %v1865, %v1864
      %v2006 = vpack.c.bf16 %v1867, %v1866
      %v2007 = vpack.c.bf16 %v1869, %v1868
      %v2008 = vpack.c.bf16 %v1871, %v1870
      %v2009 = vpack.c.bf16 %v1873, %v1872
      %v2010 = vpack.c.bf16 %v1875, %v1874
      %v2011 = vpack.c.bf16 %v1877, %v1876
      %v2012 = vpack.c.bf16 %v1879, %v1878
      %v2013 = vpack.c.bf16 %v1881, %v1880
      %v2014 = vpack.c.bf16 %v1883, %v1882
      %v2015 = vpack.c.bf16 %v1885, %v1884
      %v2016 = vpack.c.bf16 %v1887, %v1886
      %v2017 = vpack.c.bf16 %v1889, %v1888
      %v2018 = vpack.c.bf16 %v1891, %v1890
      %v2019 = vpack.c.bf16 %v1893, %v1892
      %v2020 = vpack.c.bf16 %v1895, %v1894
      %v2021 = vpack.c.bf16 %v1897, %v1896
      %v2022 = vpack.c.bf16 %v1899, %v1898
      %v2023 = vpack.c.bf16 %v1901, %v1900
      %v2024 = vpack.c.bf16 %v1903, %v1902
      %v2025 = vpack.c.bf16 %v1905, %v1904
      %v2026 = vpack.c.bf16 %v1907, %v1906
      %v2027 = vpack.c.bf16 %v1909, %v1908
      %v2028 = vpack.c.bf16 %v1911, %v1910
      %v2029 = vpack.c.bf16 %v1913, %v1912
      %v2030 = vpack.c.bf16 %v1915, %v1914
      %v2031 = vpack.c.bf16 %v1917, %v1916
      %v2032 = vpack.c.bf16 %v1919, %v1918
      %v2033 = vpack.c.bf16 %v1921, %v1920
      %v2034 = vpack.c.bf16 %v1923, %v1922
      %v2035 = vpack.c.bf16 %v1925, %v1924
      %v2036 = vpack.c.bf16 %v1927, %v1926
      %v2037 = vpack.c.bf16 %v1929, %v1928
      %v2038 = vpack.c.bf16 %v1931, %v1930
      %v2039 = vpack.c.bf16 %v1933, %v1932
      %v2040 = vpack.c.bf16 %v1935, %v1934
      %v2041 = vpack.c.bf16 %v1937, %v1936
      %v2042 = vpack.c.bf16 %v1939, %v1938
      %v2043 = vpack.c.bf16 %v1941, %v1940
      %v2044 = vpack.c.bf16 %v1943, %v1942
      %v2045 = vpack.c.bf16 %v1945, %v1944
      %v2046 = vpack.c.bf16 %v1947, %v1946
      %v2047 = vpack.c.bf16 %v1949, %v1948
      %v2048 = vpack.c.bf16 %v1951, %v1950
      %v2049 = vpack.c.bf16 %v1953, %v1952
      %v2050 = vpack.c.bf16 %v1955, %v1954
      %v2051 = vpack.c.bf16 %v1957, %v1956
      %v2052 = vpack.c.bf16 %v1959, %v1958
      %v2053 = vpack.c.bf16 %v1961, %v1960
      %v2054 = vpack.c.bf16 %v1963, %v1962
      %v2055 = vpack.c.bf16 %v1965, %v1964
      %v2056 = vpack.c.bf16 %v1967, %v1966
      %v2057 = vpack.c.bf16 %v1969, %v1968
      %v2058 = vpack.c.bf16 %v1971, %v1970
      %v2059 = vpack.c.bf16 %v1973, %v1972
      %v2060 = vpack.c.bf16 %v1975, %v1974
      %v2061 = vpack.c.bf16 %v1977, %v1976
      %v2062 = vpack.c.bf16 %v1979, %v1978
      %v2063 = vpack.c.bf16 %v1981, %v1980
      %v2064 = vpack.c.bf16 %v1983, %v1982
      %v2065 = vpack.c.bf16 %v1985, %v1984
      %v2066 = vpack.c.bf16 %v1987, %v1986
      %v2067 = vpack.c.bf16 %v1989, %v1988
      %v2068 = vpack.c.bf16 %v1991, %v1990
      %v2069 = vpack.c.bf16 %v1993, %v1992
      %v2070 = vpack.c.bf16 %v1995, %v1994
      %v2146 = vunpack.c.l.b16 %v1996
      %v2147 = vunpack.c.h.b16 %v1996
      %v2148 = vunpack.c.l.b16 %v1997
      %v2149 = vunpack.c.h.b16 %v1997
      %v2150 = vunpack.c.l.b16 %v1998
      %v2151 = vunpack.c.h.b16 %v1998
      %v2152 = vunpack.c.l.b16 %v1999
      %v2153 = vunpack.c.h.b16 %v1999
      %v2154 = vunpack.c.l.b16 %v2000
      %v2155 = vunpack.c.h.b16 %v2000
      %v2156 = vunpack.c.l.b16 %v2001
      %v2157 = vunpack.c.h.b16 %v2001
      %v2158 = vunpack.c.l.b16 %v2002
      %v2159 = vunpack.c.h.b16 %v2002
      %v2160 = vunpack.c.l.b16 %v2003
      %v2161 = vunpack.c.h.b16 %v2003
      %v2162 = vunpack.c.l.b16 %v2004
      %v2163 = vunpack.c.h.b16 %v2004
      %v2164 = vunpack.c.l.b16 %v2005
      %v2165 = vunpack.c.h.b16 %v2005
      %v2166 = vunpack.c.l.b16 %v2006
      %v2167 = vunpack.c.h.b16 %v2006
      %v2168 = vunpack.c.l.b16 %v2007
      %v2169 = vunpack.c.h.b16 %v2007
      %v2170 = vunpack.c.l.b16 %v2008
      %v2171 = vunpack.c.h.b16 %v2008
      %v2172 = vunpack.c.l.b16 %v2009
      %v2173 = vunpack.c.h.b16 %v2009
      %v2174 = vunpack.c.l.b16 %v2010
      %v2175 = vunpack.c.h.b16 %v2010
      %v2176 = vunpack.c.l.b16 %v2011
      %v2177 = vunpack.c.h.b16 %v2011
      %v2178 = vunpack.c.l.b16 %v2012
      %v2179 = vunpack.c.h.b16 %v2012
      %v2180 = vunpack.c.l.b16 %v2013
      %v2181 = vunpack.c.h.b16 %v2013
      %v2182 = vunpack.c.l.b16 %v2014
      %v2183 = vunpack.c.h.b16 %v2014
      %v2184 = vunpack.c.l.b16 %v2015
      %v2185 = vunpack.c.h.b16 %v2015
      %v2186 = vunpack.c.l.b16 %v2016
      %v2187 = vunpack.c.h.b16 %v2016
      %v2188 = vunpack.c.l.b16 %v2017
      %v2189 = vunpack.c.h.b16 %v2017
      %v2190 = vunpack.c.l.b16 %v2018
      %v2191 = vunpack.c.h.b16 %v2018
      %v2192 = vunpack.c.l.b16 %v2019
      %v2193 = vunpack.c.h.b16 %v2019
      %v2194 = vunpack.c.l.b16 %v2020
      %v2195 = vunpack.c.h.b16 %v2020
      %v2196 = vunpack.c.l.b16 %v2021
      %v2197 = vunpack.c.h.b16 %v2021
      %v2198 = vunpack.c.l.b16 %v2022
      %v2199 = vunpack.c.h.b16 %v2022
      %v2200 = vunpack.c.l.b16 %v2023
      %v2201 = vunpack.c.h.b16 %v2023
      %v2202 = vunpack.c.l.b16 %v2024
      %v2203 = vunpack.c.h.b16 %v2024
      %v2204 = vunpack.c.l.b16 %v2025
      %v2205 = vunpack.c.h.b16 %v2025
      %v2206 = vunpack.c.l.b16 %v2026
      %v2207 = vunpack.c.h.b16 %v2026
      %v2208 = vunpack.c.l.b16 %v2027
      %v2209 = vunpack.c.h.b16 %v2027
      %v2210 = vunpack.c.l.b16 %v2028
      %v2211 = vunpack.c.h.b16 %v2028
      %v2212 = vunpack.c.l.b16 %v2029
      %v2213 = vunpack.c.h.b16 %v2029
      %v2214 = vunpack.c.l.b16 %v2030
      %v2215 = vunpack.c.h.b16 %v2030
      %v2216 = vunpack.c.l.b16 %v2031
      %v2217 = vunpack.c.h.b16 %v2031
      %v2218 = vunpack.c.l.b16 %v2032
      %v2219 = vunpack.c.h.b16 %v2032
      %v2220 = vunpack.c.l.b16 %v2033
      %v2221 = vunpack.c.h.b16 %v2033
      %v2222 = vunpack.c.l.b16 %v2034
      %v2223 = vunpack.c.h.b16 %v2034
      %v2224 = vunpack.c.l.b16 %v2035
      %v2225 = vunpack.c.h.b16 %v2035
      %v2226 = vunpack.c.l.b16 %v2036
      %v2227 = vunpack.c.h.b16 %v2036
      %v2228 = vunpack.c.l.b16 %v2037
      %v2229 = vunpack.c.h.b16 %v2037
      %v2230 = vunpack.c.l.b16 %v2038
      %v2231 = vunpack.c.h.b16 %v2038
      %v2232 = vunpack.c.l.b16 %v2039
      %v2233 = vunpack.c.h.b16 %v2039
      %v2234 = vunpack.c.l.b16 %v2040
      %v2235 = vunpack.c.h.b16 %v2040
      %v2236 = vunpack.c.l.b16 %v2041
      %v2237 = vunpack.c.h.b16 %v2041
      %v2238 = vunpack.c.l.b16 %v2042
      %v2239 = vunpack.c.h.b16 %v2042
      %v2240 = vunpack.c.l.b16 %v2043
      %v2241 = vunpack.c.h.b16 %v2043
      %v2242 = vunpack.c.l.b16 %v2044
      %v2243 = vunpack.c.h.b16 %v2044
      %v2244 = vunpack.c.l.b16 %v2045
      %v2245 = vunpack.c.h.b16 %v2045
      %v2246 = vunpack.c.l.b16 %v2046
      %v2247 = vunpack.c.h.b16 %v2046
      %v2248 = vunpack.c.l.b16 %v2047
      %v2249 = vunpack.c.h.b16 %v2047
      %v2250 = vunpack.c.l.b16 %v2048
      %v2251 = vunpack.c.h.b16 %v2048
      %v2252 = vunpack.c.l.b16 %v2049
      %v2253 = vunpack.c.h.b16 %v2049
      %v2254 = vunpack.c.l.b16 %v2050
      %v2255 = vunpack.c.h.b16 %v2050
      %v2256 = vunpack.c.l.b16 %v2051
      %v2257 = vunpack.c.h.b16 %v2051
      %v2258 = vunpack.c.l.b16 %v2052
      %v2259 = vunpack.c.h.b16 %v2052
      %v2260 = vunpack.c.l.b16 %v2053
      %v2261 = vunpack.c.h.b16 %v2053
      %v2262 = vunpack.c.l.b16 %v2054
      %v2263 = vunpack.c.h.b16 %v2054
      %v2264 = vunpack.c.l.b16 %v2055
      %v2265 = vunpack.c.h.b16 %v2055
      %v2266 = vunpack.c.l.b16 %v2056
      %v2267 = vunpack.c.h.b16 %v2056
      %v2268 = vunpack.c.l.b16 %v2057
      %v2269 = vunpack.c.h.b16 %v2057
      %v2270 = vunpack.c.l.b16 %v2058
      %v2271 = vunpack.c.h.b16 %v2058
      %v2272 = vunpack.c.l.b16 %v2059
      %v2273 = vunpack.c.h.b16 %v2059
      %v2274 = vunpack.c.l.b16 %v2060
      %v2275 = vunpack.c.h.b16 %v2060
      %v2276 = vunpack.c.l.b16 %v2061
      %v2277 = vunpack.c.h.b16 %v2061
      %v2278 = vunpack.c.l.b16 %v2062
      %v2279 = vunpack.c.h.b16 %v2062
      %v2280 = vunpack.c.l.b16 %v2063
      %v2281 = vunpack.c.h.b16 %v2063
      %v2282 = vunpack.c.l.b16 %v2064
      %v2283 = vunpack.c.h.b16 %v2064
      %v2284 = vunpack.c.l.b16 %v2065
      %v2285 = vunpack.c.h.b16 %v2065
      %v2286 = vunpack.c.l.b16 %v2066
      %v2287 = vunpack.c.h.b16 %v2066
      %v2288 = vunpack.c.l.b16 %v2067
      %v2289 = vunpack.c.h.b16 %v2067
      %v2290 = vunpack.c.l.b16 %v2068
      %v2291 = vunpack.c.h.b16 %v2068
      %v2292 = vunpack.c.l.b16 %v2069
      %v2293 = vunpack.c.h.b16 %v2069
      %v2294 = vunpack.c.l.b16 %v2070
      %v2295 = vunpack.c.h.b16 %v2070
      %v2296 = vpack.c.b16 %v2146, %v2146
      %v2297 = vpack.c.b16 %v2147, %v2147
      %v2298 = vpack.c.b16 %v2148, %v2148
      %v2299 = vpack.c.b16 %v2149, %v2149
      %v2300 = vpack.c.b16 %v2150, %v2150
      %v2301 = vpack.c.b16 %v2151, %v2151
      %v2302 = vpack.c.b16 %v2152, %v2152
      %v2303 = vpack.c.b16 %v2153, %v2153
      %v2304 = vpack.c.b16 %v2154, %v2154
      %v2305 = vpack.c.b16 %v2155, %v2155
      %v2306 = vpack.c.b16 %v2156, %v2156
      %v2307 = vpack.c.b16 %v2157, %v2157
      %v2308 = vpack.c.b16 %v2158, %v2158
      %v2309 = vpack.c.b16 %v2159, %v2159
      %v2310 = vpack.c.b16 %v2160, %v2160
      %v2311 = vpack.c.b16 %v2161, %v2161
      %v2312 = vpack.c.b16 %v2162, %v2162
      %v2313 = vpack.c.b16 %v2163, %v2163
      %v2314 = vpack.c.b16 %v2164, %v2164
      %v2315 = vpack.c.b16 %v2165, %v2165
      %v2316 = vpack.c.b16 %v2166, %v2166
      %v2317 = vpack.c.b16 %v2167, %v2167
      %v2318 = vpack.c.b16 %v2168, %v2168
      %v2319 = vpack.c.b16 %v2169, %v2169
      %v2320 = vpack.c.b16 %v2170, %v2170
      %v2321 = vpack.c.b16 %v2171, %v2171
      %v2322 = vpack.c.b16 %v2172, %v2172
      %v2323 = vpack.c.b16 %v2173, %v2173
      %v2324 = vpack.c.b16 %v2174, %v2174
      %v2325 = vpack.c.b16 %v2175, %v2175
      %v2326 = vpack.c.b16 %v2176, %v2176
      %v2327 = vpack.c.b16 %v2177, %v2177
      %v2328 = vpack.c.b16 %v2178, %v2178
      %v2329 = vpack.c.b16 %v2179, %v2179
      %v2330 = vpack.c.b16 %v2180, %v2180
      %v2331 = vpack.c.b16 %v2181, %v2181
      %v2332 = vpack.c.b16 %v2182, %v2182
      %v2333 = vpack.c.b16 %v2183, %v2183
      %v2334 = vpack.c.b16 %v2184, %v2184
      %v2335 = vpack.c.b16 %v2185, %v2185
      %v2336 = vpack.c.b16 %v2186, %v2186
      %v2337 = vpack.c.b16 %v2187, %v2187
      %v2338 = vpack.c.b16 %v2188, %v2188
      %v2339 = vpack.c.b16 %v2189, %v2189
      %v2340 = vpack.c.b16 %v2190, %v2190
      %v2341 = vpack.c.b16 %v2191, %v2191
      %v2342 = vpack.c.b16 %v2192, %v2192
      %v2343 = vpack.c.b16 %v2193, %v2193
      %v2344 = vpack.c.b16 %v2194, %v2194
      %v2345 = vpack.c.b16 %v2195, %v2195
      %v2346 = vpack.c.b16 %v2196, %v2196
      %v2347 = vpack.c.b16 %v2197, %v2197
      %v2348 = vpack.c.b16 %v2198, %v2198
      %v2349 = vpack.c.b16 %v2199, %v2199
      %v2350 = vpack.c.b16 %v2200, %v2200
      %v2351 = vpack.c.b16 %v2201, %v2201
      %v2352 = vpack.c.b16 %v2202, %v2202
      %v2353 = vpack.c.b16 %v2203, %v2203
      %v2354 = vpack.c.b16 %v2204, %v2204
      %v2355 = vpack.c.b16 %v2205, %v2205
      %v2356 = vpack.c.b16 %v2206, %v2206
      %v2357 = vpack.c.b16 %v2207, %v2207
      %v2358 = vpack.c.b16 %v2208, %v2208
      %v2359 = vpack.c.b16 %v2209, %v2209
      %v2360 = vpack.c.b16 %v2210, %v2210
      %v2361 = vpack.c.b16 %v2211, %v2211
      %v2362 = vpack.c.b16 %v2212, %v2212
      %v2363 = vpack.c.b16 %v2213, %v2213
      %v2364 = vpack.c.b16 %v2214, %v2214
      %v2365 = vpack.c.b16 %v2215, %v2215
      %v2366 = vpack.c.b16 %v2216, %v2216
      %v2367 = vpack.c.b16 %v2217, %v2217
      %v2368 = vpack.c.b16 %v2218, %v2218
      %v2369 = vpack.c.b16 %v2219, %v2219
      %v2370 = vpack.c.b16 %v2220, %v2220
      %v2371 = vpack.c.b16 %v2221, %v2221
      %v2372 = vpack.c.b16 %v2222, %v2222
      %v2373 = vpack.c.b16 %v2223, %v2223
      %v2374 = vpack.c.b16 %v2224, %v2224
      %v2375 = vpack.c.b16 %v2225, %v2225
      %v2376 = vpack.c.b16 %v2226, %v2226
      %v2377 = vpack.c.b16 %v2227, %v2227
      %v2378 = vpack.c.b16 %v2228, %v2228
      %v2379 = vpack.c.b16 %v2229, %v2229
      %v2380 = vpack.c.b16 %v2230, %v2230
      %v2381 = vpack.c.b16 %v2231, %v2231
      %v2382 = vpack.c.b16 %v2232, %v2232
      %v2383 = vpack.c.b16 %v2233, %v2233
      %v2384 = vpack.c.b16 %v2234, %v2234
      %v2385 = vpack.c.b16 %v2235, %v2235
      %v2386 = vpack.c.b16 %v2236, %v2236
      %v2387 = vpack.c.b16 %v2237, %v2237
      %v2388 = vpack.c.b16 %v2238, %v2238
      %v2389 = vpack.c.b16 %v2239, %v2239
      %v2390 = vpack.c.b16 %v2240, %v2240
      %v2391 = vpack.c.b16 %v2241, %v2241
      %v2392 = vpack.c.b16 %v2242, %v2242
      %v2393 = vpack.c.b16 %v2243, %v2243
      %v2394 = vpack.c.b16 %v2244, %v2244
      %v2395 = vpack.c.b16 %v2245, %v2245
      %v2396 = vpack.c.b16 %v2246, %v2246
      %v2397 = vpack.c.b16 %v2247, %v2247
      %v2398 = vpack.c.b16 %v2248, %v2248
      %v2399 = vpack.c.b16 %v2249, %v2249
      %v2400 = vpack.c.b16 %v2250, %v2250
      %v2401 = vpack.c.b16 %v2251, %v2251
      %v2402 = vpack.c.b16 %v2252, %v2252
      %v2403 = vpack.c.b16 %v2253, %v2253
      %v2404 = vpack.c.b16 %v2254, %v2254
      %v2405 = vpack.c.b16 %v2255, %v2255
      %v2406 = vpack.c.b16 %v2256, %v2256
      %v2407 = vpack.c.b16 %v2257, %v2257
      %v2408 = vpack.c.b16 %v2258, %v2258
      %v2409 = vpack.c.b16 %v2259, %v2259
      %v2410 = vpack.c.b16 %v2260, %v2260
      %v2411 = vpack.c.b16 %v2261, %v2261
      %v2412 = vpack.c.b16 %v2262, %v2262
      %v2413 = vpack.c.b16 %v2263, %v2263
      %v2414 = vpack.c.b16 %v2264, %v2264
      %v2415 = vpack.c.b16 %v2265, %v2265
      %v2416 = vpack.c.b16 %v2266, %v2266
      %v2417 = vpack.c.b16 %v2267, %v2267
      %v2418 = vpack.c.b16 %v2268, %v2268
      %v2419 = vpack.c.b16 %v2269, %v2269
      %v2420 = vpack.c.b16 %v2270, %v2270
      %v2421 = vpack.c.b16 %v2271, %v2271
      %v2422 = vpack.c.b16 %v2272, %v2272
      %v2423 = vpack.c.b16 %v2273, %v2273
      %v2424 = vpack.c.b16 %v2274, %v2274
      %v2425 = vpack.c.b16 %v2275, %v2275
      %v2426 = vpack.c.b16 %v2276, %v2276
      %v2427 = vpack.c.b16 %v2277, %v2277
      %v2428 = vpack.c.b16 %v2278, %v2278
      %v2429 = vpack.c.b16 %v2279, %v2279
      %v2430 = vpack.c.b16 %v2280, %v2280
      %v2431 = vpack.c.b16 %v2281, %v2281
      %v2432 = vpack.c.b16 %v2282, %v2282
      %v2433 = vpack.c.b16 %v2283, %v2283
      %v2434 = vpack.c.b16 %v2284, %v2284
      %v2435 = vpack.c.b16 %v2285, %v2285
      %v2436 = vpack.c.b16 %v2286, %v2286
      %v2437 = vpack.c.b16 %v2287, %v2287
      %v2438 = vpack.c.b16 %v2288, %v2288
      %v2439 = vpack.c.b16 %v2289, %v2289
      %v2440 = vpack.c.b16 %v2290, %v2290
      %v2441 = vpack.c.b16 %v2291, %v2291
      %v2442 = vpack.c.b16 %v2292, %v2292
      %v2443 = vpack.c.b16 %v2293, %v2293
      %v2444 = vpack.c.b16 %v2294, %v2294
      %v2445 = vpack.c.b16 %v2295, %v2295
      %vm2596 = vcmask 257024
      %2597 = vst.msk [vmem:[%s175] sm:$0xf] %vm2596, %v2296
      %2598 = vst.msk [vmem:[%s175 + $0x4] sm:$0xf] %vm2596, %v2297
      %2599 = vst.msk [vmem:[%s175 + $0x8] sm:$0xf] %vm2596, %v2298
      %2600 = vst.msk [vmem:[%s175 + $0xc] sm:$0xf] %vm2596, %v2299
      %2601 = vst.msk [vmem:[%s175 + $0x10] sm:$0xf] %vm2596, %v2300
      %2602 = vst.msk [vmem:[%s175 + $0x14] sm:$0xf] %vm2596, %v2301
      %2603 = vst.msk [vmem:[%s175 + $0x18] sm:$0xf] %vm2596, %v2302
      %2604 = vst.msk [vmem:[%s175 + $0x1c] sm:$0xf] %vm2596, %v2303
      %2605 = vst.msk [vmem:[%s175 + $0x20] sm:$0xf] %vm2596, %v2304
      %2606 = vst.msk [vmem:[%s175 + $0x24] sm:$0xf] %vm2596, %v2305
      %2607 = vst.msk [vmem:[%s175 + $0x28] sm:$0xf] %vm2596, %v2306
      %2608 = vst.msk [vmem:[%s175 + $0x2c] sm:$0xf] %vm2596, %v2307
      %2609 = vst.msk [vmem:[%s175 + $0x30] sm:$0xf] %vm2596, %v2308
      %2610 = vst.msk [vmem:[%s175 + $0x34] sm:$0xf] %vm2596, %v2309
      %2611 = vst.msk [vmem:[%s175 + $0x38] sm:$0xf] %vm2596, %v2310
      %2612 = vst.msk [vmem:[%s175 + $0x3c] sm:$0xf] %vm2596, %v2311
      %2613 = vst.msk [vmem:[%s175 + $0x40] sm:$0xf] %vm2596, %v2312
      %2614 = vst.msk [vmem:[%s175 + $0x44] sm:$0xf] %vm2596, %v2313
      %2615 = vst.msk [vmem:[%s175 + $0x48] sm:$0xf] %vm2596, %v2314
      %2616 = vst.msk [vmem:[%s175 + $0x4c] sm:$0xf] %vm2596, %v2315
      %2617 = vst.msk [vmem:[%s175 + $0x50] sm:$0xf] %vm2596, %v2316
      %2618 = vst.msk [vmem:[%s175 + $0x54] sm:$0xf] %vm2596, %v2317
      %2619 = vst.msk [vmem:[%s175 + $0x58] sm:$0xf] %vm2596, %v2318
      %2620 = vst.msk [vmem:[%s175 + $0x5c] sm:$0xf] %vm2596, %v2319
      %2621 = vst.msk [vmem:[%s175 + $0x60] sm:$0xf] %vm2596, %v2320
      %2622 = vst.msk [vmem:[%s175 + $0x64] sm:$0xf] %vm2596, %v2321
      %2623 = vst.msk [vmem:[%s175 + $0x68] sm:$0xf] %vm2596, %v2322
      %2624 = vst.msk [vmem:[%s175 + $0x6c] sm:$0xf] %vm2596, %v2323
      %2625 = vst.msk [vmem:[%s175 + $0x70] sm:$0xf] %vm2596, %v2324
      %2626 = vst.msk [vmem:[%s175 + $0x74] sm:$0xf] %vm2596, %v2325
      %2627 = vst.msk [vmem:[%s175 + $0x78] sm:$0xf] %vm2596, %v2326
      %2628 = vst.msk [vmem:[%s175 + $0x7c] sm:$0xf] %vm2596, %v2327
      %2629 = vst.msk [vmem:[%s175 + $0x80] sm:$0xf] %vm2596, %v2328
      %2630 = vst.msk [vmem:[%s175 + $0x84] sm:$0xf] %vm2596, %v2329
      %2631 = vst.msk [vmem:[%s175 + $0x88] sm:$0xf] %vm2596, %v2330
      %2632 = vst.msk [vmem:[%s175 + $0x8c] sm:$0xf] %vm2596, %v2331
      %2633 = vst.msk [vmem:[%s175 + $0x90] sm:$0xf] %vm2596, %v2332
      %2634 = vst.msk [vmem:[%s175 + $0x94] sm:$0xf] %vm2596, %v2333
      %2635 = vst.msk [vmem:[%s175 + $0x98] sm:$0xf] %vm2596, %v2334
      %2636 = vst.msk [vmem:[%s175 + $0x9c] sm:$0xf] %vm2596, %v2335
      %2637 = vst.msk [vmem:[%s175 + $0xa0] sm:$0xf] %vm2596, %v2336
      %2638 = vst.msk [vmem:[%s175 + $0xa4] sm:$0xf] %vm2596, %v2337
      %2639 = vst.msk [vmem:[%s175 + $0xa8] sm:$0xf] %vm2596, %v2338
      %2640 = vst.msk [vmem:[%s175 + $0xac] sm:$0xf] %vm2596, %v2339
      %2641 = vst.msk [vmem:[%s175 + $0xb0] sm:$0xf] %vm2596, %v2340
      %2642 = vst.msk [vmem:[%s175 + $0xb4] sm:$0xf] %vm2596, %v2341
      %2643 = vst.msk [vmem:[%s175 + $0xb8] sm:$0xf] %vm2596, %v2342
      %2644 = vst.msk [vmem:[%s175 + $0xbc] sm:$0xf] %vm2596, %v2343
      %2645 = vst.msk [vmem:[%s175 + $0xc0] sm:$0xf] %vm2596, %v2344
      %2646 = vst.msk [vmem:[%s175 + $0xc4] sm:$0xf] %vm2596, %v2345
      %2647 = vst.msk [vmem:[%s175 + $0xc8] sm:$0xf] %vm2596, %v2346
      %2648 = vst.msk [vmem:[%s175 + $0xcc] sm:$0xf] %vm2596, %v2347
      %2649 = vst.msk [vmem:[%s175 + $0xd0] sm:$0xf] %vm2596, %v2348
      %2650 = vst.msk [vmem:[%s175 + $0xd4] sm:$0xf] %vm2596, %v2349
      %2651 = vst.msk [vmem:[%s175 + $0xd8] sm:$0xf] %vm2596, %v2350
      %2652 = vst.msk [vmem:[%s175 + $0xdc] sm:$0xf] %vm2596, %v2351
      %2653 = vst.msk [vmem:[%s175 + $0xe0] sm:$0xf] %vm2596, %v2352
      %2654 = vst.msk [vmem:[%s175 + $0xe4] sm:$0xf] %vm2596, %v2353
      %2655 = vst.msk [vmem:[%s175 + $0xe8] sm:$0xf] %vm2596, %v2354
      %2656 = vst.msk [vmem:[%s175 + $0xec] sm:$0xf] %vm2596, %v2355
      %2657 = vst.msk [vmem:[%s175 + $0xf0] sm:$0xf] %vm2596, %v2356
      %2658 = vst.msk [vmem:[%s175 + $0xf4] sm:$0xf] %vm2596, %v2357
      %2659 = vst.msk [vmem:[%s175 + $0xf8] sm:$0xf] %vm2596, %v2358
      %2660 = vst.msk [vmem:[%s175 + $0xfc] sm:$0xf] %vm2596, %v2359
      %2661 = vst.msk [vmem:[%s175 + $0x100] sm:$0xf] %vm2596, %v2360
      %2662 = vst.msk [vmem:[%s175 + $0x104] sm:$0xf] %vm2596, %v2361
      %2663 = vst.msk [vmem:[%s175 + $0x108] sm:$0xf] %vm2596, %v2362
      %2664 = vst.msk [vmem:[%s175 + $0x10c] sm:$0xf] %vm2596, %v2363
      %2665 = vst.msk [vmem:[%s175 + $0x110] sm:$0xf] %vm2596, %v2364
      %2666 = vst.msk [vmem:[%s175 + $0x114] sm:$0xf] %vm2596, %v2365
      %2667 = vst.msk [vmem:[%s175 + $0x118] sm:$0xf] %vm2596, %v2366
      %2668 = vst.msk [vmem:[%s175 + $0x11c] sm:$0xf] %vm2596, %v2367
      %2669 = vst.msk [vmem:[%s175 + $0x120] sm:$0xf] %vm2596, %v2368
      %2670 = vst.msk [vmem:[%s175 + $0x124] sm:$0xf] %vm2596, %v2369
      %2671 = vst.msk [vmem:[%s175 + $0x128] sm:$0xf] %vm2596, %v2370
      %2672 = vst.msk [vmem:[%s175 + $0x12c] sm:$0xf] %vm2596, %v2371
      %2673 = vst.msk [vmem:[%s175 + $0x130] sm:$0xf] %vm2596, %v2372
      %2674 = vst.msk [vmem:[%s175 + $0x134] sm:$0xf] %vm2596, %v2373
      %2675 = vst.msk [vmem:[%s175 + $0x138] sm:$0xf] %vm2596, %v2374
      %2676 = vst.msk [vmem:[%s175 + $0x13c] sm:$0xf] %vm2596, %v2375
      %2677 = vst.msk [vmem:[%s175 + $0x140] sm:$0xf] %vm2596, %v2376
      %2678 = vst.msk [vmem:[%s175 + $0x144] sm:$0xf] %vm2596, %v2377
      %2679 = vst.msk [vmem:[%s175 + $0x148] sm:$0xf] %vm2596, %v2378
      %2680 = vst.msk [vmem:[%s175 + $0x14c] sm:$0xf] %vm2596, %v2379
      %2681 = vst.msk [vmem:[%s175 + $0x150] sm:$0xf] %vm2596, %v2380
      %2682 = vst.msk [vmem:[%s175 + $0x154] sm:$0xf] %vm2596, %v2381
      %2683 = vst.msk [vmem:[%s175 + $0x158] sm:$0xf] %vm2596, %v2382
      %2684 = vst.msk [vmem:[%s175 + $0x15c] sm:$0xf] %vm2596, %v2383
      %2685 = vst.msk [vmem:[%s175 + $0x160] sm:$0xf] %vm2596, %v2384
      %2686 = vst.msk [vmem:[%s175 + $0x164] sm:$0xf] %vm2596, %v2385
      %2687 = vst.msk [vmem:[%s175 + $0x168] sm:$0xf] %vm2596, %v2386
      %2688 = vst.msk [vmem:[%s175 + $0x16c] sm:$0xf] %vm2596, %v2387
      %2689 = vst.msk [vmem:[%s175 + $0x170] sm:$0xf] %vm2596, %v2388
      %2690 = vst.msk [vmem:[%s175 + $0x174] sm:$0xf] %vm2596, %v2389
      %2691 = vst.msk [vmem:[%s175 + $0x178] sm:$0xf] %vm2596, %v2390
      %2692 = vst.msk [vmem:[%s175 + $0x17c] sm:$0xf] %vm2596, %v2391
      %2693 = vst.msk [vmem:[%s175 + $0x180] sm:$0xf] %vm2596, %v2392
      %2694 = vst.msk [vmem:[%s175 + $0x184] sm:$0xf] %vm2596, %v2393
      %2695 = vst.msk [vmem:[%s175 + $0x188] sm:$0xf] %vm2596, %v2394
      %2696 = vst.msk [vmem:[%s175 + $0x18c] sm:$0xf] %vm2596, %v2395
      %2697 = vst.msk [vmem:[%s175 + $0x190] sm:$0xf] %vm2596, %v2396
      %2698 = vst.msk [vmem:[%s175 + $0x194] sm:$0xf] %vm2596, %v2397
      %2699 = vst.msk [vmem:[%s175 + $0x198] sm:$0xf] %vm2596, %v2398
      %2700 = vst.msk [vmem:[%s175 + $0x19c] sm:$0xf] %vm2596, %v2399
      %2701 = vst.msk [vmem:[%s175 + $0x1a0] sm:$0xf] %vm2596, %v2400
      %2702 = vst.msk [vmem:[%s175 + $0x1a4] sm:$0xf] %vm2596, %v2401
      %2703 = vst.msk [vmem:[%s175 + $0x1a8] sm:$0xf] %vm2596, %v2402
      %2704 = vst.msk [vmem:[%s175 + $0x1ac] sm:$0xf] %vm2596, %v2403
      %2705 = vst.msk [vmem:[%s175 + $0x1b0] sm:$0xf] %vm2596, %v2404
      %2706 = vst.msk [vmem:[%s175 + $0x1b4] sm:$0xf] %vm2596, %v2405
      %2707 = vst.msk [vmem:[%s175 + $0x1b8] sm:$0xf] %vm2596, %v2406
      %2708 = vst.msk [vmem:[%s175 + $0x1bc] sm:$0xf] %vm2596, %v2407
      %2709 = vst.msk [vmem:[%s175 + $0x1c0] sm:$0xf] %vm2596, %v2408
      %2710 = vst.msk [vmem:[%s175 + $0x1c4] sm:$0xf] %vm2596, %v2409
      %2711 = vst.msk [vmem:[%s175 + $0x1c8] sm:$0xf] %vm2596, %v2410
      %2712 = vst.msk [vmem:[%s175 + $0x1cc] sm:$0xf] %vm2596, %v2411
      %2713 = vst.msk [vmem:[%s175 + $0x1d0] sm:$0xf] %vm2596, %v2412
      %2714 = vst.msk [vmem:[%s175 + $0x1d4] sm:$0xf] %vm2596, %v2413
      %2715 = vst.msk [vmem:[%s175 + $0x1d8] sm:$0xf] %vm2596, %v2414
      %2716 = vst.msk [vmem:[%s175 + $0x1dc] sm:$0xf] %vm2596, %v2415
      %2717 = vst.msk [vmem:[%s175 + $0x1e0] sm:$0xf] %vm2596, %v2416
      %2718 = vst.msk [vmem:[%s175 + $0x1e4] sm:$0xf] %vm2596, %v2417
      %2719 = vst.msk [vmem:[%s175 + $0x1e8] sm:$0xf] %vm2596, %v2418
      %2720 = vst.msk [vmem:[%s175 + $0x1ec] sm:$0xf] %vm2596, %v2419
      %2721 = vst.msk [vmem:[%s175 + $0x1f0] sm:$0xf] %vm2596, %v2420
      %2722 = vst.msk [vmem:[%s175 + $0x1f4] sm:$0xf] %vm2596, %v2421
      %2723 = vst.msk [vmem:[%s175 + $0x1f8] sm:$0xf] %vm2596, %v2422
      %2724 = vst.msk [vmem:[%s175 + $0x1fc] sm:$0xf] %vm2596, %v2423
      %2725 = vst.msk [vmem:[%s175 + $0x200] sm:$0xf] %vm2596, %v2424
      %2726 = vst.msk [vmem:[%s175 + $0x204] sm:$0xf] %vm2596, %v2425
      %2727 = vst.msk [vmem:[%s175 + $0x208] sm:$0xf] %vm2596, %v2426
      %2728 = vst.msk [vmem:[%s175 + $0x20c] sm:$0xf] %vm2596, %v2427
      %2729 = vst.msk [vmem:[%s175 + $0x210] sm:$0xf] %vm2596, %v2428
      %2730 = vst.msk [vmem:[%s175 + $0x214] sm:$0xf] %vm2596, %v2429
      %2731 = vst.msk [vmem:[%s175 + $0x218] sm:$0xf] %vm2596, %v2430
      %2732 = vst.msk [vmem:[%s175 + $0x21c] sm:$0xf] %vm2596, %v2431
      %2733 = vst.msk [vmem:[%s175 + $0x220] sm:$0xf] %vm2596, %v2432
      %2734 = vst.msk [vmem:[%s175 + $0x224] sm:$0xf] %vm2596, %v2433
      %2735 = vst.msk [vmem:[%s175 + $0x228] sm:$0xf] %vm2596, %v2434
      %2736 = vst.msk [vmem:[%s175 + $0x22c] sm:$0xf] %vm2596, %v2435
      %2737 = vst.msk [vmem:[%s175 + $0x230] sm:$0xf] %vm2596, %v2436
      %2738 = vst.msk [vmem:[%s175 + $0x234] sm:$0xf] %vm2596, %v2437
      %2739 = vst.msk [vmem:[%s175 + $0x238] sm:$0xf] %vm2596, %v2438
      %2740 = vst.msk [vmem:[%s175 + $0x23c] sm:$0xf] %vm2596, %v2439
      %2741 = vst.msk [vmem:[%s175 + $0x240] sm:$0xf] %vm2596, %v2440
      %2742 = vst.msk [vmem:[%s175 + $0x244] sm:$0xf] %vm2596, %v2441
      %2743 = vst.msk [vmem:[%s175 + $0x248] sm:$0xf] %vm2596, %v2442
      %2744 = vst.msk [vmem:[%s175 + $0x24c] sm:$0xf] %vm2596, %v2443
      %2745 = vst.msk [vmem:[%s175 + $0x250] sm:$0xf] %vm2596, %v2444
      %2746 = vst.msk [vmem:[%s175 + $0x254] sm:$0xf] %vm2596, %v2445
      %s2747 = smul.u32 150, %s14
      %p2748 = scmp.lt.s32.totalorder %s2747, 299
      %s2749 = scalar_select %p2748, %s2747, 299
      %s2750 = smul.addr %s2749, 4
      %s2751 = scalar_lea.vmem %s3, %s2750
      // Predicated region
      $region33: #{network_forward.4} parent=31 // pred_check
        %p2752 = pneg %p100
      $region34: #{network_forward.4} parent=31 // pred_check_branch
        %2754 = sbr.rel (%p2752) target = $region36
      $region35: #{network_forward.4} parent=31 // pred_region
        %s2755 = smul.u32 150, %s14
      $region36: #{network_forward.4} parent=31 // pred_fallthru
        _
    $region32: #{network_forward.4} parent=5 // pred_fallthru
      _
    %p2756 = scmp.le.s32.totalorder 2, %s9
    // Predicated region
    $region37: #{network_forward.4} parent=5 // pred_check
      %p2757 = pneg %p2756
    $region38: #{network_forward.4} parent=5 // pred_check_branch
      %2759 = sbr.rel (%p2757) target = $region40
    $region39: #{network_forward.4} parent=5 // pred_region
      %s2760 = ssub.s32 %s9, 2
      // Predicated region
      $region41: #{network_forward.4} parent=39 // pred_check
        %p2761 = pneg %p106
      $region42: #{network_forward.4} parent=39 // pred_check_branch
        %2763 = sbr.rel (%p2761) target = $region44
      $region43: #{network_forward.4} parent=39 // pred_region
        %s2764 = smul.u32 150, %s15
        %p2765 = scmp.lt.s32.totalorder %s2764, 299
        %s2766 = scalar_select %p2765, %s2764, 299
        %s2767 = smul.addr %s2766, 4
        %s2768 = scalar_lea.vmem %s3, %s2767
      $region44: #{network_forward.4} parent=39 // pred_fallthru
        _
    $region40: #{network_forward.4} parent=5 // pred_fallthru
      _
  $region6: #{network_forward.4} parent=0 // loop_footer
    %s13 = sadd.s32 1, %s9
  $region7: #{network_forward.4} parent=0 // loop_footer_branch
    %8 = sbr.rel target = $region3
  $region8: #{network_forward.4} parent=0 // loop_exit
    _

// kernel: network_forward.5
$region0: #{network_forward.5}
  #allocation0 [shape = 'u32[]', space=smem, size = 0x4, offset = 0x4, fixed_abs, tag = 'smem constant byte address 0x4 - core index']
  #allocation1 [shape = 'u32[144,128]{1,0:T(1,128)}', space=vmem, size = 0x12000, scoped, tag = 'internal scratch']
  %s0 = inlined_call_operand.vmem [shape: bf16[486,512], index: 0, kind: input, shape index: {}]
  %s1 = inlined_call_operand.vmem [shape: bf16[512,64], index: 1, kind: input, shape index: {}]
  %s2 = inlined_call_operand.vmem [shape: f32[1,64], index: 2, kind: input, shape index: {}]
  %s3 = inlined_call_operand.vmem [shape: bf16[486,64], index: 3, kind: output, shape index: {}]
  %s4 = sld [smem:[#allocation0]]
  $region89: #{network_forward.5} parent=0
    _
  %s6 = ssub.s32 1, %s4
  %s7 = scalar_select 0, %s6, %s4
  $region1: #{network_forward.5} parent=0
    #allocation2 [shape = 'u8[131072]{0}', space=vmem, size = 0x20000, scoped, tag = 'output window, operand 0']
    loop: start=0, step=1, limit=4
    $region2: #{network_forward.5} parent=1 // loop_pre_header
      _
    $region3: #{network_forward.5} parent=1 // loop_header
      %s9 = sphi 0, %s13
      %p10 = scmp.ge.s32.totalorder %s9, 4
      %s19 = sphi 0, %s21
      %s22 = sphi 0, %s19
      %s23 = sphi 0, %s22
      %s39 = sphi 0, %s23
      %s43 = sphi 0, %s43
      %s45 = sphi 0, %s43
      %s46 = sphi 0, %s45
      %s60 = sphi 0, %s46
      %s64 = sphi 0, %s64
      %s66 = sphi 0, %s64
      %s67 = sphi 0, %s66
      %s81 = sphi 0, %s67
      %s87 = sphi 0, %s89
      %s90 = sphi 0, %s87
      %s91 = sphi 0, %s90
      %s107 = sphi 0, %s91
    $region4: #{network_forward.5} parent=1 // loop_header_branch
      %12 = sbr.rel (%p10) target = $region8
    $region5: #{network_forward.5} parent=1 // loop_body
      %s14 = ssub.s32 %s9, 1
      %s15 = ssub.s32 %s9, 2
      %s16 = sadd.s32 %s9, 1
      %s17 = ssub.s32 %s9, %s16
      %p18 = scmp.eq.s32.totalorder %s17, 0
      %s20 = sadd.s32 %s19, 1
      %s21 = scalar_select %p18, %s19, %s20
      %p24 = pneg %p18
      %p25 = scmp.eq.s32.totalorder %s9, 1
      %p26 = por %p24, %p25
      %p27 = scmp.ne.s32.totalorder %s19, %s22
      %p28 = scmp.eq.s32.totalorder %s9, 0
      %p29 = por %p27, %p28
      %p30 = scmp.ne.s32.totalorder %s19, %s22
      %p31 = scmp.eq.s32.totalorder %s14, 1
      %p32 = por %p30, %p31
      %p33 = scmp.ne.s32.totalorder %s22, %s23
      %p34 = scmp.eq.s32.totalorder %s14, 0
      %p35 = por %p33, %p34
      %p36 = scmp.ne.s32.totalorder %s22, %s23
      %p37 = scmp.eq.s32.totalorder %s15, 1
      %p38 = por %p36, %p37
      %p40 = scmp.ne.s32.totalorder %s23, %s39
      %p41 = scmp.eq.s32.totalorder %s15, 0
      %p42 = por %p40, %p41
      %s44 = sadd.s32 %s43, 1
      %p47 = scmp.eq.s32.totalorder %s9, 1
      %p48 = scmp.ne.s32.totalorder %s43, %s45
      %p49 = scmp.eq.s32.totalorder %s9, 0
      %p50 = por %p48, %p49
      %p51 = scmp.ne.s32.totalorder %s43, %s45
      %p52 = scmp.eq.s32.totalorder %s14, 1
      %p53 = por %p51, %p52
      %p54 = scmp.ne.s32.totalorder %s45, %s46
      %p55 = scmp.eq.s32.totalorder %s14, 0
      %p56 = por %p54, %p55
      %p57 = scmp.ne.s32.totalorder %s45, %s46
      %p58 = scmp.eq.s32.totalorder %s15, 1
      %p59 = por %p57, %p58
      %p61 = scmp.ne.s32.totalorder %s46, %s60
      %p62 = scmp.eq.s32.totalorder %s15, 0
      %p63 = por %p61, %p62
      %s65 = sadd.s32 %s64, 1
      %p68 = scmp.eq.s32.totalorder %s9, 1
      %p69 = scmp.ne.s32.totalorder %s64, %s66
      %p70 = scmp.eq.s32.totalorder %s9, 0
      %p71 = por %p69, %p70
      %p72 = scmp.ne.s32.totalorder %s64, %s66
      %p73 = scmp.eq.s32.totalorder %s14, 1
      %p74 = por %p72, %p73
      %p75 = scmp.ne.s32.totalorder %s66, %s67
      %p76 = scmp.eq.s32.totalorder %s14, 0
      %p77 = por %p75, %p76
      %p78 = scmp.ne.s32.totalorder %s66, %s67
      %p79 = scmp.eq.s32.totalorder %s15, 1
      %p80 = por %p78, %p79
      %p82 = scmp.ne.s32.totalorder %s67, %s81
      %p83 = scmp.eq.s32.totalorder %s15, 0
      %p84 = por %p82, %p83
      %s85 = ssub.s32 %s9, %s16
      %p86 = scmp.eq.s32.totalorder %s85, 0
      %s88 = sadd.s32 %s87, 1
      %s89 = scalar_select %p86, %s87, %s88
      %p92 = pneg %p86
      %p93 = scmp.eq.s32.totalorder %s9, 1
      %p94 = por %p92, %p93
      %p95 = scmp.ne.s32.totalorder %s87, %s90
      %p96 = scmp.eq.s32.totalorder %s9, 0
      %p97 = por %p95, %p96
      %p98 = scmp.ne.s32.totalorder %s87, %s90
      %p99 = scmp.eq.s32.totalorder %s14, 1
      %p100 = por %p98, %p99
      %p101 = scmp.ne.s32.totalorder %s90, %s91
      %p102 = scmp.eq.s32.totalorder %s14, 0
      %p103 = por %p101, %p102
      %p104 = scmp.ne.s32.totalorder %s90, %s91
      %p105 = scmp.eq.s32.totalorder %s15, 1
      %p106 = por %p104, %p105
      %p108 = scmp.ne.s32.totalorder %s91, %s107
      %p109 = scmp.eq.s32.totalorder %s15, 0
      %p110 = por %p108, %p109
      %p111 = scmp.le.s32.totalorder 1, %s9
      %p112 = scmp.lt.s32.totalorder %s9, 3
      %p113 = pnand %p111, %p112
      %p114 = pneg %p113
      // Predicated region
      $region9: #{network_forward.5} parent=5 // pred_check
        _
      $region10: #{network_forward.5} parent=5 // pred_check_branch
        %116 = sbr.rel (%p113) target = $region12
      $region11: #{network_forward.5} parent=5 // pred_region
        %s117 = ssub.s32 %s9, 1
        // Predicated region
        $region13: #{network_forward.5} parent=11 // pred_check
          %p118 = pneg %p56
        $region14: #{network_forward.5} parent=11 // pred_check_branch
          %120 = sbr.rel (%p118) target = $region16
        $region15: #{network_forward.5} parent=11 // pred_region
          _
        $region16: #{network_forward.5} parent=11 // pred_fallthru
          _
        // Predicated region
        $region17: #{network_forward.5} parent=11 // pred_check
          %p121 = pneg %p77
        $region18: #{network_forward.5} parent=11 // pred_check_branch
          %123 = sbr.rel (%p121) target = $region20
        $region19: #{network_forward.5} parent=11 // pred_region
          _
        $region20: #{network_forward.5} parent=11 // pred_fallthru
          _
      $region12: #{network_forward.5} parent=5 // pred_fallthru
        _
      %p124 = scmp.lt.s32.totalorder %s9, 2
      // Predicated region
      $region21: #{network_forward.5} parent=5 // pred_check
        %p125 = pneg %p124
      $region22: #{network_forward.5} parent=5 // pred_check_branch
        %127 = sbr.rel (%p125) target = $region24
      $region23: #{network_forward.5} parent=5 // pred_region
        // Predicated region
        $region25: #{network_forward.5} parent=23 // pred_check
          %p128 = pneg %p29
        $region26: #{network_forward.5} parent=23 // pred_check_branch
          %130 = sbr.rel (%p128) target = $region28
        $region27: #{network_forward.5} parent=23 // pred_region
          %s131 = smul.u32 32, %s9
          %s132 = ssub.s32 61, %s131
          %p133 = scmp.lt.s32.totalorder %s132, 32
          %s134 = scalar_select %p133, %s132, 32
          %s135 = smul.u32 64, %s134
          %s136 = smul.u32 %s135, 4
          %p137 = scmp.lt.s32.totalorder %s131, 60
          %s138 = scalar_select %p137, %s131, 60
          %s139 = smul.addr %s138, 4
          %s140 = smul.addr %s139, 4
          %s141 = scalar_lea.vmem %s0, %s140
          %s142 = smul.u32 32, %s9
          %s143 = ssub.s32 61, %s142
          %p144 = scmp.lt.s32.totalorder %s143, 32
          %s145 = scalar_select %p144, %s143, 32
          %s146 = smul.u32 64, %s145
          %s147 = smul.u32 %s146, 4
        $region28: #{network_forward.5} parent=23 // pred_fallthru
          _
      $region24: #{network_forward.5} parent=5 // pred_fallthru
        _
      %p148 = scmp.le.s32.totalorder 1, %s9
      %p149 = scmp.lt.s32.totalorder %s9, 3
      %p150 = pnand %p148, %p149
      %p151 = pneg %p150
      // Predicated region
      $region29: #{network_forward.5} parent=5 // pred_check
        _
      $region30: #{network_forward.5} parent=5 // pred_check_branch
        %153 = sbr.rel (%p150) target = $region32
      $region31: #{network_forward.5} parent=5 // pred_region
        %s154 = ssub.s32 %s9, 1
        %s155 = smul.u32 32, %s14
        %s156 = ssub.s32 61, %s155
        %p157 = scmp.lt.s32.totalorder %s156, 32
        %s158 = scalar_select %p157, %s156, 32
        %s159 = smul.u32 64, %s158
        %s160 = smul.u32 %s159, 4
        %p161 = scmp.lt.s32.totalorder %s155, 60
        %s162 = scalar_select %p161, %s155, 60
        %s163 = smul.addr %s162, 4
        %s164 = smul.addr %s163, 4
        %s165 = scalar_lea.vmem %s0, %s164
        %p166 = pneg %p35
        %p167 = pneg %p32
        %p168 = pneg %p56
        %p169 = pneg %p53
        %p170 = pneg %p77
        %p171 = pneg %p74
        %p172 = pneg %p103
        %p173 = pneg %p100
        %s174 = sand.u32 %s90, 1
        %s175 = sand.u32 %s90, 1
        %s176 = smul.addr %s175, 128
        %s177 = scalar_lea.vmem [#allocation2], %s176
        %s178 = smul.u32 32, %s14
        %s179 = ssub.s32 61, %s178
        %p180 = scmp.lt.s32.totalorder %s179, 32
        %s181 = scalar_select %p180, %s179, 32
        %s182 = smul.u32 64, %s181
        %s183 = smul.u32 %s182, 4
        %p184 = scmp.lt.s32.totalorder %s178, 60
        %s185 = scalar_select %p184, %s178, 60
        %s186 = smul.addr %s185, 4
        %s187 = smul.addr %s186, 4
        %s188 = scalar_lea.vmem %s0, %s187
        %s189 = smul.u32 32, %s14
        %s190 = ssub.s32 61, %s189
        %p191 = scmp.lt.s32.totalorder %s190, 32
        %s192 = scalar_select %p191, %s190, 32
        %s193 = smul.u32 64, %s192
        %s194 = smul.u32 %s193, 4
        %s195 = smul.u32 32, %s14
        %s196 = ssub.s32 61, %s195
        %p197 = scmp.lt.s32.totalorder %s196, 32
        %s198 = scalar_select %p197, %s196, 32
        %s199 = smul.u32 64, %s198
        %v201 = vld [vmem:[%s188] sm:$0xff]
        %v202 = vld [vmem:[%s188 + $0x8] sm:$0xff]
        %v203 = vld [vmem:[%s188 + $0x10] sm:$0xff]
        %v204 = vld [vmem:[%s188 + $0x18] sm:$0xff]
        %v205 = vld [vmem:[%s188 + $0x20] sm:$0xff]
        %v206 = vld [vmem:[%s188 + $0x28] sm:$0xff]
        %v207 = vld [vmem:[%s188 + $0x30] sm:$0xff]
        %v208 = vld [vmem:[%s188 + $0x38] sm:$0xff]
        %v209 = vld [vmem:[%s188 + $0x40] sm:$0xff]
        %v210 = vld [vmem:[%s188 + $0x48] sm:$0xff]
        %v211 = vld [vmem:[%s188 + $0x50] sm:$0xff]
        %v212 = vld [vmem:[%s188 + $0x58] sm:$0xff]
        %v213 = vld [vmem:[%s188 + $0x60] sm:$0xff]
        %v214 = vld [vmem:[%s188 + $0x68] sm:$0xff]
        %v215 = vld [vmem:[%s188 + $0x70] sm:$0xff]
        %v216 = vld [vmem:[%s188 + $0x78] sm:$0xff]
        %v217 = vld [vmem:[%s188 + $0x80] sm:$0xff]
        %v218 = vld [vmem:[%s188 + $0x88] sm:$0xff]
        %v219 = vld [vmem:[%s188 + $0x90] sm:$0xff]
        %v220 = vld [vmem:[%s188 + $0x98] sm:$0xff]
        %v221 = vld [vmem:[%s188 + $0xa0] sm:$0xff]
        %v222 = vld [vmem:[%s188 + $0xa8] sm:$0xff]
        %v223 = vld [vmem:[%s188 + $0xb0] sm:$0xff]
        %v224 = vld [vmem:[%s188 + $0xb8] sm:$0xff]
        %v225 = vld [vmem:[%s188 + $0xc0] sm:$0xff]
        %v226 = vld [vmem:[%s188 + $0xc8] sm:$0xff]
        %v227 = vld [vmem:[%s188 + $0xd0] sm:$0xff]
        %v228 = vld [vmem:[%s188 + $0xd8] sm:$0xff]
        %v229 = vld [vmem:[%s188 + $0xe0] sm:$0xff]
        %v230 = vld [vmem:[%s188 + $0xe8] sm:$0xff]
        %v231 = vld [vmem:[%s188 + $0xf0] sm:$0xff]
        %v232 = vld [vmem:[%s188 + $0xf8] sm:$0xff]
        %v233 = vld [vmem:[%s188 + $0x100] sm:$0xff]
        %v234 = vld [vmem:[%s188 + $0x108] sm:$0xff]
        %v235 = vld [vmem:[%s188 + $0x110] sm:$0xff]
        %v236 = vld [vmem:[%s188 + $0x118] sm:$0xff]
        %v237 = vld [vmem:[%s188 + $0x120] sm:$0xff]
        %v238 = vld [vmem:[%s188 + $0x128] sm:$0xff]
        %v239 = vld [vmem:[%s188 + $0x130] sm:$0xff]
        %v240 = vld [vmem:[%s188 + $0x138] sm:$0xff]
        %v241 = vld [vmem:[%s188 + $0x140] sm:$0xff]
        %v242 = vld [vmem:[%s188 + $0x148] sm:$0xff]
        %v243 = vld [vmem:[%s188 + $0x150] sm:$0xff]
        %v244 = vld [vmem:[%s188 + $0x158] sm:$0xff]
        %v245 = vld [vmem:[%s188 + $0x160] sm:$0xff]
        %v246 = vld [vmem:[%s188 + $0x168] sm:$0xff]
        %v247 = vld [vmem:[%s188 + $0x170] sm:$0xff]
        %v248 = vld [vmem:[%s188 + $0x178] sm:$0xff]
        %v249 = vld [vmem:[%s188 + $0x180] sm:$0xff]
        %v250 = vld [vmem:[%s188 + $0x188] sm:$0xff]
        %v251 = vld [vmem:[%s188 + $0x190] sm:$0xff]
        %v252 = vld [vmem:[%s188 + $0x198] sm:$0xff]
        %v253 = vld [vmem:[%s188 + $0x1a0] sm:$0xff]
        %v254 = vld [vmem:[%s188 + $0x1a8] sm:$0xff]
        %v255 = vld [vmem:[%s188 + $0x1b0] sm:$0xff]
        %v256 = vld [vmem:[%s188 + $0x1b8] sm:$0xff]
        %v257 = vld [vmem:[%s188 + $0x1c0] sm:$0xff]
        %v258 = vld [vmem:[%s188 + $0x1c8] sm:$0xff]
        %v259 = vld [vmem:[%s188 + $0x1d0] sm:$0xff]
        %v260 = vld [vmem:[%s188 + $0x1d8] sm:$0xff]
        %v261 = vld [vmem:[%s188 + $0x1e0] sm:$0xff]
        %v262 = vld [vmem:[%s188 + $0x1e8] sm:$0xff]
        %v263 = vld [vmem:[%s188 + $0x1f0] sm:$0xff]
        %v264 = vld [vmem:[%s188 + $0x1f8] sm:$0xff]
        %v265 = vld [vmem:[%s1] sm:$0xf]
        %v266 = vld [vmem:[%s1 + $0x4] sm:$0xf]
        %v267 = vld [vmem:[%s1 + $0x8] sm:$0xf]
        %v268 = vld [vmem:[%s1 + $0xc] sm:$0xf]
        %v269 = vld [vmem:[%s1 + $0x10] sm:$0xf]
        %v270 = vld [vmem:[%s1 + $0x14] sm:$0xf]
        %v271 = vld [vmem:[%s1 + $0x18] sm:$0xf]
        %v272 = vld [vmem:[%s1 + $0x1c] sm:$0xf]
        %v273 = vld [vmem:[%s1 + $0x20] sm:$0xf]
        %v274 = vld [vmem:[%s1 + $0x24] sm:$0xf]
        %v275 = vld [vmem:[%s1 + $0x28] sm:$0xf]
        %v276 = vld [vmem:[%s1 + $0x2c] sm:$0xf]
        %v277 = vld [vmem:[%s1 + $0x30] sm:$0xf]
        %v278 = vld [vmem:[%s1 + $0x34] sm:$0xf]
        %v279 = vld [vmem:[%s1 + $0x38] sm:$0xf]
        %v280 = vld [vmem:[%s1 + $0x3c] sm:$0xf]
        %v281 = vld [vmem:[%s1 + $0x40] sm:$0xf]
        %v282 = vld [vmem:[%s1 + $0x44] sm:$0xf]
        %v283 = vld [vmem:[%s1 + $0x48] sm:$0xf]
        %v284 = vld [vmem:[%s1 + $0x4c] sm:$0xf]
        %v285 = vld [vmem:[%s1 + $0x50] sm:$0xf]
        %v286 = vld [vmem:[%s1 + $0x54] sm:$0xf]
        %v287 = vld [vmem:[%s1 + $0x58] sm:$0xf]
        %v288 = vld [vmem:[%s1 + $0x5c] sm:$0xf]
        %v289 = vld [vmem:[%s1 + $0x60] sm:$0xf]
        %v290 = vld [vmem:[%s1 + $0x64] sm:$0xf]
        %v291 = vld [vmem:[%s1 + $0x68] sm:$0xf]
        %v292 = vld [vmem:[%s1 + $0x6c] sm:$0xf]
        %v293 = vld [vmem:[%s1 + $0x70] sm:$0xf]
        %v294 = vld [vmem:[%s1 + $0x74] sm:$0xf]
        %v295 = vld [vmem:[%s1 + $0x78] sm:$0xf]
        %v296 = vld [vmem:[%s1 + $0x7c] sm:$0xf]
        %v297 = vld [vmem:[%s1 + $0x80] sm:$0xf]
        %v298 = vld [vmem:[%s1 + $0x84] sm:$0xf]
        %v299 = vld [vmem:[%s1 + $0x88] sm:$0xf]
        %v300 = vld [vmem:[%s1 + $0x8c] sm:$0xf]
        %v301 = vld [vmem:[%s1 + $0x90] sm:$0xf]
        %v302 = vld [vmem:[%s1 + $0x94] sm:$0xf]
        %v303 = vld [vmem:[%s1 + $0x98] sm:$0xf]
        %v304 = vld [vmem:[%s1 + $0x9c] sm:$0xf]
        %v305 = vld [vmem:[%s1 + $0xa0] sm:$0xf]
        %v306 = vld [vmem:[%s1 + $0xa4] sm:$0xf]
        %v307 = vld [vmem:[%s1 + $0xa8] sm:$0xf]
        %v308 = vld [vmem:[%s1 + $0xac] sm:$0xf]
        %v309 = vld [vmem:[%s1 + $0xb0] sm:$0xf]
        %v310 = vld [vmem:[%s1 + $0xb4] sm:$0xf]
        %v311 = vld [vmem:[%s1 + $0xb8] sm:$0xf]
        %v312 = vld [vmem:[%s1 + $0xbc] sm:$0xf]
        %v313 = vld [vmem:[%s1 + $0xc0] sm:$0xf]
        %v314 = vld [vmem:[%s1 + $0xc4] sm:$0xf]
        %v315 = vld [vmem:[%s1 + $0xc8] sm:$0xf]
        %v316 = vld [vmem:[%s1 + $0xcc] sm:$0xf]
        %v317 = vld [vmem:[%s1 + $0xd0] sm:$0xf]
        %v318 = vld [vmem:[%s1 + $0xd4] sm:$0xf]
        %v319 = vld [vmem:[%s1 + $0xd8] sm:$0xf]
        %v320 = vld [vmem:[%s1 + $0xdc] sm:$0xf]
        %v321 = vld [vmem:[%s1 + $0xe0] sm:$0xf]
        %v322 = vld [vmem:[%s1 + $0xe4] sm:$0xf]
        %v323 = vld [vmem:[%s1 + $0xe8] sm:$0xf]
        %v324 = vld [vmem:[%s1 + $0xec] sm:$0xf]
        %v325 = vld [vmem:[%s1 + $0xf0] sm:$0xf]
        %v326 = vld [vmem:[%s1 + $0xf4] sm:$0xf]
        %v327 = vld [vmem:[%s1 + $0xf8] sm:$0xf]
        %v328 = vld [vmem:[%s1 + $0xfc] sm:$0xf]
        %v329 = vld [vmem:[%s2] sm:$0x1]
        %v331 = vlaneseq
        %v332 = vshrl.u32 %v331, 7
        %v333 = vsub.s32 0, %v332
        %v334 = vrot.slane %v329, %v333
        %v400 = vunpack.c.l.b16 %v201
        %v401 = vunpack.c.h.b16 %v201
        %v402 = vunpack.c.l.b16 %v202
        %v403 = vunpack.c.h.b16 %v202
        %v404 = vunpack.c.l.b16 %v203
        %v405 = vunpack.c.h.b16 %v203
        %v406 = vunpack.c.l.b16 %v204
        %v407 = vunpack.c.h.b16 %v204
        %v408 = vunpack.c.l.b16 %v205
        %v409 = vunpack.c.h.b16 %v205
        %v410 = vunpack.c.l.b16 %v206
        %v411 = vunpack.c.h.b16 %v206
        %v412 = vunpack.c.l.b16 %v207
        %v413 = vunpack.c.h.b16 %v207
        %v414 = vunpack.c.l.b16 %v208
        %v415 = vunpack.c.h.b16 %v208
        %v416 = vunpack.c.l.b16 %v209
        %v417 = vunpack.c.h.b16 %v209
        %v418 = vunpack.c.l.b16 %v210
        %v419 = vunpack.c.h.b16 %v210
        %v420 = vunpack.c.l.b16 %v211
        %v421 = vunpack.c.h.b16 %v211
        %v422 = vunpack.c.l.b16 %v212
        %v423 = vunpack.c.h.b16 %v212
        %v424 = vunpack.c.l.b16 %v213
        %v425 = vunpack.c.h.b16 %v213
        %v426 = vunpack.c.l.b16 %v214
        %v427 = vunpack.c.h.b16 %v214
        %v428 = vunpack.c.l.b16 %v215
        %v429 = vunpack.c.h.b16 %v215
        %v430 = vunpack.c.l.b16 %v216
        %v431 = vunpack.c.h.b16 %v216
        %v432 = vunpack.c.l.b16 %v217
        %v433 = vunpack.c.h.b16 %v217
        %v434 = vunpack.c.l.b16 %v218
        %v435 = vunpack.c.h.b16 %v218
        %v436 = vunpack.c.l.b16 %v219
        %v437 = vunpack.c.h.b16 %v219
        %v438 = vunpack.c.l.b16 %v220
        %v439 = vunpack.c.h.b16 %v220
        %v440 = vunpack.c.l.b16 %v221
        %v441 = vunpack.c.h.b16 %v221
        %v442 = vunpack.c.l.b16 %v222
        %v443 = vunpack.c.h.b16 %v222
        %v444 = vunpack.c.l.b16 %v223
        %v445 = vunpack.c.h.b16 %v223
        %v446 = vunpack.c.l.b16 %v224
        %v447 = vunpack.c.h.b16 %v224
        %v448 = vunpack.c.l.b16 %v225
        %v449 = vunpack.c.h.b16 %v225
        %v450 = vunpack.c.l.b16 %v226
        %v451 = vunpack.c.h.b16 %v226
        %v452 = vunpack.c.l.b16 %v227
        %v453 = vunpack.c.h.b16 %v227
        %v454 = vunpack.c.l.b16 %v228
        %v455 = vunpack.c.h.b16 %v228
        %v456 = vunpack.c.l.b16 %v229
        %v457 = vunpack.c.h.b16 %v229
        %v458 = vunpack.c.l.b16 %v230
        %v459 = vunpack.c.h.b16 %v230
        %v460 = vunpack.c.l.b16 %v231
        %v461 = vunpack.c.h.b16 %v231
        %v462 = vunpack.c.l.b16 %v232
        %v463 = vunpack.c.h.b16 %v232
        %v464 = vunpack.c.l.b16 %v233
        %v465 = vunpack.c.h.b16 %v233
        %v466 = vunpack.c.l.b16 %v234
        %v467 = vunpack.c.h.b16 %v234
        %v468 = vunpack.c.l.b16 %v235
        %v469 = vunpack.c.h.b16 %v235
        %v470 = vunpack.c.l.b16 %v236
        %v471 = vunpack.c.h.b16 %v236
        %v472 = vunpack.c.l.b16 %v237
        %v473 = vunpack.c.h.b16 %v237
        %v474 = vunpack.c.l.b16 %v238
        %v475 = vunpack.c.h.b16 %v238
        %v476 = vunpack.c.l.b16 %v239
        %v477 = vunpack.c.h.b16 %v239
        %v478 = vunpack.c.l.b16 %v240
        %v479 = vunpack.c.h.b16 %v240
        %v480 = vunpack.c.l.b16 %v241
        %v481 = vunpack.c.h.b16 %v241
        %v482 = vunpack.c.l.b16 %v242
        %v483 = vunpack.c.h.b16 %v242
        %v484 = vunpack.c.l.b16 %v243
        %v485 = vunpack.c.h.b16 %v243
        %v486 = vunpack.c.l.b16 %v244
        %v487 = vunpack.c.h.b16 %v244
        %v488 = vunpack.c.l.b16 %v245
        %v489 = vunpack.c.h.b16 %v245
        %v490 = vunpack.c.l.b16 %v246
        %v491 = vunpack.c.h.b16 %v246
        %v492 = vunpack.c.l.b16 %v247
        %v493 = vunpack.c.h.b16 %v247
        %v494 = vunpack.c.l.b16 %v248
        %v495 = vunpack.c.h.b16 %v248
        %v496 = vunpack.c.l.b16 %v249
        %v497 = vunpack.c.h.b16 %v249
        %v498 = vunpack.c.l.b16 %v250
        %v499 = vunpack.c.h.b16 %v250
        %v500 = vunpack.c.l.b16 %v251
        %v501 = vunpack.c.h.b16 %v251
        %v502 = vunpack.c.l.b16 %v252
        %v503 = vunpack.c.h.b16 %v252
        %v504 = vunpack.c.l.b16 %v253
        %v505 = vunpack.c.h.b16 %v253
        %v506 = vunpack.c.l.b16 %v254
        %v507 = vunpack.c.h.b16 %v254
        %v508 = vunpack.c.l.b16 %v255
        %v509 = vunpack.c.h.b16 %v255
        %v510 = vunpack.c.l.b16 %v256
        %v511 = vunpack.c.h.b16 %v256
        %v512 = vunpack.c.l.b16 %v257
        %v513 = vunpack.c.h.b16 %v257
        %v514 = vunpack.c.l.b16 %v258
        %v515 = vunpack.c.h.b16 %v258
        %v516 = vunpack.c.l.b16 %v259
        %v517 = vunpack.c.h.b16 %v259
        %v518 = vunpack.c.l.b16 %v260
        %v519 = vunpack.c.h.b16 %v260
        %v520 = vunpack.c.l.b16 %v261
        %v521 = vunpack.c.h.b16 %v261
        %v522 = vunpack.c.l.b16 %v262
        %v523 = vunpack.c.h.b16 %v262
        %v524 = vunpack.c.l.b16 %v263
        %v525 = vunpack.c.h.b16 %v263
        %v526 = vunpack.c.l.b16 %v264
        %v527 = vunpack.c.h.b16 %v264
        %v528 = vpack.c.b16 %v404, %v400
        %v529 = vpack.c.b16 %v405, %v401
        %v530 = vpack.c.b16 %v406, %v402
        %v531 = vpack.c.b16 %v407, %v403
        %v532 = vpack.c.b16 %v412, %v408
        %v533 = vpack.c.b16 %v413, %v409
        %v534 = vpack.c.b16 %v414, %v410
        %v535 = vpack.c.b16 %v415, %v411
        %v536 = vpack.c.b16 %v420, %v416
        %v537 = vpack.c.b16 %v421, %v417
        %v538 = vpack.c.b16 %v422, %v418
        %v539 = vpack.c.b16 %v423, %v419
        %v540 = vpack.c.b16 %v428, %v424
        %v541 = vpack.c.b16 %v429, %v425
        %v542 = vpack.c.b16 %v430, %v426
        %v543 = vpack.c.b16 %v431, %v427
        %v544 = vpack.c.b16 %v436, %v432
        %v545 = vpack.c.b16 %v437, %v433
        %v546 = vpack.c.b16 %v438, %v434
        %v547 = vpack.c.b16 %v439, %v435
        %v548 = vpack.c.b16 %v444, %v440
        %v549 = vpack.c.b16 %v445, %v441
        %v550 = vpack.c.b16 %v446, %v442
        %v551 = vpack.c.b16 %v447, %v443
        %v552 = vpack.c.b16 %v452, %v448
        %v553 = vpack.c.b16 %v453, %v449
        %v554 = vpack.c.b16 %v454, %v450
        %v555 = vpack.c.b16 %v455, %v451
        %v556 = vpack.c.b16 %v460, %v456
        %v557 = vpack.c.b16 %v461, %v457
        %v558 = vpack.c.b16 %v462, %v458
        %v559 = vpack.c.b16 %v463, %v459
        %v560 = vpack.c.b16 %v468, %v464
        %v561 = vpack.c.b16 %v469, %v465
        %v562 = vpack.c.b16 %v470, %v466
        %v563 = vpack.c.b16 %v471, %v467
        %v564 = vpack.c.b16 %v476, %v472
        %v565 = vpack.c.b16 %v477, %v473
        %v566 = vpack.c.b16 %v478, %v474
        %v567 = vpack.c.b16 %v479, %v475
        %v568 = vpack.c.b16 %v484, %v480
        %v569 = vpack.c.b16 %v485, %v481
        %v570 = vpack.c.b16 %v486, %v482
        %v571 = vpack.c.b16 %v487, %v483
        %v572 = vpack.c.b16 %v492, %v488
        %v573 = vpack.c.b16 %v493, %v489
        %v574 = vpack.c.b16 %v494, %v490
        %v575 = vpack.c.b16 %v495, %v491
        %v576 = vpack.c.b16 %v500, %v496
        %v577 = vpack.c.b16 %v501, %v497
        %v578 = vpack.c.b16 %v502, %v498
        %v579 = vpack.c.b16 %v503, %v499
        %v580 = vpack.c.b16 %v508, %v504
        %v581 = vpack.c.b16 %v509, %v505
        %v582 = vpack.c.b16 %v510, %v506
        %v583 = vpack.c.b16 %v511, %v507
        %v584 = vpack.c.b16 %v516, %v512
        %v585 = vpack.c.b16 %v517, %v513
        %v586 = vpack.c.b16 %v518, %v514
        %v587 = vpack.c.b16 %v519, %v515
        %v588 = vpack.c.b16 %v524, %v520
        %v589 = vpack.c.b16 %v525, %v521
        %v590 = vpack.c.b16 %v526, %v522
        %v591 = vpack.c.b16 %v527, %v523
        %v720 = vunpack.c.l.b16 %v265
        %v721 = vunpack.c.l.b16 %v266
        %v722 = vunpack.c.l.b16 %v267
        %v723 = vunpack.c.l.b16 %v268
        %v724 = vunpack.c.l.b16 %v269
        %v725 = vunpack.c.l.b16 %v270
        %v726 = vunpack.c.l.b16 %v271
        %v727 = vunpack.c.l.b16 %v272
        %v728 = vunpack.c.l.b16 %v273
        %v729 = vunpack.c.l.b16 %v274
        %v730 = vunpack.c.l.b16 %v275
        %v731 = vunpack.c.l.b16 %v276
        %v732 = vunpack.c.l.b16 %v277
        %v733 = vunpack.c.l.b16 %v278
        %v734 = vunpack.c.l.b16 %v279
        %v735 = vunpack.c.l.b16 %v280
        %v736 = vunpack.c.l.b16 %v281
        %v737 = vunpack.c.l.b16 %v282
        %v738 = vunpack.c.l.b16 %v283
        %v739 = vunpack.c.l.b16 %v284
        %v740 = vunpack.c.l.b16 %v285
        %v741 = vunpack.c.l.b16 %v286
        %v742 = vunpack.c.l.b16 %v287
        %v743 = vunpack.c.l.b16 %v288
        %v744 = vunpack.c.l.b16 %v289
        %v745 = vunpack.c.l.b16 %v290
        %v746 = vunpack.c.l.b16 %v291
        %v747 = vunpack.c.l.b16 %v292
        %v748 = vunpack.c.l.b16 %v293
        %v749 = vunpack.c.l.b16 %v294
        %v750 = vunpack.c.l.b16 %v295
        %v751 = vunpack.c.l.b16 %v296
        %v752 = vunpack.c.l.b16 %v297
        %v753 = vunpack.c.l.b16 %v298
        %v754 = vunpack.c.l.b16 %v299
        %v755 = vunpack.c.l.b16 %v300
        %v756 = vunpack.c.l.b16 %v301
        %v757 = vunpack.c.l.b16 %v302
        %v758 = vunpack.c.l.b16 %v303
        %v759 = vunpack.c.l.b16 %v304
        %v760 = vunpack.c.l.b16 %v305
        %v761 = vunpack.c.l.b16 %v306
        %v762 = vunpack.c.l.b16 %v307
        %v763 = vunpack.c.l.b16 %v308
        %v764 = vunpack.c.l.b16 %v309
        %v765 = vunpack.c.l.b16 %v310
        %v766 = vunpack.c.l.b16 %v311
        %v767 = vunpack.c.l.b16 %v312
        %v768 = vunpack.c.l.b16 %v313
        %v769 = vunpack.c.l.b16 %v314
        %v770 = vunpack.c.l.b16 %v315
        %v771 = vunpack.c.l.b16 %v316
        %v772 = vunpack.c.l.b16 %v317
        %v773 = vunpack.c.l.b16 %v318
        %v774 = vunpack.c.l.b16 %v319
        %v775 = vunpack.c.l.b16 %v320
        %v776 = vunpack.c.l.b16 %v321
        %v777 = vunpack.c.l.b16 %v322
        %v778 = vunpack.c.l.b16 %v323
        %v779 = vunpack.c.l.b16 %v324
        %v780 = vunpack.c.l.b16 %v325
        %v781 = vunpack.c.l.b16 %v326
        %v782 = vunpack.c.l.b16 %v327
        %v783 = vunpack.c.l.b16 %v328
        %v784 = vpack.c.b16 %v721, %v720
        %v785 = vpack.c.b16 %v723, %v722
        %v786 = vpack.c.b16 %v725, %v724
        %v787 = vpack.c.b16 %v727, %v726
        %v788 = vpack.c.b16 %v729, %v728
        %v789 = vpack.c.b16 %v731, %v730
        %v790 = vpack.c.b16 %v733, %v732
        %v791 = vpack.c.b16 %v735, %v734
        %v792 = vpack.c.b16 %v737, %v736
        %v793 = vpack.c.b16 %v739, %v738
        %v794 = vpack.c.b16 %v741, %v740
        %v795 = vpack.c.b16 %v743, %v742
        %v796 = vpack.c.b16 %v745, %v744
        %v797 = vpack.c.b16 %v747, %v746
        %v798 = vpack.c.b16 %v749, %v748
        %v799 = vpack.c.b16 %v751, %v750
        %v800 = vpack.c.b16 %v753, %v752
        %v801 = vpack.c.b16 %v755, %v754
        %v802 = vpack.c.b16 %v757, %v756
        %v803 = vpack.c.b16 %v759, %v758
        %v804 = vpack.c.b16 %v761, %v760
        %v805 = vpack.c.b16 %v763, %v762
        %v806 = vpack.c.b16 %v765, %v764
        %v807 = vpack.c.b16 %v767, %v766
        %v808 = vpack.c.b16 %v769, %v768
        %v809 = vpack.c.b16 %v771, %v770
        %v810 = vpack.c.b16 %v773, %v772
        %v811 = vpack.c.b16 %v775, %v774
        %v812 = vpack.c.b16 %v777, %v776
        %v813 = vpack.c.b16 %v779, %v778
        %v814 = vpack.c.b16 %v781, %v780
        %v815 = vpack.c.b16 %v783, %v782
        %848 = vmatprep.subr.bf16.mxu0 0
        %849 = vmatpush1.bf16.msra.mxu0 %v784
        %850 = vmatprep.subr.bf16.mxu0 0
        %851 = vmatpush1.bf16.msra.mxu0 %v785
        %852 = vmatprep.subr.bf16.mxu0 0
        %853 = vmatpush1.bf16.msra.mxu0 %v786
        %854 = vmatprep.subr.bf16.mxu0 0
        %855 = vmatpush1.bf16.msra.mxu0 %v787
        %856 = vmatprep.subr.bf16.mxu0 0
        %857 = vmatpush1.bf16.msra.mxu0 %v788
        %858 = vmatprep.subr.bf16.mxu0 0
        %859 = vmatpush1.bf16.msra.mxu0 %v789
        %860 = vmatprep.subr.bf16.mxu0 0
        %861 = vmatpush1.bf16.msra.mxu0 %v790
        %862 = vmatprep.subr.bf16.mxu0 0
        %863 = vmatpush1.bf16.msra.mxu0 %v791
        %864 = vmatprep.subr.bf16.mxu0 0
        %865 = vmatpush1.bf16.msra.mxu0 %v792
        %866 = vmatprep.subr.bf16.mxu0 0
        %867 = vmatpush1.bf16.msra.mxu0 %v793
        %868 = vmatprep.subr.bf16.mxu0 0
        %869 = vmatpush1.bf16.msra.mxu0 %v794
        %870 = vmatprep.subr.bf16.mxu0 0
        %871 = vmatpush1.bf16.msra.mxu0 %v795
        %872 = vmatprep.subr.bf16.mxu0 0
        %873 = vmatpush1.bf16.msra.mxu0 %v796
        %874 = vmatprep.subr.bf16.mxu0 0
        %875 = vmatpush1.bf16.msra.mxu0 %v797
        %876 = vmatprep.subr.bf16.mxu0 0
        %877 = vmatpush1.bf16.msra.mxu0 %v798
        %878 = vmatprep.subr.bf16.mxu0 0
        %879 = vmatpush1.bf16.msra.mxu0 %v799
        %880 = vmatprep.mubr.bf16.mxu0 %v529
        %881 = vmatmul.mubr.bf16.gmra.mrb[0].mxu0 %v528
        %v882 = vpop.f32.mrb[0].mxu0
        %v883 = vadd.f32 %v334, %v882
        %v884 = vpop.f32.mrb[0].mxu0
        %v885 = vpop.f32.mrb[0].mxu0
        %v886 = vadd.f32 %v334, %v885
        %v887 = vpop.f32.mrb[0].mxu0
        %888 = vmatprep.mubr.bf16.mxu0 %v533
        %889 = vmatmul.mubr.bf16.gmra.mrb[0].mxu0 %v532
        %v890 = vpop.f32.mrb[0].mxu0
        %v891 = vadd.f32 %v334, %v890
        %v892 = vpop.f32.mrb[0].mxu0
        %v893 = vpop.f32.mrb[0].mxu0
        %v894 = vadd.f32 %v334, %v893
        %v895 = vpop.f32.mrb[0].mxu0
        %896 = vmatprep.mubr.bf16.mxu0 %v537
        %897 = vmatmul.mubr.bf16.gmra.mrb[0].mxu0 %v536
        %v898 = vpop.f32.mrb[0].mxu0
        %v899 = vadd.f32 %v334, %v898
        %v900 = vpop.f32.mrb[0].mxu0
        %v901 = vpop.f32.mrb[0].mxu0
        %v902 = vadd.f32 %v334, %v901
        %v903 = vpop.f32.mrb[0].mxu0
        %904 = vmatprep.mubr.bf16.mxu0 %v541
        %905 = vmatmul.mubr.bf16.gmra.mrb[0].mxu0 %v540
        %v906 = vpop.f32.mrb[0].mxu0
        %v907 = vadd.f32 %v334, %v906
        %v908 = vpop.f32.mrb[0].mxu0
        %v909 = vpop.f32.mrb[0].mxu0
        %v910 = vadd.f32 %v334, %v909
        %v911 = vpop.f32.mrb[0].mxu0
        %912 = vmatprep.mubr.bf16.mxu0 %v545
        %913 = vmatmul.mubr.bf16.gmra.mrb[0].mxu0 %v544
        %v914 = vpop.f32.mrb[0].mxu0
        %v915 = vadd.f32 %v334, %v914
        %v916 = vpop.f32.mrb[0].mxu0
        %v917 = vpop.f32.mrb[0].mxu0
        %v918 = vadd.f32 %v334, %v917
        %v919 = vpop.f32.mrb[0].mxu0
        %920 = vmatprep.mubr.bf16.mxu0 %v549
        %921 = vmatmul.mubr.bf16.gmra.mrb[0].mxu0 %v548
        %v922 = vpop.f32.mrb[0].mxu0
        %v923 = vadd.f32 %v334, %v922
        %v924 = vpop.f32.mrb[0].mxu0
        %v925 = vpop.f32.mrb[0].mxu0
        %v926 = vadd.f32 %v334, %v925
        %v927 = vpop.f32.mrb[0].mxu0
        %928 = vmatprep.mubr.bf16.mxu0 %v553
        %929 = vmatmul.mubr.bf16.gmra.mrb[0].mxu0 %v552
        %v930 = vpop.f32.mrb[0].mxu0
        %v931 = vadd.f32 %v334, %v930
        %v932 = vpop.f32.mrb[0].mxu0
        %v933 = vpop.f32.mrb[0].mxu0
        %v934 = vadd.f32 %v334, %v933
        %v935 = vpop.f32.mrb[0].mxu0
        %936 = vmatprep.mubr.bf16.mxu0 %v557
        %937 = vmatmul.mubr.bf16.gmra.mrb[0].mxu0 %v556
        %v938 = vpop.f32.mrb[0].mxu0
        %v939 = vadd.f32 %v334, %v938
        %v940 = vpop.f32.mrb[0].mxu0
        %v941 = vpop.f32.mrb[0].mxu0
        %v942 = vadd.f32 %v334, %v941
        %v943 = vpop.f32.mrb[0].mxu0
        %944 = vmatprep.mubr.bf16.mxu0 %v561
        %945 = vmatmul.mubr.bf16.gmra.mrb[0].mxu0 %v560
        %v946 = vpop.f32.mrb[0].mxu0
        %v947 = vadd.f32 %v334, %v946
        %v948 = vpop.f32.mrb[0].mxu0
        %v949 = vpop.f32.mrb[0].mxu0
        %v950 = vadd.f32 %v334, %v949
        %v951 = vpop.f32.mrb[0].mxu0
        %952 = vmatprep.mubr.bf16.mxu0 %v565
        %953 = vmatmul.mubr.bf16.gmra.mrb[0].mxu0 %v564
        %v954 = vpop.f32.mrb[0].mxu0
        %v955 = vadd.f32 %v334, %v954
        %v956 = vpop.f32.mrb[0].mxu0
        %v957 = vpop.f32.mrb[0].mxu0
        %v958 = vadd.f32 %v334, %v957
        %v959 = vpop.f32.mrb[0].mxu0
        %960 = vmatprep.mubr.bf16.mxu0 %v569
        %961 = vmatmul.mubr.bf16.gmra.mrb[0].mxu0 %v568
        %v962 = vpop.f32.mrb[0].mxu0
        %v963 = vadd.f32 %v334, %v962
        %v964 = vpop.f32.mrb[0].mxu0
        %v965 = vpop.f32.mrb[0].mxu0
        %v966 = vadd.f32 %v334, %v965
        %v967 = vpop.f32.mrb[0].mxu0
        %968 = vmatprep.mubr.bf16.mxu0 %v573
        %969 = vmatmul.mubr.bf16.gmra.mrb[0].mxu0 %v572
        %v970 = vpop.f32.mrb[0].mxu0
        %v971 = vadd.f32 %v334, %v970
        %v972 = vpop.f32.mrb[0].mxu0
        %v973 = vpop.f32.mrb[0].mxu0
        %v974 = vadd.f32 %v334, %v973
        %v975 = vpop.f32.mrb[0].mxu0
        %976 = vmatprep.mubr.bf16.mxu0 %v577
        %977 = vmatmul.mubr.bf16.gmra.mrb[0].mxu0 %v576
        %v978 = vpop.f32.mrb[0].mxu0
        %v979 = vadd.f32 %v334, %v978
        %v980 = vpop.f32.mrb[0].mxu0
        %v981 = vpop.f32.mrb[0].mxu0
        %v982 = vadd.f32 %v334, %v981
        %v983 = vpop.f32.mrb[0].mxu0
        %984 = vmatprep.mubr.bf16.mxu0 %v581
        %985 = vmatmul.mubr.bf16.gmra.mrb[0].mxu0 %v580
        %v986 = vpop.f32.mrb[0].mxu0
        %v987 = vadd.f32 %v334, %v986
        %v988 = vpop.f32.mrb[0].mxu0
        %v989 = vpop.f32.mrb[0].mxu0
        %v990 = vadd.f32 %v334, %v989
        %v991 = vpop.f32.mrb[0].mxu0
        %992 = vmatprep.mubr.bf16.mxu0 %v585
        %993 = vmatmul.mubr.bf16.gmra.mrb[0].mxu0 %v584
        %v994 = vpop.f32.mrb[0].mxu0
        %v995 = vadd.f32 %v334, %v994
        %v996 = vpop.f32.mrb[0].mxu0
        %v997 = vpop.f32.mrb[0].mxu0
        %v998 = vadd.f32 %v334, %v997
        %v999 = vpop.f32.mrb[0].mxu0
        %1000 = vmatprep.mubr.bf16.mxu0 %v589
        %1001 = vmatmul.mubr.bf16.gmra.mrb[0].mxu0 %v588
        %v1002 = vpop.f32.mrb[0].mxu0
        %v1003 = vadd.f32 %v334, %v1002
        %v1004 = vpop.f32.mrb[0].mxu0
        %v1005 = vpop.f32.mrb[0].mxu0
        %v1006 = vadd.f32 %v334, %v1005
        %v1007 = vpop.f32.mrb[0].mxu0
        %1008 = vdwg.mxu0
        %1009 = vmatprep.subr.bf16.mxu0 0
        %1010 = vmatpush1.bf16.msra.mxu0 %v800
        %1011 = vmatprep.subr.bf16.mxu0 0
        %1012 = vmatpush1.bf16.msra.mxu0 %v801
        %1013 = vmatprep.subr.bf16.mxu0 0
        %1014 = vmatpush1.bf16.msra.mxu0 %v802
        %1015 = vmatprep.subr.bf16.mxu0 0
        %1016 = vmatpush1.bf16.msra.mxu0 %v803
        %1017 = vmatprep.subr.bf16.mxu0 0
        %1018 = vmatpush1.bf16.msra.mxu0 %v804
        %1019 = vmatprep.subr.bf16.mxu0 0
        %1020 = vmatpush1.bf16.msra.mxu0 %v805
        %1021 = vmatprep.subr.bf16.mxu0 0
        %1022 = vmatpush1.bf16.msra.mxu0 %v806
        %1023 = vmatprep.subr.bf16.mxu0 0
        %1024 = vmatpush1.bf16.msra.mxu0 %v807
        %1025 = vmatprep.subr.bf16.mxu0 0
        %1026 = vmatpush1.bf16.msra.mxu0 %v808
        %1027 = vmatprep.subr.bf16.mxu0 0
        %1028 = vmatpush1.bf16.msra.mxu0 %v809
        %1029 = vmatprep.subr.bf16.mxu0 0
        %1030 = vmatpush1.bf16.msra.mxu0 %v810
        %1031 = vmatprep.subr.bf16.mxu0 0
        %1032 = vmatpush1.bf16.msra.mxu0 %v811
        %1033 = vmatprep.subr.bf16.mxu0 0
        %1034 = vmatpush1.bf16.msra.mxu0 %v812
        %1035 = vmatprep.subr.bf16.mxu0 0
        %1036 = vmatpush1.bf16.msra.mxu0 %v813
        %1037 = vmatprep.subr.bf16.mxu0 0
        %1038 = vmatpush1.bf16.msra.mxu0 %v814
        %1039 = vmatprep.subr.bf16.mxu0 0
        %1040 = vmatpush1.bf16.msra.mxu0 %v815
        %1041 = vmatprep.mubr.bf16.mxu0 %v531
        %1042 = vmatmul.mubr.bf16.gmra.mrb[0].mxu0 %v530
        %v1043 = vpop.f32.mrb[0].mxu0
        %v1044 = vadd.f32 %v883, %v1043
        %v1045 = vpop.f32.mrb[0].mxu0
        %v1046 = vpop.f32.mrb[0].mxu0
        %v1047 = vadd.f32 %v886, %v1046
        %v1048 = vpop.f32.mrb[0].mxu0
        %1049 = vmatprep.mubr.bf16.mxu0 %v535
        %1050 = vmatmul.mubr.bf16.gmra.mrb[0].mxu0 %v534
        %v1051 = vpop.f32.mrb[0].mxu0
        %v1052 = vadd.f32 %v891, %v1051
        %v1053 = vpop.f32.mrb[0].mxu0
        %v1054 = vpop.f32.mrb[0].mxu0
        %v1055 = vadd.f32 %v894, %v1054
        %v1056 = vpop.f32.mrb[0].mxu0
        %1057 = vmatprep.mubr.bf16.mxu0 %v539
        %1058 = vmatmul.mubr.bf16.gmra.mrb[0].mxu0 %v538
        %v1059 = vpop.f32.mrb[0].mxu0
        %v1060 = vadd.f32 %v899, %v1059
        %v1061 = vpop.f32.mrb[0].mxu0
        %v1062 = vpop.f32.mrb[0].mxu0
        %v1063 = vadd.f32 %v902, %v1062
        %v1064 = vpop.f32.mrb[0].mxu0
        %1065 = vmatprep.mubr.bf16.mxu0 %v543
        %1066 = vmatmul.mubr.bf16.gmra.mrb[0].mxu0 %v542
        %v1067 = vpop.f32.mrb[0].mxu0
        %v1068 = vadd.f32 %v907, %v1067
        %v1069 = vpop.f32.mrb[0].mxu0
        %v1070 = vpop.f32.mrb[0].mxu0
        %v1071 = vadd.f32 %v910, %v1070
        %v1072 = vpop.f32.mrb[0].mxu0
        %1073 = vmatprep.mubr.bf16.mxu0 %v547
        %1074 = vmatmul.mubr.bf16.gmra.mrb[0].mxu0 %v546
        %v1075 = vpop.f32.mrb[0].mxu0
        %v1076 = vadd.f32 %v915, %v1075
        %v1077 = vpop.f32.mrb[0].mxu0
        %v1078 = vpop.f32.mrb[0].mxu0
        %v1079 = vadd.f32 %v918, %v1078
        %v1080 = vpop.f32.mrb[0].mxu0
        %1081 = vmatprep.mubr.bf16.mxu0 %v551
        %1082 = vmatmul.mubr.bf16.gmra.mrb[0].mxu0 %v550
        %v1083 = vpop.f32.mrb[0].mxu0
        %v1084 = vadd.f32 %v923, %v1083
        %v1085 = vpop.f32.mrb[0].mxu0
        %v1086 = vpop.f32.mrb[0].mxu0
        %v1087 = vadd.f32 %v926, %v1086
        %v1088 = vpop.f32.mrb[0].mxu0
        %1089 = vmatprep.mubr.bf16.mxu0 %v555
        %1090 = vmatmul.mubr.bf16.gmra.mrb[0].mxu0 %v554
        %v1091 = vpop.f32.mrb[0].mxu0
        %v1092 = vadd.f32 %v931, %v1091
        %v1093 = vpop.f32.mrb[0].mxu0
        %v1094 = vpop.f32.mrb[0].mxu0
        %v1095 = vadd.f32 %v934, %v1094
        %v1096 = vpop.f32.mrb[0].mxu0
        %1097 = vmatprep.mubr.bf16.mxu0 %v559
        %1098 = vmatmul.mubr.bf16.gmra.mrb[0].mxu0 %v558
        %v1099 = vpop.f32.mrb[0].mxu0
        %v1100 = vadd.f32 %v939, %v1099
        %v1101 = vpop.f32.mrb[0].mxu0
        %v1102 = vpop.f32.mrb[0].mxu0
        %v1103 = vadd.f32 %v942, %v1102
        %v1104 = vpop.f32.mrb[0].mxu0
        %1105 = vmatprep.mubr.bf16.mxu0 %v563
        %1106 = vmatmul.mubr.bf16.gmra.mrb[0].mxu0 %v562
        %v1107 = vpop.f32.mrb[0].mxu0
        %v1108 = vadd.f32 %v947, %v1107
        %v1109 = vpop.f32.mrb[0].mxu0
        %v1110 = vpop.f32.mrb[0].mxu0
        %v1111 = vadd.f32 %v950, %v1110
        %v1112 = vpop.f32.mrb[0].mxu0
        %1113 = vmatprep.mubr.bf16.mxu0 %v567
        %1114 = vmatmul.mubr.bf16.gmra.mrb[0].mxu0 %v566
        %v1115 = vpop.f32.mrb[0].mxu0
        %v1116 = vadd.f32 %v955, %v1115
        %v1117 = vpop.f32.mrb[0].mxu0
        %v1118 = vpop.f32.mrb[0].mxu0
        %v1119 = vadd.f32 %v958, %v1118
        %v1120 = vpop.f32.mrb[0].mxu0
        %1121 = vmatprep.mubr.bf16.mxu0 %v571
        %1122 = vmatmul.mubr.bf16.gmra.mrb[0].mxu0 %v570
        %v1123 = vpop.f32.mrb[0].mxu0
        %v1124 = vadd.f32 %v963, %v1123
        %v1125 = vpop.f32.mrb[0].mxu0
        %v1126 = vpop.f32.mrb[0].mxu0
        %v1127 = vadd.f32 %v966, %v1126
        %v1128 = vpop.f32.mrb[0].mxu0
        %1129 = vmatprep.mubr.bf16.mxu0 %v575
        %1130 = vmatmul.mubr.bf16.gmra.mrb[0].mxu0 %v574
        %v1131 = vpop.f32.mrb[0].mxu0
        %v1132 = vadd.f32 %v971, %v1131
        %v1133 = vpop.f32.mrb[0].mxu0
        %v1134 = vpop.f32.mrb[0].mxu0
        %v1135 = vadd.f32 %v974, %v1134
        %v1136 = vpop.f32.mrb[0].mxu0
        %1137 = vmatprep.mubr.bf16.mxu0 %v579
        %1138 = vmatmul.mubr.bf16.gmra.mrb[0].mxu0 %v578
        %v1139 = vpop.f32.mrb[0].mxu0
        %v1140 = vadd.f32 %v979, %v1139
        %v1141 = vpop.f32.mrb[0].mxu0
        %v1142 = vpop.f32.mrb[0].mxu0
        %v1143 = vadd.f32 %v982, %v1142
        %v1144 = vpop.f32.mrb[0].mxu0
        %1145 = vmatprep.mubr.bf16.mxu0 %v583
        %1146 = vmatmul.mubr.bf16.gmra.mrb[0].mxu0 %v582
        %v1147 = vpop.f32.mrb[0].mxu0
        %v1148 = vadd.f32 %v987, %v1147
        %v1149 = vpop.f32.mrb[0].mxu0
        %v1150 = vpop.f32.mrb[0].mxu0
        %v1151 = vadd.f32 %v990, %v1150
        %v1152 = vpop.f32.mrb[0].mxu0
        %1153 = vmatprep.mubr.bf16.mxu0 %v587
        %1154 = vmatmul.mubr.bf16.gmra.mrb[0].mxu0 %v586
        %v1155 = vpop.f32.mrb[0].mxu0
        %v1156 = vadd.f32 %v995, %v1155
        %v1157 = vpop.f32.mrb[0].mxu0
        %v1158 = vpop.f32.mrb[0].mxu0
        %v1159 = vadd.f32 %v998, %v1158
        %v1160 = vpop.f32.mrb[0].mxu0
        %1161 = vmatprep.mubr.bf16.mxu0 %v591
        %1162 = vmatmul.mubr.bf16.gmra.mrb[0].mxu0 %v590
        %v1163 = vpop.f32.mrb[0].mxu0
        %v1164 = vadd.f32 %v1003, %v1163
        %v1165 = vpop.f32.mrb[0].mxu0
        %v1166 = vpop.f32.mrb[0].mxu0
        %v1167 = vadd.f32 %v1006, %v1166
        %v1168 = vpop.f32.mrb[0].mxu0
        %1169 = vdwg.mxu0
        %v1170 = vmax.f32 %v1044, 0.0
        %v1171 = vmax.f32 %v1047, 0.0
        %v1172 = vmax.f32 %v1052, 0.0
        %v1173 = vmax.f32 %v1055, 0.0
        %v1174 = vmax.f32 %v1060, 0.0
        %v1175 = vmax.f32 %v1063, 0.0
        %v1176 = vmax.f32 %v1068, 0.0
        %v1177 = vmax.f32 %v1071, 0.0
        %v1178 = vmax.f32 %v1076, 0.0
        %v1179 = vmax.f32 %v1079, 0.0
        %v1180 = vmax.f32 %v1084, 0.0
        %v1181 = vmax.f32 %v1087, 0.0
        %v1182 = vmax.f32 %v1092, 0.0
        %v1183 = vmax.f32 %v1095, 0.0
        %v1184 = vmax.f32 %v1100, 0.0
        %v1185 = vmax.f32 %v1103, 0.0
        %v1186 = vmax.f32 %v1108, 0.0
        %v1187 = vmax.f32 %v1111, 0.0
        %v1188 = vmax.f32 %v1116, 0.0
        %v1189 = vmax.f32 %v1119, 0.0
        %v1190 = vmax.f32 %v1124, 0.0
        %v1191 = vmax.f32 %v1127, 0.0
        %v1192 = vmax.f32 %v1132, 0.0
        %v1193 = vmax.f32 %v1135, 0.0
        %v1194 = vmax.f32 %v1140, 0.0
        %v1195 = vmax.f32 %v1143, 0.0
        %v1196 = vmax.f32 %v1148, 0.0
        %v1197 = vmax.f32 %v1151, 0.0
        %v1198 = vmax.f32 %v1156, 0.0
        %v1199 = vmax.f32 %v1159, 0.0
        %v1200 = vmax.f32 %v1164, 0.0
        %v1201 = vmax.f32 %v1167, 0.0
        %v1202 = vpack.c.bf16 %v1171, %v1170
        %v1203 = vpack.c.bf16 %v1173, %v1172
        %v1204 = vpack.c.bf16 %v1175, %v1174
        %v1205 = vpack.c.bf16 %v1177, %v1176
        %v1206 = vpack.c.bf16 %v1179, %v1178
        %v1207 = vpack.c.bf16 %v1181, %v1180
        %v1208 = vpack.c.bf16 %v1183, %v1182
        %v1209 = vpack.c.bf16 %v1185, %v1184
        %v1210 = vpack.c.bf16 %v1187, %v1186
        %v1211 = vpack.c.bf16 %v1189, %v1188
        %v1212 = vpack.c.bf16 %v1191, %v1190
        %v1213 = vpack.c.bf16 %v1193, %v1192
        %v1214 = vpack.c.bf16 %v1195, %v1194
        %v1215 = vpack.c.bf16 %v1197, %v1196
        %v1216 = vpack.c.bf16 %v1199, %v1198
        %v1217 = vpack.c.bf16 %v1201, %v1200
        %v1234 = vunpack.c.l.b16 %v1202
        %v1235 = vunpack.c.h.b16 %v1202
        %v1236 = vunpack.c.l.b16 %v1203
        %v1237 = vunpack.c.h.b16 %v1203
        %v1238 = vunpack.c.l.b16 %v1204
        %v1239 = vunpack.c.h.b16 %v1204
        %v1240 = vunpack.c.l.b16 %v1205
        %v1241 = vunpack.c.h.b16 %v1205
        %v1242 = vunpack.c.l.b16 %v1206
        %v1243 = vunpack.c.h.b16 %v1206
        %v1244 = vunpack.c.l.b16 %v1207
        %v1245 = vunpack.c.h.b16 %v1207
        %v1246 = vunpack.c.l.b16 %v1208
        %v1247 = vunpack.c.h.b16 %v1208
        %v1248 = vunpack.c.l.b16 %v1209
        %v1249 = vunpack.c.h.b16 %v1209
        %v1250 = vunpack.c.l.b16 %v1210
        %v1251 = vunpack.c.h.b16 %v1210
        %v1252 = vunpack.c.l.b16 %v1211
        %v1253 = vunpack.c.h.b16 %v1211
        %v1254 = vunpack.c.l.b16 %v1212
        %v1255 = vunpack.c.h.b16 %v1212
        %v1256 = vunpack.c.l.b16 %v1213
        %v1257 = vunpack.c.h.b16 %v1213
        %v1258 = vunpack.c.l.b16 %v1214
        %v1259 = vunpack.c.h.b16 %v1214
        %v1260 = vunpack.c.l.b16 %v1215
        %v1261 = vunpack.c.h.b16 %v1215
        %v1262 = vunpack.c.l.b16 %v1216
        %v1263 = vunpack.c.h.b16 %v1216
        %v1264 = vunpack.c.l.b16 %v1217
        %v1265 = vunpack.c.h.b16 %v1217
        %v1266 = vpack.c.b16 %v1234, %v1234
        %v1267 = vpack.c.b16 %v1235, %v1235
        %v1268 = vpack.c.b16 %v1236, %v1236
        %v1269 = vpack.c.b16 %v1237, %v1237
        %v1270 = vpack.c.b16 %v1238, %v1238
        %v1271 = vpack.c.b16 %v1239, %v1239
        %v1272 = vpack.c.b16 %v1240, %v1240
        %v1273 = vpack.c.b16 %v1241, %v1241
        %v1274 = vpack.c.b16 %v1242, %v1242
        %v1275 = vpack.c.b16 %v1243, %v1243
        %v1276 = vpack.c.b16 %v1244, %v1244
        %v1277 = vpack.c.b16 %v1245, %v1245
        %v1278 = vpack.c.b16 %v1246, %v1246
        %v1279 = vpack.c.b16 %v1247, %v1247
        %v1280 = vpack.c.b16 %v1248, %v1248
        %v1281 = vpack.c.b16 %v1249, %v1249
        %v1282 = vpack.c.b16 %v1250, %v1250
        %v1283 = vpack.c.b16 %v1251, %v1251
        %v1284 = vpack.c.b16 %v1252, %v1252
        %v1285 = vpack.c.b16 %v1253, %v1253
        %v1286 = vpack.c.b16 %v1254, %v1254
        %v1287 = vpack.c.b16 %v1255, %v1255
        %v1288 = vpack.c.b16 %v1256, %v1256
        %v1289 = vpack.c.b16 %v1257, %v1257
        %v1290 = vpack.c.b16 %v1258, %v1258
        %v1291 = vpack.c.b16 %v1259, %v1259
        %v1292 = vpack.c.b16 %v1260, %v1260
        %v1293 = vpack.c.b16 %v1261, %v1261
        %v1294 = vpack.c.b16 %v1262, %v1262
        %v1295 = vpack.c.b16 %v1263, %v1263
        %v1296 = vpack.c.b16 %v1264, %v1264
        %v1297 = vpack.c.b16 %v1265, %v1265
        %vm1330 = vcmask 519168
        %1331 = vst.msk [vmem:[%s177] sm:$0xf] %vm1330, %v1266
        %1332 = vst.msk [vmem:[%s177 + $0x4] sm:$0xf] %vm1330, %v1267
        %1333 = vst.msk [vmem:[%s177 + $0x8] sm:$0xf] %vm1330, %v1268
        %1334 = vst.msk [vmem:[%s177 + $0xc] sm:$0xf] %vm1330, %v1269
        %1335 = vst.msk [vmem:[%s177 + $0x10] sm:$0xf] %vm1330, %v1270
        %1336 = vst.msk [vmem:[%s177 + $0x14] sm:$0xf] %vm1330, %v1271
        %1337 = vst.msk [vmem:[%s177 + $0x18] sm:$0xf] %vm1330, %v1272
        %1338 = vst.msk [vmem:[%s177 + $0x1c] sm:$0xf] %vm1330, %v1273
        %1339 = vst.msk [vmem:[%s177 + $0x20] sm:$0xf] %vm1330, %v1274
        %1340 = vst.msk [vmem:[%s177 + $0x24] sm:$0xf] %vm1330, %v1275
        %1341 = vst.msk [vmem:[%s177 + $0x28] sm:$0xf] %vm1330, %v1276
        %1342 = vst.msk [vmem:[%s177 + $0x2c] sm:$0xf] %vm1330, %v1277
        %1343 = vst.msk [vmem:[%s177 + $0x30] sm:$0xf] %vm1330, %v1278
        %1344 = vst.msk [vmem:[%s177 + $0x34] sm:$0xf] %vm1330, %v1279
        %1345 = vst.msk [vmem:[%s177 + $0x38] sm:$0xf] %vm1330, %v1280
        %1346 = vst.msk [vmem:[%s177 + $0x3c] sm:$0xf] %vm1330, %v1281
        %1347 = vst.msk [vmem:[%s177 + $0x40] sm:$0xf] %vm1330, %v1282
        %1348 = vst.msk [vmem:[%s177 + $0x44] sm:$0xf] %vm1330, %v1283
        %1349 = vst.msk [vmem:[%s177 + $0x48] sm:$0xf] %vm1330, %v1284
        %1350 = vst.msk [vmem:[%s177 + $0x4c] sm:$0xf] %vm1330, %v1285
        %1351 = vst.msk [vmem:[%s177 + $0x50] sm:$0xf] %vm1330, %v1286
        %1352 = vst.msk [vmem:[%s177 + $0x54] sm:$0xf] %vm1330, %v1287
        %1353 = vst.msk [vmem:[%s177 + $0x58] sm:$0xf] %vm1330, %v1288
        %1354 = vst.msk [vmem:[%s177 + $0x5c] sm:$0xf] %vm1330, %v1289
        %1355 = vst.msk [vmem:[%s177 + $0x60] sm:$0xf] %vm1330, %v1290
        %1356 = vst.msk [vmem:[%s177 + $0x64] sm:$0xf] %vm1330, %v1291
        %1357 = vst.msk [vmem:[%s177 + $0x68] sm:$0xf] %vm1330, %v1292
        %1358 = vst.msk [vmem:[%s177 + $0x6c] sm:$0xf] %vm1330, %v1293
        %1359 = vst.msk [vmem:[%s177 + $0x70] sm:$0xf] %vm1330, %v1294
        %1360 = vst.msk [vmem:[%s177 + $0x74] sm:$0xf] %vm1330, %v1295
        %1361 = vst.msk [vmem:[%s177 + $0x78] sm:$0xf] %vm1330, %v1296
        %1362 = vst.msk [vmem:[%s177 + $0x7c] sm:$0xf] %vm1330, %v1297
        %s1363 = sand.u32 %s90, 1
        %s1364 = sand.u32 %s90, 1
        %s1365 = smul.addr %s1364, 128
        %s1366 = scalar_lea.vmem [#allocation2], %s1365
        // Predicated region
        $region33: #{network_forward.5} parent=31 // pred_check
          %p1367 = pneg %p100
        $region34: #{network_forward.5} parent=31 // pred_check_branch
          %1369 = sbr.rel (%p1367) target = $region36
        $region35: #{network_forward.5} parent=31 // pred_region
          %s1370 = smul.u32 32, %s14
          %s1371 = ssub.s32 61, %s1370
          %p1372 = scmp.lt.s32.totalorder %s1371, 32
          %s1373 = scalar_select %p1372, %s1371, 32
          %s1374 = smul.u32 64, %s1373
          %p1375 = scmp.ne.s32.totalorder 0, %s1374
          %s1376 = smul.addr %s1370, 4
          %s1377 = scalar_lea.vmem %s3, %s1376
          // Predicated region
          $region37: #{network_forward.5} parent=35 // pred_check
            %p1378 = pneg %p1375
          $region38: #{network_forward.5} parent=35 // pred_check_branch
            %1380 = sbr.rel (%p1378) target = $region40
          $region39: #{network_forward.5} parent=35 // pred_region
            // Predicated region
            $region41: #{network_forward.5} parent=39 // pred_check
              _
            $region42: #{network_forward.5} parent=39 // pred_check_branch
              %1382 = sbr.rel target = $region44
            $region43: #{network_forward.5} parent=39 // pred_region
              // Predicated region
              $region63: #{network_forward.5} parent=43 // pred_check
                _
              $region64: #{network_forward.5} parent=43 // pred_check_branch
                %1493 = sbr.rel (0) target = $region66
              $region65: #{network_forward.5} parent=43 // pred_region
                %s1495 = sshrl.u32 %s1373, 5
                // While loop
                $region67: #{network_forward.5} parent=65 // loop_pre_header
                  _
                $region68: #{network_forward.5} parent=65 // loop_header
                  %s1497 = sphi 0, %s1499
                  %p1498 = scmp.ge.s32.totalorder %s1497, %s1495
                  %s1502 = sphi 0, %s1571
                  %s1503 = sphi %s1366, %s1574
                  %s1504 = sphi %s1377, %s1575
                $region69: #{network_forward.5} parent=65 // loop_header_branch
                  %1501 = sbr.rel (%p1498) target = $region73
                $region70: #{network_forward.5} parent=65 // loop_body
                  %v1505 = vld [vmem:[%s1503] sm:$0xf]
                  %1506 = vst [vmem:[%s1504] sm:$0xf] %v1505
                  %v1507 = vld [vmem:[%s1503 + $0x4] sm:$0xf]
                  %1508 = vst [vmem:[%s1504 + $0x4] sm:$0xf] %v1507
                  %v1509 = vld [vmem:[%s1503 + $0x8] sm:$0xf]
                  %1510 = vst [vmem:[%s1504 + $0x8] sm:$0xf] %v1509
                  %v1511 = vld [vmem:[%s1503 + $0xc] sm:$0xf]
                  %1512 = vst [vmem:[%s1504 + $0xc] sm:$0xf] %v1511
                  %v1513 = vld [vmem:[%s1503 + $0x10] sm:$0xf]
                  %1514 = vst [vmem:[%s1504 + $0x10] sm:$0xf] %v1513
                  %v1515 = vld [vmem:[%s1503 + $0x14] sm:$0xf]
                  %1516 = vst [vmem:[%s1504 + $0x14] sm:$0xf] %v1515
                  %v1517 = vld [vmem:[%s1503 + $0x18] sm:$0xf]
                  %1518 = vst [vmem:[%s1504 + $0x18] sm:$0xf] %v1517
                  %v1519 = vld [vmem:[%s1503 + $0x1c] sm:$0xf]
                  %1520 = vst [vmem:[%s1504 + $0x1c] sm:$0xf] %v1519
                  %v1521 = vld [vmem:[%s1503 + $0x20] sm:$0xf]
                  %1522 = vst [vmem:[%s1504 + $0x20] sm:$0xf] %v1521
                  %v1523 = vld [vmem:[%s1503 + $0x24] sm:$0xf]
                  %1524 = vst [vmem:[%s1504 + $0x24] sm:$0xf] %v1523
                  %v1525 = vld [vmem:[%s1503 + $0x28] sm:$0xf]
                  %1526 = vst [vmem:[%s1504 + $0x28] sm:$0xf] %v1525
                  %v1527 = vld [vmem:[%s1503 + $0x2c] sm:$0xf]
                  %1528 = vst [vmem:[%s1504 + $0x2c] sm:$0xf] %v1527
                  %v1529 = vld [vmem:[%s1503 + $0x30] sm:$0xf]
                  %1530 = vst [vmem:[%s1504 + $0x30] sm:$0xf] %v1529
                  %v1531 = vld [vmem:[%s1503 + $0x34] sm:$0xf]
                  %1532 = vst [vmem:[%s1504 + $0x34] sm:$0xf] %v1531
                  %v1533 = vld [vmem:[%s1503 + $0x38] sm:$0xf]
                  %1534 = vst [vmem:[%s1504 + $0x38] sm:$0xf] %v1533
                  %v1535 = vld [vmem:[%s1503 + $0x3c] sm:$0xf]
                  %1536 = vst [vmem:[%s1504 + $0x3c] sm:$0xf] %v1535
                  %v1537 = vld [vmem:[%s1503 + $0x40] sm:$0xf]
                  %1538 = vst [vmem:[%s1504 + $0x40] sm:$0xf] %v1537
                  %v1539 = vld [vmem:[%s1503 + $0x44] sm:$0xf]
                  %1540 = vst [vmem:[%s1504 + $0x44] sm:$0xf] %v1539
                  %v1541 = vld [vmem:[%s1503 + $0x48] sm:$0xf]
                  %1542 = vst [vmem:[%s1504 + $0x48] sm:$0xf] %v1541
                  %v1543 = vld [vmem:[%s1503 + $0x4c] sm:$0xf]
                  %1544 = vst [vmem:[%s1504 + $0x4c] sm:$0xf] %v1543
                  %v1545 = vld [vmem:[%s1503 + $0x50] sm:$0xf]
                  %1546 = vst [vmem:[%s1504 + $0x50] sm:$0xf] %v1545
                  %v1547 = vld [vmem:[%s1503 + $0x54] sm:$0xf]
                  %1548 = vst [vmem:[%s1504 + $0x54] sm:$0xf] %v1547
                  %v1549 = vld [vmem:[%s1503 + $0x58] sm:$0xf]
                  %1550 = vst [vmem:[%s1504 + $0x58] sm:$0xf] %v1549
                  %v1551 = vld [vmem:[%s1503 + $0x5c] sm:$0xf]
                  %1552 = vst [vmem:[%s1504 + $0x5c] sm:$0xf] %v1551
                  %v1553 = vld [vmem:[%s1503 + $0x60] sm:$0xf]
                  %1554 = vst [vmem:[%s1504 + $0x60] sm:$0xf] %v1553
                  %v1555 = vld [vmem:[%s1503 + $0x64] sm:$0xf]
                  %1556 = vst [vmem:[%s1504 + $0x64] sm:$0xf] %v1555
                  %v1557 = vld [vmem:[%s1503 + $0x68] sm:$0xf]
                  %1558 = vst [vmem:[%s1504 + $0x68] sm:$0xf] %v1557
                  %v1559 = vld [vmem:[%s1503 + $0x6c] sm:$0xf]
                  %1560 = vst [vmem:[%s1504 + $0x6c] sm:$0xf] %v1559
                  %v1561 = vld [vmem:[%s1503 + $0x70] sm:$0xf]
                  %1562 = vst [vmem:[%s1504 + $0x70] sm:$0xf] %v1561
                  %v1563 = vld [vmem:[%s1503 + $0x74] sm:$0xf]
                  %1564 = vst [vmem:[%s1504 + $0x74] sm:$0xf] %v1563
                  %v1565 = vld [vmem:[%s1503 + $0x78] sm:$0xf]
                  %1566 = vst [vmem:[%s1504 + $0x78] sm:$0xf] %v1565
                  %v1567 = vld [vmem:[%s1503 + $0x7c] sm:$0xf]
                  %1568 = vst [vmem:[%s1504 + $0x7c] sm:$0xf] %v1567
                  %s1569 = sadd.s32 1, %s1502
                  %p1570 = scmp.ge.s32.totalorder %s1569, %s1495
                  %s1571 = scalar_select %p1570, 0, %s1569
                  %s1572 = smul.u32 %s1571, 128
                  %s1573 = smul.u32 %s1571, 128
                  %s1574 = scalar_lea.vmem %s1366, %s1572 [#allocation2]
                  %s1575 = scalar_lea.vmem %s1377, %s1573
                $region71: #{network_forward.5} parent=65 // loop_footer
                  %s1499 = sadd.s32 %s1497, 1
                $region72: #{network_forward.5} parent=65 // loop_footer_branch
                  %1496 = sbr.rel target = $region68
                $region73: #{network_forward.5} parent=65 // loop_exit
                  _
                %s1576 = sshrl.u32 %s1373, 5
                %s1577 = sand.u32 %s1373, 31
                %s1578 = smul.u32 %s1576, 32
                %s1579 = smul.u32 4, %s1578
                %s1580 = scalar_lea.vmem %s1366, %s1579 [#allocation2]
                %s1581 = smul.u32 4, %s1578
                %s1582 = scalar_lea.vmem %s1377, %s1581
                // While loop
                $region74: #{network_forward.5} parent=65 // loop_pre_header
                  _
                $region75: #{network_forward.5} parent=65 // loop_header
                  %s1584 = sphi 0, %s1586
                  %p1585 = scmp.ge.s32.totalorder %s1584, %s1577
                  %s1589 = sphi 0, %s1596
                  %s1590 = sphi %s1580, %s1599
                  %s1591 = sphi %s1582, %s1600
                $region76: #{network_forward.5} parent=65 // loop_header_branch
                  %1588 = sbr.rel (%p1585) target = $region80
                $region77: #{network_forward.5} parent=65 // loop_body
                  %v1592 = vld [vmem:[%s1590] sm:$0xf]
                  %1593 = vst [vmem:[%s1591] sm:$0xf] %v1592
                  %s1594 = sadd.s32 1, %s1589
                  %p1595 = scmp.ge.s32.totalorder %s1594, %s1577
                  %s1596 = scalar_select %p1595, 0, %s1594
                  %s1597 = smul.u32 %s1596, 4
                  %s1598 = smul.u32 %s1596, 4
                  %s1599 = scalar_lea.vmem %s1580, %s1597 [#allocation2]
                  %s1600 = scalar_lea.vmem %s1582, %s1598
                $region78: #{network_forward.5} parent=65 // loop_footer
                  %s1586 = sadd.s32 %s1584, 1
                $region79: #{network_forward.5} parent=65 // loop_footer_branch
                  %1583 = sbr.rel target = $region75
                $region80: #{network_forward.5} parent=65 // loop_exit
                  _
              $region66: #{network_forward.5} parent=43 // pred_fallthru
                _
            $region44: #{network_forward.5} parent=39 // pred_fallthru
              _
            // Predicated region
            $region45: #{network_forward.5} parent=39 // pred_check
              _
            $region46: #{network_forward.5} parent=39 // pred_check_branch
              %1384 = sbr.rel (0) target = $region48
            $region47: #{network_forward.5} parent=39 // pred_region
              %s1386 = sshrl.u32 %s1373, 5
              // While loop
              $region49: #{network_forward.5} parent=47 // loop_pre_header
                _
              $region50: #{network_forward.5} parent=47 // loop_header
                %s1388 = sphi 0, %s1390
                %p1389 = scmp.ge.s32.totalorder %s1388, %s1386
                %s1393 = sphi 0, %s1462
                %s1394 = sphi %s1366, %s1465
                %s1395 = sphi %s1377, %s1466
              $region51: #{network_forward.5} parent=47 // loop_header_branch
                %1392 = sbr.rel (%p1389) target = $region55
              $region52: #{network_forward.5} parent=47 // loop_body
                %v1396 = vld [vmem:[%s1394] sm:$0xf]
                %1397 = vst [vmem:[%s1395] sm:$0xf] %v1396
                %v1398 = vld [vmem:[%s1394 + $0x4] sm:$0xf]
                %1399 = vst [vmem:[%s1395 + $0x4] sm:$0xf] %v1398
                %v1400 = vld [vmem:[%s1394 + $0x8] sm:$0xf]
                %1401 = vst [vmem:[%s1395 + $0x8] sm:$0xf] %v1400
                %v1402 = vld [vmem:[%s1394 + $0xc] sm:$0xf]
                %1403 = vst [vmem:[%s1395 + $0xc] sm:$0xf] %v1402
                %v1404 = vld [vmem:[%s1394 + $0x10] sm:$0xf]
                %1405 = vst [vmem:[%s1395 + $0x10] sm:$0xf] %v1404
                %v1406 = vld [vmem:[%s1394 + $0x14] sm:$0xf]
                %1407 = vst [vmem:[%s1395 + $0x14] sm:$0xf] %v1406
                %v1408 = vld [vmem:[%s1394 + $0x18] sm:$0xf]
                %1409 = vst [vmem:[%s1395 + $0x18] sm:$0xf] %v1408
                %v1410 = vld [vmem:[%s1394 + $0x1c] sm:$0xf]
                %1411 = vst [vmem:[%s1395 + $0x1c] sm:$0xf] %v1410
                %v1412 = vld [vmem:[%s1394 + $0x20] sm:$0xf]
                %1413 = vst [vmem:[%s1395 + $0x20] sm:$0xf] %v1412
                %v1414 = vld [vmem:[%s1394 + $0x24] sm:$0xf]
                %1415 = vst [vmem:[%s1395 + $0x24] sm:$0xf] %v1414
                %v1416 = vld [vmem:[%s1394 + $0x28] sm:$0xf]
                %1417 = vst [vmem:[%s1395 + $0x28] sm:$0xf] %v1416
                %v1418 = vld [vmem:[%s1394 + $0x2c] sm:$0xf]
                %1419 = vst [vmem:[%s1395 + $0x2c] sm:$0xf] %v1418
                %v1420 = vld [vmem:[%s1394 + $0x30] sm:$0xf]
                %1421 = vst [vmem:[%s1395 + $0x30] sm:$0xf] %v1420
                %v1422 = vld [vmem:[%s1394 + $0x34] sm:$0xf]
                %1423 = vst [vmem:[%s1395 + $0x34] sm:$0xf] %v1422
                %v1424 = vld [vmem:[%s1394 + $0x38] sm:$0xf]
                %1425 = vst [vmem:[%s1395 + $0x38] sm:$0xf] %v1424
                %v1426 = vld [vmem:[%s1394 + $0x3c] sm:$0xf]
                %1427 = vst [vmem:[%s1395 + $0x3c] sm:$0xf] %v1426
                %v1428 = vld [vmem:[%s1394 + $0x40] sm:$0xf]
                %1429 = vst [vmem:[%s1395 + $0x40] sm:$0xf] %v1428
                %v1430 = vld [vmem:[%s1394 + $0x44] sm:$0xf]
                %1431 = vst [vmem:[%s1395 + $0x44] sm:$0xf] %v1430
                %v1432 = vld [vmem:[%s1394 + $0x48] sm:$0xf]
                %1433 = vst [vmem:[%s1395 + $0x48] sm:$0xf] %v1432
                %v1434 = vld [vmem:[%s1394 + $0x4c] sm:$0xf]
                %1435 = vst [vmem:[%s1395 + $0x4c] sm:$0xf] %v1434
                %v1436 = vld [vmem:[%s1394 + $0x50] sm:$0xf]
                %1437 = vst [vmem:[%s1395 + $0x50] sm:$0xf] %v1436
                %v1438 = vld [vmem:[%s1394 + $0x54] sm:$0xf]
                %1439 = vst [vmem:[%s1395 + $0x54] sm:$0xf] %v1438
                %v1440 = vld [vmem:[%s1394 + $0x58] sm:$0xf]
                %1441 = vst [vmem:[%s1395 + $0x58] sm:$0xf] %v1440
                %v1442 = vld [vmem:[%s1394 + $0x5c] sm:$0xf]
                %1443 = vst [vmem:[%s1395 + $0x5c] sm:$0xf] %v1442
                %v1444 = vld [vmem:[%s1394 + $0x60] sm:$0xf]
                %1445 = vst [vmem:[%s1395 + $0x60] sm:$0xf] %v1444
                %v1446 = vld [vmem:[%s1394 + $0x64] sm:$0xf]
                %1447 = vst [vmem:[%s1395 + $0x64] sm:$0xf] %v1446
                %v1448 = vld [vmem:[%s1394 + $0x68] sm:$0xf]
                %1449 = vst [vmem:[%s1395 + $0x68] sm:$0xf] %v1448
                %v1450 = vld [vmem:[%s1394 + $0x6c] sm:$0xf]
                %1451 = vst [vmem:[%s1395 + $0x6c] sm:$0xf] %v1450
                %v1452 = vld [vmem:[%s1394 + $0x70] sm:$0xf]
                %1453 = vst [vmem:[%s1395 + $0x70] sm:$0xf] %v1452
                %v1454 = vld [vmem:[%s1394 + $0x74] sm:$0xf]
                %1455 = vst [vmem:[%s1395 + $0x74] sm:$0xf] %v1454
                %v1456 = vld [vmem:[%s1394 + $0x78] sm:$0xf]
                %1457 = vst [vmem:[%s1395 + $0x78] sm:$0xf] %v1456
                %v1458 = vld [vmem:[%s1394 + $0x7c] sm:$0xf]
                %1459 = vst [vmem:[%s1395 + $0x7c] sm:$0xf] %v1458
                %s1460 = sadd.s32 1, %s1393
                %p1461 = scmp.ge.s32.totalorder %s1460, %s1386
                %s1462 = scalar_select %p1461, 0, %s1460
                %s1463 = smul.u32 %s1462, 128
                %s1464 = smul.u32 %s1462, 128
                %s1465 = scalar_lea.vmem %s1366, %s1463 [#allocation2]
                %s1466 = scalar_lea.vmem %s1377, %s1464
              $region53: #{network_forward.5} parent=47 // loop_footer
                %s1390 = sadd.s32 %s1388, 1
              $region54: #{network_forward.5} parent=47 // loop_footer_branch
                %1387 = sbr.rel target = $region50
              $region55: #{network_forward.5} parent=47 // loop_exit
                _
              %s1467 = sshrl.u32 %s1373, 5
              %s1468 = sand.u32 %s1373, 31
              %s1469 = smul.u32 %s1467, 32
              %s1470 = smul.u32 4, %s1469
              %s1471 = scalar_lea.vmem %s1366, %s1470 [#allocation2]
              %s1472 = smul.u32 4, %s1469
              %s1473 = scalar_lea.vmem %s1377, %s1472
              // While loop
              $region56: #{network_forward.5} parent=47 // loop_pre_header
                _
              $region57: #{network_forward.5} parent=47 // loop_header
                %s1475 = sphi 0, %s1477
                %p1476 = scmp.ge.s32.totalorder %s1475, %s1468
                %s1480 = sphi 0, %s1487
                %s1481 = sphi %s1471, %s1490
                %s1482 = sphi %s1473, %s1491
              $region58: #{network_forward.5} parent=47 // loop_header_branch
                %1479 = sbr.rel (%p1476) target = $region62
              $region59: #{network_forward.5} parent=47 // loop_body
                %v1483 = vld [vmem:[%s1481] sm:$0xf]
                %1484 = vst [vmem:[%s1482] sm:$0xf] %v1483
                %s1485 = sadd.s32 1, %s1480
                %p1486 = scmp.ge.s32.totalorder %s1485, %s1468
                %s1487 = scalar_select %p1486, 0, %s1485
                %s1488 = smul.u32 %s1487, 4
                %s1489 = smul.u32 %s1487, 4
                %s1490 = scalar_lea.vmem %s1471, %s1488 [#allocation2]
                %s1491 = scalar_lea.vmem %s1473, %s1489
              $region60: #{network_forward.5} parent=47 // loop_footer
                %s1477 = sadd.s32 %s1475, 1
              $region61: #{network_forward.5} parent=47 // loop_footer_branch
                %1474 = sbr.rel target = $region57
              $region62: #{network_forward.5} parent=47 // loop_exit
                _
            $region48: #{network_forward.5} parent=39 // pred_fallthru
              _
          $region40: #{network_forward.5} parent=35 // pred_fallthru
            _
          %1601 = vnop
        $region36: #{network_forward.5} parent=31 // pred_fallthru
          _
      $region32: #{network_forward.5} parent=5 // pred_fallthru
        _
      %p1602 = scmp.le.s32.totalorder 2, %s9
      // Predicated region
      $region81: #{network_forward.5} parent=5 // pred_check
        %p1603 = pneg %p1602
      $region82: #{network_forward.5} parent=5 // pred_check_branch
        %1605 = sbr.rel (%p1603) target = $region84
      $region83: #{network_forward.5} parent=5 // pred_region
        %s1606 = ssub.s32 %s9, 2
        // Predicated region
        $region85: #{network_forward.5} parent=83 // pred_check
          %p1607 = pneg %p106
        $region86: #{network_forward.5} parent=83 // pred_check_branch
          %1609 = sbr.rel (%p1607) target = $region88
        $region87: #{network_forward.5} parent=83 // pred_region
          %s1610 = sand.u32 %s91, 1
          %s1611 = sand.u32 %s91, 1
          %s1612 = smul.addr %s1611, 128
          %s1613 = scalar_lea.vmem [#allocation2], %s1612
        $region88: #{network_forward.5} parent=83 // pred_fallthru
          _
      $region84: #{network_forward.5} parent=5 // pred_fallthru
        _
    $region6: #{network_forward.5} parent=1 // loop_footer
      %s13 = sadd.s32 1, %s9
    $region7: #{network_forward.5} parent=1 // loop_footer_branch
      %8 = sbr.rel target = $region3
    $region8: #{network_forward.5} parent=1 // loop_exit
      _

// kernel: network_forward.6
$region0: #{network_forward.6}
  #allocation0 [shape = 'u32[]', space=smem, size = 0x4, offset = 0x4, fixed_abs, tag = 'smem constant byte address 0x4 - core index']
  #allocation1 [shape = 'u32[144,128]{1,0:T(1,128)}', space=vmem, size = 0x12000, scoped, tag = 'internal scratch']
  %s0 = inlined_call_operand.vmem [shape: bf16[294,576], index: 0, kind: input, shape index: {}]
  %s1 = inlined_call_operand.vmem [shape: bf16[576,32], index: 1, kind: input, shape index: {}]
  %s2 = inlined_call_operand.vmem [shape: f32[1,32], index: 2, kind: input, shape index: {}]
  %s3 = inlined_call_operand.vmem [shape: bf16[294,32], index: 3, kind: output, shape index: {}]
  %s4 = sld [smem:[#allocation0]]
  $region89: #{network_forward.6} parent=0
    _
  %s6 = ssub.s32 1, %s4
  %s7 = scalar_select 0, %s6, %s4
  $region1: #{network_forward.6} parent=0
    #allocation2 [shape = 'u8[81920]{0}', space=vmem, size = 0x14000, scoped, tag = 'output window, operand 0']
    loop: start=0, step=1, limit=4
    $region2: #{network_forward.6} parent=1 // loop_pre_header
      _
    $region3: #{network_forward.6} parent=1 // loop_header
      %s9 = sphi 0, %s13
      %p10 = scmp.ge.s32.totalorder %s9, 4
      %s19 = sphi 0, %s21
      %s22 = sphi 0, %s19
      %s23 = sphi 0, %s22
      %s39 = sphi 0, %s23
      %s43 = sphi 0, %s43
      %s45 = sphi 0, %s43
      %s46 = sphi 0, %s45
      %s60 = sphi 0, %s46
      %s64 = sphi 0, %s64
      %s66 = sphi 0, %s64
      %s67 = sphi 0, %s66
      %s81 = sphi 0, %s67
      %s87 = sphi 0, %s89
      %s90 = sphi 0, %s87
      %s91 = sphi 0, %s90
      %s107 = sphi 0, %s91
    $region4: #{network_forward.6} parent=1 // loop_header_branch
      %12 = sbr.rel (%p10) target = $region8
    $region5: #{network_forward.6} parent=1 // loop_body
      %s14 = ssub.s32 %s9, 1
      %s15 = ssub.s32 %s9, 2
      %s16 = sadd.s32 %s9, 1
      %s17 = ssub.s32 %s9, %s16
      %p18 = scmp.eq.s32.totalorder %s17, 0
      %s20 = sadd.s32 %s19, 1
      %s21 = scalar_select %p18, %s19, %s20
      %p24 = pneg %p18
      %p25 = scmp.eq.s32.totalorder %s9, 1
      %p26 = por %p24, %p25
      %p27 = scmp.ne.s32.totalorder %s19, %s22
      %p28 = scmp.eq.s32.totalorder %s9, 0
      %p29 = por %p27, %p28
      %p30 = scmp.ne.s32.totalorder %s19, %s22
      %p31 = scmp.eq.s32.totalorder %s14, 1
      %p32 = por %p30, %p31
      %p33 = scmp.ne.s32.totalorder %s22, %s23
      %p34 = scmp.eq.s32.totalorder %s14, 0
      %p35 = por %p33, %p34
      %p36 = scmp.ne.s32.totalorder %s22, %s23
      %p37 = scmp.eq.s32.totalorder %s15, 1
      %p38 = por %p36, %p37
      %p40 = scmp.ne.s32.totalorder %s23, %s39
      %p41 = scmp.eq.s32.totalorder %s15, 0
      %p42 = por %p40, %p41
      %s44 = sadd.s32 %s43, 1
      %p47 = scmp.eq.s32.totalorder %s9, 1
      %p48 = scmp.ne.s32.totalorder %s43, %s45
      %p49 = scmp.eq.s32.totalorder %s9, 0
      %p50 = por %p48, %p49
      %p51 = scmp.ne.s32.totalorder %s43, %s45
      %p52 = scmp.eq.s32.totalorder %s14, 1
      %p53 = por %p51, %p52
      %p54 = scmp.ne.s32.totalorder %s45, %s46
      %p55 = scmp.eq.s32.totalorder %s14, 0
      %p56 = por %p54, %p55
      %p57 = scmp.ne.s32.totalorder %s45, %s46
      %p58 = scmp.eq.s32.totalorder %s15, 1
      %p59 = por %p57, %p58
      %p61 = scmp.ne.s32.totalorder %s46, %s60
      %p62 = scmp.eq.s32.totalorder %s15, 0
      %p63 = por %p61, %p62
      %s65 = sadd.s32 %s64, 1
      %p68 = scmp.eq.s32.totalorder %s9, 1
      %p69 = scmp.ne.s32.totalorder %s64, %s66
      %p70 = scmp.eq.s32.totalorder %s9, 0
      %p71 = por %p69, %p70
      %p72 = scmp.ne.s32.totalorder %s64, %s66
      %p73 = scmp.eq.s32.totalorder %s14, 1
      %p74 = por %p72, %p73
      %p75 = scmp.ne.s32.totalorder %s66, %s67
      %p76 = scmp.eq.s32.totalorder %s14, 0
      %p77 = por %p75, %p76
      %p78 = scmp.ne.s32.totalorder %s66, %s67
      %p79 = scmp.eq.s32.totalorder %s15, 1
      %p80 = por %p78, %p79
      %p82 = scmp.ne.s32.totalorder %s67, %s81
      %p83 = scmp.eq.s32.totalorder %s15, 0
      %p84 = por %p82, %p83
      %s85 = ssub.s32 %s9, %s16
      %p86 = scmp.eq.s32.totalorder %s85, 0
      %s88 = sadd.s32 %s87, 1
      %s89 = scalar_select %p86, %s87, %s88
      %p92 = pneg %p86
      %p93 = scmp.eq.s32.totalorder %s9, 1
      %p94 = por %p92, %p93
      %p95 = scmp.ne.s32.totalorder %s87, %s90
      %p96 = scmp.eq.s32.totalorder %s9, 0
      %p97 = por %p95, %p96
      %p98 = scmp.ne.s32.totalorder %s87, %s90
      %p99 = scmp.eq.s32.totalorder %s14, 1
      %p100 = por %p98, %p99
      %p101 = scmp.ne.s32.totalorder %s90, %s91
      %p102 = scmp.eq.s32.totalorder %s14, 0
      %p103 = por %p101, %p102
      %p104 = scmp.ne.s32.totalorder %s90, %s91
      %p105 = scmp.eq.s32.totalorder %s15, 1
      %p106 = por %p104, %p105
      %p108 = scmp.ne.s32.totalorder %s91, %s107
      %p109 = scmp.eq.s32.totalorder %s15, 0
      %p110 = por %p108, %p109
      %p111 = scmp.le.s32.totalorder 1, %s9
      %p112 = scmp.lt.s32.totalorder %s9, 3
      %p113 = pnand %p111, %p112
      %p114 = pneg %p113
      // Predicated region
      $region9: #{network_forward.6} parent=5 // pred_check
        _
      $region10: #{network_forward.6} parent=5 // pred_check_branch
        %116 = sbr.rel (%p113) target = $region12
      $region11: #{network_forward.6} parent=5 // pred_region
        %s117 = ssub.s32 %s9, 1
        // Predicated region
        $region13: #{network_forward.6} parent=11 // pred_check
          %p118 = pneg %p56
        $region14: #{network_forward.6} parent=11 // pred_check_branch
          %120 = sbr.rel (%p118) target = $region16
        $region15: #{network_forward.6} parent=11 // pred_region
          _
        $region16: #{network_forward.6} parent=11 // pred_fallthru
          _
        // Predicated region
        $region17: #{network_forward.6} parent=11 // pred_check
          %p121 = pneg %p77
        $region18: #{network_forward.6} parent=11 // pred_check_branch
          %123 = sbr.rel (%p121) target = $region20
        $region19: #{network_forward.6} parent=11 // pred_region
          _
        $region20: #{network_forward.6} parent=11 // pred_fallthru
          _
      $region12: #{network_forward.6} parent=5 // pred_fallthru
        _
      %p124 = scmp.lt.s32.totalorder %s9, 2
      // Predicated region
      $region21: #{network_forward.6} parent=5 // pred_check
        %p125 = pneg %p124
      $region22: #{network_forward.6} parent=5 // pred_check_branch
        %127 = sbr.rel (%p125) target = $region24
      $region23: #{network_forward.6} parent=5 // pred_region
        // Predicated region
        $region25: #{network_forward.6} parent=23 // pred_check
          %p128 = pneg %p29
        $region26: #{network_forward.6} parent=23 // pred_check_branch
          %130 = sbr.rel (%p128) target = $region28
        $region27: #{network_forward.6} parent=23 // pred_region
          %s131 = smul.u32 20, %s9
          %s132 = ssub.s32 37, %s131
          %p133 = scmp.lt.s32.totalorder %s132, 20
          %s134 = scalar_select %p133, %s132, 20
          %s135 = smul.u32 64, %s134
          %s136 = smul.u32 %s135, 5
          %p137 = scmp.lt.s32.totalorder %s131, 36
          %s138 = scalar_select %p137, %s131, 36
          %s139 = smul.addr %s138, 5
          %s140 = smul.addr %s139, 4
          %s141 = scalar_lea.vmem %s0, %s140
          %s142 = smul.u32 20, %s9
          %s143 = ssub.s32 37, %s142
          %p144 = scmp.lt.s32.totalorder %s143, 20
          %s145 = scalar_select %p144, %s143, 20
          %s146 = smul.u32 64, %s145
          %s147 = smul.u32 %s146, 5
        $region28: #{network_forward.6} parent=23 // pred_fallthru
          _
      $region24: #{network_forward.6} parent=5 // pred_fallthru
        _
      %p148 = scmp.le.s32.totalorder 1, %s9
      %p149 = scmp.lt.s32.totalorder %s9, 3
      %p150 = pnand %p148, %p149
      %p151 = pneg %p150
      // Predicated region
      $region29: #{network_forward.6} parent=5 // pred_check
        _
      $region30: #{network_forward.6} parent=5 // pred_check_branch
        %153 = sbr.rel (%p150) target = $region32
      $region31: #{network_forward.6} parent=5 // pred_region
        %s154 = ssub.s32 %s9, 1
        %s155 = smul.u32 20, %s14
        %s156 = ssub.s32 37, %s155
        %p157 = scmp.lt.s32.totalorder %s156, 20
        %s158 = scalar_select %p157, %s156, 20
        %s159 = smul.u32 64, %s158
        %s160 = smul.u32 %s159, 5
        %p161 = scmp.lt.s32.totalorder %s155, 36
        %s162 = scalar_select %p161, %s155, 36
        %s163 = smul.addr %s162, 5
        %s164 = smul.addr %s163, 4
        %s165 = scalar_lea.vmem %s0, %s164
        %p166 = pneg %p35
        %p167 = pneg %p32
        %p168 = pneg %p56
        %p169 = pneg %p53
        %p170 = pneg %p77
        %p171 = pneg %p74
        %p172 = pneg %p103
        %p173 = pneg %p100
        %s174 = sand.u32 %s90, 1
        %s175 = sand.u32 %s90, 1
        %s176 = smul.addr %s175, 80
        %s177 = scalar_lea.vmem [#allocation2], %s176
        %s178 = smul.u32 20, %s14
        %s179 = ssub.s32 37, %s178
        %p180 = scmp.lt.s32.totalorder %s179, 20
        %s181 = scalar_select %p180, %s179, 20
        %s182 = smul.u32 64, %s181
        %s183 = smul.u32 %s182, 5
        %p184 = scmp.lt.s32.totalorder %s178, 36
        %s185 = scalar_select %p184, %s178, 36
        %s186 = smul.addr %s185, 5
        %s187 = smul.addr %s186, 4
        %s188 = scalar_lea.vmem %s0, %s187
        %s189 = smul.u32 20, %s14
        %s190 = ssub.s32 37, %s189
        %p191 = scmp.lt.s32.totalorder %s190, 20
        %s192 = scalar_select %p191, %s190, 20
        %s193 = smul.u32 64, %s192
        %s194 = smul.u32 %s193, 5
        %s195 = smul.u32 20, %s14
        %s196 = ssub.s32 37, %s195
        %p197 = scmp.lt.s32.totalorder %s196, 20
        %s198 = scalar_select %p197, %s196, 20
        %s199 = smul.u32 64, %s198
        %v201 = vld [vmem:[%s188] sm:$0xff]
        %v202 = vld [vmem:[%s188 + $0x8] sm:$0xff]
        %v203 = vld [vmem:[%s188 + $0x10] sm:$0xf]
        %v204 = vld [vmem:[%s188 + $0x14] sm:$0xff]
        %v205 = vld [vmem:[%s188 + $0x1c] sm:$0xff]
        %v206 = vld [vmem:[%s188 + $0x24] sm:$0xf]
        %v207 = vld [vmem:[%s188 + $0x28] sm:$0xff]
        %v208 = vld [vmem:[%s188 + $0x30] sm:$0xff]
        %v209 = vld [vmem:[%s188 + $0x38] sm:$0xf]
        %v210 = vld [vmem:[%s188 + $0x3c] sm:$0xff]
        %v211 = vld [vmem:[%s188 + $0x44] sm:$0xff]
        %v212 = vld [vmem:[%s188 + $0x4c] sm:$0xf]
        %v213 = vld [vmem:[%s188 + $0x50] sm:$0xff]
        %v214 = vld [vmem:[%s188 + $0x58] sm:$0xff]
        %v215 = vld [vmem:[%s188 + $0x60] sm:$0xf]
        %v216 = vld [vmem:[%s188 + $0x64] sm:$0xff]
        %v217 = vld [vmem:[%s188 + $0x6c] sm:$0xff]
        %v218 = vld [vmem:[%s188 + $0x74] sm:$0xf]
        %v219 = vld [vmem:[%s188 + $0x78] sm:$0xff]
        %v220 = vld [vmem:[%s188 + $0x80] sm:$0xff]
        %v221 = vld [vmem:[%s188 + $0x88] sm:$0xf]
        %v222 = vld [vmem:[%s188 + $0x8c] sm:$0xff]
        %v223 = vld [vmem:[%s188 + $0x94] sm:$0xff]
        %v224 = vld [vmem:[%s188 + $0x9c] sm:$0xf]
        %v225 = vld [vmem:[%s188 + $0xa0] sm:$0xff]
        %v226 = vld [vmem:[%s188 + $0xa8] sm:$0xff]
        %v227 = vld [vmem:[%s188 + $0xb0] sm:$0xf]
        %v228 = vld [vmem:[%s188 + $0xb4] sm:$0xff]
        %v229 = vld [vmem:[%s188 + $0xbc] sm:$0xff]
        %v230 = vld [vmem:[%s188 + $0xc4] sm:$0xf]
        %v231 = vld [vmem:[%s188 + $0xc8] sm:$0xff]
        %v232 = vld [vmem:[%s188 + $0xd0] sm:$0xff]
        %v233 = vld [vmem:[%s188 + $0xd8] sm:$0xf]
        %v234 = vld [vmem:[%s188 + $0xdc] sm:$0xff]
        %v235 = vld [vmem:[%s188 + $0xe4] sm:$0xff]
        %v236 = vld [vmem:[%s188 + $0xec] sm:$0xf]
        %v237 = vld [vmem:[%s188 + $0xf0] sm:$0xff]
        %v238 = vld [vmem:[%s188 + $0xf8] sm:$0xff]
        %v239 = vld [vmem:[%s188 + $0x100] sm:$0xf]
        %v240 = vld [vmem:[%s188 + $0x104] sm:$0xff]
        %v241 = vld [vmem:[%s188 + $0x10c] sm:$0xff]
        %v242 = vld [vmem:[%s188 + $0x114] sm:$0xf]
        %v243 = vld [vmem:[%s188 + $0x118] sm:$0xff]
        %v244 = vld [vmem:[%s188 + $0x120] sm:$0xff]
        %v245 = vld [vmem:[%s188 + $0x128] sm:$0xf]
        %v246 = vld [vmem:[%s188 + $0x12c] sm:$0xff]
        %v247 = vld [vmem:[%s188 + $0x134] sm:$0xff]
        %v248 = vld [vmem:[%s188 + $0x13c] sm:$0xf]
        %v249 = vld [vmem:[%s188 + $0x140] sm:$0xff]
        %v250 = vld [vmem:[%s188 + $0x148] sm:$0xff]
        %v251 = vld [vmem:[%s188 + $0x150] sm:$0xf]
        %v252 = vld [vmem:[%s188 + $0x154] sm:$0xff]
        %v253 = vld [vmem:[%s188 + $0x15c] sm:$0xff]
        %v254 = vld [vmem:[%s188 + $0x164] sm:$0xf]
        %v255 = vld [vmem:[%s188 + $0x168] sm:$0xff]
        %v256 = vld [vmem:[%s188 + $0x170] sm:$0xff]
        %v257 = vld [vmem:[%s188 + $0x178] sm:$0xf]
        %v258 = vld [vmem:[%s188 + $0x17c] sm:$0xff]
        %v259 = vld [vmem:[%s188 + $0x184] sm:$0xff]
        %v260 = vld [vmem:[%s188 + $0x18c] sm:$0xf]
        %v261 = vld [vmem:[%s1] sm:$0xf]
        %v262 = vld [vmem:[%s1 + $0x4] sm:$0xf]
        %v263 = vld [vmem:[%s1 + $0x8] sm:$0xf]
        %v264 = vld [vmem:[%s1 + $0xc] sm:$0xf]
        %v265 = vld [vmem:[%s1 + $0x10] sm:$0xf]
        %v266 = vld [vmem:[%s1 + $0x14] sm:$0xf]
        %v267 = vld [vmem:[%s1 + $0x18] sm:$0xf]
        %v268 = vld [vmem:[%s1 + $0x1c] sm:$0xf]
        %v269 = vld [vmem:[%s1 + $0x20] sm:$0xf]
        %v270 = vld [vmem:[%s1 + $0x24] sm:$0xf]
        %v271 = vld [vmem:[%s1 + $0x28] sm:$0xf]
        %v272 = vld [vmem:[%s1 + $0x2c] sm:$0xf]
        %v273 = vld [vmem:[%s1 + $0x30] sm:$0xf]
        %v274 = vld [vmem:[%s1 + $0x34] sm:$0xf]
        %v275 = vld [vmem:[%s1 + $0x38] sm:$0xf]
        %v276 = vld [vmem:[%s1 + $0x3c] sm:$0xf]
        %v277 = vld [vmem:[%s1 + $0x40] sm:$0xf]
        %v278 = vld [vmem:[%s1 + $0x44] sm:$0xf]
        %v279 = vld [vmem:[%s1 + $0x48] sm:$0xf]
        %v280 = vld [vmem:[%s1 + $0x4c] sm:$0xf]
        %v281 = vld [vmem:[%s1 + $0x50] sm:$0xf]
        %v282 = vld [vmem:[%s1 + $0x54] sm:$0xf]
        %v283 = vld [vmem:[%s1 + $0x58] sm:$0xf]
        %v284 = vld [vmem:[%s1 + $0x5c] sm:$0xf]
        %v285 = vld [vmem:[%s1 + $0x60] sm:$0xf]
        %v286 = vld [vmem:[%s1 + $0x64] sm:$0xf]
        %v287 = vld [vmem:[%s1 + $0x68] sm:$0xf]
        %v288 = vld [vmem:[%s1 + $0x6c] sm:$0xf]
        %v289 = vld [vmem:[%s1 + $0x70] sm:$0xf]
        %v290 = vld [vmem:[%s1 + $0x74] sm:$0xf]
        %v291 = vld [vmem:[%s1 + $0x78] sm:$0xf]
        %v292 = vld [vmem:[%s1 + $0x7c] sm:$0xf]
        %v293 = vld [vmem:[%s1 + $0x80] sm:$0xf]
        %v294 = vld [vmem:[%s1 + $0x84] sm:$0xf]
        %v295 = vld [vmem:[%s1 + $0x88] sm:$0xf]
        %v296 = vld [vmem:[%s1 + $0x8c] sm:$0xf]
        %v297 = vld [vmem:[%s1 + $0x90] sm:$0xf]
        %v298 = vld [vmem:[%s1 + $0x94] sm:$0xf]
        %v299 = vld [vmem:[%s1 + $0x98] sm:$0xf]
        %v300 = vld [vmem:[%s1 + $0x9c] sm:$0xf]
        %v301 = vld [vmem:[%s1 + $0xa0] sm:$0xf]
        %v302 = vld [vmem:[%s1 + $0xa4] sm:$0xf]
        %v303 = vld [vmem:[%s1 + $0xa8] sm:$0xf]
        %v304 = vld [vmem:[%s1 + $0xac] sm:$0xf]
        %v305 = vld [vmem:[%s1 + $0xb0] sm:$0xf]
        %v306 = vld [vmem:[%s1 + $0xb4] sm:$0xf]
        %v307 = vld [vmem:[%s1 + $0xb8] sm:$0xf]
        %v308 = vld [vmem:[%s1 + $0xbc] sm:$0xf]
        %v309 = vld [vmem:[%s1 + $0xc0] sm:$0xf]
        %v310 = vld [vmem:[%s1 + $0xc4] sm:$0xf]
        %v311 = vld [vmem:[%s1 + $0xc8] sm:$0xf]
        %v312 = vld [vmem:[%s1 + $0xcc] sm:$0xf]
        %v313 = vld [vmem:[%s1 + $0xd0] sm:$0xf]
        %v314 = vld [vmem:[%s1 + $0xd4] sm:$0xf]
        %v315 = vld [vmem:[%s1 + $0xd8] sm:$0xf]
        %v316 = vld [vmem:[%s1 + $0xdc] sm:$0xf]
        %v317 = vld [vmem:[%s1 + $0xe0] sm:$0xf]
        %v318 = vld [vmem:[%s1 + $0xe4] sm:$0xf]
        %v319 = vld [vmem:[%s1 + $0xe8] sm:$0xf]
        %v320 = vld [vmem:[%s1 + $0xec] sm:$0xf]
        %v321 = vld [vmem:[%s1 + $0xf0] sm:$0xf]
        %v322 = vld [vmem:[%s1 + $0xf4] sm:$0xf]
        %v323 = vld [vmem:[%s1 + $0xf8] sm:$0xf]
        %v324 = vld [vmem:[%s1 + $0xfc] sm:$0xf]
        %v325 = vld [vmem:[%s1 + $0x100] sm:$0xf]
        %v326 = vld [vmem:[%s1 + $0x104] sm:$0xf]
        %v327 = vld [vmem:[%s1 + $0x108] sm:$0xf]
        %v328 = vld [vmem:[%s1 + $0x10c] sm:$0xf]
        %v329 = vld [vmem:[%s1 + $0x110] sm:$0xf]
        %v330 = vld [vmem:[%s1 + $0x114] sm:$0xf]
        %v331 = vld [vmem:[%s1 + $0x118] sm:$0xf]
        %v332 = vld [vmem:[%s1 + $0x11c] sm:$0xf]
        %v333 = vld [vmem:[%s2] sm:$0x1]
        %v335 = vlaneseq
        %v336 = vshrl.u32 %v335, 7
        %v337 = vsub.s32 0, %v336
        %v338 = vrot.slane %v333, %v337
        %v400 = vunpack.c.l.b16 %v201
        %v401 = vunpack.c.h.b16 %v201
        %v402 = vunpack.c.l.b16 %v202
        %v403 = vunpack.c.h.b16 %v202
        %v404 = vunpack.c.l.b16 %v203
        %v405 = vunpack.c.l.b16 %v204
        %v406 = vunpack.c.h.b16 %v204
        %v407 = vunpack.c.l.b16 %v205
        %v408 = vunpack.c.h.b16 %v205
        %v409 = vunpack.c.l.b16 %v206
        %v410 = vunpack.c.l.b16 %v207
        %v411 = vunpack.c.h.b16 %v207
        %v412 = vunpack.c.l.b16 %v208
        %v413 = vunpack.c.h.b16 %v208
        %v414 = vunpack.c.l.b16 %v209
        %v415 = vunpack.c.l.b16 %v210
        %v416 = vunpack.c.h.b16 %v210
        %v417 = vunpack.c.l.b16 %v211
        %v418 = vunpack.c.h.b16 %v211
        %v419 = vunpack.c.l.b16 %v212
        %v420 = vunpack.c.l.b16 %v213
        %v421 = vunpack.c.h.b16 %v213
        %v422 = vunpack.c.l.b16 %v214
        %v423 = vunpack.c.h.b16 %v214
        %v424 = vunpack.c.l.b16 %v215
        %v425 = vunpack.c.l.b16 %v216
        %v426 = vunpack.c.h.b16 %v216
        %v427 = vunpack.c.l.b16 %v217
        %v428 = vunpack.c.h.b16 %v217
        %v429 = vunpack.c.l.b16 %v218
        %v430 = vunpack.c.l.b16 %v219
        %v431 = vunpack.c.h.b16 %v219
        %v432 = vunpack.c.l.b16 %v220
        %v433 = vunpack.c.h.b16 %v220
        %v434 = vunpack.c.l.b16 %v221
        %v435 = vunpack.c.l.b16 %v222
        %v436 = vunpack.c.h.b16 %v222
        %v437 = vunpack.c.l.b16 %v223
        %v438 = vunpack.c.h.b16 %v223
        %v439 = vunpack.c.l.b16 %v224
        %v440 = vunpack.c.l.b16 %v225
        %v441 = vunpack.c.h.b16 %v225
        %v442 = vunpack.c.l.b16 %v226
        %v443 = vunpack.c.h.b16 %v226
        %v444 = vunpack.c.l.b16 %v227
        %v445 = vunpack.c.l.b16 %v228
        %v446 = vunpack.c.h.b16 %v228
        %v447 = vunpack.c.l.b16 %v229
        %v448 = vunpack.c.h.b16 %v229
        %v449 = vunpack.c.l.b16 %v230
        %v450 = vunpack.c.l.b16 %v231
        %v451 = vunpack.c.h.b16 %v231
        %v452 = vunpack.c.l.b16 %v232
        %v453 = vunpack.c.h.b16 %v232
        %v454 = vunpack.c.l.b16 %v233
        %v455 = vunpack.c.l.b16 %v234
        %v456 = vunpack.c.h.b16 %v234
        %v457 = vunpack.c.l.b16 %v235
        %v458 = vunpack.c.h.b16 %v235
        %v459 = vunpack.c.l.b16 %v236
        %v460 = vunpack.c.l.b16 %v237
        %v461 = vunpack.c.h.b16 %v237
        %v462 = vunpack.c.l.b16 %v238
        %v463 = vunpack.c.h.b16 %v238
        %v464 = vunpack.c.l.b16 %v239
        %v465 = vunpack.c.l.b16 %v240
        %v466 = vunpack.c.h.b16 %v240
        %v467 = vunpack.c.l.b16 %v241
        %v468 = vunpack.c.h.b16 %v241
        %v469 = vunpack.c.l.b16 %v242
        %v470 = vunpack.c.l.b16 %v243
        %v471 = vunpack.c.h.b16 %v243
        %v472 = vunpack.c.l.b16 %v244
        %v473 = vunpack.c.h.b16 %v244
        %v474 = vunpack.c.l.b16 %v245
        %v475 = vunpack.c.l.b16 %v246
        %v476 = vunpack.c.h.b16 %v246
        %v477 = vunpack.c.l.b16 %v247
        %v478 = vunpack.c.h.b16 %v247
        %v479 = vunpack.c.l.b16 %v248
        %v480 = vunpack.c.l.b16 %v249
        %v481 = vunpack.c.h.b16 %v249
        %v482 = vunpack.c.l.b16 %v250
        %v483 = vunpack.c.h.b16 %v250
        %v484 = vunpack.c.l.b16 %v251
        %v485 = vunpack.c.l.b16 %v252
        %v486 = vunpack.c.h.b16 %v252
        %v487 = vunpack.c.l.b16 %v253
        %v488 = vunpack.c.h.b16 %v253
        %v489 = vunpack.c.l.b16 %v254
        %v490 = vunpack.c.l.b16 %v255
        %v491 = vunpack.c.h.b16 %v255
        %v492 = vunpack.c.l.b16 %v256
        %v493 = vunpack.c.h.b16 %v256
        %v494 = vunpack.c.l.b16 %v257
        %v495 = vunpack.c.l.b16 %v258
        %v496 = vunpack.c.h.b16 %v258
        %v497 = vunpack.c.l.b16 %v259
        %v498 = vunpack.c.h.b16 %v259
        %v499 = vunpack.c.l.b16 %v260
        %v500 = vpack.c.b16 %v405, %v400
        %v501 = vpack.c.b16 %v406, %v401
        %v502 = vpack.c.b16 %v407, %v402
        %v503 = vpack.c.b16 %v408, %v403
        %v504 = vpack.c.b16 %v409, %v404
        %v505 = vpack.c.b16 %v415, %v410
        %v506 = vpack.c.b16 %v416, %v411
        %v507 = vpack.c.b16 %v417, %v412
        %v508 = vpack.c.b16 %v418, %v413
        %v509 = vpack.c.b16 %v419, %v414
        %v510 = vpack.c.b16 %v425, %v420
        %v511 = vpack.c.b16 %v426, %v421
        %v512 = vpack.c.b16 %v427, %v422
        %v513 = vpack.c.b16 %v428, %v423
        %v514 = vpack.c.b16 %v429, %v424
        %v515 = vpack.c.b16 %v435, %v430
        %v516 = vpack.c.b16 %v436, %v431
        %v517 = vpack.c.b16 %v437, %v432
        %v518 = vpack.c.b16 %v438, %v433
        %v519 = vpack.c.b16 %v439, %v434
        %v520 = vpack.c.b16 %v445, %v440
        %v521 = vpack.c.b16 %v446, %v441
        %v522 = vpack.c.b16 %v447, %v442
        %v523 = vpack.c.b16 %v448, %v443
        %v524 = vpack.c.b16 %v449, %v444
        %v525 = vpack.c.b16 %v455, %v450
        %v526 = vpack.c.b16 %v456, %v451
        %v527 = vpack.c.b16 %v457, %v452
        %v528 = vpack.c.b16 %v458, %v453
        %v529 = vpack.c.b16 %v459, %v454
        %v530 = vpack.c.b16 %v465, %v460
        %v531 = vpack.c.b16 %v466, %v461
        %v532 = vpack.c.b16 %v467, %v462
        %v533 = vpack.c.b16 %v468, %v463
        %v534 = vpack.c.b16 %v469, %v464
        %v535 = vpack.c.b16 %v475, %v470
        %v536 = vpack.c.b16 %v476, %v471
        %v537 = vpack.c.b16 %v477, %v472
        %v538 = vpack.c.b16 %v478, %v473
        %v539 = vpack.c.b16 %v479, %v474
        %v540 = vpack.c.b16 %v485, %v480
        %v541 = vpack.c.b16 %v486, %v481
        %v542 = vpack.c.b16 %v487, %v482
        %v543 = vpack.c.b16 %v488, %v483
        %v544 = vpack.c.b16 %v489, %v484
        %v545 = vpack.c.b16 %v495, %v490
        %v546 = vpack.c.b16 %v496, %v491
        %v547 = vpack.c.b16 %v497, %v492
        %v548 = vpack.c.b16 %v498, %v493
        %v549 = vpack.c.b16 %v499, %v494
        %v662 = vunpack.c.l.b16 %v261
        %v663 = vunpack.c.l.b16 %v262
        %v664 = vunpack.c.l.b16 %v263
        %v665 = vunpack.c.l.b16 %v264
        %v666 = vunpack.c.l.b16 %v265
        %v667 = vunpack.c.l.b16 %v266
        %v668 = vunpack.c.l.b16 %v267
        %v669 = vunpack.c.l.b16 %v268
        %v670 = vunpack.c.l.b16 %v269
        %v671 = vunpack.c.l.b16 %v270
        %v672 = vunpack.c.l.b16 %v271
        %v673 = vunpack.c.l.b16 %v272
        %v674 = vunpack.c.l.b16 %v273
        %v675 = vunpack.c.l.b16 %v274
        %v676 = vunpack.c.l.b16 %v275
        %v677 = vunpack.c.l.b16 %v276
        %v678 = vunpack.c.l.b16 %v277
        %v679 = vunpack.c.l.b16 %v278
        %v680 = vunpack.c.l.b16 %v279
        %v681 = vunpack.c.l.b16 %v280
        %v682 = vunpack.c.l.b16 %v281
        %v683 = vunpack.c.l.b16 %v282
        %v684 = vunpack.c.l.b16 %v283
        %v685 = vunpack.c.l.b16 %v284
        %v686 = vunpack.c.l.b16 %v285
        %v687 = vunpack.c.l.b16 %v286
        %v688 = vunpack.c.l.b16 %v287
        %v689 = vunpack.c.l.b16 %v288
        %v690 = vunpack.c.l.b16 %v289
        %v691 = vunpack.c.l.b16 %v290
        %v692 = vunpack.c.l.b16 %v291
        %v693 = vunpack.c.l.b16 %v292
        %v694 = vunpack.c.l.b16 %v293
        %v695 = vunpack.c.l.b16 %v294
        %v696 = vunpack.c.l.b16 %v295
        %v697 = vunpack.c.l.b16 %v296
        %v698 = vunpack.c.l.b16 %v297
        %v699 = vunpack.c.l.b16 %v298
        %v700 = vunpack.c.l.b16 %v299
        %v701 = vunpack.c.l.b16 %v300
        %v702 = vunpack.c.l.b16 %v301
        %v703 = vunpack.c.l.b16 %v302
        %v704 = vunpack.c.l.b16 %v303
        %v705 = vunpack.c.l.b16 %v304
        %v706 = vunpack.c.l.b16 %v305
        %v707 = vunpack.c.l.b16 %v306
        %v708 = vunpack.c.l.b16 %v307
        %v709 = vunpack.c.l.b16 %v308
        %v710 = vunpack.c.l.b16 %v309
        %v711 = vunpack.c.l.b16 %v310
        %v712 = vunpack.c.l.b16 %v311
        %v713 = vunpack.c.l.b16 %v312
        %v714 = vunpack.c.l.b16 %v313
        %v715 = vunpack.c.l.b16 %v314
        %v716 = vunpack.c.l.b16 %v315
        %v717 = vunpack.c.l.b16 %v316
        %v718 = vunpack.c.l.b16 %v317
        %v719 = vunpack.c.l.b16 %v318
        %v720 = vunpack.c.l.b16 %v319
        %v721 = vunpack.c.l.b16 %v320
        %v722 = vunpack.c.l.b16 %v321
        %v723 = vunpack.c.l.b16 %v322
        %v724 = vunpack.c.l.b16 %v323
        %v725 = vunpack.c.l.b16 %v324
        %v726 = vunpack.c.l.b16 %v325
        %v727 = vunpack.c.l.b16 %v326
        %v728 = vunpack.c.l.b16 %v327
        %v729 = vunpack.c.l.b16 %v328
        %v730 = vunpack.c.l.b16 %v329
        %v731 = vunpack.c.l.b16 %v330
        %v732 = vunpack.c.l.b16 %v331
        %v733 = vunpack.c.l.b16 %v332
        %v734 = vpack.c.b16 %v663, %v662
        %v735 = vpack.c.b16 %v665, %v664
        %v736 = vpack.c.b16 %v667, %v666
        %v737 = vpack.c.b16 %v669, %v668
        %v738 = vpack.c.b16 %v671, %v670
        %v739 = vpack.c.b16 %v673, %v672
        %v740 = vpack.c.b16 %v675, %v674
        %v741 = vpack.c.b16 %v677, %v676
        %v742 = vpack.c.b16 %v679, %v678
        %v743 = vpack.c.b16 %v681, %v680
        %v744 = vpack.c.b16 %v683, %v682
        %v745 = vpack.c.b16 %v685, %v684
        %v746 = vpack.c.b16 %v687, %v686
        %v747 = vpack.c.b16 %v689, %v688
        %v748 = vpack.c.b16 %v691, %v690
        %v749 = vpack.c.b16 %v693, %v692
        %v750 = vpack.c.b16 %v695, %v694
        %v751 = vpack.c.b16 %v697, %v696
        %v752 = vpack.c.b16 %v699, %v698
        %v753 = vpack.c.b16 %v701, %v700
        %v754 = vpack.c.b16 %v703, %v702
        %v755 = vpack.c.b16 %v705, %v704
        %v756 = vpack.c.b16 %v707, %v706
        %v757 = vpack.c.b16 %v709, %v708
        %v758 = vpack.c.b16 %v711, %v710
        %v759 = vpack.c.b16 %v713, %v712
        %v760 = vpack.c.b16 %v715, %v714
        %v761 = vpack.c.b16 %v717, %v716
        %v762 = vpack.c.b16 %v719, %v718
        %v763 = vpack.c.b16 %v721, %v720
        %v764 = vpack.c.b16 %v723, %v722
        %v765 = vpack.c.b16 %v725, %v724
        %v766 = vpack.c.b16 %v727, %v726
        %v767 = vpack.c.b16 %v729, %v728
        %v768 = vpack.c.b16 %v731, %v730
        %v769 = vpack.c.b16 %v733, %v732
        %vm806 = vcmask 523264
        %v808 = vsel %vm806, %v504, 0
        %v811 = vsel %vm806, %v509, 0
        %v814 = vsel %vm806, %v514, 0
        %v817 = vsel %vm806, %v519, 0
        %v820 = vsel %vm806, %v524, 0
        %v823 = vsel %vm806, %v529, 0
        %v826 = vsel %vm806, %v534, 0
        %v829 = vsel %vm806, %v539, 0
        %v832 = vsel %vm806, %v544, 0
        %v835 = vsel %vm806, %v549, 0
        %837 = vmatprep.subr.bf16.mxu0 0
        %838 = vmatpush1.bf16.msra.mxu0 %v734
        %839 = vmatprep.subr.bf16.mxu0 0
        %840 = vmatpush1.bf16.msra.mxu0 %v735
        %841 = vmatprep.subr.bf16.mxu0 0
        %842 = vmatpush1.bf16.msra.mxu0 %v736
        %843 = vmatprep.subr.bf16.mxu0 0
        %844 = vmatpush1.bf16.msra.mxu0 %v737
        %845 = vmatprep.subr.bf16.mxu0 0
        %846 = vmatpush1.bf16.msra.mxu0 %v738
        %847 = vmatprep.subr.bf16.mxu0 0
        %848 = vmatpush1.bf16.msra.mxu0 %v739
        %849 = vmatprep.subr.bf16.mxu0 0
        %850 = vmatpush1.bf16.msra.mxu0 %v740
        %851 = vmatprep.subr.bf16.mxu0 0
        %852 = vmatpush1.bf16.msra.mxu0 %v741
        %853 = vmatprep.subr.bf16.mxu0 0
        %854 = vmatpush1.bf16.msra.mxu0 %v742
        %855 = vmatprep.subr.bf16.mxu0 0
        %856 = vmatpush1.bf16.msra.mxu0 %v743
        %857 = vmatprep.subr.bf16.mxu0 0
        %858 = vmatpush1.bf16.msra.mxu0 %v744
        %859 = vmatprep.subr.bf16.mxu0 0
        %860 = vmatpush1.bf16.msra.mxu0 %v745
        %861 = vmatprep.subr.bf16.mxu0 0
        %862 = vmatpush1.bf16.msra.mxu0 %v746
        %863 = vmatprep.subr.bf16.mxu0 0
        %864 = vmatpush1.bf16.msra.mxu0 %v747
        %865 = vmatprep.subr.bf16.mxu0 0
        %866 = vmatpush1.bf16.msra.mxu0 %v748
        %867 = vmatprep.subr.bf16.mxu0 0
        %868 = vmatpush1.bf16.msra.mxu0 %v749
        %869 = vmatprep.mubr.bf16.mxu0 %v501
        %870 = vmatmul.mubr.bf16.gmra.mrb[0].mxu0 %v500
        %v871 = vpop.f32.mrb[0].mxu0
        %v872 = vadd.f32 %v338, %v871
        %v873 = vpop.f32.mrb[0].mxu0
        %v874 = vpop.f32.mrb[0].mxu0
        %v875 = vadd.f32 %v338, %v874
        %v876 = vpop.f32.mrb[0].mxu0
        %877 = vmatprep.mubr.bf16.mxu0 %v506
        %878 = vmatmul.mubr.bf16.gmra.mrb[0].mxu0 %v505
        %v879 = vpop.f32.mrb[0].mxu0
        %v880 = vadd.f32 %v338, %v879
        %v881 = vpop.f32.mrb[0].mxu0
        %v882 = vpop.f32.mrb[0].mxu0
        %v883 = vadd.f32 %v338, %v882
        %v884 = vpop.f32.mrb[0].mxu0
        %885 = vmatprep.mubr.bf16.mxu0 %v511
        %886 = vmatmul.mubr.bf16.gmra.mrb[0].mxu0 %v510
        %v887 = vpop.f32.mrb[0].mxu0
        %v888 = vadd.f32 %v338, %v887
        %v889 = vpop.f32.mrb[0].mxu0
        %v890 = vpop.f32.mrb[0].mxu0
        %v891 = vadd.f32 %v338, %v890
        %v892 = vpop.f32.mrb[0].mxu0
        %893 = vmatprep.mubr.bf16.mxu0 %v516
        %894 = vmatmul.mubr.bf16.gmra.mrb[0].mxu0 %v515
        %v895 = vpop.f32.mrb[0].mxu0
        %v896 = vadd.f32 %v338, %v895
        %v897 = vpop.f32.mrb[0].mxu0
        %v898 = vpop.f32.mrb[0].mxu0
        %v899 = vadd.f32 %v338, %v898
        %v900 = vpop.f32.mrb[0].mxu0
        %901 = vmatprep.mubr.bf16.mxu0 %v521
        %902 = vmatmul.mubr.bf16.gmra.mrb[0].mxu0 %v520
        %v903 = vpop.f32.mrb[0].mxu0
        %v904 = vadd.f32 %v338, %v903
        %v905 = vpop.f32.mrb[0].mxu0
        %v906 = vpop.f32.mrb[0].mxu0
        %v907 = vadd.f32 %v338, %v906
        %v908 = vpop.f32.mrb[0].mxu0
        %909 = vmatprep.mubr.bf16.mxu0 %v526
        %910 = vmatmul.mubr.bf16.gmra.mrb[0].mxu0 %v525
        %v911 = vpop.f32.mrb[0].mxu0
        %v912 = vadd.f32 %v338, %v911
        %v913 = vpop.f32.mrb[0].mxu0
        %v914 = vpop.f32.mrb[0].mxu0
        %v915 = vadd.f32 %v338, %v914
        %v916 = vpop.f32.mrb[0].mxu0
        %917 = vmatprep.mubr.bf16.mxu0 %v531
        %918 = vmatmul.mubr.bf16.gmra.mrb[0].mxu0 %v530
        %v919 = vpop.f32.mrb[0].mxu0
        %v920 = vadd.f32 %v338, %v919
        %v921 = vpop.f32.mrb[0].mxu0
        %v922 = vpop.f32.mrb[0].mxu0
        %v923 = vadd.f32 %v338, %v922
        %v924 = vpop.f32.mrb[0].mxu0
        %925 = vmatprep.mubr.bf16.mxu0 %v536
        %926 = vmatmul.mubr.bf16.gmra.mrb[0].mxu0 %v535
        %v927 = vpop.f32.mrb[0].mxu0
        %v928 = vadd.f32 %v338, %v927
        %v929 = vpop.f32.mrb[0].mxu0
        %v930 = vpop.f32.mrb[0].mxu0
        %v931 = vadd.f32 %v338, %v930
        %v932 = vpop.f32.mrb[0].mxu0
        %933 = vmatprep.mubr.bf16.mxu0 %v541
        %934 = vmatmul.mubr.bf16.gmra.mrb[0].mxu0 %v540
        %v935 = vpop.f32.mrb[0].mxu0
        %v936 = vadd.f32 %v338, %v935
        %v937 = vpop.f32.mrb[0].mxu0
        %v938 = vpop.f32.mrb[0].mxu0
        %v939 = vadd.f32 %v338, %v938
        %v940 = vpop.f32.mrb[0].mxu0
        %941 = vmatprep.mubr.bf16.mxu0 %v546
        %942 = vmatmul.mubr.bf16.gmra.mrb[0].mxu0 %v545
        %v943 = vpop.f32.mrb[0].mxu0
        %v944 = vadd.f32 %v338, %v943
        %v945 = vpop.f32.mrb[0].mxu0
        %v946 = vpop.f32.mrb[0].mxu0
        %v947 = vadd.f32 %v338, %v946
        %v948 = vpop.f32.mrb[0].mxu0
        %949 = vdwg.mxu0
        %950 = vmatprep.subr.bf16.mxu0 0
        %951 = vmatpush1.bf16.msra.mxu0 %v750
        %952 = vmatprep.subr.bf16.mxu0 0
        %953 = vmatpush1.bf16.msra.mxu0 %v751
        %954 = vmatprep.subr.bf16.mxu0 0
        %955 = vmatpush1.bf16.msra.mxu0 %v752
        %956 = vmatprep.subr.bf16.mxu0 0
        %957 = vmatpush1.bf16.msra.mxu0 %v753
        %958 = vmatprep.subr.bf16.mxu0 0
        %959 = vmatpush1.bf16.msra.mxu0 %v754
        %960 = vmatprep.subr.bf16.mxu0 0
        %961 = vmatpush1.bf16.msra.mxu0 %v755
        %962 = vmatprep.subr.bf16.mxu0 0
        %963 = vmatpush1.bf16.msra.mxu0 %v756
        %964 = vmatprep.subr.bf16.mxu0 0
        %965 = vmatpush1.bf16.msra.mxu0 %v757
        %966 = vmatprep.subr.bf16.mxu0 0
        %967 = vmatpush1.bf16.msra.mxu0 %v758
        %968 = vmatprep.subr.bf16.mxu0 0
        %969 = vmatpush1.bf16.msra.mxu0 %v759
        %970 = vmatprep.subr.bf16.mxu0 0
        %971 = vmatpush1.bf16.msra.mxu0 %v760
        %972 = vmatprep.subr.bf16.mxu0 0
        %973 = vmatpush1.bf16.msra.mxu0 %v761
        %974 = vmatprep.subr.bf16.mxu0 0
        %975 = vmatpush1.bf16.msra.mxu0 %v762
        %976 = vmatprep.subr.bf16.mxu0 0
        %977 = vmatpush1.bf16.msra.mxu0 %v763
        %978 = vmatprep.subr.bf16.mxu0 0
        %979 = vmatpush1.bf16.msra.mxu0 %v764
        %980 = vmatprep.subr.bf16.mxu0 0
        %981 = vmatpush1.bf16.msra.mxu0 %v765
        %982 = vmatprep.mubr.bf16.mxu0 %v503
        %983 = vmatmul.mubr.bf16.gmra.mrb[0].mxu0 %v502
        %v984 = vpop.f32.mrb[0].mxu0
        %v985 = vadd.f32 %v872, %v984
        %v986 = vpop.f32.mrb[0].mxu0
        %v987 = vpop.f32.mrb[0].mxu0
        %v988 = vadd.f32 %v875, %v987
        %v989 = vpop.f32.mrb[0].mxu0
        %990 = vmatprep.mubr.bf16.mxu0 %v508
        %991 = vmatmul.mubr.bf16.gmra.mrb[0].mxu0 %v507
        %v992 = vpop.f32.mrb[0].mxu0
        %v993 = vadd.f32 %v880, %v992
        %v994 = vpop.f32.mrb[0].mxu0
        %v995 = vpop.f32.mrb[0].mxu0
        %v996 = vadd.f32 %v883, %v995
        %v997 = vpop.f32.mrb[0].mxu0
        %998 = vmatprep.mubr.bf16.mxu0 %v513
        %999 = vmatmul.mubr.bf16.gmra.mrb[0].mxu0 %v512
        %v1000 = vpop.f32.mrb[0].mxu0
        %v1001 = vadd.f32 %v888, %v1000
        %v1002 = vpop.f32.mrb[0].mxu0
        %v1003 = vpop.f32.mrb[0].mxu0
        %v1004 = vadd.f32 %v891, %v1003
        %v1005 = vpop.f32.mrb[0].mxu0
        %1006 = vmatprep.mubr.bf16.mxu0 %v518
        %1007 = vmatmul.mubr.bf16.gmra.mrb[0].mxu0 %v517
        %v1008 = vpop.f32.mrb[0].mxu0
        %v1009 = vadd.f32 %v896, %v1008
        %v1010 = vpop.f32.mrb[0].mxu0
        %v1011 = vpop.f32.mrb[0].mxu0
        %v1012 = vadd.f32 %v899, %v1011
        %v1013 = vpop.f32.mrb[0].mxu0
        %1014 = vmatprep.mubr.bf16.mxu0 %v523
        %1015 = vmatmul.mubr.bf16.gmra.mrb[0].mxu0 %v522
        %v1016 = vpop.f32.mrb[0].mxu0
        %v1017 = vadd.f32 %v904, %v1016
        %v1018 = vpop.f32.mrb[0].mxu0
        %v1019 = vpop.f32.mrb[0].mxu0
        %v1020 = vadd.f32 %v907, %v1019
        %v1021 = vpop.f32.mrb[0].mxu0
        %1022 = vmatprep.mubr.bf16.mxu0 %v528
        %1023 = vmatmul.mubr.bf16.gmra.mrb[0].mxu0 %v527
        %v1024 = vpop.f32.mrb[0].mxu0
        %v1025 = vadd.f32 %v912, %v1024
        %v1026 = vpop.f32.mrb[0].mxu0
        %v1027 = vpop.f32.mrb[0].mxu0
        %v1028 = vadd.f32 %v915, %v1027
        %v1029 = vpop.f32.mrb[0].mxu0
        %1030 = vmatprep.mubr.bf16.mxu0 %v533
        %1031 = vmatmul.mubr.bf16.gmra.mrb[0].mxu0 %v532
        %v1032 = vpop.f32.mrb[0].mxu0
        %v1033 = vadd.f32 %v920, %v1032
        %v1034 = vpop.f32.mrb[0].mxu0
        %v1035 = vpop.f32.mrb[0].mxu0
        %v1036 = vadd.f32 %v923, %v1035
        %v1037 = vpop.f32.mrb[0].mxu0
        %1038 = vmatprep.mubr.bf16.mxu0 %v538
        %1039 = vmatmul.mubr.bf16.gmra.mrb[0].mxu0 %v537
        %v1040 = vpop.f32.mrb[0].mxu0
        %v1041 = vadd.f32 %v928, %v1040
        %v1042 = vpop.f32.mrb[0].mxu0
        %v1043 = vpop.f32.mrb[0].mxu0
        %v1044 = vadd.f32 %v931, %v1043
        %v1045 = vpop.f32.mrb[0].mxu0
        %1046 = vmatprep.mubr.bf16.mxu0 %v543
        %1047 = vmatmul.mubr.bf16.gmra.mrb[0].mxu0 %v542
        %v1048 = vpop.f32.mrb[0].mxu0
        %v1049 = vadd.f32 %v936, %v1048
        %v1050 = vpop.f32.mrb[0].mxu0
        %v1051 = vpop.f32.mrb[0].mxu0
        %v1052 = vadd.f32 %v939, %v1051
        %v1053 = vpop.f32.mrb[0].mxu0
        %1054 = vmatprep.mubr.bf16.mxu0 %v548
        %1055 = vmatmul.mubr.bf16.gmra.mrb[0].mxu0 %v547
        %v1056 = vpop.f32.mrb[0].mxu0
        %v1057 = vadd.f32 %v944, %v1056
        %v1058 = vpop.f32.mrb[0].mxu0
        %v1059 = vpop.f32.mrb[0].mxu0
        %v1060 = vadd.f32 %v947, %v1059
        %v1061 = vpop.f32.mrb[0].mxu0
        %1062 = vdwg.mxu0
        %1063 = vmatprep.subr.bf16.mxu0 0
        %1064 = vmatpush1.bf16.msra.mxu0 %v766
        %1065 = vmatprep.subr.bf16.mxu0 0
        %1066 = vmatpush1.bf16.msra.mxu0 %v767
        %1067 = vmatprep.subr.bf16.mxu0 0
        %1068 = vmatpush1.bf16.msra.mxu0 %v768
        %1069 = vmatprep.subr.bf16.mxu0 0
        %1070 = vmatpush1.bf16.msra.mxu0 %v769
        %1071 = vmatprep.subr.bf16.mxu0 0
        %1072 = vmatpush1.bf16.msra.mxu0 0
        %1073 = vmatprep.subr.bf16.mxu0 0
        %1074 = vmatpush1.bf16.msra.mxu0 0
        %1075 = vmatprep.subr.bf16.mxu0 0
        %1076 = vmatpush1.bf16.msra.mxu0 0
        %1077 = vmatprep.subr.bf16.mxu0 0
        %1078 = vmatpush1.bf16.msra.mxu0 0
        %1079 = vmatprep.subr.bf16.mxu0 0
        %1080 = vmatpush1.bf16.msra.mxu0 0
        %1081 = vmatprep.subr.bf16.mxu0 0
        %1082 = vmatpush1.bf16.msra.mxu0 0
        %1083 = vmatprep.subr.bf16.mxu0 0
        %1084 = vmatpush1.bf16.msra.mxu0 0
        %1085 = vmatprep.subr.bf16.mxu0 0
        %1086 = vmatpush1.bf16.msra.mxu0 0
        %1087 = vmatprep.subr.bf16.mxu0 0
        %1088 = vmatpush1.bf16.msra.mxu0 0
        %1089 = vmatprep.subr.bf16.mxu0 0
        %1090 = vmatpush1.bf16.msra.mxu0 0
        %1091 = vmatprep.subr.bf16.mxu0 0
        %1092 = vmatpush1.bf16.msra.mxu0 0
        %1093 = vmatprep.subr.bf16.mxu0 0
        %1094 = vmatpush1.bf16.msra.mxu0 0
        %1095 = vmatprep.mubr.bf16.mxu0 0
        %1096 = vmatmul.mubr.bf16.gmra.mrb[0].mxu0 %v808
        %v1097 = vpop.f32.mrb[0].mxu0
        %v1098 = vadd.f32 %v985, %v1097
        %v1099 = vpop.f32.mrb[0].mxu0
        %v1100 = vpop.f32.mrb[0].mxu0
        %v1101 = vadd.f32 %v988, %v1100
        %v1102 = vpop.f32.mrb[0].mxu0
        %1103 = vmatprep.mubr.bf16.mxu0 0
        %1104 = vmatmul.mubr.bf16.gmra.mrb[0].mxu0 %v811
        %v1105 = vpop.f32.mrb[0].mxu0
        %v1106 = vadd.f32 %v993, %v1105
        %v1107 = vpop.f32.mrb[0].mxu0
        %v1108 = vpop.f32.mrb[0].mxu0
        %v1109 = vadd.f32 %v996, %v1108
        %v1110 = vpop.f32.mrb[0].mxu0
        %1111 = vmatprep.mubr.bf16.mxu0 0
        %1112 = vmatmul.mubr.bf16.gmra.mrb[0].mxu0 %v814
        %v1113 = vpop.f32.mrb[0].mxu0
        %v1114 = vadd.f32 %v1001, %v1113
        %v1115 = vpop.f32.mrb[0].mxu0
        %v1116 = vpop.f32.mrb[0].mxu0
        %v1117 = vadd.f32 %v1004, %v1116
        %v1118 = vpop.f32.mrb[0].mxu0
        %1119 = vmatprep.mubr.bf16.mxu0 0
        %1120 = vmatmul.mubr.bf16.gmra.mrb[0].mxu0 %v817
        %v1121 = vpop.f32.mrb[0].mxu0
        %v1122 = vadd.f32 %v1009, %v1121
        %v1123 = vpop.f32.mrb[0].mxu0
        %v1124 = vpop.f32.mrb[0].mxu0
        %v1125 = vadd.f32 %v1012, %v1124
        %v1126 = vpop.f32.mrb[0].mxu0
        %1127 = vmatprep.mubr.bf16.mxu0 0
        %1128 = vmatmul.mubr.bf16.gmra.mrb[0].mxu0 %v820
        %v1129 = vpop.f32.mrb[0].mxu0
        %v1130 = vadd.f32 %v1017, %v1129
        %v1131 = vpop.f32.mrb[0].mxu0
        %v1132 = vpop.f32.mrb[0].mxu0
        %v1133 = vadd.f32 %v1020, %v1132
        %v1134 = vpop.f32.mrb[0].mxu0
        %1135 = vmatprep.mubr.bf16.mxu0 0
        %1136 = vmatmul.mubr.bf16.gmra.mrb[0].mxu0 %v823
        %v1137 = vpop.f32.mrb[0].mxu0
        %v1138 = vadd.f32 %v1025, %v1137
        %v1139 = vpop.f32.mrb[0].mxu0
        %v1140 = vpop.f32.mrb[0].mxu0
        %v1141 = vadd.f32 %v1028, %v1140
        %v1142 = vpop.f32.mrb[0].mxu0
        %1143 = vmatprep.mubr.bf16.mxu0 0
        %1144 = vmatmul.mubr.bf16.gmra.mrb[0].mxu0 %v826
        %v1145 = vpop.f32.mrb[0].mxu0
        %v1146 = vadd.f32 %v1033, %v1145
        %v1147 = vpop.f32.mrb[0].mxu0
        %v1148 = vpop.f32.mrb[0].mxu0
        %v1149 = vadd.f32 %v1036, %v1148
        %v1150 = vpop.f32.mrb[0].mxu0
        %1151 = vmatprep.mubr.bf16.mxu0 0
        %1152 = vmatmul.mubr.bf16.gmra.mrb[0].mxu0 %v829
        %v1153 = vpop.f32.mrb[0].mxu0
        %v1154 = vadd.f32 %v1041, %v1153
        %v1155 = vpop.f32.mrb[0].mxu0
        %v1156 = vpop.f32.mrb[0].mxu0
        %v1157 = vadd.f32 %v1044, %v1156
        %v1158 = vpop.f32.mrb[0].mxu0
        %1159 = vmatprep.mubr.bf16.mxu0 0
        %1160 = vmatmul.mubr.bf16.gmra.mrb[0].mxu0 %v832
        %v1161 = vpop.f32.mrb[0].mxu0
        %v1162 = vadd.f32 %v1049, %v1161
        %v1163 = vpop.f32.mrb[0].mxu0
        %v1164 = vpop.f32.mrb[0].mxu0
        %v1165 = vadd.f32 %v1052, %v1164
        %v1166 = vpop.f32.mrb[0].mxu0
        %1167 = vmatprep.mubr.bf16.mxu0 0
        %1168 = vmatmul.mubr.bf16.gmra.mrb[0].mxu0 %v835
        %v1169 = vpop.f32.mrb[0].mxu0
        %v1170 = vadd.f32 %v1057, %v1169
        %v1171 = vpop.f32.mrb[0].mxu0
        %v1172 = vpop.f32.mrb[0].mxu0
        %v1173 = vadd.f32 %v1060, %v1172
        %v1174 = vpop.f32.mrb[0].mxu0
        %1175 = vdwg.mxu0
        %v1176 = vmax.f32 %v1098, 0.0
        %v1177 = vmax.f32 %v1101, 0.0
        %v1178 = vmax.f32 %v1106, 0.0
        %v1179 = vmax.f32 %v1109, 0.0
        %v1180 = vmax.f32 %v1114, 0.0
        %v1181 = vmax.f32 %v1117, 0.0
        %v1182 = vmax.f32 %v1122, 0.0
        %v1183 = vmax.f32 %v1125, 0.0
        %v1184 = vmax.f32 %v1130, 0.0
        %v1185 = vmax.f32 %v1133, 0.0
        %v1186 = vmax.f32 %v1138, 0.0
        %v1187 = vmax.f32 %v1141, 0.0
        %v1188 = vmax.f32 %v1146, 0.0
        %v1189 = vmax.f32 %v1149, 0.0
        %v1190 = vmax.f32 %v1154, 0.0
        %v1191 = vmax.f32 %v1157, 0.0
        %v1192 = vmax.f32 %v1162, 0.0
        %v1193 = vmax.f32 %v1165, 0.0
        %v1194 = vmax.f32 %v1170, 0.0
        %v1195 = vmax.f32 %v1173, 0.0
        %v1196 = vpack.c.bf16 %v1177, %v1176
        %v1197 = vpack.c.bf16 %v1179, %v1178
        %v1198 = vpack.c.bf16 %v1181, %v1180
        %v1199 = vpack.c.bf16 %v1183, %v1182
        %v1200 = vpack.c.bf16 %v1185, %v1184
        %v1201 = vpack.c.bf16 %v1187, %v1186
        %v1202 = vpack.c.bf16 %v1189, %v1188
        %v1203 = vpack.c.bf16 %v1191, %v1190
        %v1204 = vpack.c.bf16 %v1193, %v1192
        %v1205 = vpack.c.bf16 %v1195, %v1194
        %v1216 = vunpack.c.l.b16 %v1196
        %v1217 = vunpack.c.h.b16 %v1196
        %v1218 = vunpack.c.l.b16 %v1197
        %v1219 = vunpack.c.h.b16 %v1197
        %v1220 = vunpack.c.l.b16 %v1198
        %v1221 = vunpack.c.h.b16 %v1198
        %v1222 = vunpack.c.l.b16 %v1199
        %v1223 = vunpack.c.h.b16 %v1199
        %v1224 = vunpack.c.l.b16 %v1200
        %v1225 = vunpack.c.h.b16 %v1200
        %v1226 = vunpack.c.l.b16 %v1201
        %v1227 = vunpack.c.h.b16 %v1201
        %v1228 = vunpack.c.l.b16 %v1202
        %v1229 = vunpack.c.h.b16 %v1202
        %v1230 = vunpack.c.l.b16 %v1203
        %v1231 = vunpack.c.h.b16 %v1203
        %v1232 = vunpack.c.l.b16 %v1204
        %v1233 = vunpack.c.h.b16 %v1204
        %v1234 = vunpack.c.l.b16 %v1205
        %v1235 = vunpack.c.h.b16 %v1205
        %v1236 = vpack.c.b16 %v1216, %v1216
        %v1237 = vpack.c.b16 %v1217, %v1217
        %v1238 = vpack.c.b16 %v1218, %v1218
        %v1239 = vpack.c.b16 %v1219, %v1219
        %v1240 = vpack.c.b16 %v1220, %v1220
        %v1241 = vpack.c.b16 %v1221, %v1221
        %v1242 = vpack.c.b16 %v1222, %v1222
        %v1243 = vpack.c.b16 %v1223, %v1223
        %v1244 = vpack.c.b16 %v1224, %v1224
        %v1245 = vpack.c.b16 %v1225, %v1225
        %v1246 = vpack.c.b16 %v1226, %v1226
        %v1247 = vpack.c.b16 %v1227, %v1227
        %v1248 = vpack.c.b16 %v1228, %v1228
        %v1249 = vpack.c.b16 %v1229, %v1229
        %v1250 = vpack.c.b16 %v1230, %v1230
        %v1251 = vpack.c.b16 %v1231, %v1231
        %v1252 = vpack.c.b16 %v1232, %v1232
        %v1253 = vpack.c.b16 %v1233, %v1233
        %v1254 = vpack.c.b16 %v1234, %v1234
        %v1255 = vpack.c.b16 %v1235, %v1235
        %vm1276 = vcmask 257024
        %1277 = vst.msk [vmem:[%s177] sm:$0xf] %vm1276, %v1236
        %1278 = vst.msk [vmem:[%s177 + $0x4] sm:$0xf] %vm1276, %v1237
        %1279 = vst.msk [vmem:[%s177 + $0x8] sm:$0xf] %vm1276, %v1238
        %1280 = vst.msk [vmem:[%s177 + $0xc] sm:$0xf] %vm1276, %v1239
        %1281 = vst.msk [vmem:[%s177 + $0x10] sm:$0xf] %vm1276, %v1240
        %1282 = vst.msk [vmem:[%s177 + $0x14] sm:$0xf] %vm1276, %v1241
        %1283 = vst.msk [vmem:[%s177 + $0x18] sm:$0xf] %vm1276, %v1242
        %1284 = vst.msk [vmem:[%s177 + $0x1c] sm:$0xf] %vm1276, %v1243
        %1285 = vst.msk [vmem:[%s177 + $0x20] sm:$0xf] %vm1276, %v1244
        %1286 = vst.msk [vmem:[%s177 + $0x24] sm:$0xf] %vm1276, %v1245
        %1287 = vst.msk [vmem:[%s177 + $0x28] sm:$0xf] %vm1276, %v1246
        %1288 = vst.msk [vmem:[%s177 + $0x2c] sm:$0xf] %vm1276, %v1247
        %1289 = vst.msk [vmem:[%s177 + $0x30] sm:$0xf] %vm1276, %v1248
        %1290 = vst.msk [vmem:[%s177 + $0x34] sm:$0xf] %vm1276, %v1249
        %1291 = vst.msk [vmem:[%s177 + $0x38] sm:$0xf] %vm1276, %v1250
        %1292 = vst.msk [vmem:[%s177 + $0x3c] sm:$0xf] %vm1276, %v1251
        %1293 = vst.msk [vmem:[%s177 + $0x40] sm:$0xf] %vm1276, %v1252
        %1294 = vst.msk [vmem:[%s177 + $0x44] sm:$0xf] %vm1276, %v1253
        %1295 = vst.msk [vmem:[%s177 + $0x48] sm:$0xf] %vm1276, %v1254
        %1296 = vst.msk [vmem:[%s177 + $0x4c] sm:$0xf] %vm1276, %v1255
        %s1297 = sand.u32 %s90, 1
        %s1298 = sand.u32 %s90, 1
        %s1299 = smul.addr %s1298, 80
        %s1300 = scalar_lea.vmem [#allocation2], %s1299
        // Predicated region
        $region33: #{network_forward.6} parent=31 // pred_check
          %p1301 = pneg %p100
        $region34: #{network_forward.6} parent=31 // pred_check_branch
          %1303 = sbr.rel (%p1301) target = $region36
        $region35: #{network_forward.6} parent=31 // pred_region
          %s1304 = smul.u32 20, %s14
          %s1305 = ssub.s32 37, %s1304
          %p1306 = scmp.lt.s32.totalorder %s1305, 20
          %s1307 = scalar_select %p1306, %s1305, 20
          %s1308 = smul.u32 64, %s1307
          %p1309 = scmp.ne.s32.totalorder 0, %s1308
          %s1310 = smul.addr %s1304, 4
          %s1311 = scalar_lea.vmem %s3, %s1310
          // Predicated region
          $region37: #{network_forward.6} parent=35 // pred_check
            %p1312 = pneg %p1309
          $region38: #{network_forward.6} parent=35 // pred_check_branch
            %1314 = sbr.rel (%p1312) target = $region40
          $region39: #{network_forward.6} parent=35 // pred_region
            // Predicated region
            $region41: #{network_forward.6} parent=39 // pred_check
              _
            $region42: #{network_forward.6} parent=39 // pred_check_branch
              %1316 = sbr.rel target = $region44
            $region43: #{network_forward.6} parent=39 // pred_region
              // Predicated region
              $region63: #{network_forward.6} parent=43 // pred_check
                _
              $region64: #{network_forward.6} parent=43 // pred_check_branch
                %1404 = sbr.rel (0) target = $region66
              $region65: #{network_forward.6} parent=43 // pred_region
                %s1406 = sdiv.u32.pop %s1307, 20
                %s1407 = srem.u32.pop %s1307, 20
                // While loop
                $region67: #{network_forward.6} parent=65 // loop_pre_header
                  _
                $region68: #{network_forward.6} parent=65 // loop_header
                  %s1409 = sphi 0, %s1411
                  %p1410 = scmp.ge.s32.totalorder %s1409, %s1406
                  %s1414 = sphi 0, %s1459
                  %s1415 = sphi %s1300, %s1462
                  %s1416 = sphi %s1311, %s1463
                $region69: #{network_forward.6} parent=65 // loop_header_branch
                  %1413 = sbr.rel (%p1410) target = $region73
                $region70: #{network_forward.6} parent=65 // loop_body
                  %v1417 = vld [vmem:[%s1415] sm:$0xf]
                  %1418 = vst [vmem:[%s1416] sm:$0xf] %v1417
                  %v1419 = vld [vmem:[%s1415 + $0x4] sm:$0xf]
                  %1420 = vst [vmem:[%s1416 + $0x4] sm:$0xf] %v1419
                  %v1421 = vld [vmem:[%s1415 + $0x8] sm:$0xf]
                  %1422 = vst [vmem:[%s1416 + $0x8] sm:$0xf] %v1421
                  %v1423 = vld [vmem:[%s1415 + $0xc] sm:$0xf]
                  %1424 = vst [vmem:[%s1416 + $0xc] sm:$0xf] %v1423
                  %v1425 = vld [vmem:[%s1415 + $0x10] sm:$0xf]
                  %1426 = vst [vmem:[%s1416 + $0x10] sm:$0xf] %v1425
                  %v1427 = vld [vmem:[%s1415 + $0x14] sm:$0xf]
                  %1428 = vst [vmem:[%s1416 + $0x14] sm:$0xf] %v1427
                  %v1429 = vld [vmem:[%s1415 + $0x18] sm:$0xf]
                  %1430 = vst [vmem:[%s1416 + $0x18] sm:$0xf] %v1429
                  %v1431 = vld [vmem:[%s1415 + $0x1c] sm:$0xf]
                  %1432 = vst [vmem:[%s1416 + $0x1c] sm:$0xf] %v1431
                  %v1433 = vld [vmem:[%s1415 + $0x20] sm:$0xf]
                  %1434 = vst [vmem:[%s1416 + $0x20] sm:$0xf] %v1433
                  %v1435 = vld [vmem:[%s1415 + $0x24] sm:$0xf]
                  %1436 = vst [vmem:[%s1416 + $0x24] sm:$0xf] %v1435
                  %v1437 = vld [vmem:[%s1415 + $0x28] sm:$0xf]
                  %1438 = vst [vmem:[%s1416 + $0x28] sm:$0xf] %v1437
                  %v1439 = vld [vmem:[%s1415 + $0x2c] sm:$0xf]
                  %1440 = vst [vmem:[%s1416 + $0x2c] sm:$0xf] %v1439
                  %v1441 = vld [vmem:[%s1415 + $0x30] sm:$0xf]
                  %1442 = vst [vmem:[%s1416 + $0x30] sm:$0xf] %v1441
                  %v1443 = vld [vmem:[%s1415 + $0x34] sm:$0xf]
                  %1444 = vst [vmem:[%s1416 + $0x34] sm:$0xf] %v1443
                  %v1445 = vld [vmem:[%s1415 + $0x38] sm:$0xf]
                  %1446 = vst [vmem:[%s1416 + $0x38] sm:$0xf] %v1445
                  %v1447 = vld [vmem:[%s1415 + $0x3c] sm:$0xf]
                  %1448 = vst [vmem:[%s1416 + $0x3c] sm:$0xf] %v1447
                  %v1449 = vld [vmem:[%s1415 + $0x40] sm:$0xf]
                  %1450 = vst [vmem:[%s1416 + $0x40] sm:$0xf] %v1449
                  %v1451 = vld [vmem:[%s1415 + $0x44] sm:$0xf]
                  %1452 = vst [vmem:[%s1416 + $0x44] sm:$0xf] %v1451
                  %v1453 = vld [vmem:[%s1415 + $0x48] sm:$0xf]
                  %1454 = vst [vmem:[%s1416 + $0x48] sm:$0xf] %v1453
                  %v1455 = vld [vmem:[%s1415 + $0x4c] sm:$0xf]
                  %1456 = vst [vmem:[%s1416 + $0x4c] sm:$0xf] %v1455
                  %s1457 = sadd.s32 1, %s1414
                  %p1458 = scmp.ge.s32.totalorder %s1457, %s1406
                  %s1459 = scalar_select %p1458, 0, %s1457
                  %s1460 = smul.u32 %s1459, 80
                  %s1461 = smul.u32 %s1459, 80
                  %s1462 = scalar_lea.vmem %s1300, %s1460 [#allocation2]
                  %s1463 = scalar_lea.vmem %s1311, %s1461
                $region71: #{network_forward.6} parent=65 // loop_footer
                  %s1411 = sadd.s32 %s1409, 1
                $region72: #{network_forward.6} parent=65 // loop_footer_branch
                  %1408 = sbr.rel target = $region68
                $region73: #{network_forward.6} parent=65 // loop_exit
                  _
                %s1464 = sdiv.u32.pop %s1307, 20
                %s1465 = srem.u32.pop %s1307, 20
                %s1466 = smul.u32 %s1464, 20
                %s1467 = smul.u32 4, %s1466
                %s1468 = scalar_lea.vmem %s1300, %s1467 [#allocation2]
                %s1469 = smul.u32 4, %s1466
                %s1470 = scalar_lea.vmem %s1311, %s1469
                // While loop
                $region74: #{network_forward.6} parent=65 // loop_pre_header
                  _
                $region75: #{network_forward.6} parent=65 // loop_header
                  %s1472 = sphi 0, %s1474
                  %p1473 = scmp.ge.s32.totalorder %s1472, %s1465
                  %s1477 = sphi 0, %s1484
                  %s1478 = sphi %s1468, %s1487
                  %s1479 = sphi %s1470, %s1488
                $region76: #{network_forward.6} parent=65 // loop_header_branch
                  %1476 = sbr.rel (%p1473) target = $region80
                $region77: #{network_forward.6} parent=65 // loop_body
                  %v1480 = vld [vmem:[%s1478] sm:$0xf]
                  %1481 = vst [vmem:[%s1479] sm:$0xf] %v1480
                  %s1482 = sadd.s32 1, %s1477
                  %p1483 = scmp.ge.s32.totalorder %s1482, %s1465
                  %s1484 = scalar_select %p1483, 0, %s1482
                  %s1485 = smul.u32 %s1484, 4
                  %s1486 = smul.u32 %s1484, 4
                  %s1487 = scalar_lea.vmem %s1468, %s1485 [#allocation2]
                  %s1488 = scalar_lea.vmem %s1470, %s1486
                $region78: #{network_forward.6} parent=65 // loop_footer
                  %s1474 = sadd.s32 %s1472, 1
                $region79: #{network_forward.6} parent=65 // loop_footer_branch
                  %1471 = sbr.rel target = $region75
                $region80: #{network_forward.6} parent=65 // loop_exit
                  _
              $region66: #{network_forward.6} parent=43 // pred_fallthru
                _
            $region44: #{network_forward.6} parent=39 // pred_fallthru
              _
            // Predicated region
            $region45: #{network_forward.6} parent=39 // pred_check
              _
            $region46: #{network_forward.6} parent=39 // pred_check_branch
              %1318 = sbr.rel (0) target = $region48
            $region47: #{network_forward.6} parent=39 // pred_region
              %s1320 = sdiv.u32.pop %s1307, 20
              %s1321 = srem.u32.pop %s1307, 20
              // While loop
              $region49: #{network_forward.6} parent=47 // loop_pre_header
                _
              $region50: #{network_forward.6} parent=47 // loop_header
                %s1323 = sphi 0, %s1325
                %p1324 = scmp.ge.s32.totalorder %s1323, %s1320
                %s1328 = sphi 0, %s1373
                %s1329 = sphi %s1300, %s1376
                %s1330 = sphi %s1311, %s1377
              $region51: #{network_forward.6} parent=47 // loop_header_branch
                %1327 = sbr.rel (%p1324) target = $region55
              $region52: #{network_forward.6} parent=47 // loop_body
                %v1331 = vld [vmem:[%s1329] sm:$0xf]
                %1332 = vst [vmem:[%s1330] sm:$0xf] %v1331
                %v1333 = vld [vmem:[%s1329 + $0x4] sm:$0xf]
                %1334 = vst [vmem:[%s1330 + $0x4] sm:$0xf] %v1333
                %v1335 = vld [vmem:[%s1329 + $0x8] sm:$0xf]
                %1336 = vst [vmem:[%s1330 + $0x8] sm:$0xf] %v1335
                %v1337 = vld [vmem:[%s1329 + $0xc] sm:$0xf]
                %1338 = vst [vmem:[%s1330 + $0xc] sm:$0xf] %v1337
                %v1339 = vld [vmem:[%s1329 + $0x10] sm:$0xf]
                %1340 = vst [vmem:[%s1330 + $0x10] sm:$0xf] %v1339
                %v1341 = vld [vmem:[%s1329 + $0x14] sm:$0xf]
                %1342 = vst [vmem:[%s1330 + $0x14] sm:$0xf] %v1341
                %v1343 = vld [vmem:[%s1329 + $0x18] sm:$0xf]
                %1344 = vst [vmem:[%s1330 + $0x18] sm:$0xf] %v1343
                %v1345 = vld [vmem:[%s1329 + $0x1c] sm:$0xf]
                %1346 = vst [vmem:[%s1330 + $0x1c] sm:$0xf] %v1345
                %v1347 = vld [vmem:[%s1329 + $0x20] sm:$0xf]
                %1348 = vst [vmem:[%s1330 + $0x20] sm:$0xf] %v1347
                %v1349 = vld [vmem:[%s1329 + $0x24] sm:$0xf]
                %1350 = vst [vmem:[%s1330 + $0x24] sm:$0xf] %v1349
                %v1351 = vld [vmem:[%s1329 + $0x28] sm:$0xf]
                %1352 = vst [vmem:[%s1330 + $0x28] sm:$0xf] %v1351
                %v1353 = vld [vmem:[%s1329 + $0x2c] sm:$0xf]
                %1354 = vst [vmem:[%s1330 + $0x2c] sm:$0xf] %v1353
                %v1355 = vld [vmem:[%s1329 + $0x30] sm:$0xf]
                %1356 = vst [vmem:[%s1330 + $0x30] sm:$0xf] %v1355
                %v1357 = vld [vmem:[%s1329 + $0x34] sm:$0xf]
                %1358 = vst [vmem:[%s1330 + $0x34] sm:$0xf] %v1357
                %v1359 = vld [vmem:[%s1329 + $0x38] sm:$0xf]
                %1360 = vst [vmem:[%s1330 + $0x38] sm:$0xf] %v1359
                %v1361 = vld [vmem:[%s1329 + $0x3c] sm:$0xf]
                %1362 = vst [vmem:[%s1330 + $0x3c] sm:$0xf] %v1361
                %v1363 = vld [vmem:[%s1329 + $0x40] sm:$0xf]
                %1364 = vst [vmem:[%s1330 + $0x40] sm:$0xf] %v1363
                %v1365 = vld [vmem:[%s1329 + $0x44] sm:$0xf]
                %1366 = vst [vmem:[%s1330 + $0x44] sm:$0xf] %v1365
                %v1367 = vld [vmem:[%s1329 + $0x48] sm:$0xf]
                %1368 = vst [vmem:[%s1330 + $0x48] sm:$0xf] %v1367
                %v1369 = vld [vmem:[%s1329 + $0x4c] sm:$0xf]
                %1370 = vst [vmem:[%s1330 + $0x4c] sm:$0xf] %v1369
                %s1371 = sadd.s32 1, %s1328
                %p1372 = scmp.ge.s32.totalorder %s1371, %s1320
                %s1373 = scalar_select %p1372, 0, %s1371
                %s1374 = smul.u32 %s1373, 80
                %s1375 = smul.u32 %s1373, 80
                %s1376 = scalar_lea.vmem %s1300, %s1374 [#allocation2]
                %s1377 = scalar_lea.vmem %s1311, %s1375
              $region53: #{network_forward.6} parent=47 // loop_footer
                %s1325 = sadd.s32 %s1323, 1
              $region54: #{network_forward.6} parent=47 // loop_footer_branch
                %1322 = sbr.rel target = $region50
              $region55: #{network_forward.6} parent=47 // loop_exit
                _
              %s1378 = sdiv.u32.pop %s1307, 20
              %s1379 = srem.u32.pop %s1307, 20
              %s1380 = smul.u32 %s1378, 20
              %s1381 = smul.u32 4, %s1380
              %s1382 = scalar_lea.vmem %s1300, %s1381 [#allocation2]
              %s1383 = smul.u32 4, %s1380
              %s1384 = scalar_lea.vmem %s1311, %s1383
              // While loop
              $region56: #{network_forward.6} parent=47 // loop_pre_header
                _
              $region57: #{network_forward.6} parent=47 // loop_header
                %s1386 = sphi 0, %s1388
                %p1387 = scmp.ge.s32.totalorder %s1386, %s1379
                %s1391 = sphi 0, %s1398
                %s1392 = sphi %s1382, %s1401
                %s1393 = sphi %s1384, %s1402
              $region58: #{network_forward.6} parent=47 // loop_header_branch
                %1390 = sbr.rel (%p1387) target = $region62
              $region59: #{network_forward.6} parent=47 // loop_body
                %v1394 = vld [vmem:[%s1392] sm:$0xf]
                %1395 = vst [vmem:[%s1393] sm:$0xf] %v1394
                %s1396 = sadd.s32 1, %s1391
                %p1397 = scmp.ge.s32.totalorder %s1396, %s1379
                %s1398 = scalar_select %p1397, 0, %s1396
                %s1399 = smul.u32 %s1398, 4
                %s1400 = smul.u32 %s1398, 4
                %s1401 = scalar_lea.vmem %s1382, %s1399 [#allocation2]
                %s1402 = scalar_lea.vmem %s1384, %s1400
              $region60: #{network_forward.6} parent=47 // loop_footer
                %s1388 = sadd.s32 %s1386, 1
              $region61: #{network_forward.6} parent=47 // loop_footer_branch
                %1385 = sbr.rel target = $region57
              $region62: #{network_forward.6} parent=47 // loop_exit
                _
            $region48: #{network_forward.6} parent=39 // pred_fallthru
              _
          $region40: #{network_forward.6} parent=35 // pred_fallthru
            _
          %1489 = vnop
        $region36: #{network_forward.6} parent=31 // pred_fallthru
          _
      $region32: #{network_forward.6} parent=5 // pred_fallthru
        _
      %p1490 = scmp.le.s32.totalorder 2, %s9
      // Predicated region
      $region81: #{network_forward.6} parent=5 // pred_check
        %p1491 = pneg %p1490
      $region82: #{network_forward.6} parent=5 // pred_check_branch
        %1493 = sbr.rel (%p1491) target = $region84
      $region83: #{network_forward.6} parent=5 // pred_region
        %s1494 = ssub.s32 %s9, 2
        // Predicated region
        $region85: #{network_forward.6} parent=83 // pred_check
          %p1495 = pneg %p106
        $region86: #{network_forward.6} parent=83 // pred_check_branch
          %1497 = sbr.rel (%p1495) target = $region88
        $region87: #{network_forward.6} parent=83 // pred_region
          %s1498 = sand.u32 %s91, 1
          %s1499 = sand.u32 %s91, 1
          %s1500 = smul.addr %s1499, 80
          %s1501 = scalar_lea.vmem [#allocation2], %s1500
        $region88: #{network_forward.6} parent=83 // pred_fallthru
          _
      $region84: #{network_forward.6} parent=5 // pred_fallthru
        _
    $region6: #{network_forward.6} parent=1 // loop_footer
      %s13 = sadd.s32 1, %s9
    $region7: #{network_forward.6} parent=1 // loop_footer_branch
      %8 = sbr.rel target = $region3
    $region8: #{network_forward.6} parent=1 // loop_exit
      _

// kernel: network_forward.7
$region0: #{network_forward.7}
  #allocation0 [shape = 'u32[]', space=smem, size = 0x4, offset = 0x4, fixed_abs, tag = 'smem constant byte address 0x4 - core index']
  #allocation1 [shape = 'u32[144,128]{1,0:T(1,128)}', space=vmem, size = 0x12000, scoped, tag = 'internal scratch']
  %s0 = inlined_call_operand.vmem [shape: bf16[6,1568], index: 0, kind: input, shape index: {}]
  %s1 = inlined_call_operand.vmem [shape: bf16[1568,512], index: 1, kind: input, shape index: {}]
  %s2 = inlined_call_operand.vmem [shape: f32[1,512], index: 2, kind: input, shape index: {}]
  %s3 = inlined_call_operand.vmem [shape: bf16[512,7], index: 3, kind: input, shape index: {}]
  %s4 = inlined_call_operand.vmem [shape: f32[1,7], index: 4, kind: input, shape index: {}]
  %s5 = inlined_call_operand.vmem [shape: f32[6,7], index: 5, kind: output, shape index: {}]
  %s6 = sld [smem:[#allocation0]]
  $region30: #{network_forward.7} parent=0
    _
  %s8 = ssub.s32 1, %s6
  %s9 = scalar_select 0, %s8, %s6
  // Predicated region
  $region2: #{network_forward.7} parent=0 // pred_check
    _
  $region3: #{network_forward.7} parent=0 // pred_check_branch
    %11 = sbr.rel (0) target = $region5
  $region4: #{network_forward.7} parent=0 // pred_region
    _
  $region5: #{network_forward.7} parent=0 // pred_fallthru
    _
  // Predicated region
  $region6: #{network_forward.7} parent=0 // pred_check
    _
  $region7: #{network_forward.7} parent=0 // pred_check_branch
    %13 = sbr.rel (0) target = $region9
  $region8: #{network_forward.7} parent=0 // pred_region
    _
  $region9: #{network_forward.7} parent=0 // pred_fallthru
    _
  // Predicated region
  $region10: #{network_forward.7} parent=0 // pred_check
    _
  $region11: #{network_forward.7} parent=0 // pred_check_branch
    %15 = sbr.rel (0) target = $region13
  $region12: #{network_forward.7} parent=0 // pred_region
    _
  $region13: #{network_forward.7} parent=0 // pred_fallthru
    _
  // Predicated region
  $region14: #{network_forward.7} parent=0 // pred_check
    _
  $region15: #{network_forward.7} parent=0 // pred_check_branch
    %17 = sbr.rel (0) target = $region17
  $region16: #{network_forward.7} parent=0 // pred_region
    _
  $region17: #{network_forward.7} parent=0 // pred_fallthru
    _
  // Predicated region
  $region18: #{network_forward.7} parent=0 // pred_check
    _
  $region19: #{network_forward.7} parent=0 // pred_check_branch
    %19 = sbr.rel (0) target = $region21
  $region20: #{network_forward.7} parent=0 // pred_region
    _
  $region21: #{network_forward.7} parent=0 // pred_fallthru
    _
  %v21 = vld [vmem:[%s0] sm:$0x77]
  %v22 = vld [vmem:[%s0 + $0x8] sm:$0x77]
  %v23 = vld [vmem:[%s0 + $0x10] sm:$0x77]
  %v24 = vld [vmem:[%s0 + $0x18] sm:$0x77]
  %v25 = vld [vmem:[%s0 + $0x20] sm:$0x77]
  %v26 = vld [vmem:[%s0 + $0x28] sm:$0x77]
  %v27 = vld [vmem:[%s0 + $0x30] sm:$0x7]
  %v28 = vld [vmem:[%s1] sm:$0xff]
  %v29 = vld [vmem:[%s1 + $0x8] sm:$0xff]
  %v30 = vld [vmem:[%s1 + $0x10] sm:$0xff]
  %v31 = vld [vmem:[%s1 + $0x18] sm:$0xff]
  %v32 = vld [vmem:[%s1 + $0x20] sm:$0xff]
  %v33 = vld [vmem:[%s1 + $0x28] sm:$0xff]
  %v34 = vld [vmem:[%s1 + $0x30] sm:$0xff]
  %v35 = vld [vmem:[%s1 + $0x38] sm:$0xff]
  %v36 = vld [vmem:[%s1 + $0x40] sm:$0xff]
  %v37 = vld [vmem:[%s1 + $0x48] sm:$0xff]
  %v38 = vld [vmem:[%s1 + $0x50] sm:$0xff]
  %v39 = vld [vmem:[%s1 + $0x58] sm:$0xff]
  %v40 = vld [vmem:[%s1 + $0x60] sm:$0xff]
  %v41 = vld [vmem:[%s1 + $0x68] sm:$0xff]
  %v42 = vld [vmem:[%s1 + $0x70] sm:$0xff]
  %v43 = vld [vmem:[%s1 + $0x78] sm:$0xff]
  %v44 = vld [vmem:[%s1 + $0x80] sm:$0xff]
  %v45 = vld [vmem:[%s1 + $0x88] sm:$0xff]
  %v46 = vld [vmem:[%s1 + $0x90] sm:$0xff]
  %v47 = vld [vmem:[%s1 + $0x98] sm:$0xff]
  %v48 = vld [vmem:[%s1 + $0xa0] sm:$0xff]
  %v49 = vld [vmem:[%s1 + $0xa8] sm:$0xff]
  %v50 = vld [vmem:[%s1 + $0xb0] sm:$0xff]
  %v51 = vld [vmem:[%s1 + $0xb8] sm:$0xff]
  %v52 = vld [vmem:[%s1 + $0xc0] sm:$0xff]
  %v53 = vld [vmem:[%s1 + $0xc8] sm:$0xff]
  %v54 = vld [vmem:[%s1 + $0xd0] sm:$0xff]
  %v55 = vld [vmem:[%s1 + $0xd8] sm:$0xff]
  %v56 = vld [vmem:[%s1 + $0xe0] sm:$0xff]
  %v57 = vld [vmem:[%s1 + $0xe8] sm:$0xff]
  %v58 = vld [vmem:[%s1 + $0xf0] sm:$0xff]
  %v59 = vld [vmem:[%s1 + $0xf8] sm:$0xff]
  %v60 = vld [vmem:[%s1 + $0x100] sm:$0xff]
  %v61 = vld [vmem:[%s1 + $0x108] sm:$0xff]
  %v62 = vld [vmem:[%s1 + $0x110] sm:$0xff]
  %v63 = vld [vmem:[%s1 + $0x118] sm:$0xff]
  %v64 = vld [vmem:[%s1 + $0x120] sm:$0xff]
  %v65 = vld [vmem:[%s1 + $0x128] sm:$0xff]
  %v66 = vld [vmem:[%s1 + $0x130] sm:$0xff]
  %v67 = vld [vmem:[%s1 + $0x138] sm:$0xff]
  %v68 = vld [vmem:[%s1 + $0x140] sm:$0xff]
  %v69 = vld [vmem:[%s1 + $0x148] sm:$0xff]
  %v70 = vld [vmem:[%s1 + $0x150] sm:$0xff]
  %v71 = vld [vmem:[%s1 + $0x158] sm:$0xff]
  %v72 = vld [vmem:[%s1 + $0x160] sm:$0xff]
  %v73 = vld [vmem:[%s1 + $0x168] sm:$0xff]
  %v74 = vld [vmem:[%s1 + $0x170] sm:$0xff]
  %v75 = vld [vmem:[%s1 + $0x178] sm:$0xff]
  %v76 = vld [vmem:[%s1 + $0x180] sm:$0xff]
  %v77 = vld [vmem:[%s1 + $0x188] sm:$0xff]
  %v78 = vld [vmem:[%s1 + $0x190] sm:$0xff]
  %v79 = vld [vmem:[%s1 + $0x198] sm:$0xff]
  %v80 = vld [vmem:[%s1 + $0x1a0] sm:$0xff]
  %v81 = vld [vmem:[%s1 + $0x1a8] sm:$0xff]
  %v82 = vld [vmem:[%s1 + $0x1b0] sm:$0xff]
  %v83 = vld [vmem:[%s1 + $0x1b8] sm:$0xff]
  %v84 = vld [vmem:[%s1 + $0x1c0] sm:$0xff]
  %v85 = vld [vmem:[%s1 + $0x1c8] sm:$0xff]
  %v86 = vld [vmem:[%s1 + $0x1d0] sm:$0xff]
  %v87 = vld [vmem:[%s1 + $0x1d8] sm:$0xff]
  %v88 = vld [vmem:[%s1 + $0x1e0] sm:$0xff]
  %v89 = vld [vmem:[%s1 + $0x1e8] sm:$0xff]
  %v90 = vld [vmem:[%s1 + $0x1f0] sm:$0xff]
  %v91 = vld [vmem:[%s1 + $0x1f8] sm:$0xff]
  %v92 = vld [vmem:[%s1 + $0x200] sm:$0xff]
  %v93 = vld [vmem:[%s1 + $0x208] sm:$0xff]
  %v94 = vld [vmem:[%s1 + $0x210] sm:$0xff]
  %v95 = vld [vmem:[%s1 + $0x218] sm:$0xff]
  %v96 = vld [vmem:[%s1 + $0x220] sm:$0xff]
  %v97 = vld [vmem:[%s1 + $0x228] sm:$0xff]
  %v98 = vld [vmem:[%s1 + $0x230] sm:$0xff]
  %v99 = vld [vmem:[%s1 + $0x238] sm:$0xff]
  %v100 = vld [vmem:[%s1 + $0x240] sm:$0xff]
  %v101 = vld [vmem:[%s1 + $0x248] sm:$0xff]
  %v102 = vld [vmem:[%s1 + $0x250] sm:$0xff]
  %v103 = vld [vmem:[%s1 + $0x258] sm:$0xff]
  %v104 = vld [vmem:[%s1 + $0x260] sm:$0xff]
  %v105 = vld [vmem:[%s1 + $0x268] sm:$0xff]
  %v106 = vld [vmem:[%s1 + $0x270] sm:$0xff]
  %v107 = vld [vmem:[%s1 + $0x278] sm:$0xff]
  %v108 = vld [vmem:[%s1 + $0x280] sm:$0xff]
  %v109 = vld [vmem:[%s1 + $0x288] sm:$0xff]
  %v110 = vld [vmem:[%s1 + $0x290] sm:$0xff]
  %v111 = vld [vmem:[%s1 + $0x298] sm:$0xff]
  %v112 = vld [vmem:[%s1 + $0x2a0] sm:$0xff]
  %v113 = vld [vmem:[%s1 + $0x2a8] sm:$0xff]
  %v114 = vld [vmem:[%s1 + $0x2b0] sm:$0xff]
  %v115 = vld [vmem:[%s1 + $0x2b8] sm:$0xff]
  %v116 = vld [vmem:[%s1 + $0x2c0] sm:$0xff]
  %v117 = vld [vmem:[%s1 + $0x2c8] sm:$0xff]
  %v118 = vld [vmem:[%s1 + $0x2d0] sm:$0xff]
  %v119 = vld [vmem:[%s1 + $0x2d8] sm:$0xff]
  %v120 = vld [vmem:[%s1 + $0x2e0] sm:$0xff]
  %v121 = vld [vmem:[%s1 + $0x2e8] sm:$0xff]
  %v122 = vld [vmem:[%s1 + $0x2f0] sm:$0xff]
  %v123 = vld [vmem:[%s1 + $0x2f8] sm:$0xff]
  %v124 = vld [vmem:[%s1 + $0x300] sm:$0xff]
  %v125 = vld [vmem:[%s1 + $0x308] sm:$0xff]
  %v126 = vld [vmem:[%s1 + $0x310] sm:$0xff]
  %v127 = vld [vmem:[%s1 + $0x318] sm:$0xff]
  %v128 = vld [vmem:[%s1 + $0x320] sm:$0xff]
  %v129 = vld [vmem:[%s1 + $0x328] sm:$0xff]
  %v130 = vld [vmem:[%s1 + $0x330] sm:$0xff]
  %v131 = vld [vmem:[%s1 + $0x338] sm:$0xff]
  %v132 = vld [vmem:[%s1 + $0x340] sm:$0xff]
  %v133 = vld [vmem:[%s1 + $0x348] sm:$0xff]
  %v134 = vld [vmem:[%s1 + $0x350] sm:$0xff]
  %v135 = vld [vmem:[%s1 + $0x358] sm:$0xff]
  %v136 = vld [vmem:[%s1 + $0x360] sm:$0xff]
  %v137 = vld [vmem:[%s1 + $0x368] sm:$0xff]
  %v138 = vld [vmem:[%s1 + $0x370] sm:$0xff]
  %v139 = vld [vmem:[%s1 + $0x378] sm:$0xff]
  %v140 = vld [vmem:[%s1 + $0x380] sm:$0xff]
  %v141 = vld [vmem:[%s1 + $0x388] sm:$0xff]
  %v142 = vld [vmem:[%s1 + $0x390] sm:$0xff]
  %v143 = vld [vmem:[%s1 + $0x398] sm:$0xff]
  %v144 = vld [vmem:[%s1 + $0x3a0] sm:$0xff]
  %v145 = vld [vmem:[%s1 + $0x3a8] sm:$0xff]
  %v146 = vld [vmem:[%s1 + $0x3b0] sm:$0xff]
  %v147 = vld [vmem:[%s1 + $0x3b8] sm:$0xff]
  %v148 = vld [vmem:[%s1 + $0x3c0] sm:$0xff]
  %v149 = vld [vmem:[%s1 + $0x3c8] sm:$0xff]
  %v150 = vld [vmem:[%s1 + $0x3d0] sm:$0xff]
  %v151 = vld [vmem:[%s1 + $0x3d8] sm:$0xff]
  %v152 = vld [vmem:[%s1 + $0x3e0] sm:$0xff]
  %v153 = vld [vmem:[%s1 + $0x3e8] sm:$0xff]
  %v154 = vld [vmem:[%s1 + $0x3f0] sm:$0xff]
  %v155 = vld [vmem:[%s1 + $0x3f8] sm:$0xff]
  %v156 = vld [vmem:[%s1 + $0x400] sm:$0xff]
  %v157 = vld [vmem:[%s1 + $0x408] sm:$0xff]
  %v158 = vld [vmem:[%s1 + $0x410] sm:$0xff]
  %v159 = vld [vmem:[%s1 + $0x418] sm:$0xff]
  %v160 = vld [vmem:[%s1 + $0x420] sm:$0xff]
  %v161 = vld [vmem:[%s1 + $0x428] sm:$0xff]
  %v162 = vld [vmem:[%s1 + $0x430] sm:$0xff]
  %v163 = vld [vmem:[%s1 + $0x438] sm:$0xff]
  %v164 = vld [vmem:[%s1 + $0x440] sm:$0xff]
  %v165 = vld [vmem:[%s1 + $0x448] sm:$0xff]
  %v166 = vld [vmem:[%s1 + $0x450] sm:$0xff]
  %v167 = vld [vmem:[%s1 + $0x458] sm:$0xff]
  %v168 = vld [vmem:[%s1 + $0x460] sm:$0xff]
  %v169 = vld [vmem:[%s1 + $0x468] sm:$0xff]
  %v170 = vld [vmem:[%s1 + $0x470] sm:$0xff]
  %v171 = vld [vmem:[%s1 + $0x478] sm:$0xff]
  %v172 = vld [vmem:[%s1 + $0x480] sm:$0xff]
  %v173 = vld [vmem:[%s1 + $0x488] sm:$0xff]
  %v174 = vld [vmem:[%s1 + $0x490] sm:$0xff]
  %v175 = vld [vmem:[%s1 + $0x498] sm:$0xff]
  %v176 = vld [vmem:[%s1 + $0x4a0] sm:$0xff]
  %v177 = vld [vmem:[%s1 + $0x4a8] sm:$0xff]
  %v178 = vld [vmem:[%s1 + $0x4b0] sm:$0xff]
  %v179 = vld [vmem:[%s1 + $0x4b8] sm:$0xff]
  %v180 = vld [vmem:[%s1 + $0x4c0] sm:$0xff]
  %v181 = vld [vmem:[%s1 + $0x4c8] sm:$0xff]
  %v182 = vld [vmem:[%s1 + $0x4d0] sm:$0xff]
  %v183 = vld [vmem:[%s1 + $0x4d8] sm:$0xff]
  %v184 = vld [vmem:[%s1 + $0x4e0] sm:$0xff]
  %v185 = vld [vmem:[%s1 + $0x4e8] sm:$0xff]
  %v186 = vld [vmem:[%s1 + $0x4f0] sm:$0xff]
  %v187 = vld [vmem:[%s1 + $0x4f8] sm:$0xff]
  %v188 = vld [vmem:[%s1 + $0x500] sm:$0xff]
  %v189 = vld [vmem:[%s1 + $0x508] sm:$0xff]
  %v190 = vld [vmem:[%s1 + $0x510] sm:$0xff]
  %v191 = vld [vmem:[%s1 + $0x518] sm:$0xff]
  %v192 = vld [vmem:[%s1 + $0x520] sm:$0xff]
  %v193 = vld [vmem:[%s1 + $0x528] sm:$0xff]
  %v194 = vld [vmem:[%s1 + $0x530] sm:$0xff]
  %v195 = vld [vmem:[%s1 + $0x538] sm:$0xff]
  %v196 = vld [vmem:[%s1 + $0x540] sm:$0xff]
  %v197 = vld [vmem:[%s1 + $0x548] sm:$0xff]
  %v198 = vld [vmem:[%s1 + $0x550] sm:$0xff]
  %v199 = vld [vmem:[%s1 + $0x558] sm:$0xff]
  %v200 = vld [vmem:[%s1 + $0x560] sm:$0xff]
  %v201 = vld [vmem:[%s1 + $0x568] sm:$0xff]
  %v202 = vld [vmem:[%s1 + $0x570] sm:$0xff]
  %v203 = vld [vmem:[%s1 + $0x578] sm:$0xff]
  %v204 = vld [vmem:[%s1 + $0x580] sm:$0xff]
  %v205 = vld [vmem:[%s1 + $0x588] sm:$0xff]
  %v206 = vld [vmem:[%s1 + $0x590] sm:$0xff]
  %v207 = vld [vmem:[%s1 + $0x598] sm:$0xff]
  %v208 = vld [vmem:[%s1 + $0x5a0] sm:$0xff]
  %v209 = vld [vmem:[%s1 + $0x5a8] sm:$0xff]
  %v210 = vld [vmem:[%s1 + $0x5b0] sm:$0xff]
  %v211 = vld [vmem:[%s1 + $0x5b8] sm:$0xff]
  %v212 = vld [vmem:[%s1 + $0x5c0] sm:$0xff]
  %v213 = vld [vmem:[%s1 + $0x5c8] sm:$0xff]
  %v214 = vld [vmem:[%s1 + $0x5d0] sm:$0xff]
  %v215 = vld [vmem:[%s1 + $0x5d8] sm:$0xff]
  %v216 = vld [vmem:[%s1 + $0x5e0] sm:$0xff]
  %v217 = vld [vmem:[%s1 + $0x5e8] sm:$0xff]
  %v218 = vld [vmem:[%s1 + $0x5f0] sm:$0xff]
  %v219 = vld [vmem:[%s1 + $0x5f8] sm:$0xff]
  %v220 = vld [vmem:[%s1 + $0x600] sm:$0xff]
  %v221 = vld [vmem:[%s1 + $0x608] sm:$0xff]
  %v222 = vld [vmem:[%s1 + $0x610] sm:$0xff]
  %v223 = vld [vmem:[%s1 + $0x618] sm:$0xff]
  %v224 = vld [vmem:[%s1 + $0x620] sm:$0xff]
  %v225 = vld [vmem:[%s1 + $0x628] sm:$0xff]
  %v226 = vld [vmem:[%s1 + $0x630] sm:$0xff]
  %v227 = vld [vmem:[%s1 + $0x638] sm:$0xff]
  %v228 = vld [vmem:[%s1 + $0x640] sm:$0xff]
  %v229 = vld [vmem:[%s1 + $0x648] sm:$0xff]
  %v230 = vld [vmem:[%s1 + $0x650] sm:$0xff]
  %v231 = vld [vmem:[%s1 + $0x658] sm:$0xff]
  %v232 = vld [vmem:[%s1 + $0x660] sm:$0xff]
  %v233 = vld [vmem:[%s1 + $0x668] sm:$0xff]
  %v234 = vld [vmem:[%s1 + $0x670] sm:$0xff]
  %v235 = vld [vmem:[%s1 + $0x678] sm:$0xff]
  %v236 = vld [vmem:[%s1 + $0x680] sm:$0xff]
  %v237 = vld [vmem:[%s1 + $0x688] sm:$0xff]
  %v238 = vld [vmem:[%s1 + $0x690] sm:$0xff]
  %v239 = vld [vmem:[%s1 + $0x698] sm:$0xff]
  %v240 = vld [vmem:[%s1 + $0x6a0] sm:$0xff]
  %v241 = vld [vmem:[%s1 + $0x6a8] sm:$0xff]
  %v242 = vld [vmem:[%s1 + $0x6b0] sm:$0xff]
  %v243 = vld [vmem:[%s1 + $0x6b8] sm:$0xff]
  %v244 = vld [vmem:[%s1 + $0x6c0] sm:$0xff]
  %v245 = vld [vmem:[%s1 + $0x6c8] sm:$0xff]
  %v246 = vld [vmem:[%s1 + $0x6d0] sm:$0xff]
  %v247 = vld [vmem:[%s1 + $0x6d8] sm:$0xff]
  %v248 = vld [vmem:[%s1 + $0x6e0] sm:$0xff]
  %v249 = vld [vmem:[%s1 + $0x6e8] sm:$0xff]
  %v250 = vld [vmem:[%s1 + $0x6f0] sm:$0xff]
  %v251 = vld [vmem:[%s1 + $0x6f8] sm:$0xff]
  %v252 = vld [vmem:[%s1 + $0x700] sm:$0xff]
  %v253 = vld [vmem:[%s1 + $0x708] sm:$0xff]
  %v254 = vld [vmem:[%s1 + $0x710] sm:$0xff]
  %v255 = vld [vmem:[%s1 + $0x718] sm:$0xff]
  %v256 = vld [vmem:[%s1 + $0x720] sm:$0xff]
  %v257 = vld [vmem:[%s1 + $0x728] sm:$0xff]
  %v258 = vld [vmem:[%s1 + $0x730] sm:$0xff]
  %v259 = vld [vmem:[%s1 + $0x738] sm:$0xff]
  %v260 = vld [vmem:[%s1 + $0x740] sm:$0xff]
  %v261 = vld [vmem:[%s1 + $0x748] sm:$0xff]
  %v262 = vld [vmem:[%s1 + $0x750] sm:$0xff]
  %v263 = vld [vmem:[%s1 + $0x758] sm:$0xff]
  %v264 = vld [vmem:[%s1 + $0x760] sm:$0xff]
  %v265 = vld [vmem:[%s1 + $0x768] sm:$0xff]
  %v266 = vld [vmem:[%s1 + $0x770] sm:$0xff]
  %v267 = vld [vmem:[%s1 + $0x778] sm:$0xff]
  %v268 = vld [vmem:[%s1 + $0x780] sm:$0xff]
  %v269 = vld [vmem:[%s1 + $0x788] sm:$0xff]
  %v270 = vld [vmem:[%s1 + $0x790] sm:$0xff]
  %v271 = vld [vmem:[%s1 + $0x798] sm:$0xff]
  %v272 = vld [vmem:[%s1 + $0x7a0] sm:$0xff]
  %v273 = vld [vmem:[%s1 + $0x7a8] sm:$0xff]
  %v274 = vld [vmem:[%s1 + $0x7b0] sm:$0xff]
  %v275 = vld [vmem:[%s1 + $0x7b8] sm:$0xff]
  %v276 = vld [vmem:[%s1 + $0x7c0] sm:$0xff]
  %v277 = vld [vmem:[%s1 + $0x7c8] sm:$0xff]
  %v278 = vld [vmem:[%s1 + $0x7d0] sm:$0xff]
  %v279 = vld [vmem:[%s1 + $0x7d8] sm:$0xff]
  %v280 = vld [vmem:[%s1 + $0x7e0] sm:$0xff]
  %v281 = vld [vmem:[%s1 + $0x7e8] sm:$0xff]
  %v282 = vld [vmem:[%s1 + $0x7f0] sm:$0xff]
  %v283 = vld [vmem:[%s1 + $0x7f8] sm:$0xff]
  %v284 = vld [vmem:[%s1 + $0x800] sm:$0xff]
  %v285 = vld [vmem:[%s1 + $0x808] sm:$0xff]
  %v286 = vld [vmem:[%s1 + $0x810] sm:$0xff]
  %v287 = vld [vmem:[%s1 + $0x818] sm:$0xff]
  %v288 = vld [vmem:[%s1 + $0x820] sm:$0xff]
  %v289 = vld [vmem:[%s1 + $0x828] sm:$0xff]
  %v290 = vld [vmem:[%s1 + $0x830] sm:$0xff]
  %v291 = vld [vmem:[%s1 + $0x838] sm:$0xff]
  %v292 = vld [vmem:[%s1 + $0x840] sm:$0xff]
  %v293 = vld [vmem:[%s1 + $0x848] sm:$0xff]
  %v294 = vld [vmem:[%s1 + $0x850] sm:$0xff]
  %v295 = vld [vmem:[%s1 + $0x858] sm:$0xff]
  %v296 = vld [vmem:[%s1 + $0x860] sm:$0xff]
  %v297 = vld [vmem:[%s1 + $0x868] sm:$0xff]
  %v298 = vld [vmem:[%s1 + $0x870] sm:$0xff]
  %v299 = vld [vmem:[%s1 + $0x878] sm:$0xff]
  %v300 = vld [vmem:[%s1 + $0x880] sm:$0xff]
  %v301 = vld [vmem:[%s1 + $0x888] sm:$0xff]
  %v302 = vld [vmem:[%s1 + $0x890] sm:$0xff]
  %v303 = vld [vmem:[%s1 + $0x898] sm:$0xff]
  %v304 = vld [vmem:[%s1 + $0x8a0] sm:$0xff]
  %v305 = vld [vmem:[%s1 + $0x8a8] sm:$0xff]
  %v306 = vld [vmem:[%s1 + $0x8b0] sm:$0xff]
  %v307 = vld [vmem:[%s1 + $0x8b8] sm:$0xff]
  %v308 = vld [vmem:[%s1 + $0x8c0] sm:$0xff]
  %v309 = vld [vmem:[%s1 + $0x8c8] sm:$0xff]
  %v310 = vld [vmem:[%s1 + $0x8d0] sm:$0xff]
  %v311 = vld [vmem:[%s1 + $0x8d8] sm:$0xff]
  %v312 = vld [vmem:[%s1 + $0x8e0] sm:$0xff]
  %v313 = vld [vmem:[%s1 + $0x8e8] sm:$0xff]
  %v314 = vld [vmem:[%s1 + $0x8f0] sm:$0xff]
  %v315 = vld [vmem:[%s1 + $0x8f8] sm:$0xff]
  %v316 = vld [vmem:[%s1 + $0x900] sm:$0xff]
  %v317 = vld [vmem:[%s1 + $0x908] sm:$0xff]
  %v318 = vld [vmem:[%s1 + $0x910] sm:$0xff]
  %v319 = vld [vmem:[%s1 + $0x918] sm:$0xff]
  %v320 = vld [vmem:[%s1 + $0x920] sm:$0xff]
  %v321 = vld [vmem:[%s1 + $0x928] sm:$0xff]
  %v322 = vld [vmem:[%s1 + $0x930] sm:$0xff]
  %v323 = vld [vmem:[%s1 + $0x938] sm:$0xff]
  %v324 = vld [vmem:[%s1 + $0x940] sm:$0xff]
  %v325 = vld [vmem:[%s1 + $0x948] sm:$0xff]
  %v326 = vld [vmem:[%s1 + $0x950] sm:$0xff]
  %v327 = vld [vmem:[%s1 + $0x958] sm:$0xff]
  %v328 = vld [vmem:[%s1 + $0x960] sm:$0xff]
  %v329 = vld [vmem:[%s1 + $0x968] sm:$0xff]
  %v330 = vld [vmem:[%s1 + $0x970] sm:$0xff]
  %v331 = vld [vmem:[%s1 + $0x978] sm:$0xff]
  %v332 = vld [vmem:[%s1 + $0x980] sm:$0xff]
  %v333 = vld [vmem:[%s1 + $0x988] sm:$0xff]
  %v334 = vld [vmem:[%s1 + $0x990] sm:$0xff]
  %v335 = vld [vmem:[%s1 + $0x998] sm:$0xff]
  %v336 = vld [vmem:[%s1 + $0x9a0] sm:$0xff]
  %v337 = vld [vmem:[%s1 + $0x9a8] sm:$0xff]
  %v338 = vld [vmem:[%s1 + $0x9b0] sm:$0xff]
  %v339 = vld [vmem:[%s1 + $0x9b8] sm:$0xff]
  %v340 = vld [vmem:[%s1 + $0x9c0] sm:$0xff]
  %v341 = vld [vmem:[%s1 + $0x9c8] sm:$0xff]
  %v342 = vld [vmem:[%s1 + $0x9d0] sm:$0xff]
  %v343 = vld [vmem:[%s1 + $0x9d8] sm:$0xff]
  %v344 = vld [vmem:[%s1 + $0x9e0] sm:$0xff]
  %v345 = vld [vmem:[%s1 + $0x9e8] sm:$0xff]
  %v346 = vld [vmem:[%s1 + $0x9f0] sm:$0xff]
  %v347 = vld [vmem:[%s1 + $0x9f8] sm:$0xff]
  %v348 = vld [vmem:[%s1 + $0xa00] sm:$0xff]
  %v349 = vld [vmem:[%s1 + $0xa08] sm:$0xff]
  %v350 = vld [vmem:[%s1 + $0xa10] sm:$0xff]
  %v351 = vld [vmem:[%s1 + $0xa18] sm:$0xff]
  %v352 = vld [vmem:[%s1 + $0xa20] sm:$0xff]
  %v353 = vld [vmem:[%s1 + $0xa28] sm:$0xff]
  %v354 = vld [vmem:[%s1 + $0xa30] sm:$0xff]
  %v355 = vld [vmem:[%s1 + $0xa38] sm:$0xff]
  %v356 = vld [vmem:[%s1 + $0xa40] sm:$0xff]
  %v357 = vld [vmem:[%s1 + $0xa48] sm:$0xff]
  %v358 = vld [vmem:[%s1 + $0xa50] sm:$0xff]
  %v359 = vld [vmem:[%s1 + $0xa58] sm:$0xff]
  %v360 = vld [vmem:[%s1 + $0xa60] sm:$0xff]
  %v361 = vld [vmem:[%s1 + $0xa68] sm:$0xff]
  %v362 = vld [vmem:[%s1 + $0xa70] sm:$0xff]
  %v363 = vld [vmem:[%s1 + $0xa78] sm:$0xff]
  %v364 = vld [vmem:[%s1 + $0xa80] sm:$0xff]
  %v365 = vld [vmem:[%s1 + $0xa88] sm:$0xff]
  %v366 = vld [vmem:[%s1 + $0xa90] sm:$0xff]
  %v367 = vld [vmem:[%s1 + $0xa98] sm:$0xff]
  %v368 = vld [vmem:[%s1 + $0xaa0] sm:$0xff]
  %v369 = vld [vmem:[%s1 + $0xaa8] sm:$0xff]
  %v370 = vld [vmem:[%s1 + $0xab0] sm:$0xff]
  %v371 = vld [vmem:[%s1 + $0xab8] sm:$0xff]
  %v372 = vld [vmem:[%s1 + $0xac0] sm:$0xff]
  %v373 = vld [vmem:[%s1 + $0xac8] sm:$0xff]
  %v374 = vld [vmem:[%s1 + $0xad0] sm:$0xff]
  %v375 = vld [vmem:[%s1 + $0xad8] sm:$0xff]
  %v376 = vld [vmem:[%s1 + $0xae0] sm:$0xff]
  %v377 = vld [vmem:[%s1 + $0xae8] sm:$0xff]
  %v378 = vld [vmem:[%s1 + $0xaf0] sm:$0xff]
  %v379 = vld [vmem:[%s1 + $0xaf8] sm:$0xff]
  %v380 = vld [vmem:[%s1 + $0xb00] sm:$0xff]
  %v381 = vld [vmem:[%s1 + $0xb08] sm:$0xff]
  %v382 = vld [vmem:[%s1 + $0xb10] sm:$0xff]
  %v383 = vld [vmem:[%s1 + $0xb18] sm:$0xff]
  %v384 = vld [vmem:[%s1 + $0xb20] sm:$0xff]
  %v385 = vld [vmem:[%s1 + $0xb28] sm:$0xff]
  %v386 = vld [vmem:[%s1 + $0xb30] sm:$0xff]
  %v387 = vld [vmem:[%s1 + $0xb38] sm:$0xff]
  %v388 = vld [vmem:[%s1 + $0xb40] sm:$0xff]
  %v389 = vld [vmem:[%s1 + $0xb48] sm:$0xff]
  %v390 = vld [vmem:[%s1 + $0xb50] sm:$0xff]
  %v391 = vld [vmem:[%s1 + $0xb58] sm:$0xff]
  %v392 = vld [vmem:[%s1 + $0xb60] sm:$0xff]
  %v393 = vld [vmem:[%s1 + $0xb68] sm:$0xff]
  %v394 = vld [vmem:[%s1 + $0xb70] sm:$0xff]
  %v395 = vld [vmem:[%s1 + $0xb78] sm:$0xff]
  %v396 = vld [vmem:[%s1 + $0xb80] sm:$0xff]
  %v397 = vld [vmem:[%s1 + $0xb88] sm:$0xff]
  %v398 = vld [vmem:[%s1 + $0xb90] sm:$0xff]
  %v399 = vld [vmem:[%s1 + $0xb98] sm:$0xff]
  %v400 = vld [vmem:[%s1 + $0xba0] sm:$0xff]
  %v401 = vld [vmem:[%s1 + $0xba8] sm:$0xff]
  %v402 = vld [vmem:[%s1 + $0xbb0] sm:$0xff]
  %v403 = vld [vmem:[%s1 + $0xbb8] sm:$0xff]
  %v404 = vld [vmem:[%s1 + $0xbc0] sm:$0xff]
  %v405 = vld [vmem:[%s1 + $0xbc8] sm:$0xff]
  %v406 = vld [vmem:[%s1 + $0xbd0] sm:$0xff]
  %v407 = vld [vmem:[%s1 + $0xbd8] sm:$0xff]
  %v408 = vld [vmem:[%s1 + $0xbe0] sm:$0xff]
  %v409 = vld [vmem:[%s1 + $0xbe8] sm:$0xff]
  %v410 = vld [vmem:[%s1 + $0xbf0] sm:$0xff]
  %v411 = vld [vmem:[%s1 + $0xbf8] sm:$0xff]
  %v412 = vld [vmem:[%s1 + $0xc00] sm:$0xff]
  %v413 = vld [vmem:[%s1 + $0xc08] sm:$0xff]
  %v414 = vld [vmem:[%s1 + $0xc10] sm:$0xff]
  %v415 = vld [vmem:[%s1 + $0xc18] sm:$0xff]
  %v416 = vld [vmem:[%s1 + $0xc20] sm:$0xff]
  %v417 = vld [vmem:[%s1 + $0xc28] sm:$0xff]
  %v418 = vld [vmem:[%s1 + $0xc30] sm:$0xff]
  %v419 = vld [vmem:[%s1 + $0xc38] sm:$0xff]
  %v420 = vld [vmem:[%s2] sm:$0xf]
  %v422 = vlaneseq
  %v423 = vshrl.u32 %v422, 7
  %v424 = vsub.s32 0, %v423
  %v425 = vrot.slane %v420, %v424
  %v426 = vlaneseq
  %v427 = vshrl.u32 %v426, 7
  %v428 = vsub.s32 1, %v427
  %v429 = vrot.slane %v420, %v428
  %v430 = vlaneseq
  %v431 = vshrl.u32 %v430, 7
  %v432 = vsub.s32 2, %v431
  %v433 = vrot.slane %v420, %v432
  %v434 = vlaneseq
  %v435 = vshrl.u32 %v434, 7
  %v436 = vsub.s32 3, %v435
  %v437 = vrot.slane %v420, %v436
  %v449 = vunpack.c.l.b16 %v21
  %v450 = vunpack.c.h.b16 %v21
  %v451 = vunpack.c.l.b16 %v22
  %v452 = vunpack.c.h.b16 %v22
  %v453 = vunpack.c.l.b16 %v23
  %v454 = vunpack.c.h.b16 %v23
  %v455 = vunpack.c.l.b16 %v24
  %v456 = vunpack.c.h.b16 %v24
  %v457 = vunpack.c.l.b16 %v25
  %v458 = vunpack.c.h.b16 %v25
  %v459 = vunpack.c.l.b16 %v26
  %v460 = vunpack.c.h.b16 %v26
  %v461 = vunpack.c.l.b16 %v27
  %v462 = vpack.c.b16 %v449, %v449
  %v463 = vpack.c.b16 %v450, %v450
  %v464 = vpack.c.b16 %v451, %v451
  %v465 = vpack.c.b16 %v452, %v452
  %v466 = vpack.c.b16 %v453, %v453
  %v467 = vpack.c.b16 %v454, %v454
  %v468 = vpack.c.b16 %v455, %v455
  %v469 = vpack.c.b16 %v456, %v456
  %v470 = vpack.c.b16 %v457, %v457
  %v471 = vpack.c.b16 %v458, %v458
  %v472 = vpack.c.b16 %v459, %v459
  %v473 = vpack.c.b16 %v460, %v460
  %v474 = vpack.c.b16 %v461, %v461
  %v879 = vunpack.c.l.b16 %v28
  %v880 = vunpack.c.h.b16 %v28
  %v881 = vunpack.c.l.b16 %v29
  %v882 = vunpack.c.h.b16 %v29
  %v883 = vunpack.c.l.b16 %v30
  %v884 = vunpack.c.h.b16 %v30
  %v885 = vunpack.c.l.b16 %v31
  %v886 = vunpack.c.h.b16 %v31
  %v887 = vunpack.c.l.b16 %v32
  %v888 = vunpack.c.h.b16 %v32
  %v889 = vunpack.c.l.b16 %v33
  %v890 = vunpack.c.h.b16 %v33
  %v891 = vunpack.c.l.b16 %v34
  %v892 = vunpack.c.h.b16 %v34
  %v893 = vunpack.c.l.b16 %v35
  %v894 = vunpack.c.h.b16 %v35
  %v895 = vunpack.c.l.b16 %v36
  %v896 = vunpack.c.h.b16 %v36
  %v897 = vunpack.c.l.b16 %v37
  %v898 = vunpack.c.h.b16 %v37
  %v899 = vunpack.c.l.b16 %v38
  %v900 = vunpack.c.h.b16 %v38
  %v901 = vunpack.c.l.b16 %v39
  %v902 = vunpack.c.h.b16 %v39
  %v903 = vunpack.c.l.b16 %v40
  %v904 = vunpack.c.h.b16 %v40
  %v905 = vunpack.c.l.b16 %v41
  %v906 = vunpack.c.h.b16 %v41
  %v907 = vunpack.c.l.b16 %v42
  %v908 = vunpack.c.h.b16 %v42
  %v909 = vunpack.c.l.b16 %v43
  %v910 = vunpack.c.h.b16 %v43
  %v911 = vunpack.c.l.b16 %v44
  %v912 = vunpack.c.h.b16 %v44
  %v913 = vunpack.c.l.b16 %v45
  %v914 = vunpack.c.h.b16 %v45
  %v915 = vunpack.c.l.b16 %v46
  %v916 = vunpack.c.h.b16 %v46
  %v917 = vunpack.c.l.b16 %v47
  %v918 = vunpack.c.h.b16 %v47
  %v919 = vunpack.c.l.b16 %v48
  %v920 = vunpack.c.h.b16 %v48
  %v921 = vunpack.c.l.b16 %v49
  %v922 = vunpack.c.h.b16 %v49
  %v923 = vunpack.c.l.b16 %v50
  %v924 = vunpack.c.h.b16 %v50
  %v925 = vunpack.c.l.b16 %v51
  %v926 = vunpack.c.h.b16 %v51
  %v927 = vunpack.c.l.b16 %v52
  %v928 = vunpack.c.h.b16 %v52
  %v929 = vunpack.c.l.b16 %v53
  %v930 = vunpack.c.h.b16 %v53
  %v931 = vunpack.c.l.b16 %v54
  %v932 = vunpack.c.h.b16 %v54
  %v933 = vunpack.c.l.b16 %v55
  %v934 = vunpack.c.h.b16 %v55
  %v935 = vunpack.c.l.b16 %v56
  %v936 = vunpack.c.h.b16 %v56
  %v937 = vunpack.c.l.b16 %v57
  %v938 = vunpack.c.h.b16 %v57
  %v939 = vunpack.c.l.b16 %v58
  %v940 = vunpack.c.h.b16 %v58
  %v941 = vunpack.c.l.b16 %v59
  %v942 = vunpack.c.h.b16 %v59
  %v943 = vunpack.c.l.b16 %v60
  %v944 = vunpack.c.h.b16 %v60
  %v945 = vunpack.c.l.b16 %v61
  %v946 = vunpack.c.h.b16 %v61
  %v947 = vunpack.c.l.b16 %v62
  %v948 = vunpack.c.h.b16 %v62
  %v949 = vunpack.c.l.b16 %v63
  %v950 = vunpack.c.h.b16 %v63
  %v951 = vunpack.c.l.b16 %v64
  %v952 = vunpack.c.h.b16 %v64
  %v953 = vunpack.c.l.b16 %v65
  %v954 = vunpack.c.h.b16 %v65
  %v955 = vunpack.c.l.b16 %v66
  %v956 = vunpack.c.h.b16 %v66
  %v957 = vunpack.c.l.b16 %v67
  %v958 = vunpack.c.h.b16 %v67
  %v959 = vunpack.c.l.b16 %v68
  %v960 = vunpack.c.h.b16 %v68
  %v961 = vunpack.c.l.b16 %v69
  %v962 = vunpack.c.h.b16 %v69
  %v963 = vunpack.c.l.b16 %v70
  %v964 = vunpack.c.h.b16 %v70
  %v965 = vunpack.c.l.b16 %v71
  %v966 = vunpack.c.h.b16 %v71
  %v967 = vunpack.c.l.b16 %v72
  %v968 = vunpack.c.h.b16 %v72
  %v969 = vunpack.c.l.b16 %v73
  %v970 = vunpack.c.h.b16 %v73
  %v971 = vunpack.c.l.b16 %v74
  %v972 = vunpack.c.h.b16 %v74
  %v973 = vunpack.c.l.b16 %v75
  %v974 = vunpack.c.h.b16 %v75
  %v975 = vunpack.c.l.b16 %v76
  %v976 = vunpack.c.h.b16 %v76
  %v977 = vunpack.c.l.b16 %v77
  %v978 = vunpack.c.h.b16 %v77
  %v979 = vunpack.c.l.b16 %v78
  %v980 = vunpack.c.h.b16 %v78
  %v981 = vunpack.c.l.b16 %v79
  %v982 = vunpack.c.h.b16 %v79
  %v983 = vunpack.c.l.b16 %v80
  %v984 = vunpack.c.h.b16 %v80
  %v985 = vunpack.c.l.b16 %v81
  %v986 = vunpack.c.h.b16 %v81
  %v987 = vunpack.c.l.b16 %v82
  %v988 = vunpack.c.h.b16 %v82
  %v989 = vunpack.c.l.b16 %v83
  %v990 = vunpack.c.h.b16 %v83
  %v991 = vunpack.c.l.b16 %v84
  %v992 = vunpack.c.h.b16 %v84
  %v993 = vunpack.c.l.b16 %v85
  %v994 = vunpack.c.h.b16 %v85
  %v995 = vunpack.c.l.b16 %v86
  %v996 = vunpack.c.h.b16 %v86
  %v997 = vunpack.c.l.b16 %v87
  %v998 = vunpack.c.h.b16 %v87
  %v999 = vunpack.c.l.b16 %v88
  %v1000 = vunpack.c.h.b16 %v88
  %v1001 = vunpack.c.l.b16 %v89
  %v1002 = vunpack.c.h.b16 %v89
  %v1003 = vunpack.c.l.b16 %v90
  %v1004 = vunpack.c.h.b16 %v90
  %v1005 = vunpack.c.l.b16 %v91
  %v1006 = vunpack.c.h.b16 %v91
  %v1007 = vunpack.c.l.b16 %v92
  %v1008 = vunpack.c.h.b16 %v92
  %v1009 = vunpack.c.l.b16 %v93
  %v1010 = vunpack.c.h.b16 %v93
  %v1011 = vunpack.c.l.b16 %v94
  %v1012 = vunpack.c.h.b16 %v94
  %v1013 = vunpack.c.l.b16 %v95
  %v1014 = vunpack.c.h.b16 %v95
  %v1015 = vunpack.c.l.b16 %v96
  %v1016 = vunpack.c.h.b16 %v96
  %v1017 = vunpack.c.l.b16 %v97
  %v1018 = vunpack.c.h.b16 %v97
  %v1019 = vunpack.c.l.b16 %v98
  %v1020 = vunpack.c.h.b16 %v98
  %v1021 = vunpack.c.l.b16 %v99
  %v1022 = vunpack.c.h.b16 %v99
  %v1023 = vunpack.c.l.b16 %v100
  %v1024 = vunpack.c.h.b16 %v100
  %v1025 = vunpack.c.l.b16 %v101
  %v1026 = vunpack.c.h.b16 %v101
  %v1027 = vunpack.c.l.b16 %v102
  %v1028 = vunpack.c.h.b16 %v102
  %v1029 = vunpack.c.l.b16 %v103
  %v1030 = vunpack.c.h.b16 %v103
  %v1031 = vunpack.c.l.b16 %v104
  %v1032 = vunpack.c.h.b16 %v104
  %v1033 = vunpack.c.l.b16 %v105
  %v1034 = vunpack.c.h.b16 %v105
  %v1035 = vunpack.c.l.b16 %v106
  %v1036 = vunpack.c.h.b16 %v106
  %v1037 = vunpack.c.l.b16 %v107
  %v1038 = vunpack.c.h.b16 %v107
  %v1039 = vunpack.c.l.b16 %v108
  %v1040 = vunpack.c.h.b16 %v108
  %v1041 = vunpack.c.l.b16 %v109
  %v1042 = vunpack.c.h.b16 %v109
  %v1043 = vunpack.c.l.b16 %v110
  %v1044 = vunpack.c.h.b16 %v110
  %v1045 = vunpack.c.l.b16 %v111
  %v1046 = vunpack.c.h.b16 %v111
  %v1047 = vunpack.c.l.b16 %v112
  %v1048 = vunpack.c.h.b16 %v112
  %v1049 = vunpack.c.l.b16 %v113
  %v1050 = vunpack.c.h.b16 %v113
  %v1051 = vunpack.c.l.b16 %v114
  %v1052 = vunpack.c.h.b16 %v114
  %v1053 = vunpack.c.l.b16 %v115
  %v1054 = vunpack.c.h.b16 %v115
  %v1055 = vunpack.c.l.b16 %v116
  %v1056 = vunpack.c.h.b16 %v116
  %v1057 = vunpack.c.l.b16 %v117
  %v1058 = vunpack.c.h.b16 %v117
  %v1059 = vunpack.c.l.b16 %v118
  %v1060 = vunpack.c.h.b16 %v118
  %v1061 = vunpack.c.l.b16 %v119
  %v1062 = vunpack.c.h.b16 %v119
  %v1063 = vunpack.c.l.b16 %v120
  %v1064 = vunpack.c.h.b16 %v120
  %v1065 = vunpack.c.l.b16 %v121
  %v1066 = vunpack.c.h.b16 %v121
  %v1067 = vunpack.c.l.b16 %v122
  %v1068 = vunpack.c.h.b16 %v122
  %v1069 = vunpack.c.l.b16 %v123
  %v1070 = vunpack.c.h.b16 %v123
  %v1071 = vunpack.c.l.b16 %v124
  %v1072 = vunpack.c.h.b16 %v124
  %v1073 = vunpack.c.l.b16 %v125
  %v1074 = vunpack.c.h.b16 %v125
  %v1075 = vunpack.c.l.b16 %v126
  %v1076 = vunpack.c.h.b16 %v126
  %v1077 = vunpack.c.l.b16 %v127
  %v1078 = vunpack.c.h.b16 %v127
  %v1079 = vunpack.c.l.b16 %v128
  %v1080 = vunpack.c.h.b16 %v128
  %v1081 = vunpack.c.l.b16 %v129
  %v1082 = vunpack.c.h.b16 %v129
  %v1083 = vunpack.c.l.b16 %v130
  %v1084 = vunpack.c.h.b16 %v130
  %v1085 = vunpack.c.l.b16 %v131
  %v1086 = vunpack.c.h.b16 %v131
  %v1087 = vunpack.c.l.b16 %v132
  %v1088 = vunpack.c.h.b16 %v132
  %v1089 = vunpack.c.l.b16 %v133
  %v1090 = vunpack.c.h.b16 %v133
  %v1091 = vunpack.c.l.b16 %v134
  %v1092 = vunpack.c.h.b16 %v134
  %v1093 = vunpack.c.l.b16 %v135
  %v1094 = vunpack.c.h.b16 %v135
  %v1095 = vunpack.c.l.b16 %v136
  %v1096 = vunpack.c.h.b16 %v136
  %v1097 = vunpack.c.l.b16 %v137
  %v1098 = vunpack.c.h.b16 %v137
  %v1099 = vunpack.c.l.b16 %v138
  %v1100 = vunpack.c.h.b16 %v138
  %v1101 = vunpack.c.l.b16 %v139
  %v1102 = vunpack.c.h.b16 %v139
  %v1103 = vunpack.c.l.b16 %v140
  %v1104 = vunpack.c.h.b16 %v140
  %v1105 = vunpack.c.l.b16 %v141
  %v1106 = vunpack.c.h.b16 %v141
  %v1107 = vunpack.c.l.b16 %v142
  %v1108 = vunpack.c.h.b16 %v142
  %v1109 = vunpack.c.l.b16 %v143
  %v1110 = vunpack.c.h.b16 %v143
  %v1111 = vunpack.c.l.b16 %v144
  %v1112 = vunpack.c.h.b16 %v144
  %v1113 = vunpack.c.l.b16 %v145
  %v1114 = vunpack.c.h.b16 %v145
  %v1115 = vunpack.c.l.b16 %v146
  %v1116 = vunpack.c.h.b16 %v146
  %v1117 = vunpack.c.l.b16 %v147
  %v1118 = vunpack.c.h.b16 %v147
  %v1119 = vunpack.c.l.b16 %v148
  %v1120 = vunpack.c.h.b16 %v148
  %v1121 = vunpack.c.l.b16 %v149
  %v1122 = vunpack.c.h.b16 %v149
  %v1123 = vunpack.c.l.b16 %v150
  %v1124 = vunpack.c.h.b16 %v150
  %v1125 = vunpack.c.l.b16 %v151
  %v1126 = vunpack.c.h.b16 %v151
  %v1127 = vunpack.c.l.b16 %v152
  %v1128 = vunpack.c.h.b16 %v152
  %v1129 = vunpack.c.l.b16 %v153
  %v1130 = vunpack.c.h.b16 %v153
  %v1131 = vunpack.c.l.b16 %v154
  %v1132 = vunpack.c.h.b16 %v154
  %v1133 = vunpack.c.l.b16 %v155
  %v1134 = vunpack.c.h.b16 %v155
  %v1135 = vunpack.c.l.b16 %v156
  %v1136 = vunpack.c.h.b16 %v156
  %v1137 = vunpack.c.l.b16 %v157
  %v1138 = vunpack.c.h.b16 %v157
  %v1139 = vunpack.c.l.b16 %v158
  %v1140 = vunpack.c.h.b16 %v158
  %v1141 = vunpack.c.l.b16 %v159
  %v1142 = vunpack.c.h.b16 %v159
  %v1143 = vunpack.c.l.b16 %v160
  %v1144 = vunpack.c.h.b16 %v160
  %v1145 = vunpack.c.l.b16 %v161
  %v1146 = vunpack.c.h.b16 %v161
  %v1147 = vunpack.c.l.b16 %v162
  %v1148 = vunpack.c.h.b16 %v162
  %v1149 = vunpack.c.l.b16 %v163
  %v1150 = vunpack.c.h.b16 %v163
  %v1151 = vunpack.c.l.b16 %v164
  %v1152 = vunpack.c.h.b16 %v164
  %v1153 = vunpack.c.l.b16 %v165
  %v1154 = vunpack.c.h.b16 %v165
  %v1155 = vunpack.c.l.b16 %v166
  %v1156 = vunpack.c.h.b16 %v166
  %v1157 = vunpack.c.l.b16 %v167
  %v1158 = vunpack.c.h.b16 %v167
  %v1159 = vunpack.c.l.b16 %v168
  %v1160 = vunpack.c.h.b16 %v168
  %v1161 = vunpack.c.l.b16 %v169
  %v1162 = vunpack.c.h.b16 %v169
  %v1163 = vunpack.c.l.b16 %v170
  %v1164 = vunpack.c.h.b16 %v170
  %v1165 = vunpack.c.l.b16 %v171
  %v1166 = vunpack.c.h.b16 %v171
  %v1167 = vunpack.c.l.b16 %v172
  %v1168 = vunpack.c.h.b16 %v172
  %v1169 = vunpack.c.l.b16 %v173
  %v1170 = vunpack.c.h.b16 %v173
  %v1171 = vunpack.c.l.b16 %v174
  %v1172 = vunpack.c.h.b16 %v174
  %v1173 = vunpack.c.l.b16 %v175
  %v1174 = vunpack.c.h.b16 %v175
  %v1175 = vunpack.c.l.b16 %v176
  %v1176 = vunpack.c.h.b16 %v176
  %v1177 = vunpack.c.l.b16 %v177
  %v1178 = vunpack.c.h.b16 %v177
  %v1179 = vunpack.c.l.b16 %v178
  %v1180 = vunpack.c.h.b16 %v178
  %v1181 = vunpack.c.l.b16 %v179
  %v1182 = vunpack.c.h.b16 %v179
  %v1183 = vunpack.c.l.b16 %v180
  %v1184 = vunpack.c.h.b16 %v180
  %v1185 = vunpack.c.l.b16 %v181
  %v1186 = vunpack.c.h.b16 %v181
  %v1187 = vunpack.c.l.b16 %v182
  %v1188 = vunpack.c.h.b16 %v182
  %v1189 = vunpack.c.l.b16 %v183
  %v1190 = vunpack.c.h.b16 %v183
  %v1191 = vunpack.c.l.b16 %v184
  %v1192 = vunpack.c.h.b16 %v184
  %v1193 = vunpack.c.l.b16 %v185
  %v1194 = vunpack.c.h.b16 %v185
  %v1195 = vunpack.c.l.b16 %v186
  %v1196 = vunpack.c.h.b16 %v186
  %v1197 = vunpack.c.l.b16 %v187
  %v1198 = vunpack.c.h.b16 %v187
  %v1199 = vunpack.c.l.b16 %v188
  %v1200 = vunpack.c.h.b16 %v188
  %v1201 = vunpack.c.l.b16 %v189
  %v1202 = vunpack.c.h.b16 %v189
  %v1203 = vunpack.c.l.b16 %v190
  %v1204 = vunpack.c.h.b16 %v190
  %v1205 = vunpack.c.l.b16 %v191
  %v1206 = vunpack.c.h.b16 %v191
  %v1207 = vunpack.c.l.b16 %v192
  %v1208 = vunpack.c.h.b16 %v192
  %v1209 = vunpack.c.l.b16 %v193
  %v1210 = vunpack.c.h.b16 %v193
  %v1211 = vunpack.c.l.b16 %v194
  %v1212 = vunpack.c.h.b16 %v194
  %v1213 = vunpack.c.l.b16 %v195
  %v1214 = vunpack.c.h.b16 %v195
  %v1215 = vunpack.c.l.b16 %v196
  %v1216 = vunpack.c.h.b16 %v196
  %v1217 = vunpack.c.l.b16 %v197
  %v1218 = vunpack.c.h.b16 %v197
  %v1219 = vunpack.c.l.b16 %v198
  %v1220 = vunpack.c.h.b16 %v198
  %v1221 = vunpack.c.l.b16 %v199
  %v1222 = vunpack.c.h.b16 %v199
  %v1223 = vunpack.c.l.b16 %v200
  %v1224 = vunpack.c.h.b16 %v200
  %v1225 = vunpack.c.l.b16 %v201
  %v1226 = vunpack.c.h.b16 %v201
  %v1227 = vunpack.c.l.b16 %v202
  %v1228 = vunpack.c.h.b16 %v202
  %v1229 = vunpack.c.l.b16 %v203
  %v1230 = vunpack.c.h.b16 %v203
  %v1231 = vunpack.c.l.b16 %v204
  %v1232 = vunpack.c.h.b16 %v204
  %v1233 = vunpack.c.l.b16 %v205
  %v1234 = vunpack.c.h.b16 %v205
  %v1235 = vunpack.c.l.b16 %v206
  %v1236 = vunpack.c.h.b16 %v206
  %v1237 = vunpack.c.l.b16 %v207
  %v1238 = vunpack.c.h.b16 %v207
  %v1239 = vunpack.c.l.b16 %v208
  %v1240 = vunpack.c.h.b16 %v208
  %v1241 = vunpack.c.l.b16 %v209
  %v1242 = vunpack.c.h.b16 %v209
  %v1243 = vunpack.c.l.b16 %v210
  %v1244 = vunpack.c.h.b16 %v210
  %v1245 = vunpack.c.l.b16 %v211
  %v1246 = vunpack.c.h.b16 %v211
  %v1247 = vunpack.c.l.b16 %v212
  %v1248 = vunpack.c.h.b16 %v212
  %v1249 = vunpack.c.l.b16 %v213
  %v1250 = vunpack.c.h.b16 %v213
  %v1251 = vunpack.c.l.b16 %v214
  %v1252 = vunpack.c.h.b16 %v214
  %v1253 = vunpack.c.l.b16 %v215
  %v1254 = vunpack.c.h.b16 %v215
  %v1255 = vunpack.c.l.b16 %v216
  %v1256 = vunpack.c.h.b16 %v216
  %v1257 = vunpack.c.l.b16 %v217
  %v1258 = vunpack.c.h.b16 %v217
  %v1259 = vunpack.c.l.b16 %v218
  %v1260 = vunpack.c.h.b16 %v218
  %v1261 = vunpack.c.l.b16 %v219
  %v1262 = vunpack.c.h.b16 %v219
  %v1263 = vunpack.c.l.b16 %v220
  %v1264 = vunpack.c.h.b16 %v220
  %v1265 = vunpack.c.l.b16 %v221
  %v1266 = vunpack.c.h.b16 %v221
  %v1267 = vunpack.c.l.b16 %v222
  %v1268 = vunpack.c.h.b16 %v222
  %v1269 = vunpack.c.l.b16 %v223
  %v1270 = vunpack.c.h.b16 %v223
  %v1271 = vunpack.c.l.b16 %v224
  %v1272 = vunpack.c.h.b16 %v224
  %v1273 = vunpack.c.l.b16 %v225
  %v1274 = vunpack.c.h.b16 %v225
  %v1275 = vunpack.c.l.b16 %v226
  %v1276 = vunpack.c.h.b16 %v226
  %v1277 = vunpack.c.l.b16 %v227
  %v1278 = vunpack.c.h.b16 %v227
  %v1279 = vunpack.c.l.b16 %v228
  %v1280 = vunpack.c.h.b16 %v228
  %v1281 = vunpack.c.l.b16 %v229
  %v1282 = vunpack.c.h.b16 %v229
  %v1283 = vunpack.c.l.b16 %v230
  %v1284 = vunpack.c.h.b16 %v230
  %v1285 = vunpack.c.l.b16 %v231
  %v1286 = vunpack.c.h.b16 %v231
  %v1287 = vunpack.c.l.b16 %v232
  %v1288 = vunpack.c.h.b16 %v232
  %v1289 = vunpack.c.l.b16 %v233
  %v1290 = vunpack.c.h.b16 %v233
  %v1291 = vunpack.c.l.b16 %v234
  %v1292 = vunpack.c.h.b16 %v234
  %v1293 = vunpack.c.l.b16 %v235
  %v1294 = vunpack.c.h.b16 %v235
  %v1295 = vunpack.c.l.b16 %v236
  %v1296 = vunpack.c.h.b16 %v236
  %v1297 = vunpack.c.l.b16 %v237
  %v1298 = vunpack.c.h.b16 %v237
  %v1299 = vunpack.c.l.b16 %v238
  %v1300 = vunpack.c.h.b16 %v238
  %v1301 = vunpack.c.l.b16 %v239
  %v1302 = vunpack.c.h.b16 %v239
  %v1303 = vunpack.c.l.b16 %v240
  %v1304 = vunpack.c.h.b16 %v240
  %v1305 = vunpack.c.l.b16 %v241
  %v1306 = vunpack.c.h.b16 %v241
  %v1307 = vunpack.c.l.b16 %v242
  %v1308 = vunpack.c.h.b16 %v242
  %v1309 = vunpack.c.l.b16 %v243
  %v1310 = vunpack.c.h.b16 %v243
  %v1311 = vunpack.c.l.b16 %v244
  %v1312 = vunpack.c.h.b16 %v244
  %v1313 = vunpack.c.l.b16 %v245
  %v1314 = vunpack.c.h.b16 %v245
  %v1315 = vunpack.c.l.b16 %v246
  %v1316 = vunpack.c.h.b16 %v246
  %v1317 = vunpack.c.l.b16 %v247
  %v1318 = vunpack.c.h.b16 %v247
  %v1319 = vunpack.c.l.b16 %v248
  %v1320 = vunpack.c.h.b16 %v248
  %v1321 = vunpack.c.l.b16 %v249
  %v1322 = vunpack.c.h.b16 %v249
  %v1323 = vunpack.c.l.b16 %v250
  %v1324 = vunpack.c.h.b16 %v250
  %v1325 = vunpack.c.l.b16 %v251
  %v1326 = vunpack.c.h.b16 %v251
  %v1327 = vunpack.c.l.b16 %v252
  %v1328 = vunpack.c.h.b16 %v252
  %v1329 = vunpack.c.l.b16 %v253
  %v1330 = vunpack.c.h.b16 %v253
  %v1331 = vunpack.c.l.b16 %v254
  %v1332 = vunpack.c.h.b16 %v254
  %v1333 = vunpack.c.l.b16 %v255
  %v1334 = vunpack.c.h.b16 %v255
  %v1335 = vunpack.c.l.b16 %v256
  %v1336 = vunpack.c.h.b16 %v256
  %v1337 = vunpack.c.l.b16 %v257
  %v1338 = vunpack.c.h.b16 %v257
  %v1339 = vunpack.c.l.b16 %v258
  %v1340 = vunpack.c.h.b16 %v258
  %v1341 = vunpack.c.l.b16 %v259
  %v1342 = vunpack.c.h.b16 %v259
  %v1343 = vunpack.c.l.b16 %v260
  %v1344 = vunpack.c.h.b16 %v260
  %v1345 = vunpack.c.l.b16 %v261
  %v1346 = vunpack.c.h.b16 %v261
  %v1347 = vunpack.c.l.b16 %v262
  %v1348 = vunpack.c.h.b16 %v262
  %v1349 = vunpack.c.l.b16 %v263
  %v1350 = vunpack.c.h.b16 %v263
  %v1351 = vunpack.c.l.b16 %v264
  %v1352 = vunpack.c.h.b16 %v264
  %v1353 = vunpack.c.l.b16 %v265
  %v1354 = vunpack.c.h.b16 %v265
  %v1355 = vunpack.c.l.b16 %v266
  %v1356 = vunpack.c.h.b16 %v266
  %v1357 = vunpack.c.l.b16 %v267
  %v1358 = vunpack.c.h.b16 %v267
  %v1359 = vunpack.c.l.b16 %v268
  %v1360 = vunpack.c.h.b16 %v268
  %v1361 = vunpack.c.l.b16 %v269
  %v1362 = vunpack.c.h.b16 %v269
  %v1363 = vunpack.c.l.b16 %v270
  %v1364 = vunpack.c.h.b16 %v270
  %v1365 = vunpack.c.l.b16 %v271
  %v1366 = vunpack.c.h.b16 %v271
  %v1367 = vunpack.c.l.b16 %v272
  %v1368 = vunpack.c.h.b16 %v272
  %v1369 = vunpack.c.l.b16 %v273
  %v1370 = vunpack.c.h.b16 %v273
  %v1371 = vunpack.c.l.b16 %v274
  %v1372 = vunpack.c.h.b16 %v274
  %v1373 = vunpack.c.l.b16 %v275
  %v1374 = vunpack.c.h.b16 %v275
  %v1375 = vunpack.c.l.b16 %v276
  %v1376 = vunpack.c.h.b16 %v276
  %v1377 = vunpack.c.l.b16 %v277
  %v1378 = vunpack.c.h.b16 %v277
  %v1379 = vunpack.c.l.b16 %v278
  %v1380 = vunpack.c.h.b16 %v278
  %v1381 = vunpack.c.l.b16 %v279
  %v1382 = vunpack.c.h.b16 %v279
  %v1383 = vunpack.c.l.b16 %v280
  %v1384 = vunpack.c.h.b16 %v280
  %v1385 = vunpack.c.l.b16 %v281
  %v1386 = vunpack.c.h.b16 %v281
  %v1387 = vunpack.c.l.b16 %v282
  %v1388 = vunpack.c.h.b16 %v282
  %v1389 = vunpack.c.l.b16 %v283
  %v1390 = vunpack.c.h.b16 %v283
  %v1391 = vunpack.c.l.b16 %v284
  %v1392 = vunpack.c.h.b16 %v284
  %v1393 = vunpack.c.l.b16 %v285
  %v1394 = vunpack.c.h.b16 %v285
  %v1395 = vunpack.c.l.b16 %v286
  %v1396 = vunpack.c.h.b16 %v286
  %v1397 = vunpack.c.l.b16 %v287
  %v1398 = vunpack.c.h.b16 %v287
  %v1399 = vunpack.c.l.b16 %v288
  %v1400 = vunpack.c.h.b16 %v288
  %v1401 = vunpack.c.l.b16 %v289
  %v1402 = vunpack.c.h.b16 %v289
  %v1403 = vunpack.c.l.b16 %v290
  %v1404 = vunpack.c.h.b16 %v290
  %v1405 = vunpack.c.l.b16 %v291
  %v1406 = vunpack.c.h.b16 %v291
  %v1407 = vunpack.c.l.b16 %v292
  %v1408 = vunpack.c.h.b16 %v292
  %v1409 = vunpack.c.l.b16 %v293
  %v1410 = vunpack.c.h.b16 %v293
  %v1411 = vunpack.c.l.b16 %v294
  %v1412 = vunpack.c.h.b16 %v294
  %v1413 = vunpack.c.l.b16 %v295
  %v1414 = vunpack.c.h.b16 %v295
  %v1415 = vunpack.c.l.b16 %v296
  %v1416 = vunpack.c.h.b16 %v296
  %v1417 = vunpack.c.l.b16 %v297
  %v1418 = vunpack.c.h.b16 %v297
  %v1419 = vunpack.c.l.b16 %v298
  %v1420 = vunpack.c.h.b16 %v298
  %v1421 = vunpack.c.l.b16 %v299
  %v1422 = vunpack.c.h.b16 %v299
  %v1423 = vunpack.c.l.b16 %v300
  %v1424 = vunpack.c.h.b16 %v300
  %v1425 = vunpack.c.l.b16 %v301
  %v1426 = vunpack.c.h.b16 %v301
  %v1427 = vunpack.c.l.b16 %v302
  %v1428 = vunpack.c.h.b16 %v302
  %v1429 = vunpack.c.l.b16 %v303
  %v1430 = vunpack.c.h.b16 %v303
  %v1431 = vunpack.c.l.b16 %v304
  %v1432 = vunpack.c.h.b16 %v304
  %v1433 = vunpack.c.l.b16 %v305
  %v1434 = vunpack.c.h.b16 %v305
  %v1435 = vunpack.c.l.b16 %v306
  %v1436 = vunpack.c.h.b16 %v306
  %v1437 = vunpack.c.l.b16 %v307
  %v1438 = vunpack.c.h.b16 %v307
  %v1439 = vunpack.c.l.b16 %v308
  %v1440 = vunpack.c.h.b16 %v308
  %v1441 = vunpack.c.l.b16 %v309
  %v1442 = vunpack.c.h.b16 %v309
  %v1443 = vunpack.c.l.b16 %v310
  %v1444 = vunpack.c.h.b16 %v310
  %v1445 = vunpack.c.l.b16 %v311
  %v1446 = vunpack.c.h.b16 %v311
  %v1447 = vunpack.c.l.b16 %v312
  %v1448 = vunpack.c.h.b16 %v312
  %v1449 = vunpack.c.l.b16 %v313
  %v1450 = vunpack.c.h.b16 %v313
  %v1451 = vunpack.c.l.b16 %v314
  %v1452 = vunpack.c.h.b16 %v314
  %v1453 = vunpack.c.l.b16 %v315
  %v1454 = vunpack.c.h.b16 %v315
  %v1455 = vunpack.c.l.b16 %v316
  %v1456 = vunpack.c.h.b16 %v316
  %v1457 = vunpack.c.l.b16 %v317
  %v1458 = vunpack.c.h.b16 %v317
  %v1459 = vunpack.c.l.b16 %v318
  %v1460 = vunpack.c.h.b16 %v318
  %v1461 = vunpack.c.l.b16 %v319
  %v1462 = vunpack.c.h.b16 %v319
  %v1463 = vunpack.c.l.b16 %v320
  %v1464 = vunpack.c.h.b16 %v320
  %v1465 = vunpack.c.l.b16 %v321
  %v1466 = vunpack.c.h.b16 %v321
  %v1467 = vunpack.c.l.b16 %v322
  %v1468 = vunpack.c.h.b16 %v322
  %v1469 = vunpack.c.l.b16 %v323
  %v1470 = vunpack.c.h.b16 %v323
  %v1471 = vunpack.c.l.b16 %v324
  %v1472 = vunpack.c.h.b16 %v324
  %v1473 = vunpack.c.l.b16 %v325
  %v1474 = vunpack.c.h.b16 %v325
  %v1475 = vunpack.c.l.b16 %v326
  %v1476 = vunpack.c.h.b16 %v326
  %v1477 = vunpack.c.l.b16 %v327
  %v1478 = vunpack.c.h.b16 %v327
  %v1479 = vunpack.c.l.b16 %v328
  %v1480 = vunpack.c.h.b16 %v328
  %v1481 = vunpack.c.l.b16 %v329
  %v1482 = vunpack.c.h.b16 %v329
  %v1483 = vunpack.c.l.b16 %v330
  %v1484 = vunpack.c.h.b16 %v330
  %v1485 = vunpack.c.l.b16 %v331
  %v1486 = vunpack.c.h.b16 %v331
  %v1487 = vunpack.c.l.b16 %v332
  %v1488 = vunpack.c.h.b16 %v332
  %v1489 = vunpack.c.l.b16 %v333
  %v1490 = vunpack.c.h.b16 %v333
  %v1491 = vunpack.c.l.b16 %v334
  %v1492 = vunpack.c.h.b16 %v334
  %v1493 = vunpack.c.l.b16 %v335
  %v1494 = vunpack.c.h.b16 %v335
  %v1495 = vunpack.c.l.b16 %v336
  %v1496 = vunpack.c.h.b16 %v336
  %v1497 = vunpack.c.l.b16 %v337
  %v1498 = vunpack.c.h.b16 %v337
  %v1499 = vunpack.c.l.b16 %v338
  %v1500 = vunpack.c.h.b16 %v338
  %v1501 = vunpack.c.l.b16 %v339
  %v1502 = vunpack.c.h.b16 %v339
  %v1503 = vunpack.c.l.b16 %v340
  %v1504 = vunpack.c.h.b16 %v340
  %v1505 = vunpack.c.l.b16 %v341
  %v1506 = vunpack.c.h.b16 %v341
  %v1507 = vunpack.c.l.b16 %v342
  %v1508 = vunpack.c.h.b16 %v342
  %v1509 = vunpack.c.l.b16 %v343
  %v1510 = vunpack.c.h.b16 %v343
  %v1511 = vunpack.c.l.b16 %v344
  %v1512 = vunpack.c.h.b16 %v344
  %v1513 = vunpack.c.l.b16 %v345
  %v1514 = vunpack.c.h.b16 %v345
  %v1515 = vunpack.c.l.b16 %v346
  %v1516 = vunpack.c.h.b16 %v346
  %v1517 = vunpack.c.l.b16 %v347
  %v1518 = vunpack.c.h.b16 %v347
  %v1519 = vunpack.c.l.b16 %v348
  %v1520 = vunpack.c.h.b16 %v348
  %v1521 = vunpack.c.l.b16 %v349
  %v1522 = vunpack.c.h.b16 %v349
  %v1523 = vunpack.c.l.b16 %v350
  %v1524 = vunpack.c.h.b16 %v350
  %v1525 = vunpack.c.l.b16 %v351
  %v1526 = vunpack.c.h.b16 %v351
  %v1527 = vunpack.c.l.b16 %v352
  %v1528 = vunpack.c.h.b16 %v352
  %v1529 = vunpack.c.l.b16 %v353
  %v1530 = vunpack.c.h.b16 %v353
  %v1531 = vunpack.c.l.b16 %v354
  %v1532 = vunpack.c.h.b16 %v354
  %v1533 = vunpack.c.l.b16 %v355
  %v1534 = vunpack.c.h.b16 %v355
  %v1535 = vunpack.c.l.b16 %v356
  %v1536 = vunpack.c.h.b16 %v356
  %v1537 = vunpack.c.l.b16 %v357
  %v1538 = vunpack.c.h.b16 %v357
  %v1539 = vunpack.c.l.b16 %v358
  %v1540 = vunpack.c.h.b16 %v358
  %v1541 = vunpack.c.l.b16 %v359
  %v1542 = vunpack.c.h.b16 %v359
  %v1543 = vunpack.c.l.b16 %v360
  %v1544 = vunpack.c.h.b16 %v360
  %v1545 = vunpack.c.l.b16 %v361
  %v1546 = vunpack.c.h.b16 %v361
  %v1547 = vunpack.c.l.b16 %v362
  %v1548 = vunpack.c.h.b16 %v362
  %v1549 = vunpack.c.l.b16 %v363
  %v1550 = vunpack.c.h.b16 %v363
  %v1551 = vunpack.c.l.b16 %v364
  %v1552 = vunpack.c.h.b16 %v364
  %v1553 = vunpack.c.l.b16 %v365
  %v1554 = vunpack.c.h.b16 %v365
  %v1555 = vunpack.c.l.b16 %v366
  %v1556 = vunpack.c.h.b16 %v366
  %v1557 = vunpack.c.l.b16 %v367
  %v1558 = vunpack.c.h.b16 %v367
  %v1559 = vunpack.c.l.b16 %v368
  %v1560 = vunpack.c.h.b16 %v368
  %v1561 = vunpack.c.l.b16 %v369
  %v1562 = vunpack.c.h.b16 %v369
  %v1563 = vunpack.c.l.b16 %v370
  %v1564 = vunpack.c.h.b16 %v370
  %v1565 = vunpack.c.l.b16 %v371
  %v1566 = vunpack.c.h.b16 %v371
  %v1567 = vunpack.c.l.b16 %v372
  %v1568 = vunpack.c.h.b16 %v372
  %v1569 = vunpack.c.l.b16 %v373
  %v1570 = vunpack.c.h.b16 %v373
  %v1571 = vunpack.c.l.b16 %v374
  %v1572 = vunpack.c.h.b16 %v374
  %v1573 = vunpack.c.l.b16 %v375
  %v1574 = vunpack.c.h.b16 %v375
  %v1575 = vunpack.c.l.b16 %v376
  %v1576 = vunpack.c.h.b16 %v376
  %v1577 = vunpack.c.l.b16 %v377
  %v1578 = vunpack.c.h.b16 %v377
  %v1579 = vunpack.c.l.b16 %v378
  %v1580 = vunpack.c.h.b16 %v378
  %v1581 = vunpack.c.l.b16 %v379
  %v1582 = vunpack.c.h.b16 %v379
  %v1583 = vunpack.c.l.b16 %v380
  %v1584 = vunpack.c.h.b16 %v380
  %v1585 = vunpack.c.l.b16 %v381
  %v1586 = vunpack.c.h.b16 %v381
  %v1587 = vunpack.c.l.b16 %v382
  %v1588 = vunpack.c.h.b16 %v382
  %v1589 = vunpack.c.l.b16 %v383
  %v1590 = vunpack.c.h.b16 %v383
  %v1591 = vunpack.c.l.b16 %v384
  %v1592 = vunpack.c.h.b16 %v384
  %v1593 = vunpack.c.l.b16 %v385
  %v1594 = vunpack.c.h.b16 %v385
  %v1595 = vunpack.c.l.b16 %v386
  %v1596 = vunpack.c.h.b16 %v386
  %v1597 = vunpack.c.l.b16 %v387
  %v1598 = vunpack.c.h.b16 %v387
  %v1599 = vunpack.c.l.b16 %v388
  %v1600 = vunpack.c.h.b16 %v388
  %v1601 = vunpack.c.l.b16 %v389
  %v1602 = vunpack.c.h.b16 %v389
  %v1603 = vunpack.c.l.b16 %v390
  %v1604 = vunpack.c.h.b16 %v390
  %v1605 = vunpack.c.l.b16 %v391
  %v1606 = vunpack.c.h.b16 %v391
  %v1607 = vunpack.c.l.b16 %v392
  %v1608 = vunpack.c.h.b16 %v392
  %v1609 = vunpack.c.l.b16 %v393
  %v1610 = vunpack.c.h.b16 %v393
  %v1611 = vunpack.c.l.b16 %v394
  %v1612 = vunpack.c.h.b16 %v394
  %v1613 = vunpack.c.l.b16 %v395
  %v1614 = vunpack.c.h.b16 %v395
  %v1615 = vunpack.c.l.b16 %v396
  %v1616 = vunpack.c.h.b16 %v396
  %v1617 = vunpack.c.l.b16 %v397
  %v1618 = vunpack.c.h.b16 %v397
  %v1619 = vunpack.c.l.b16 %v398
  %v1620 = vunpack.c.h.b16 %v398
  %v1621 = vunpack.c.l.b16 %v399
  %v1622 = vunpack.c.h.b16 %v399
  %v1623 = vunpack.c.l.b16 %v400
  %v1624 = vunpack.c.h.b16 %v400
  %v1625 = vunpack.c.l.b16 %v401
  %v1626 = vunpack.c.h.b16 %v401
  %v1627 = vunpack.c.l.b16 %v402
  %v1628 = vunpack.c.h.b16 %v402
  %v1629 = vunpack.c.l.b16 %v403
  %v1630 = vunpack.c.h.b16 %v403
  %v1631 = vunpack.c.l.b16 %v404
  %v1632 = vunpack.c.h.b16 %v404
  %v1633 = vunpack.c.l.b16 %v405
  %v1634 = vunpack.c.h.b16 %v405
  %v1635 = vunpack.c.l.b16 %v406
  %v1636 = vunpack.c.h.b16 %v406
  %v1637 = vunpack.c.l.b16 %v407
  %v1638 = vunpack.c.h.b16 %v407
  %v1639 = vunpack.c.l.b16 %v408
  %v1640 = vunpack.c.h.b16 %v408
  %v1641 = vunpack.c.l.b16 %v409
  %v1642 = vunpack.c.h.b16 %v409
  %v1643 = vunpack.c.l.b16 %v410
  %v1644 = vunpack.c.h.b16 %v410
  %v1645 = vunpack.c.l.b16 %v411
  %v1646 = vunpack.c.h.b16 %v411
  %v1647 = vunpack.c.l.b16 %v412
  %v1648 = vunpack.c.h.b16 %v412
  %v1649 = vunpack.c.l.b16 %v413
  %v1650 = vunpack.c.h.b16 %v413
  %v1651 = vunpack.c.l.b16 %v414
  %v1652 = vunpack.c.h.b16 %v414
  %v1653 = vunpack.c.l.b16 %v415
  %v1654 = vunpack.c.h.b16 %v415
  %v1655 = vunpack.c.l.b16 %v416
  %v1656 = vunpack.c.h.b16 %v416
  %v1657 = vunpack.c.l.b16 %v417
  %v1658 = vunpack.c.h.b16 %v417
  %v1659 = vunpack.c.l.b16 %v418
  %v1660 = vunpack.c.h.b16 %v418
  %v1661 = vunpack.c.l.b16 %v419
  %v1662 = vunpack.c.h.b16 %v419
  %v1663 = vpack.c.b16 %v883, %v879
  %v1664 = vpack.c.b16 %v884, %v880
  %v1665 = vpack.c.b16 %v885, %v881
  %v1666 = vpack.c.b16 %v886, %v882
  %v1667 = vpack.c.b16 %v891, %v887
  %v1668 = vpack.c.b16 %v892, %v888
  %v1669 = vpack.c.b16 %v893, %v889
  %v1670 = vpack.c.b16 %v894, %v890
  %v1671 = vpack.c.b16 %v899, %v895
  %v1672 = vpack.c.b16 %v900, %v896
  %v1673 = vpack.c.b16 %v901, %v897
  %v1674 = vpack.c.b16 %v902, %v898
  %v1675 = vpack.c.b16 %v907, %v903
  %v1676 = vpack.c.b16 %v908, %v904
  %v1677 = vpack.c.b16 %v909, %v905
  %v1678 = vpack.c.b16 %v910, %v906
  %v1679 = vpack.c.b16 %v915, %v911
  %v1680 = vpack.c.b16 %v916, %v912
  %v1681 = vpack.c.b16 %v917, %v913
  %v1682 = vpack.c.b16 %v918, %v914
  %v1683 = vpack.c.b16 %v923, %v919
  %v1684 = vpack.c.b16 %v924, %v920
  %v1685 = vpack.c.b16 %v925, %v921
  %v1686 = vpack.c.b16 %v926, %v922
  %v1687 = vpack.c.b16 %v931, %v927
  %v1688 = vpack.c.b16 %v932, %v928
  %v1689 = vpack.c.b16 %v933, %v929
  %v1690 = vpack.c.b16 %v934, %v930
  %v1691 = vpack.c.b16 %v939, %v935
  %v1692 = vpack.c.b16 %v940, %v936
  %v1693 = vpack.c.b16 %v941, %v937
  %v1694 = vpack.c.b16 %v942, %v938
  %v1695 = vpack.c.b16 %v947, %v943
  %v1696 = vpack.c.b16 %v948, %v944
  %v1697 = vpack.c.b16 %v949, %v945
  %v1698 = vpack.c.b16 %v950, %v946
  %v1699 = vpack.c.b16 %v955, %v951
  %v1700 = vpack.c.b16 %v956, %v952
  %v1701 = vpack.c.b16 %v957, %v953
  %v1702 = vpack.c.b16 %v958, %v954
  %v1703 = vpack.c.b16 %v963, %v959
  %v1704 = vpack.c.b16 %v964, %v960
  %v1705 = vpack.c.b16 %v965, %v961
  %v1706 = vpack.c.b16 %v966, %v962
  %v1707 = vpack.c.b16 %v971, %v967
  %v1708 = vpack.c.b16 %v972, %v968
  %v1709 = vpack.c.b16 %v973, %v969
  %v1710 = vpack.c.b16 %v974, %v970
  %v1711 = vpack.c.b16 %v979, %v975
  %v1712 = vpack.c.b16 %v980, %v976
  %v1713 = vpack.c.b16 %v981, %v977
  %v1714 = vpack.c.b16 %v982, %v978
  %v1715 = vpack.c.b16 %v987, %v983
  %v1716 = vpack.c.b16 %v988, %v984
  %v1717 = vpack.c.b16 %v989, %v985
  %v1718 = vpack.c.b16 %v990, %v986
  %v1719 = vpack.c.b16 %v995, %v991
  %v1720 = vpack.c.b16 %v996, %v992
  %v1721 = vpack.c.b16 %v997, %v993
  %v1722 = vpack.c.b16 %v998, %v994
  %v1723 = vpack.c.b16 %v1003, %v999
  %v1724 = vpack.c.b16 %v1004, %v1000
  %v1725 = vpack.c.b16 %v1005, %v1001
  %v1726 = vpack.c.b16 %v1006, %v1002
  %v1727 = vpack.c.b16 %v1011, %v1007
  %v1728 = vpack.c.b16 %v1012, %v1008
  %v1729 = vpack.c.b16 %v1013, %v1009
  %v1730 = vpack.c.b16 %v1014, %v1010
  %v1731 = vpack.c.b16 %v1019, %v1015
  %v1732 = vpack.c.b16 %v1020, %v1016
  %v1733 = vpack.c.b16 %v1021, %v1017
  %v1734 = vpack.c.b16 %v1022, %v1018
  %v1735 = vpack.c.b16 %v1027, %v1023
  %v1736 = vpack.c.b16 %v1028, %v1024
  %v1737 = vpack.c.b16 %v1029, %v1025
  %v1738 = vpack.c.b16 %v1030, %v1026
  %v1739 = vpack.c.b16 %v1035, %v1031
  %v1740 = vpack.c.b16 %v1036, %v1032
  %v1741 = vpack.c.b16 %v1037, %v1033
  %v1742 = vpack.c.b16 %v1038, %v1034
  %v1743 = vpack.c.b16 %v1043, %v1039
  %v1744 = vpack.c.b16 %v1044, %v1040
  %v1745 = vpack.c.b16 %v1045, %v1041
  %v1746 = vpack.c.b16 %v1046, %v1042
  %v1747 = vpack.c.b16 %v1051, %v1047
  %v1748 = vpack.c.b16 %v1052, %v1048
  %v1749 = vpack.c.b16 %v1053, %v1049
  %v1750 = vpack.c.b16 %v1054, %v1050
  %v1751 = vpack.c.b16 %v1059, %v1055
  %v1752 = vpack.c.b16 %v1060, %v1056
  %v1753 = vpack.c.b16 %v1061, %v1057
  %v1754 = vpack.c.b16 %v1062, %v1058
  %v1755 = vpack.c.b16 %v1067, %v1063
  %v1756 = vpack.c.b16 %v1068, %v1064
  %v1757 = vpack.c.b16 %v1069, %v1065
  %v1758 = vpack.c.b16 %v1070, %v1066
  %v1759 = vpack.c.b16 %v1075, %v1071
  %v1760 = vpack.c.b16 %v1076, %v1072
  %v1761 = vpack.c.b16 %v1077, %v1073
  %v1762 = vpack.c.b16 %v1078, %v1074
  %v1763 = vpack.c.b16 %v1083, %v1079
  %v1764 = vpack.c.b16 %v1084, %v1080
  %v1765 = vpack.c.b16 %v1085, %v1081
  %v1766 = vpack.c.b16 %v1086, %v1082
  %v1767 = vpack.c.b16 %v1091, %v1087
  %v1768 = vpack.c.b16 %v1092, %v1088
  %v1769 = vpack.c.b16 %v1093, %v1089
  %v1770 = vpack.c.b16 %v1094, %v1090
  %v1771 = vpack.c.b16 %v1099, %v1095
  %v1772 = vpack.c.b16 %v1100, %v1096
  %v1773 = vpack.c.b16 %v1101, %v1097
  %v1774 = vpack.c.b16 %v1102, %v1098
  %v1775 = vpack.c.b16 %v1107, %v1103
  %v1776 = vpack.c.b16 %v1108, %v1104
  %v1777 = vpack.c.b16 %v1109, %v1105
  %v1778 = vpack.c.b16 %v1110, %v1106
  %v1779 = vpack.c.b16 %v1115, %v1111
  %v1780 = vpack.c.b16 %v1116, %v1112
  %v1781 = vpack.c.b16 %v1117, %v1113
  %v1782 = vpack.c.b16 %v1118, %v1114
  %v1783 = vpack.c.b16 %v1123, %v1119
  %v1784 = vpack.c.b16 %v1124, %v1120
  %v1785 = vpack.c.b16 %v1125, %v1121
  %v1786 = vpack.c.b16 %v1126, %v1122
  %v1787 = vpack.c.b16 %v1131, %v1127
  %v1788 = vpack.c.b16 %v1132, %v1128
  %v1789 = vpack.c.b16 %v1133, %v1129
  %v1790 = vpack.c.b16 %v1134, %v1130
  %v1791 = vpack.c.b16 %v1139, %v1135
  %v1792 = vpack.c.b16 %v1140, %v1136
  %v1793 = vpack.c.b16 %v1141, %v1137
  %v1794 = vpack.c.b16 %v1142, %v1138
  %v1795 = vpack.c.b16 %v1147, %v1143
  %v1796 = vpack.c.b16 %v1148, %v1144
  %v1797 = vpack.c.b16 %v1149, %v1145
  %v1798 = vpack.c.b16 %v1150, %v1146
  %v1799 = vpack.c.b16 %v1155, %v1151
  %v1800 = vpack.c.b16 %v1156, %v1152
  %v1801 = vpack.c.b16 %v1157, %v1153
  %v1802 = vpack.c.b16 %v1158, %v1154
  %v1803 = vpack.c.b16 %v1163, %v1159
  %v1804 = vpack.c.b16 %v1164, %v1160
  %v1805 = vpack.c.b16 %v1165, %v1161
  %v1806 = vpack.c.b16 %v1166, %v1162
  %v1807 = vpack.c.b16 %v1171, %v1167
  %v1808 = vpack.c.b16 %v1172, %v1168
  %v1809 = vpack.c.b16 %v1173, %v1169
  %v1810 = vpack.c.b16 %v1174, %v1170
  %v1811 = vpack.c.b16 %v1179, %v1175
  %v1812 = vpack.c.b16 %v1180, %v1176
  %v1813 = vpack.c.b16 %v1181, %v1177
  %v1814 = vpack.c.b16 %v1182, %v1178
  %v1815 = vpack.c.b16 %v1187, %v1183
  %v1816 = vpack.c.b16 %v1188, %v1184
  %v1817 = vpack.c.b16 %v1189, %v1185
  %v1818 = vpack.c.b16 %v1190, %v1186
  %v1819 = vpack.c.b16 %v1195, %v1191
  %v1820 = vpack.c.b16 %v1196, %v1192
  %v1821 = vpack.c.b16 %v1197, %v1193
  %v1822 = vpack.c.b16 %v1198, %v1194
  %v1823 = vpack.c.b16 %v1203, %v1199
  %v1824 = vpack.c.b16 %v1204, %v1200
  %v1825 = vpack.c.b16 %v1205, %v1201
  %v1826 = vpack.c.b16 %v1206, %v1202
  %v1827 = vpack.c.b16 %v1211, %v1207
  %v1828 = vpack.c.b16 %v1212, %v1208
  %v1829 = vpack.c.b16 %v1213, %v1209
  %v1830 = vpack.c.b16 %v1214, %v1210
  %v1831 = vpack.c.b16 %v1219, %v1215
  %v1832 = vpack.c.b16 %v1220, %v1216
  %v1833 = vpack.c.b16 %v1221, %v1217
  %v1834 = vpack.c.b16 %v1222, %v1218
  %v1835 = vpack.c.b16 %v1227, %v1223
  %v1836 = vpack.c.b16 %v1228, %v1224
  %v1837 = vpack.c.b16 %v1229, %v1225
  %v1838 = vpack.c.b16 %v1230, %v1226
  %v1839 = vpack.c.b16 %v1235, %v1231
  %v1840 = vpack.c.b16 %v1236, %v1232
  %v1841 = vpack.c.b16 %v1237, %v1233
  %v1842 = vpack.c.b16 %v1238, %v1234
  %v1843 = vpack.c.b16 %v1243, %v1239
  %v1844 = vpack.c.b16 %v1244, %v1240
  %v1845 = vpack.c.b16 %v1245, %v1241
  %v1846 = vpack.c.b16 %v1246, %v1242
  %v1847 = vpack.c.b16 %v1251, %v1247
  %v1848 = vpack.c.b16 %v1252, %v1248
  %v1849 = vpack.c.b16 %v1253, %v1249
  %v1850 = vpack.c.b16 %v1254, %v1250
  %v1851 = vpack.c.b16 %v1259, %v1255
  %v1852 = vpack.c.b16 %v1260, %v1256
  %v1853 = vpack.c.b16 %v1261, %v1257
  %v1854 = vpack.c.b16 %v1262, %v1258
  %v1855 = vpack.c.b16 %v1267, %v1263
  %v1856 = vpack.c.b16 %v1268, %v1264
  %v1857 = vpack.c.b16 %v1269, %v1265
  %v1858 = vpack.c.b16 %v1270, %v1266
  %v1859 = vpack.c.b16 %v1275, %v1271
  %v1860 = vpack.c.b16 %v1276, %v1272
  %v1861 = vpack.c.b16 %v1277, %v1273
  %v1862 = vpack.c.b16 %v1278, %v1274
  %v1863 = vpack.c.b16 %v1283, %v1279
  %v1864 = vpack.c.b16 %v1284, %v1280
  %v1865 = vpack.c.b16 %v1285, %v1281
  %v1866 = vpack.c.b16 %v1286, %v1282
  %v1867 = vpack.c.b16 %v1291, %v1287
  %v1868 = vpack.c.b16 %v1292, %v1288
  %v1869 = vpack.c.b16 %v1293, %v1289
  %v1870 = vpack.c.b16 %v1294, %v1290
  %v1871 = vpack.c.b16 %v1299, %v1295
  %v1872 = vpack.c.b16 %v1300, %v1296
  %v1873 = vpack.c.b16 %v1301, %v1297
  %v1874 = vpack.c.b16 %v1302, %v1298
  %v1875 = vpack.c.b16 %v1307, %v1303
  %v1876 = vpack.c.b16 %v1308, %v1304
  %v1877 = vpack.c.b16 %v1309, %v1305
  %v1878 = vpack.c.b16 %v1310, %v1306
  %v1879 = vpack.c.b16 %v1315, %v1311
  %v1880 = vpack.c.b16 %v1316, %v1312
  %v1881 = vpack.c.b16 %v1317, %v1313
  %v1882 = vpack.c.b16 %v1318, %v1314
  %v1883 = vpack.c.b16 %v1323, %v1319
  %v1884 = vpack.c.b16 %v1324, %v1320
  %v1885 = vpack.c.b16 %v1325, %v1321
  %v1886 = vpack.c.b16 %v1326, %v1322
  %v1887 = vpack.c.b16 %v1331, %v1327
  %v1888 = vpack.c.b16 %v1332, %v1328
  %v1889 = vpack.c.b16 %v1333, %v1329
  %v1890 = vpack.c.b16 %v1334, %v1330
  %v1891 = vpack.c.b16 %v1339, %v1335
  %v1892 = vpack.c.b16 %v1340, %v1336
  %v1893 = vpack.c.b16 %v1341, %v1337
  %v1894 = vpack.c.b16 %v1342, %v1338
  %v1895 = vpack.c.b16 %v1347, %v1343
  %v1896 = vpack.c.b16 %v1348, %v1344
  %v1897 = vpack.c.b16 %v1349, %v1345
  %v1898 = vpack.c.b16 %v1350, %v1346
  %v1899 = vpack.c.b16 %v1355, %v1351
  %v1900 = vpack.c.b16 %v1356, %v1352
  %v1901 = vpack.c.b16 %v1357, %v1353
  %v1902 = vpack.c.b16 %v1358, %v1354
  %v1903 = vpack.c.b16 %v1363, %v1359
  %v1904 = vpack.c.b16 %v1364, %v1360
  %v1905 = vpack.c.b16 %v1365, %v1361
  %v1906 = vpack.c.b16 %v1366, %v1362
  %v1907 = vpack.c.b16 %v1371, %v1367
  %v1908 = vpack.c.b16 %v1372, %v1368
  %v1909 = vpack.c.b16 %v1373, %v1369
  %v1910 = vpack.c.b16 %v1374, %v1370
  %v1911 = vpack.c.b16 %v1379, %v1375
  %v1912 = vpack.c.b16 %v1380, %v1376
  %v1913 = vpack.c.b16 %v1381, %v1377
  %v1914 = vpack.c.b16 %v1382, %v1378
  %v1915 = vpack.c.b16 %v1387, %v1383
  %v1916 = vpack.c.b16 %v1388, %v1384
  %v1917 = vpack.c.b16 %v1389, %v1385
  %v1918 = vpack.c.b16 %v1390, %v1386
  %v1919 = vpack.c.b16 %v1395, %v1391
  %v1920 = vpack.c.b16 %v1396, %v1392
  %v1921 = vpack.c.b16 %v1397, %v1393
  %v1922 = vpack.c.b16 %v1398, %v1394
  %v1923 = vpack.c.b16 %v1403, %v1399
  %v1924 = vpack.c.b16 %v1404, %v1400
  %v1925 = vpack.c.b16 %v1405, %v1401
  %v1926 = vpack.c.b16 %v1406, %v1402
  %v1927 = vpack.c.b16 %v1411, %v1407
  %v1928 = vpack.c.b16 %v1412, %v1408
  %v1929 = vpack.c.b16 %v1413, %v1409
  %v1930 = vpack.c.b16 %v1414, %v1410
  %v1931 = vpack.c.b16 %v1419, %v1415
  %v1932 = vpack.c.b16 %v1420, %v1416
  %v1933 = vpack.c.b16 %v1421, %v1417
  %v1934 = vpack.c.b16 %v1422, %v1418
  %v1935 = vpack.c.b16 %v1427, %v1423
  %v1936 = vpack.c.b16 %v1428, %v1424
  %v1937 = vpack.c.b16 %v1429, %v1425
  %v1938 = vpack.c.b16 %v1430, %v1426
  %v1939 = vpack.c.b16 %v1435, %v1431
  %v1940 = vpack.c.b16 %v1436, %v1432
  %v1941 = vpack.c.b16 %v1437, %v1433
  %v1942 = vpack.c.b16 %v1438, %v1434
  %v1943 = vpack.c.b16 %v1443, %v1439
  %v1944 = vpack.c.b16 %v1444, %v1440
  %v1945 = vpack.c.b16 %v1445, %v1441
  %v1946 = vpack.c.b16 %v1446, %v1442
  %v1947 = vpack.c.b16 %v1451, %v1447
  %v1948 = vpack.c.b16 %v1452, %v1448
  %v1949 = vpack.c.b16 %v1453, %v1449
  %v1950 = vpack.c.b16 %v1454, %v1450
  %v1951 = vpack.c.b16 %v1459, %v1455
  %v1952 = vpack.c.b16 %v1460, %v1456
  %v1953 = vpack.c.b16 %v1461, %v1457
  %v1954 = vpack.c.b16 %v1462, %v1458
  %v1955 = vpack.c.b16 %v1467, %v1463
  %v1956 = vpack.c.b16 %v1468, %v1464
  %v1957 = vpack.c.b16 %v1469, %v1465
  %v1958 = vpack.c.b16 %v1470, %v1466
  %v1959 = vpack.c.b16 %v1475, %v1471
  %v1960 = vpack.c.b16 %v1476, %v1472
  %v1961 = vpack.c.b16 %v1477, %v1473
  %v1962 = vpack.c.b16 %v1478, %v1474
  %v1963 = vpack.c.b16 %v1483, %v1479
  %v1964 = vpack.c.b16 %v1484, %v1480
  %v1965 = vpack.c.b16 %v1485, %v1481
  %v1966 = vpack.c.b16 %v1486, %v1482
  %v1967 = vpack.c.b16 %v1491, %v1487
  %v1968 = vpack.c.b16 %v1492, %v1488
  %v1969 = vpack.c.b16 %v1493, %v1489
  %v1970 = vpack.c.b16 %v1494, %v1490
  %v1971 = vpack.c.b16 %v1499, %v1495
  %v1972 = vpack.c.b16 %v1500, %v1496
  %v1973 = vpack.c.b16 %v1501, %v1497
  %v1974 = vpack.c.b16 %v1502, %v1498
  %v1975 = vpack.c.b16 %v1507, %v1503
  %v1976 = vpack.c.b16 %v1508, %v1504
  %v1977 = vpack.c.b16 %v1509, %v1505
  %v1978 = vpack.c.b16 %v1510, %v1506
  %v1979 = vpack.c.b16 %v1515, %v1511
  %v1980 = vpack.c.b16 %v1516, %v1512
  %v1981 = vpack.c.b16 %v1517, %v1513
  %v1982 = vpack.c.b16 %v1518, %v1514
  %v1983 = vpack.c.b16 %v1523, %v1519
  %v1984 = vpack.c.b16 %v1524, %v1520
  %v1985 = vpack.c.b16 %v1525, %v1521
  %v1986 = vpack.c.b16 %v1526, %v1522
  %v1987 = vpack.c.b16 %v1531, %v1527
  %v1988 = vpack.c.b16 %v1532, %v1528
  %v1989 = vpack.c.b16 %v1533, %v1529
  %v1990 = vpack.c.b16 %v1534, %v1530
  %v1991 = vpack.c.b16 %v1539, %v1535
  %v1992 = vpack.c.b16 %v1540, %v1536
  %v1993 = vpack.c.b16 %v1541, %v1537
  %v1994 = vpack.c.b16 %v1542, %v1538
  %v1995 = vpack.c.b16 %v1547, %v1543
  %v1996 = vpack.c.b16 %v1548, %v1544
  %v1997 = vpack.c.b16 %v1549, %v1545
  %v1998 = vpack.c.b16 %v1550, %v1546
  %v1999 = vpack.c.b16 %v1555, %v1551
  %v2000 = vpack.c.b16 %v1556, %v1552
  %v2001 = vpack.c.b16 %v1557, %v1553
  %v2002 = vpack.c.b16 %v1558, %v1554
  %v2003 = vpack.c.b16 %v1563, %v1559
  %v2004 = vpack.c.b16 %v1564, %v1560
  %v2005 = vpack.c.b16 %v1565, %v1561
  %v2006 = vpack.c.b16 %v1566, %v1562
  %v2007 = vpack.c.b16 %v1571, %v1567
  %v2008 = vpack.c.b16 %v1572, %v1568
  %v2009 = vpack.c.b16 %v1573, %v1569
  %v2010 = vpack.c.b16 %v1574, %v1570
  %v2011 = vpack.c.b16 %v1579, %v1575
  %v2012 = vpack.c.b16 %v1580, %v1576
  %v2013 = vpack.c.b16 %v1581, %v1577
  %v2014 = vpack.c.b16 %v1582, %v1578
  %v2015 = vpack.c.b16 %v1587, %v1583
  %v2016 = vpack.c.b16 %v1588, %v1584
  %v2017 = vpack.c.b16 %v1589, %v1585
  %v2018 = vpack.c.b16 %v1590, %v1586
  %v2019 = vpack.c.b16 %v1595, %v1591
  %v2020 = vpack.c.b16 %v1596, %v1592
  %v2021 = vpack.c.b16 %v1597, %v1593
  %v2022 = vpack.c.b16 %v1598, %v1594
  %v2023 = vpack.c.b16 %v1603, %v1599
  %v2024 = vpack.c.b16 %v1604, %v1600
  %v2025 = vpack.c.b16 %v1605, %v1601
  %v2026 = vpack.c.b16 %v1606, %v1602
  %v2027 = vpack.c.b16 %v1611, %v1607
  %v2028 = vpack.c.b16 %v1612, %v1608
  %v2029 = vpack.c.b16 %v1613, %v1609
  %v2030 = vpack.c.b16 %v1614, %v1610
  %v2031 = vpack.c.b16 %v1619, %v1615
  %v2032 = vpack.c.b16 %v1620, %v1616
  %v2033 = vpack.c.b16 %v1621, %v1617
  %v2034 = vpack.c.b16 %v1622, %v1618
  %v2035 = vpack.c.b16 %v1627, %v1623
  %v2036 = vpack.c.b16 %v1628, %v1624
  %v2037 = vpack.c.b16 %v1629, %v1625
  %v2038 = vpack.c.b16 %v1630, %v1626
  %v2039 = vpack.c.b16 %v1635, %v1631
  %v2040 = vpack.c.b16 %v1636, %v1632
  %v2041 = vpack.c.b16 %v1637, %v1633
  %v2042 = vpack.c.b16 %v1638, %v1634
  %v2043 = vpack.c.b16 %v1643, %v1639
  %v2044 = vpack.c.b16 %v1644, %v1640
  %v2045 = vpack.c.b16 %v1645, %v1641
  %v2046 = vpack.c.b16 %v1646, %v1642
  %v2047 = vpack.c.b16 %v1651, %v1647
  %v2048 = vpack.c.b16 %v1652, %v1648
  %v2049 = vpack.c.b16 %v1653, %v1649
  %v2050 = vpack.c.b16 %v1654, %v1650
  %v2051 = vpack.c.b16 %v1659, %v1655
  %v2052 = vpack.c.b16 %v1660, %v1656
  %v2053 = vpack.c.b16 %v1661, %v1657
  %v2054 = vpack.c.b16 %v1662, %v1658
  %vm2447 = vcmask 261120
  %v2449 = vsel %vm2447, %v474, 0
  %2451 = vmatprep.subr.bf16.mxu0 %v1664
  %2452 = vmatpush1.bf16.msra.mxu0 %v1663
  %2453 = vmatprep.subr.bf16.mxu0 %v1668
  %2454 = vmatpush1.bf16.msra.mxu0 %v1667
  %2455 = vmatprep.subr.bf16.mxu0 %v1672
  %2456 = vmatpush1.bf16.msra.mxu0 %v1671
  %2457 = vmatprep.subr.bf16.mxu0 %v1676
  %2458 = vmatpush1.bf16.msra.mxu0 %v1675
  %2459 = vmatprep.subr.bf16.mxu0 %v1680
  %2460 = vmatpush1.bf16.msra.mxu0 %v1679
  %2461 = vmatprep.subr.bf16.mxu0 %v1684
  %2462 = vmatpush1.bf16.msra.mxu0 %v1683
  %2463 = vmatprep.subr.bf16.mxu0 %v1688
  %2464 = vmatpush1.bf16.msra.mxu0 %v1687
  %2465 = vmatprep.subr.bf16.mxu0 %v1692
  %2466 = vmatpush1.bf16.msra.mxu0 %v1691
  %2467 = vmatprep.subr.bf16.mxu0 %v1696
  %2468 = vmatpush1.bf16.msra.mxu0 %v1695
  %2469 = vmatprep.subr.bf16.mxu0 %v1700
  %2470 = vmatpush1.bf16.msra.mxu0 %v1699
  %2471 = vmatprep.subr.bf16.mxu0 %v1704
  %2472 = vmatpush1.bf16.msra.mxu0 %v1703
  %2473 = vmatprep.subr.bf16.mxu0 %v1708
  %2474 = vmatpush1.bf16.msra.mxu0 %v1707
  %2475 = vmatprep.subr.bf16.mxu0 %v1712
  %2476 = vmatpush1.bf16.msra.mxu0 %v1711
  %2477 = vmatprep.subr.bf16.mxu0 %v1716
  %2478 = vmatpush1.bf16.msra.mxu0 %v1715
  %2479 = vmatprep.subr.bf16.mxu0 %v1720
  %2480 = vmatpush1.bf16.msra.mxu0 %v1719
  %2481 = vmatprep.subr.bf16.mxu0 %v1724
  %2482 = vmatpush1.bf16.msra.mxu0 %v1723
  %2483 = vmatprep.mubr.bf16.mxu0 %v463
  %2484 = vmatmul.mubr.bf16.gmra.mrb[0].mxu0 %v462
  %v2485 = vpop.f32.mrb[0].mxu0
  %v2486 = vadd.f32 %v425, %v2485
  %v2487 = vpop.f32.mrb[0].mxu0
  %v2488 = vadd.f32 %v429, %v2487
  %v2489 = vpop.f32.mrb[0].mxu0
  %v2490 = vpop.f32.mrb[0].mxu0
  %2491 = vdwg.mxu0
  %2492 = vmatprep.subr.bf16.mxu0 %v1728
  %2493 = vmatpush1.bf16.msra.mxu0 %v1727
  %2494 = vmatprep.subr.bf16.mxu0 %v1732
  %2495 = vmatpush1.bf16.msra.mxu0 %v1731
  %2496 = vmatprep.subr.bf16.mxu0 %v1736
  %2497 = vmatpush1.bf16.msra.mxu0 %v1735
  %2498 = vmatprep.subr.bf16.mxu0 %v1740
  %2499 = vmatpush1.bf16.msra.mxu0 %v1739
  %2500 = vmatprep.subr.bf16.mxu0 %v1744
  %2501 = vmatpush1.bf16.msra.mxu0 %v1743
  %2502 = vmatprep.subr.bf16.mxu0 %v1748
  %2503 = vmatpush1.bf16.msra.mxu0 %v1747
  %2504 = vmatprep.subr.bf16.mxu0 %v1752
  %2505 = vmatpush1.bf16.msra.mxu0 %v1751
  %2506 = vmatprep.subr.bf16.mxu0 %v1756
  %2507 = vmatpush1.bf16.msra.mxu0 %v1755
  %2508 = vmatprep.subr.bf16.mxu0 %v1760
  %2509 = vmatpush1.bf16.msra.mxu0 %v1759
  %2510 = vmatprep.subr.bf16.mxu0 %v1764
  %2511 = vmatpush1.bf16.msra.mxu0 %v1763
  %2512 = vmatprep.subr.bf16.mxu0 %v1768
  %2513 = vmatpush1.bf16.msra.mxu0 %v1767
  %2514 = vmatprep.subr.bf16.mxu0 %v1772
  %2515 = vmatpush1.bf16.msra.mxu0 %v1771
  %2516 = vmatprep.subr.bf16.mxu0 %v1776
  %2517 = vmatpush1.bf16.msra.mxu0 %v1775
  %2518 = vmatprep.subr.bf16.mxu0 %v1780
  %2519 = vmatpush1.bf16.msra.mxu0 %v1779
  %2520 = vmatprep.subr.bf16.mxu0 %v1784
  %2521 = vmatpush1.bf16.msra.mxu0 %v1783
  %2522 = vmatprep.subr.bf16.mxu0 %v1788
  %2523 = vmatpush1.bf16.msra.mxu0 %v1787
  %2524 = vmatprep.mubr.bf16.mxu0 %v465
  %2525 = vmatmul.mubr.bf16.gmra.mrb[0].mxu0 %v464
  %v2526 = vpop.f32.mrb[0].mxu0
  %v2527 = vadd.f32 %v2486, %v2526
  %v2528 = vpop.f32.mrb[0].mxu0
  %v2529 = vadd.f32 %v2488, %v2528
  %v2530 = vpop.f32.mrb[0].mxu0
  %v2531 = vpop.f32.mrb[0].mxu0
  %2532 = vdwg.mxu0
  %2533 = vmatprep.subr.bf16.mxu0 %v1792
  %2534 = vmatpush1.bf16.msra.mxu0 %v1791
  %2535 = vmatprep.subr.bf16.mxu0 %v1796
  %2536 = vmatpush1.bf16.msra.mxu0 %v1795
  %2537 = vmatprep.subr.bf16.mxu0 %v1800
  %2538 = vmatpush1.bf16.msra.mxu0 %v1799
  %2539 = vmatprep.subr.bf16.mxu0 %v1804
  %2540 = vmatpush1.bf16.msra.mxu0 %v1803
  %2541 = vmatprep.subr.bf16.mxu0 %v1808
  %2542 = vmatpush1.bf16.msra.mxu0 %v1807
  %2543 = vmatprep.subr.bf16.mxu0 %v1812
  %2544 = vmatpush1.bf16.msra.mxu0 %v1811
  %2545 = vmatprep.subr.bf16.mxu0 %v1816
  %2546 = vmatpush1.bf16.msra.mxu0 %v1815
  %2547 = vmatprep.subr.bf16.mxu0 %v1820
  %2548 = vmatpush1.bf16.msra.mxu0 %v1819
  %2549 = vmatprep.subr.bf16.mxu0 %v1824
  %2550 = vmatpush1.bf16.msra.mxu0 %v1823
  %2551 = vmatprep.subr.bf16.mxu0 %v1828
  %2552 = vmatpush1.bf16.msra.mxu0 %v1827
  %2553 = vmatprep.subr.bf16.mxu0 %v1832
  %2554 = vmatpush1.bf16.msra.mxu0 %v1831
  %2555 = vmatprep.subr.bf16.mxu0 %v1836
  %2556 = vmatpush1.bf16.msra.mxu0 %v1835
  %2557 = vmatprep.subr.bf16.mxu0 %v1840
  %2558 = vmatpush1.bf16.msra.mxu0 %v1839
  %2559 = vmatprep.subr.bf16.mxu0 %v1844
  %2560 = vmatpush1.bf16.msra.mxu0 %v1843
  %2561 = vmatprep.subr.bf16.mxu0 %v1848
  %2562 = vmatpush1.bf16.msra.mxu0 %v1847
  %2563 = vmatprep.subr.bf16.mxu0 %v1852
  %2564 = vmatpush1.bf16.msra.mxu0 %v1851
  %2565 = vmatprep.mubr.bf16.mxu0 %v467
  %2566 = vmatmul.mubr.bf16.gmra.mrb[0].mxu0 %v466
  %v2567 = vpop.f32.mrb[0].mxu0
  %v2568 = vadd.f32 %v2527, %v2567
  %v2569 = vpop.f32.mrb[0].mxu0
  %v2570 = vadd.f32 %v2529, %v2569
  %v2571 = vpop.f32.mrb[0].mxu0
  %v2572 = vpop.f32.mrb[0].mxu0
  %2573 = vdwg.mxu0
  %2574 = vmatprep.subr.bf16.mxu0 %v1856
  %2575 = vmatpush1.bf16.msra.mxu0 %v1855
  %2576 = vmatprep.subr.bf16.mxu0 %v1860
  %2577 = vmatpush1.bf16.msra.mxu0 %v1859
  %2578 = vmatprep.subr.bf16.mxu0 %v1864
  %2579 = vmatpush1.bf16.msra.mxu0 %v1863
  %2580 = vmatprep.subr.bf16.mxu0 %v1868
  %2581 = vmatpush1.bf16.msra.mxu0 %v1867
  %2582 = vmatprep.subr.bf16.mxu0 %v1872
  %2583 = vmatpush1.bf16.msra.mxu0 %v1871
  %2584 = vmatprep.subr.bf16.mxu0 %v1876
  %2585 = vmatpush1.bf16.msra.mxu0 %v1875
  %2586 = vmatprep.subr.bf16.mxu0 %v1880
  %2587 = vmatpush1.bf16.msra.mxu0 %v1879
  %2588 = vmatprep.subr.bf16.mxu0 %v1884
  %2589 = vmatpush1.bf16.msra.mxu0 %v1883
  %2590 = vmatprep.subr.bf16.mxu0 %v1888
  %2591 = vmatpush1.bf16.msra.mxu0 %v1887
  %2592 = vmatprep.subr.bf16.mxu0 %v1892
  %2593 = vmatpush1.bf16.msra.mxu0 %v1891
  %2594 = vmatprep.subr.bf16.mxu0 %v1896
  %2595 = vmatpush1.bf16.msra.mxu0 %v1895
  %2596 = vmatprep.subr.bf16.mxu0 %v1900
  %2597 = vmatpush1.bf16.msra.mxu0 %v1899
  %2598 = vmatprep.subr.bf16.mxu0 %v1904
  %2599 = vmatpush1.bf16.msra.mxu0 %v1903
  %2600 = vmatprep.subr.bf16.mxu0 %v1908
  %2601 = vmatpush1.bf16.msra.mxu0 %v1907
  %2602 = vmatprep.subr.bf16.mxu0 %v1912
  %2603 = vmatpush1.bf16.msra.mxu0 %v1911
  %2604 = vmatprep.subr.bf16.mxu0 %v1916
  %2605 = vmatpush1.bf16.msra.mxu0 %v1915
  %2606 = vmatprep.mubr.bf16.mxu0 %v469
  %2607 = vmatmul.mubr.bf16.gmra.mrb[0].mxu0 %v468
  %v2608 = vpop.f32.mrb[0].mxu0
  %v2609 = vadd.f32 %v2568, %v2608
  %v2610 = vpop.f32.mrb[0].mxu0
  %v2611 = vadd.f32 %v2570, %v2610
  %v2612 = vpop.f32.mrb[0].mxu0
  %v2613 = vpop.f32.mrb[0].mxu0
  %2614 = vdwg.mxu0
  %2615 = vmatprep.subr.bf16.mxu0 %v1920
  %2616 = vmatpush1.bf16.msra.mxu0 %v1919
  %2617 = vmatprep.subr.bf16.mxu0 %v1924
  %2618 = vmatpush1.bf16.msra.mxu0 %v1923
  %2619 = vmatprep.subr.bf16.mxu0 %v1928
  %2620 = vmatpush1.bf16.msra.mxu0 %v1927
  %2621 = vmatprep.subr.bf16.mxu0 %v1932
  %2622 = vmatpush1.bf16.msra.mxu0 %v1931
  %2623 = vmatprep.subr.bf16.mxu0 %v1936
  %2624 = vmatpush1.bf16.msra.mxu0 %v1935
  %2625 = vmatprep.subr.bf16.mxu0 %v1940
  %2626 = vmatpush1.bf16.msra.mxu0 %v1939
  %2627 = vmatprep.subr.bf16.mxu0 %v1944
  %2628 = vmatpush1.bf16.msra.mxu0 %v1943
  %2629 = vmatprep.subr.bf16.mxu0 %v1948
  %2630 = vmatpush1.bf16.msra.mxu0 %v1947
  %2631 = vmatprep.subr.bf16.mxu0 %v1952
  %2632 = vmatpush1.bf16.msra.mxu0 %v1951
  %2633 = vmatprep.subr.bf16.mxu0 %v1956
  %2634 = vmatpush1.bf16.msra.mxu0 %v1955
  %2635 = vmatprep.subr.bf16.mxu0 %v1960
  %2636 = vmatpush1.bf16.msra.mxu0 %v1959
  %2637 = vmatprep.subr.bf16.mxu0 %v1964
  %2638 = vmatpush1.bf16.msra.mxu0 %v1963
  %2639 = vmatprep.subr.bf16.mxu0 %v1968
  %2640 = vmatpush1.bf16.msra.mxu0 %v1967
  %2641 = vmatprep.subr.bf16.mxu0 %v1972
  %2642 = vmatpush1.bf16.msra.mxu0 %v1971
  %2643 = vmatprep.subr.bf16.mxu0 %v1976
  %2644 = vmatpush1.bf16.msra.mxu0 %v1975
  %2645 = vmatprep.subr.bf16.mxu0 %v1980
  %2646 = vmatpush1.bf16.msra.mxu0 %v1979
  %2647 = vmatprep.mubr.bf16.mxu0 %v471
  %2648 = vmatmul.mubr.bf16.gmra.mrb[0].mxu0 %v470
  %v2649 = vpop.f32.mrb[0].mxu0
  %v2650 = vadd.f32 %v2609, %v2649
  %v2651 = vpop.f32.mrb[0].mxu0
  %v2652 = vadd.f32 %v2611, %v2651
  %v2653 = vpop.f32.mrb[0].mxu0
  %v2654 = vpop.f32.mrb[0].mxu0
  %2655 = vdwg.mxu0
  %2656 = vmatprep.subr.bf16.mxu0 %v1984
  %2657 = vmatpush1.bf16.msra.mxu0 %v1983
  %2658 = vmatprep.subr.bf16.mxu0 %v1988
  %2659 = vmatpush1.bf16.msra.mxu0 %v1987
  %2660 = vmatprep.subr.bf16.mxu0 %v1992
  %2661 = vmatpush1.bf16.msra.mxu0 %v1991
  %2662 = vmatprep.subr.bf16.mxu0 %v1996
  %2663 = vmatpush1.bf16.msra.mxu0 %v1995
  %2664 = vmatprep.subr.bf16.mxu0 %v2000
  %2665 = vmatpush1.bf16.msra.mxu0 %v1999
  %2666 = vmatprep.subr.bf16.mxu0 %v2004
  %2667 = vmatpush1.bf16.msra.mxu0 %v2003
  %2668 = vmatprep.subr.bf16.mxu0 %v2008
  %2669 = vmatpush1.bf16.msra.mxu0 %v2007
  %2670 = vmatprep.subr.bf16.mxu0 %v2012
  %2671 = vmatpush1.bf16.msra.mxu0 %v2011
  %2672 = vmatprep.subr.bf16.mxu0 %v2016
  %2673 = vmatpush1.bf16.msra.mxu0 %v2015
  %2674 = vmatprep.subr.bf16.mxu0 %v2020
  %2675 = vmatpush1.bf16.msra.mxu0 %v2019
  %2676 = vmatprep.subr.bf16.mxu0 %v2024
  %2677 = vmatpush1.bf16.msra.mxu0 %v2023
  %2678 = vmatprep.subr.bf16.mxu0 %v2028
  %2679 = vmatpush1.bf16.msra.mxu0 %v2027
  %2680 = vmatprep.subr.bf16.mxu0 %v2032
  %2681 = vmatpush1.bf16.msra.mxu0 %v2031
  %2682 = vmatprep.subr.bf16.mxu0 %v2036
  %2683 = vmatpush1.bf16.msra.mxu0 %v2035
  %2684 = vmatprep.subr.bf16.mxu0 %v2040
  %2685 = vmatpush1.bf16.msra.mxu0 %v2039
  %2686 = vmatprep.subr.bf16.mxu0 %v2044
  %2687 = vmatpush1.bf16.msra.mxu0 %v2043
  %2688 = vmatprep.mubr.bf16.mxu0 %v473
  %2689 = vmatmul.mubr.bf16.gmra.mrb[0].mxu0 %v472
  %v2690 = vpop.f32.mrb[0].mxu0
  %v2691 = vadd.f32 %v2650, %v2690
  %v2692 = vpop.f32.mrb[0].mxu0
  %v2693 = vadd.f32 %v2652, %v2692
  %v2694 = vpop.f32.mrb[0].mxu0
  %v2695 = vpop.f32.mrb[0].mxu0
  %2696 = vdwg.mxu0
  %2697 = vmatprep.subr.bf16.mxu0 %v2048
  %2698 = vmatpush1.bf16.msra.mxu0 %v2047
  %2699 = vmatprep.subr.bf16.mxu0 %v2052
  %2700 = vmatpush1.bf16.msra.mxu0 %v2051
  %2701 = vmatprep.subr.bf16.mxu0 0
  %2702 = vmatpush1.bf16.msra.mxu0 0
  %2703 = vmatprep.subr.bf16.mxu0 0
  %2704 = vmatpush1.bf16.msra.mxu0 0
  %2705 = vmatprep.subr.bf16.mxu0 0
  %2706 = vmatpush1.bf16.msra.mxu0 0
  %2707 = vmatprep.subr.bf16.mxu0 0
  %2708 = vmatpush1.bf16.msra.mxu0 0
  %2709 = vmatprep.subr.bf16.mxu0 0
  %2710 = vmatpush1.bf16.msra.mxu0 0
  %2711 = vmatprep.subr.bf16.mxu0 0
  %2712 = vmatpush1.bf16.msra.mxu0 0
  %2713 = vmatprep.subr.bf16.mxu0 0
  %2714 = vmatpush1.bf16.msra.mxu0 0
  %2715 = vmatprep.subr.bf16.mxu0 0
  %2716 = vmatpush1.bf16.msra.mxu0 0
  %2717 = vmatprep.subr.bf16.mxu0 0
  %2718 = vmatpush1.bf16.msra.mxu0 0
  %2719 = vmatprep.subr.bf16.mxu0 0
  %2720 = vmatpush1.bf16.msra.mxu0 0
  %2721 = vmatprep.subr.bf16.mxu0 0
  %2722 = vmatpush1.bf16.msra.mxu0 0
  %2723 = vmatprep.subr.bf16.mxu0 0
  %2724 = vmatpush1.bf16.msra.mxu0 0
  %2725 = vmatprep.subr.bf16.mxu0 0
  %2726 = vmatpush1.bf16.msra.mxu0 0
  %2727 = vmatprep.subr.bf16.mxu0 0
  %2728 = vmatpush1.bf16.msra.mxu0 0
  %2729 = vmatprep.mubr.bf16.mxu0 0
  %2730 = vmatmul.mubr.bf16.gmra.mrb[0].mxu0 %v2449
  %v2731 = vpop.f32.mrb[0].mxu0
  %v2732 = vadd.f32 %v2691, %v2731
  %v2733 = vpop.f32.mrb[0].mxu0
  %v2734 = vadd.f32 %v2693, %v2733
  %v2735 = vpop.f32.mrb[0].mxu0
  %v2736 = vpop.f32.mrb[0].mxu0
  %2737 = vdwg.mxu0
  %2738 = vmatprep.subr.bf16.mxu0 %v1666
  %2739 = vmatpush1.bf16.msra.mxu0 %v1665
  %2740 = vmatprep.subr.bf16.mxu0 %v1670
  %2741 = vmatpush1.bf16.msra.mxu0 %v1669
  %2742 = vmatprep.subr.bf16.mxu0 %v1674
  %2743 = vmatpush1.bf16.msra.mxu0 %v1673
  %2744 = vmatprep.subr.bf16.mxu0 %v1678
  %2745 = vmatpush1.bf16.msra.mxu0 %v1677
  %2746 = vmatprep.subr.bf16.mxu0 %v1682
  %2747 = vmatpush1.bf16.msra.mxu0 %v1681
  %2748 = vmatprep.subr.bf16.mxu0 %v1686
  %2749 = vmatpush1.bf16.msra.mxu0 %v1685
  %2750 = vmatprep.subr.bf16.mxu0 %v1690
  %2751 = vmatpush1.bf16.msra.mxu0 %v1689
  %2752 = vmatprep.subr.bf16.mxu0 %v1694
  %2753 = vmatpush1.bf16.msra.mxu0 %v1693
  %2754 = vmatprep.subr.bf16.mxu0 %v1698
  %2755 = vmatpush1.bf16.msra.mxu0 %v1697
  %2756 = vmatprep.subr.bf16.mxu0 %v1702
  %2757 = vmatpush1.bf16.msra.mxu0 %v1701
  %2758 = vmatprep.subr.bf16.mxu0 %v1706
  %2759 = vmatpush1.bf16.msra.mxu0 %v1705
  %2760 = vmatprep.subr.bf16.mxu0 %v1710
  %2761 = vmatpush1.bf16.msra.mxu0 %v1709
  %2762 = vmatprep.subr.bf16.mxu0 %v1714
  %2763 = vmatpush1.bf16.msra.mxu0 %v1713
  %2764 = vmatprep.subr.bf16.mxu0 %v1718
  %2765 = vmatpush1.bf16.msra.mxu0 %v1717
  %2766 = vmatprep.subr.bf16.mxu0 %v1722
  %2767 = vmatpush1.bf16.msra.mxu0 %v1721
  %2768 = vmatprep.subr.bf16.mxu0 %v1726
  %2769 = vmatpush1.bf16.msra.mxu0 %v1725
  %2770 = vmatprep.mubr.bf16.mxu0 %v463
  %2771 = vmatmul.mubr.bf16.gmra.mrb[0].mxu0 %v462
  %v2772 = vpop.f32.mrb[0].mxu0
  %v2773 = vadd.f32 %v433, %v2772
  %v2774 = vpop.f32.mrb[0].mxu0
  %v2775 = vadd.f32 %v437, %v2774
  %v2776 = vpop.f32.mrb[0].mxu0
  %v2777 = vpop.f32.mrb[0].mxu0
  %2778 = vdwg.mxu0
  %2779 = vmatprep.subr.bf16.mxu0 %v1730
  %2780 = vmatpush1.bf16.msra.mxu0 %v1729
  %2781 = vmatprep.subr.bf16.mxu0 %v1734
  %2782 = vmatpush1.bf16.msra.mxu0 %v1733
  %2783 = vmatprep.subr.bf16.mxu0 %v1738
  %2784 = vmatpush1.bf16.msra.mxu0 %v1737
  %2785 = vmatprep.subr.bf16.mxu0 %v1742
  %2786 = vmatpush1.bf16.msra.mxu0 %v1741
  %2787 = vmatprep.subr.bf16.mxu0 %v1746
  %2788 = vmatpush1.bf16.msra.mxu0 %v1745
  %2789 = vmatprep.subr.bf16.mxu0 %v1750
  %2790 = vmatpush1.bf16.msra.mxu0 %v1749
  %2791 = vmatprep.subr.bf16.mxu0 %v1754
  %2792 = vmatpush1.bf16.msra.mxu0 %v1753
  %2793 = vmatprep.subr.bf16.mxu0 %v1758
  %2794 = vmatpush1.bf16.msra.mxu0 %v1757
  %2795 = vmatprep.subr.bf16.mxu0 %v1762
  %2796 = vmatpush1.bf16.msra.mxu0 %v1761
  %2797 = vmatprep.subr.bf16.mxu0 %v1766
  %2798 = vmatpush1.bf16.msra.mxu0 %v1765
  %2799 = vmatprep.subr.bf16.mxu0 %v1770
  %2800 = vmatpush1.bf16.msra.mxu0 %v1769
  %2801 = vmatprep.subr.bf16.mxu0 %v1774
  %2802 = vmatpush1.bf16.msra.mxu0 %v1773
  %2803 = vmatprep.subr.bf16.mxu0 %v1778
  %2804 = vmatpush1.bf16.msra.mxu0 %v1777
  %2805 = vmatprep.subr.bf16.mxu0 %v1782
  %2806 = vmatpush1.bf16.msra.mxu0 %v1781
  %2807 = vmatprep.subr.bf16.mxu0 %v1786
  %2808 = vmatpush1.bf16.msra.mxu0 %v1785
  %2809 = vmatprep.subr.bf16.mxu0 %v1790
  %2810 = vmatpush1.bf16.msra.mxu0 %v1789
  %2811 = vmatprep.mubr.bf16.mxu0 %v465
  %2812 = vmatmul.mubr.bf16.gmra.mrb[0].mxu0 %v464
  %v2813 = vpop.f32.mrb[0].mxu0
  %v2814 = vadd.f32 %v2773, %v2813
  %v2815 = vpop.f32.mrb[0].mxu0
  %v2816 = vadd.f32 %v2775, %v2815
  %v2817 = vpop.f32.mrb[0].mxu0
  %v2818 = vpop.f32.mrb[0].mxu0
  %2819 = vdwg.mxu0
  %2820 = vmatprep.subr.bf16.mxu0 %v1794
  %2821 = vmatpush1.bf16.msra.mxu0 %v1793
  %2822 = vmatprep.subr.bf16.mxu0 %v1798
  %2823 = vmatpush1.bf16.msra.mxu0 %v1797
  %2824 = vmatprep.subr.bf16.mxu0 %v1802
  %2825 = vmatpush1.bf16.msra.mxu0 %v1801
  %2826 = vmatprep.subr.bf16.mxu0 %v1806
  %2827 = vmatpush1.bf16.msra.mxu0 %v1805
  %2828 = vmatprep.subr.bf16.mxu0 %v1810
  %2829 = vmatpush1.bf16.msra.mxu0 %v1809
  %2830 = vmatprep.subr.bf16.mxu0 %v1814
  %2831 = vmatpush1.bf16.msra.mxu0 %v1813
  %2832 = vmatprep.subr.bf16.mxu0 %v1818
  %2833 = vmatpush1.bf16.msra.mxu0 %v1817
  %2834 = vmatprep.subr.bf16.mxu0 %v1822
  %2835 = vmatpush1.bf16.msra.mxu0 %v1821
  %2836 = vmatprep.subr.bf16.mxu0 %v1826
  %2837 = vmatpush1.bf16.msra.mxu0 %v1825
  %2838 = vmatprep.subr.bf16.mxu0 %v1830
  %2839 = vmatpush1.bf16.msra.mxu0 %v1829
  %2840 = vmatprep.subr.bf16.mxu0 %v1834
  %2841 = vmatpush1.bf16.msra.mxu0 %v1833
  %2842 = vmatprep.subr.bf16.mxu0 %v1838
  %2843 = vmatpush1.bf16.msra.mxu0 %v1837
  %2844 = vmatprep.subr.bf16.mxu0 %v1842
  %2845 = vmatpush1.bf16.msra.mxu0 %v1841
  %2846 = vmatprep.subr.bf16.mxu0 %v1846
  %2847 = vmatpush1.bf16.msra.mxu0 %v1845
  %2848 = vmatprep.subr.bf16.mxu0 %v1850
  %2849 = vmatpush1.bf16.msra.mxu0 %v1849
  %2850 = vmatprep.subr.bf16.mxu0 %v1854
  %2851 = vmatpush1.bf16.msra.mxu0 %v1853
  %2852 = vmatprep.mubr.bf16.mxu0 %v467
  %2853 = vmatmul.mubr.bf16.gmra.mrb[0].mxu0 %v466
  %v2854 = vpop.f32.mrb[0].mxu0
  %v2855 = vadd.f32 %v2814, %v2854
  %v2856 = vpop.f32.mrb[0].mxu0
  %v2857 = vadd.f32 %v2816, %v2856
  %v2858 = vpop.f32.mrb[0].mxu0
  %v2859 = vpop.f32.mrb[0].mxu0
  %2860 = vdwg.mxu0
  %2861 = vmatprep.subr.bf16.mxu0 %v1858
  %2862 = vmatpush1.bf16.msra.mxu0 %v1857
  %2863 = vmatprep.subr.bf16.mxu0 %v1862
  %2864 = vmatpush1.bf16.msra.mxu0 %v1861
  %2865 = vmatprep.subr.bf16.mxu0 %v1866
  %2866 = vmatpush1.bf16.msra.mxu0 %v1865
  %2867 = vmatprep.subr.bf16.mxu0 %v1870
  %2868 = vmatpush1.bf16.msra.mxu0 %v1869
  %2869 = vmatprep.subr.bf16.mxu0 %v1874
  %2870 = vmatpush1.bf16.msra.mxu0 %v1873
  %2871 = vmatprep.subr.bf16.mxu0 %v1878
  %2872 = vmatpush1.bf16.msra.mxu0 %v1877
  %2873 = vmatprep.subr.bf16.mxu0 %v1882
  %2874 = vmatpush1.bf16.msra.mxu0 %v1881
  %2875 = vmatprep.subr.bf16.mxu0 %v1886
  %2876 = vmatpush1.bf16.msra.mxu0 %v1885
  %2877 = vmatprep.subr.bf16.mxu0 %v1890
  %2878 = vmatpush1.bf16.msra.mxu0 %v1889
  %2879 = vmatprep.subr.bf16.mxu0 %v1894
  %2880 = vmatpush1.bf16.msra.mxu0 %v1893
  %2881 = vmatprep.subr.bf16.mxu0 %v1898
  %2882 = vmatpush1.bf16.msra.mxu0 %v1897
  %2883 = vmatprep.subr.bf16.mxu0 %v1902
  %2884 = vmatpush1.bf16.msra.mxu0 %v1901
  %2885 = vmatprep.subr.bf16.mxu0 %v1906
  %2886 = vmatpush1.bf16.msra.mxu0 %v1905
  %2887 = vmatprep.subr.bf16.mxu0 %v1910
  %2888 = vmatpush1.bf16.msra.mxu0 %v1909
  %2889 = vmatprep.subr.bf16.mxu0 %v1914
  %2890 = vmatpush1.bf16.msra.mxu0 %v1913
  %2891 = vmatprep.subr.bf16.mxu0 %v1918
  %2892 = vmatpush1.bf16.msra.mxu0 %v1917
  %2893 = vmatprep.mubr.bf16.mxu0 %v469
  %2894 = vmatmul.mubr.bf16.gmra.mrb[0].mxu0 %v468
  %v2895 = vpop.f32.mrb[0].mxu0
  %v2896 = vadd.f32 %v2855, %v2895
  %v2897 = vpop.f32.mrb[0].mxu0
  %v2898 = vadd.f32 %v2857, %v2897
  %v2899 = vpop.f32.mrb[0].mxu0
  %v2900 = vpop.f32.mrb[0].mxu0
  %2901 = vdwg.mxu0
  %2902 = vmatprep.subr.bf16.mxu0 %v1922
  %2903 = vmatpush1.bf16.msra.mxu0 %v1921
  %2904 = vmatprep.subr.bf16.mxu0 %v1926
  %2905 = vmatpush1.bf16.msra.mxu0 %v1925
  %2906 = vmatprep.subr.bf16.mxu0 %v1930
  %2907 = vmatpush1.bf16.msra.mxu0 %v1929
  %2908 = vmatprep.subr.bf16.mxu0 %v1934
  %2909 = vmatpush1.bf16.msra.mxu0 %v1933
  %2910 = vmatprep.subr.bf16.mxu0 %v1938
  %2911 = vmatpush1.bf16.msra.mxu0 %v1937
  %2912 = vmatprep.subr.bf16.mxu0 %v1942
  %2913 = vmatpush1.bf16.msra.mxu0 %v1941
  %2914 = vmatprep.subr.bf16.mxu0 %v1946
  %2915 = vmatpush1.bf16.msra.mxu0 %v1945
  %2916 = vmatprep.subr.bf16.mxu0 %v1950
  %2917 = vmatpush1.bf16.msra.mxu0 %v1949
  %2918 = vmatprep.subr.bf16.mxu0 %v1954
  %2919 = vmatpush1.bf16.msra.mxu0 %v1953
  %2920 = vmatprep.subr.bf16.mxu0 %v1958
  %2921 = vmatpush1.bf16.msra.mxu0 %v1957
  %2922 = vmatprep.subr.bf16.mxu0 %v1962
  %2923 = vmatpush1.bf16.msra.mxu0 %v1961
  %2924 = vmatprep.subr.bf16.mxu0 %v1966
  %2925 = vmatpush1.bf16.msra.mxu0 %v1965
  %2926 = vmatprep.subr.bf16.mxu0 %v1970
  %2927 = vmatpush1.bf16.msra.mxu0 %v1969
  %2928 = vmatprep.subr.bf16.mxu0 %v1974
  %2929 = vmatpush1.bf16.msra.mxu0 %v1973
  %2930 = vmatprep.subr.bf16.mxu0 %v1978
  %2931 = vmatpush1.bf16.msra.mxu0 %v1977
  %2932 = vmatprep.subr.bf16.mxu0 %v1982
  %2933 = vmatpush1.bf16.msra.mxu0 %v1981
  %2934 = vmatprep.mubr.bf16.mxu0 %v471
  %2935 = vmatmul.mubr.bf16.gmra.mrb[0].mxu0 %v470
  %v2936 = vpop.f32.mrb[0].mxu0
  %v2937 = vadd.f32 %v2896, %v2936
  %v2938 = vpop.f32.mrb[0].mxu0
  %v2939 = vadd.f32 %v2898, %v2938
  %v2940 = vpop.f32.mrb[0].mxu0
  %v2941 = vpop.f32.mrb[0].mxu0
  %2942 = vdwg.mxu0
  %2943 = vmatprep.subr.bf16.mxu0 %v1986
  %2944 = vmatpush1.bf16.msra.mxu0 %v1985
  %2945 = vmatprep.subr.bf16.mxu0 %v1990
  %2946 = vmatpush1.bf16.msra.mxu0 %v1989
  %2947 = vmatprep.subr.bf16.mxu0 %v1994
  %2948 = vmatpush1.bf16.msra.mxu0 %v1993
  %2949 = vmatprep.subr.bf16.mxu0 %v1998
  %2950 = vmatpush1.bf16.msra.mxu0 %v1997
  %2951 = vmatprep.subr.bf16.mxu0 %v2002
  %2952 = vmatpush1.bf16.msra.mxu0 %v2001
  %2953 = vmatprep.subr.bf16.mxu0 %v2006
  %2954 = vmatpush1.bf16.msra.mxu0 %v2005
  %2955 = vmatprep.subr.bf16.mxu0 %v2010
  %2956 = vmatpush1.bf16.msra.mxu0 %v2009
  %2957 = vmatprep.subr.bf16.mxu0 %v2014
  %2958 = vmatpush1.bf16.msra.mxu0 %v2013
  %2959 = vmatprep.subr.bf16.mxu0 %v2018
  %2960 = vmatpush1.bf16.msra.mxu0 %v2017
  %2961 = vmatprep.subr.bf16.mxu0 %v2022
  %2962 = vmatpush1.bf16.msra.mxu0 %v2021
  %2963 = vmatprep.subr.bf16.mxu0 %v2026
  %2964 = vmatpush1.bf16.msra.mxu0 %v2025
  %2965 = vmatprep.subr.bf16.mxu0 %v2030
  %2966 = vmatpush1.bf16.msra.mxu0 %v2029
  %2967 = vmatprep.subr.bf16.mxu0 %v2034
  %2968 = vmatpush1.bf16.msra.mxu0 %v2033
  %2969 = vmatprep.subr.bf16.mxu0 %v2038
  %2970 = vmatpush1.bf16.msra.mxu0 %v2037
  %2971 = vmatprep.subr.bf16.mxu0 %v2042
  %2972 = vmatpush1.bf16.msra.mxu0 %v2041
  %2973 = vmatprep.subr.bf16.mxu0 %v2046
  %2974 = vmatpush1.bf16.msra.mxu0 %v2045
  %2975 = vmatprep.mubr.bf16.mxu0 %v473
  %2976 = vmatmul.mubr.bf16.gmra.mrb[0].mxu0 %v472
  %v2977 = vpop.f32.mrb[0].mxu0
  %v2978 = vadd.f32 %v2937, %v2977
  %v2979 = vpop.f32.mrb[0].mxu0
  %v2980 = vadd.f32 %v2939, %v2979
  %v2981 = vpop.f32.mrb[0].mxu0
  %v2982 = vpop.f32.mrb[0].mxu0
  %2983 = vdwg.mxu0
  %2984 = vmatprep.subr.bf16.mxu0 %v2050
  %2985 = vmatpush1.bf16.msra.mxu0 %v2049
  %2986 = vmatprep.subr.bf16.mxu0 %v2054
  %2987 = vmatpush1.bf16.msra.mxu0 %v2053
  %2988 = vmatprep.subr.bf16.mxu0 0
  %2989 = vmatpush1.bf16.msra.mxu0 0
  %2990 = vmatprep.subr.bf16.mxu0 0
  %2991 = vmatpush1.bf16.msra.mxu0 0
  %2992 = vmatprep.subr.bf16.mxu0 0
  %2993 = vmatpush1.bf16.msra.mxu0 0
  %2994 = vmatprep.subr.bf16.mxu0 0
  %2995 = vmatpush1.bf16.msra.mxu0 0
  %2996 = vmatprep.subr.bf16.mxu0 0
  %2997 = vmatpush1.bf16.msra.mxu0 0
  %2998 = vmatprep.subr.bf16.mxu0 0
  %2999 = vmatpush1.bf16.msra.mxu0 0
  %3000 = vmatprep.subr.bf16.mxu0 0
  %3001 = vmatpush1.bf16.msra.mxu0 0
  %3002 = vmatprep.subr.bf16.mxu0 0
  %3003 = vmatpush1.bf16.msra.mxu0 0
  %3004 = vmatprep.subr.bf16.mxu0 0
  %3005 = vmatpush1.bf16.msra.mxu0 0
  %3006 = vmatprep.subr.bf16.mxu0 0
  %3007 = vmatpush1.bf16.msra.mxu0 0
  %3008 = vmatprep.subr.bf16.mxu0 0
  %3009 = vmatpush1.bf16.msra.mxu0 0
  %3010 = vmatprep.subr.bf16.mxu0 0
  %3011 = vmatpush1.bf16.msra.mxu0 0
  %3012 = vmatprep.subr.bf16.mxu0 0
  %3013 = vmatpush1.bf16.msra.mxu0 0
  %3014 = vmatprep.subr.bf16.mxu0 0
  %3015 = vmatpush1.bf16.msra.mxu0 0
  %3016 = vmatprep.mubr.bf16.mxu0 0
  %3017 = vmatmul.mubr.bf16.gmra.mrb[0].mxu0 %v2449
  %v3018 = vpop.f32.mrb[0].mxu0
  %v3019 = vadd.f32 %v2978, %v3018
  %v3020 = vpop.f32.mrb[0].mxu0
  %v3021 = vadd.f32 %v2980, %v3020
  %v3022 = vpop.f32.mrb[0].mxu0
  %v3023 = vpop.f32.mrb[0].mxu0
  %3024 = vdwg.mxu0
  %v3025 = vmax.f32 %v2732, 0.0
  %v3026 = vmax.f32 %v2734, 0.0
  %v3027 = vmax.f32 %v3019, 0.0
  %v3028 = vmax.f32 %v3021, 0.0
  %v3029 = vpack.c.bf16 %v3025, %v3025
  %v3030 = vpack.c.bf16 %v3026, %v3026
  %v3031 = vpack.c.bf16 %v3027, %v3027
  %v3032 = vpack.c.bf16 %v3028, %v3028
  %v3033 = vld [vmem:[%s3] sm:$0xf]
  %v3034 = vld [vmem:[%s3 + $0x4] sm:$0xf]
  %v3035 = vld [vmem:[%s3 + $0x8] sm:$0xf]
  %v3036 = vld [vmem:[%s3 + $0xc] sm:$0xf]
  %v3037 = vld [vmem:[%s3 + $0x10] sm:$0xf]
  %v3038 = vld [vmem:[%s3 + $0x14] sm:$0xf]
  %v3039 = vld [vmem:[%s3 + $0x18] sm:$0xf]
  %v3040 = vld [vmem:[%s3 + $0x1c] sm:$0xf]
  %v3041 = vld [vmem:[%s3 + $0x20] sm:$0xf]
  %v3042 = vld [vmem:[%s3 + $0x24] sm:$0xf]
  %v3043 = vld [vmem:[%s3 + $0x28] sm:$0xf]
  %v3044 = vld [vmem:[%s3 + $0x2c] sm:$0xf]
  %v3045 = vld [vmem:[%s3 + $0x30] sm:$0xf]
  %v3046 = vld [vmem:[%s3 + $0x34] sm:$0xf]
  %v3047 = vld [vmem:[%s3 + $0x38] sm:$0xf]
  %v3048 = vld [vmem:[%s3 + $0x3c] sm:$0xf]
  %v3049 = vld [vmem:[%s3 + $0x40] sm:$0xf]
  %v3050 = vld [vmem:[%s3 + $0x44] sm:$0xf]
  %v3051 = vld [vmem:[%s3 + $0x48] sm:$0xf]
  %v3052 = vld [vmem:[%s3 + $0x4c] sm:$0xf]
  %v3053 = vld [vmem:[%s3 + $0x50] sm:$0xf]
  %v3054 = vld [vmem:[%s3 + $0x54] sm:$0xf]
  %v3055 = vld [vmem:[%s3 + $0x58] sm:$0xf]
  %v3056 = vld [vmem:[%s3 + $0x5c] sm:$0xf]
  %v3057 = vld [vmem:[%s3 + $0x60] sm:$0xf]
  %v3058 = vld [vmem:[%s3 + $0x64] sm:$0xf]
  %v3059 = vld [vmem:[%s3 + $0x68] sm:$0xf]
  %v3060 = vld [vmem:[%s3 + $0x6c] sm:$0xf]
  %v3061 = vld [vmem:[%s3 + $0x70] sm:$0xf]
  %v3062 = vld [vmem:[%s3 + $0x74] sm:$0xf]
  %v3063 = vld [vmem:[%s3 + $0x78] sm:$0xf]
  %v3064 = vld [vmem:[%s3 + $0x7c] sm:$0xf]
  %v3065 = vld [vmem:[%s3 + $0x80] sm:$0xf]
  %v3066 = vld [vmem:[%s3 + $0x84] sm:$0xf]
  %v3067 = vld [vmem:[%s3 + $0x88] sm:$0xf]
  %v3068 = vld [vmem:[%s3 + $0x8c] sm:$0xf]
  %v3069 = vld [vmem:[%s3 + $0x90] sm:$0xf]
  %v3070 = vld [vmem:[%s3 + $0x94] sm:$0xf]
  %v3071 = vld [vmem:[%s3 + $0x98] sm:$0xf]
  %v3072 = vld [vmem:[%s3 + $0x9c] sm:$0xf]
  %v3073 = vld [vmem:[%s3 + $0xa0] sm:$0xf]
  %v3074 = vld [vmem:[%s3 + $0xa4] sm:$0xf]
  %v3075 = vld [vmem:[%s3 + $0xa8] sm:$0xf]
  %v3076 = vld [vmem:[%s3 + $0xac] sm:$0xf]
  %v3077 = vld [vmem:[%s3 + $0xb0] sm:$0xf]
  %v3078 = vld [vmem:[%s3 + $0xb4] sm:$0xf]
  %v3079 = vld [vmem:[%s3 + $0xb8] sm:$0xf]
  %v3080 = vld [vmem:[%s3 + $0xbc] sm:$0xf]
  %v3081 = vld [vmem:[%s3 + $0xc0] sm:$0xf]
  %v3082 = vld [vmem:[%s3 + $0xc4] sm:$0xf]
  %v3083 = vld [vmem:[%s3 + $0xc8] sm:$0xf]
  %v3084 = vld [vmem:[%s3 + $0xcc] sm:$0xf]
  %v3085 = vld [vmem:[%s3 + $0xd0] sm:$0xf]
  %v3086 = vld [vmem:[%s3 + $0xd4] sm:$0xf]
  %v3087 = vld [vmem:[%s3 + $0xd8] sm:$0xf]
  %v3088 = vld [vmem:[%s3 + $0xdc] sm:$0xf]
  %v3089 = vld [vmem:[%s3 + $0xe0] sm:$0xf]
  %v3090 = vld [vmem:[%s3 + $0xe4] sm:$0xf]
  %v3091 = vld [vmem:[%s3 + $0xe8] sm:$0xf]
  %v3092 = vld [vmem:[%s3 + $0xec] sm:$0xf]
  %v3093 = vld [vmem:[%s3 + $0xf0] sm:$0xf]
  %v3094 = vld [vmem:[%s3 + $0xf4] sm:$0xf]
  %v3095 = vld [vmem:[%s3 + $0xf8] sm:$0xf]
  %v3096 = vld [vmem:[%s3 + $0xfc] sm:$0xf]
  %v3097 = vld [vmem:[%s4] sm:$0x1]
  %v3099 = vlaneseq
  %v3100 = vshrl.u32 %v3099, 7
  %v3101 = vsub.s32 0, %v3100
  %v3102 = vrot.slane %v3097, %v3101
  %v3168 = vunpack.c.l.b16 %v3033
  %v3169 = vunpack.c.l.b16 %v3034
  %v3170 = vunpack.c.l.b16 %v3035
  %v3171 = vunpack.c.l.b16 %v3036
  %v3172 = vunpack.c.l.b16 %v3037
  %v3173 = vunpack.c.l.b16 %v3038
  %v3174 = vunpack.c.l.b16 %v3039
  %v3175 = vunpack.c.l.b16 %v3040
  %v3176 = vunpack.c.l.b16 %v3041
  %v3177 = vunpack.c.l.b16 %v3042
  %v3178 = vunpack.c.l.b16 %v3043
  %v3179 = vunpack.c.l.b16 %v3044
  %v3180 = vunpack.c.l.b16 %v3045
  %v3181 = vunpack.c.l.b16 %v3046
  %v3182 = vunpack.c.l.b16 %v3047
  %v3183 = vunpack.c.l.b16 %v3048
  %v3184 = vunpack.c.l.b16 %v3049
  %v3185 = vunpack.c.l.b16 %v3050
  %v3186 = vunpack.c.l.b16 %v3051
  %v3187 = vunpack.c.l.b16 %v3052
  %v3188 = vunpack.c.l.b16 %v3053
  %v3189 = vunpack.c.l.b16 %v3054
  %v3190 = vunpack.c.l.b16 %v3055
  %v3191 = vunpack.c.l.b16 %v3056
  %v3192 = vunpack.c.l.b16 %v3057
  %v3193 = vunpack.c.l.b16 %v3058
  %v3194 = vunpack.c.l.b16 %v3059
  %v3195 = vunpack.c.l.b16 %v3060
  %v3196 = vunpack.c.l.b16 %v3061
  %v3197 = vunpack.c.l.b16 %v3062
  %v3198 = vunpack.c.l.b16 %v3063
  %v3199 = vunpack.c.l.b16 %v3064
  %v3200 = vunpack.c.l.b16 %v3065
  %v3201 = vunpack.c.l.b16 %v3066
  %v3202 = vunpack.c.l.b16 %v3067
  %v3203 = vunpack.c.l.b16 %v3068
  %v3204 = vunpack.c.l.b16 %v3069
  %v3205 = vunpack.c.l.b16 %v3070
  %v3206 = vunpack.c.l.b16 %v3071
  %v3207 = vunpack.c.l.b16 %v3072
  %v3208 = vunpack.c.l.b16 %v3073
  %v3209 = vunpack.c.l.b16 %v3074
  %v3210 = vunpack.c.l.b16 %v3075
  %v3211 = vunpack.c.l.b16 %v3076
  %v3212 = vunpack.c.l.b16 %v3077
  %v3213 = vunpack.c.l.b16 %v3078
  %v3214 = vunpack.c.l.b16 %v3079
  %v3215 = vunpack.c.l.b16 %v3080
  %v3216 = vunpack.c.l.b16 %v3081
  %v3217 = vunpack.c.l.b16 %v3082
  %v3218 = vunpack.c.l.b16 %v3083
  %v3219 = vunpack.c.l.b16 %v3084
  %v3220 = vunpack.c.l.b16 %v3085
  %v3221 = vunpack.c.l.b16 %v3086
  %v3222 = vunpack.c.l.b16 %v3087
  %v3223 = vunpack.c.l.b16 %v3088
  %v3224 = vunpack.c.l.b16 %v3089
  %v3225 = vunpack.c.l.b16 %v3090
  %v3226 = vunpack.c.l.b16 %v3091
  %v3227 = vunpack.c.l.b16 %v3092
  %v3228 = vunpack.c.l.b16 %v3093
  %v3229 = vunpack.c.l.b16 %v3094
  %v3230 = vunpack.c.l.b16 %v3095
  %v3231 = vunpack.c.l.b16 %v3096
  %v3232 = vpack.c.b16 %v3169, %v3168
  %v3233 = vpack.c.b16 %v3171, %v3170
  %v3234 = vpack.c.b16 %v3173, %v3172
  %v3235 = vpack.c.b16 %v3175, %v3174
  %v3236 = vpack.c.b16 %v3177, %v3176
  %v3237 = vpack.c.b16 %v3179, %v3178
  %v3238 = vpack.c.b16 %v3181, %v3180
  %v3239 = vpack.c.b16 %v3183, %v3182
  %v3240 = vpack.c.b16 %v3185, %v3184
  %v3241 = vpack.c.b16 %v3187, %v3186
  %v3242 = vpack.c.b16 %v3189, %v3188
  %v3243 = vpack.c.b16 %v3191, %v3190
  %v3244 = vpack.c.b16 %v3193, %v3192
  %v3245 = vpack.c.b16 %v3195, %v3194
  %v3246 = vpack.c.b16 %v3197, %v3196
  %v3247 = vpack.c.b16 %v3199, %v3198
  %v3248 = vpack.c.b16 %v3201, %v3200
  %v3249 = vpack.c.b16 %v3203, %v3202
  %v3250 = vpack.c.b16 %v3205, %v3204
  %v3251 = vpack.c.b16 %v3207, %v3206
  %v3252 = vpack.c.b16 %v3209, %v3208
  %v3253 = vpack.c.b16 %v3211, %v3210
  %v3254 = vpack.c.b16 %v3213, %v3212
  %v3255 = vpack.c.b16 %v3215, %v3214
  %v3256 = vpack.c.b16 %v3217, %v3216
  %v3257 = vpack.c.b16 %v3219, %v3218
  %v3258 = vpack.c.b16 %v3221, %v3220
  %v3259 = vpack.c.b16 %v3223, %v3222
  %v3260 = vpack.c.b16 %v3225, %v3224
  %v3261 = vpack.c.b16 %v3227, %v3226
  %v3262 = vpack.c.b16 %v3229, %v3228
  %v3263 = vpack.c.b16 %v3231, %v3230
  %3296 = vmatprep.subr.bf16.mxu0 0
  %3297 = vmatpush1.bf16.msra.mxu0 %v3232
  %3298 = vmatprep.subr.bf16.mxu0 0
  %3299 = vmatpush1.bf16.msra.mxu0 %v3233
  %3300 = vmatprep.subr.bf16.mxu0 0
  %3301 = vmatpush1.bf16.msra.mxu0 %v3234
  %3302 = vmatprep.subr.bf16.mxu0 0
  %3303 = vmatpush1.bf16.msra.mxu0 %v3235
  %3304 = vmatprep.subr.bf16.mxu0 0
  %3305 = vmatpush1.bf16.msra.mxu0 %v3236
  %3306 = vmatprep.subr.bf16.mxu0 0
  %3307 = vmatpush1.bf16.msra.mxu0 %v3237
  %3308 = vmatprep.subr.bf16.mxu0 0
  %3309 = vmatpush1.bf16.msra.mxu0 %v3238
  %3310 = vmatprep.subr.bf16.mxu0 0
  %3311 = vmatpush1.bf16.msra.mxu0 %v3239
  %3312 = vmatprep.subr.bf16.mxu0 0
  %3313 = vmatpush1.bf16.msra.mxu0 %v3240
  %3314 = vmatprep.subr.bf16.mxu0 0
  %3315 = vmatpush1.bf16.msra.mxu0 %v3241
  %3316 = vmatprep.subr.bf16.mxu0 0
  %3317 = vmatpush1.bf16.msra.mxu0 %v3242
  %3318 = vmatprep.subr.bf16.mxu0 0
  %3319 = vmatpush1.bf16.msra.mxu0 %v3243
  %3320 = vmatprep.subr.bf16.mxu0 0
  %3321 = vmatpush1.bf16.msra.mxu0 %v3244
  %3322 = vmatprep.subr.bf16.mxu0 0
  %3323 = vmatpush1.bf16.msra.mxu0 %v3245
  %3324 = vmatprep.subr.bf16.mxu0 0
  %3325 = vmatpush1.bf16.msra.mxu0 %v3246
  %3326 = vmatprep.subr.bf16.mxu0 0
  %3327 = vmatpush1.bf16.msra.mxu0 %v3247
  %3328 = vmatprep.mubr.bf16.mxu0 %v3030
  %3329 = vmatmul.mubr.bf16.gmra.mrb[0].mxu0 %v3029
  %v3330 = vpop.f32.mrb[0].mxu0
  %v3331 = vadd.f32 %v3102, %v3330
  %v3332 = vpop.f32.mrb[0].mxu0
  %v3333 = vpop.f32.mrb[0].mxu0
  %v3334 = vpop.f32.mrb[0].mxu0
  %3335 = vdwg.mxu0
  %3336 = vmatprep.subr.bf16.mxu0 0
  %3337 = vmatpush1.bf16.msra.mxu0 %v3248
  %3338 = vmatprep.subr.bf16.mxu0 0
  %3339 = vmatpush1.bf16.msra.mxu0 %v3249
  %3340 = vmatprep.subr.bf16.mxu0 0
  %3341 = vmatpush1.bf16.msra.mxu0 %v3250
  %3342 = vmatprep.subr.bf16.mxu0 0
  %3343 = vmatpush1.bf16.msra.mxu0 %v3251
  %3344 = vmatprep.subr.bf16.mxu0 0
  %3345 = vmatpush1.bf16.msra.mxu0 %v3252
  %3346 = vmatprep.subr.bf16.mxu0 0
  %3347 = vmatpush1.bf16.msra.mxu0 %v3253
  %3348 = vmatprep.subr.bf16.mxu0 0
  %3349 = vmatpush1.bf16.msra.mxu0 %v3254
  %3350 = vmatprep.subr.bf16.mxu0 0
  %3351 = vmatpush1.bf16.msra.mxu0 %v3255
  %3352 = vmatprep.subr.bf16.mxu0 0
  %3353 = vmatpush1.bf16.msra.mxu0 %v3256
  %3354 = vmatprep.subr.bf16.mxu0 0
  %3355 = vmatpush1.bf16.msra.mxu0 %v3257
  %3356 = vmatprep.subr.bf16.mxu0 0
  %3357 = vmatpush1.bf16.msra.mxu0 %v3258
  %3358 = vmatprep.subr.bf16.mxu0 0
  %3359 = vmatpush1.bf16.msra.mxu0 %v3259
  %3360 = vmatprep.subr.bf16.mxu0 0
  %3361 = vmatpush1.bf16.msra.mxu0 %v3260
  %3362 = vmatprep.subr.bf16.mxu0 0
  %3363 = vmatpush1.bf16.msra.mxu0 %v3261
  %3364 = vmatprep.subr.bf16.mxu0 0
  %3365 = vmatpush1.bf16.msra.mxu0 %v3262
  %3366 = vmatprep.subr.bf16.mxu0 0
  %3367 = vmatpush1.bf16.msra.mxu0 %v3263
  %3368 = vmatprep.mubr.bf16.mxu0 %v3032
  %3369 = vmatmul.mubr.bf16.gmra.mrb[0].mxu0 %v3031
  %v3370 = vpop.f32.mrb[0].mxu0
  %v3371 = vadd.f32 %v3331, %v3370
  %v3372 = vpop.f32.mrb[0].mxu0
  %v3373 = vpop.f32.mrb[0].mxu0
  %v3374 = vpop.f32.mrb[0].mxu0
  %3375 = vdwg.mxu0
  %vm3376 = vcmask 54272
  %3377 = vst.msk [vmem:[%s5] sm:$0x3f] %vm3376, %v3371
  // Predicated region
  $region22: #{network_forward.7} parent=0 // pred_check
    _
  $region23: #{network_forward.7} parent=0 // pred_check_branch
    %3379 = sbr.rel (0) target = $region25
  $region24: #{network_forward.7} parent=0 // pred_region
    _
  $region25: #{network_forward.7} parent=0 // pred_fallthru
    _
  // Predicated region
  $region26: #{network_forward.7} parent=0 // pred_check
    _
  $region27: #{network_forward.7} parent=0 // pred_check_branch
    %3381 = sbr.rel (0) target = $region29
  $region28: #{network_forward.7} parent=0 // pred_region
    _
  $region29: #{network_forward.7} parent=0 // pred_fallthru
    _

</llo_original>
